<compile_context>
chip_gen: v7x
topology: tpu7x:2x2x1
jax: 0.10.0
libtpu: 0.0.40
codegen_flags: <defaults>
</compile_context>

<pallas_src>
import jax
import jax.numpy as jnp
from jax.experimental import pallas as pl
from jax.experimental.pallas import tpu as pltpu


# ----------------------------- Pallas kernel -------------------------------

def fused_cnn_kernel(p00_ref, p01_ref, p10_ref, p11_ref,
                     cw_ref, cb_ref, fw_ref, fb_ref, o_ref):
    """Conv3x3(pad=1) + bias + ReLU + MaxPool2x2 + Linear, entirely in VMEM.

    p**_ref : (N, P, K)  im2col patches, one per 2x2 pooling tap,
                         rows ordered (ho, wo) per batch. K = 3*3*3, P = 14*14
    cw_ref  : (K, OC)    conv weight (OIHW flattened, transposed)
    cb_ref  : (1, OC)    conv bias
    fw_ref  : (OC, P, NC) fc weight, fw[k, p, c] == fc_w[c, k*P + p]
    fb_ref  : (1, NC)    fc bias
    o_ref   : (N, NC)    logits
    """
    N = o_ref.shape[0]
    OC = cw_ref.shape[1]
    w = cw_ref[...]
    cb = cb_ref[...]
    fb = fb_ref[...]

    for n in range(N):  # static unroll over the (tiny) batch
        # ---- conv as 4 MXU matmuls (one per pooling tap) + max + bias + relu
        z00 = jnp.dot(p00_ref[n], w, preferred_element_type=jnp.float32)
        z01 = jnp.dot(p01_ref[n], w, preferred_element_type=jnp.float32)
        z10 = jnp.dot(p10_ref[n], w, preferred_element_type=jnp.float32)
        z11 = jnp.dot(p11_ref[n], w, preferred_element_type=jnp.float32)
        z = jnp.maximum(jnp.maximum(z00, z01), jnp.maximum(z10, z11))
        pooled = jnp.maximum(z + cb, 0.0)                    # (P, OC)

        # ---- fc: out[c] = sum_p sum_k pooled[p, k] * fw[k, p, c]
        # reshape-free contraction: 16 broadcast mult-adds on (P, NC) tiles
        acc = pooled[:, 0:1] * fw_ref[0]                     # (P, NC)
        for k in range(1, OC):
            acc = acc + pooled[:, k:k + 1] * fw_ref[k]
        row = jnp.sum(acc, axis=0, keepdims=True) + fb       # (1, NC)
        o_ref[pl.ds(n, 1), :] = row


# ------------------------------- forward -----------------------------------

@jax.jit
def simple_cnn_forward(x, conv_w, conv_b, fc_w, fc_b):
    N, C, H, W = x.shape            # (N, 3, 28, 28)
    KH = KW = 3
    OC = conv_w.shape[0]            # 16
    NC = fc_w.shape[0]              # 10
    Ho, Wo = H // 2, W // 2         # 14, 14
    K = C * KH * KW                 # 27
    P = Ho * Wo                     # 196 pooled pixels per batch element

    # ---- im2col (layout glue, fused by XLA): one patch matrix per 2x2 tap
    xp = jnp.pad(x, ((0, 0), (0, 0), (1, 1), (1, 1)))
    cols = [xp[:, :, kh:kh + H, kw:kw + W]          # (N, C, H, W)
            for kh in range(KH) for kw in range(KW)]
    # feature index = c*9 + kh*3 + kw matches PyTorch OIHW weight flatten
    patches = (jnp.stack(cols, axis=2)              # (N, C, 9, H, W)
                  .reshape(N, K, H, W)
                  .transpose(0, 2, 3, 1))           # (N, H, W, 27)
    taps = [patches[:, i::2, j::2, :].reshape(N, P, K)   # rows in (ho, wo) order
            for i in range(2) for j in range(2)]

    cw = conv_w.reshape(OC, K).T                    # (27, 16)
    cb = conv_b.reshape(1, OC)
    # PyTorch flatten order of (C=16, H=14, W=14) is (oc, ho, wo) -> (OC, P, NC)
    fw = fc_w.reshape(NC, OC, P).transpose(1, 2, 0)  # (16, 196, 10)
    fb = fc_b.reshape(1, NC)

    def full(shape):
        return pl.BlockSpec(shape, lambda i, _s=len(shape): (0,) * _s)

    out = pl.pallas_call(
        fused_cnn_kernel,
        out_shape=jax.ShapeDtypeStruct((N, NC), jnp.float32),
        grid=(1,),
        in_specs=[full((N, P, K))] * 4 + [
            full((K, OC)), full((1, OC)), full((OC, P, NC)), full((1, NC))],
        out_specs=full((N, NC)),
        compiler_params=pltpu.CompilerParams(
            dimension_semantics=("arbitrary",)),
    )(*taps, cw, cb, fw, fb)
    return out


# ----------------------------- reference (JAX) ------------------------------

def simple_cnn_reference(x, conv_w, conv_b, fc_w, fc_b):
    y = jax.lax.conv_general_dilated(
        x, conv_w, window_strides=(1, 1), padding=((1, 1), (1, 1)),
        dimension_numbers=("NCHW", "OIHW", "NCHW"))
    y = y + conv_b.reshape(1, -1, 1, 1)
    y = jnp.maximum(y, 0.0)
    y = jax.lax.reduce_window(
        y, -jnp.inf, jax.lax.max,
        window_dimensions=(1, 1, 2, 2), window_strides=(1, 1, 2, 2),
        padding="VALID")
    feat = y.reshape(y.shape[0], -1)
    return feat @ fc_w.T + fc_b


# --------------------------------- main -------------------------------------

if __name__ == "__main__":
    key = jax.random.PRNGKey(0)
    k1, k2, k3, k4, k5 = jax.random.split(key, 5)

    # Deterministic synthetic parameters (PyTorch shapes / conventions).
    conv_w = jax.random.normal(k1, (16, 3, 3, 3), jnp.float32) * 0.1   # OIHW
    conv_b = jax.random.normal(k2, (16,), jnp.float32) * 0.1
    fc_w = jax.random.normal(k3, (10, 16 * 14 * 14), jnp.float32) * 0.01
    fc_b = jax.random.normal(k4, (10,), jnp.float32) * 0.1

    # Input: NCHW, 28x28 spatial (required by the fc of 16*14*14 features).
    x = jax.random.normal(k5, (2, 3, 28, 28), jnp.float32)

    out = simple_cnn_forward(x, conv_w, conv_b, fc_w, fc_b)
    out = jax.block_until_ready(out)

    ref = simple_cnn_reference(x, conv_w, conv_b, fc_w, fc_b)
    if not jnp.allclose(out, ref, rtol=1e-2, atol=1e-2):
        raise AssertionError("Pallas output mismatch vs JAX reference")

    print("KERNEL_OK")
</pallas_src>

<mosaic_0001>
module attributes {stable_mosaic.version = 11 : i64} {
  func.func @fused_cnn_kernel(%arg0: i32, %arg1: memref<2x196x27xf32, #tpu.memory_space<vmem>>, %arg2: memref<2x196x27xf32, #tpu.memory_space<vmem>>, %arg3: memref<2x196x27xf32, #tpu.memory_space<vmem>>, %arg4: memref<2x196x27xf32, #tpu.memory_space<vmem>>, %arg5: memref<27x16xf32, #tpu.memory_space<vmem>>, %arg6: memref<1x16xf32, #tpu.memory_space<vmem>>, %arg7: memref<16x196x10xf32, #tpu.memory_space<vmem>>, %arg8: memref<1x10xf32, #tpu.memory_space<vmem>>, %arg9: memref<2x10xf32, #tpu.memory_space<vmem>>) attributes {dimension_semantics = [#tpu.dimension_semantics<arbitrary>], iteration_bounds = array<i64: 1>, scalar_prefetch = 0 : i64, scratch_operands = 0 : i64, tpu.core_type = #tpu.core_type<tc>, window_params = [{pipeline_mode = #tpu.pipeline_mode<synchronous>, transform_indices = @transform_0, window_bounds = array<i64: 2, 196, 27>}, {pipeline_mode = #tpu.pipeline_mode<synchronous>, transform_indices = @transform_1, window_bounds = array<i64: 2, 196, 27>}, {pipeline_mode = #tpu.pipeline_mode<synchronous>, transform_indices = @transform_2, window_bounds = array<i64: 2, 196, 27>}, {pipeline_mode = #tpu.pipeline_mode<synchronous>, transform_indices = @transform_3, window_bounds = array<i64: 2, 196, 27>}, {pipeline_mode = #tpu.pipeline_mode<synchronous>, transform_indices = @transform_4, window_bounds = array<i64: 27, 16>}, {pipeline_mode = #tpu.pipeline_mode<synchronous>, transform_indices = @transform_5, window_bounds = array<i64: 1, 16>}, {pipeline_mode = #tpu.pipeline_mode<synchronous>, transform_indices = @transform_6, window_bounds = array<i64: 16, 196, 10>}, {pipeline_mode = #tpu.pipeline_mode<synchronous>, transform_indices = @transform_7, window_bounds = array<i64: 1, 10>}, {pipeline_mode = #tpu.pipeline_mode<synchronous>, transform_indices = @transform_8, window_bounds = array<i64: 2, 10>}]} {
    %c0 = arith.constant 0 : index
    %c0_0 = arith.constant 0 : index
    %0 = vector.load %arg5[%c0, %c0_0] : memref<27x16xf32, #tpu.memory_space<vmem>>, vector<27x16xf32>
    %c0_1 = arith.constant 0 : index
    %c0_2 = arith.constant 0 : index
    %1 = vector.load %arg6[%c0_1, %c0_2] : memref<1x16xf32, #tpu.memory_space<vmem>>, vector<1x16xf32>
    %c0_3 = arith.constant 0 : index
    %c0_4 = arith.constant 0 : index
    %2 = vector.load %arg8[%c0_3, %c0_4] : memref<1x10xf32, #tpu.memory_space<vmem>>, vector<1x10xf32>
    %c0_5 = arith.constant 0 : index
    %c0_6 = arith.constant 0 : index
    %c0_7 = arith.constant 0 : index
    %3 = vector.load %arg1[%c0_5, %c0_6, %c0_7] : memref<2x196x27xf32, #tpu.memory_space<vmem>>, vector<1x196x27xf32>
    %4 = vector.shape_cast %3 : vector<1x196x27xf32> to vector<196x27xf32>
    %cst = arith.constant dense<0.000000e+00> : vector<196x16xf32>
    %5 = tpu.matmul %4, %0, %cst {dimension_numbers = #tpu.dot_dimension_numbers<[1], [0], [0], [1], [0, 0, 1, 1], [], []>} : vector<196x27xf32>, vector<27x16xf32>, vector<196x16xf32> -> vector<196x16xf32>
    %c0_8 = arith.constant 0 : index
    %c0_9 = arith.constant 0 : index
    %c0_10 = arith.constant 0 : index
    %6 = vector.load %arg2[%c0_8, %c0_9, %c0_10] : memref<2x196x27xf32, #tpu.memory_space<vmem>>, vector<1x196x27xf32>
    %7 = vector.shape_cast %6 : vector<1x196x27xf32> to vector<196x27xf32>
    %cst_11 = arith.constant dense<0.000000e+00> : vector<196x16xf32>
    %8 = tpu.matmul %7, %0, %cst_11 {dimension_numbers = #tpu.dot_dimension_numbers<[1], [0], [0], [1], [0, 0, 1, 1], [], []>} : vector<196x27xf32>, vector<27x16xf32>, vector<196x16xf32> -> vector<196x16xf32>
    %c0_12 = arith.constant 0 : index
    %c0_13 = arith.constant 0 : index
    %c0_14 = arith.constant 0 : index
    %9 = vector.load %arg3[%c0_12, %c0_13, %c0_14] : memref<2x196x27xf32, #tpu.memory_space<vmem>>, vector<1x196x27xf32>
    %10 = vector.shape_cast %9 : vector<1x196x27xf32> to vector<196x27xf32>
    %cst_15 = arith.constant dense<0.000000e+00> : vector<196x16xf32>
    %11 = tpu.matmul %10, %0, %cst_15 {dimension_numbers = #tpu.dot_dimension_numbers<[1], [0], [0], [1], [0, 0, 1, 1], [], []>} : vector<196x27xf32>, vector<27x16xf32>, vector<196x16xf32> -> vector<196x16xf32>
    %c0_16 = arith.constant 0 : index
    %c0_17 = arith.constant 0 : index
    %c0_18 = arith.constant 0 : index
    %12 = vector.load %arg4[%c0_16, %c0_17, %c0_18] : memref<2x196x27xf32, #tpu.memory_space<vmem>>, vector<1x196x27xf32>
    %13 = vector.shape_cast %12 : vector<1x196x27xf32> to vector<196x27xf32>
    %cst_19 = arith.constant dense<0.000000e+00> : vector<196x16xf32>
    %14 = tpu.matmul %13, %0, %cst_19 {dimension_numbers = #tpu.dot_dimension_numbers<[1], [0], [0], [1], [0, 0, 1, 1], [], []>} : vector<196x27xf32>, vector<27x16xf32>, vector<196x16xf32> -> vector<196x16xf32>
    %15 = arith.maximumf %5, %8 : vector<196x16xf32>
    %16 = arith.maximumf %11, %14 : vector<196x16xf32>
    %17 = arith.maximumf %15, %16 : vector<196x16xf32>
    %18 = vector.broadcast %1 : vector<1x16xf32> to vector<196x16xf32>
    %19 = arith.addf %17, %18 : vector<196x16xf32>
    %cst_20 = arith.constant 0.000000e+00 : f32
    %20 = vector.broadcast %cst_20 : f32 to vector<196x16xf32>
    %21 = arith.maximumf %19, %20 : vector<196x16xf32>
    %22 = vector.extract_strided_slice %21 {offsets = [0, 0], sizes = [196, 1], strides = [1, 1]} : vector<196x16xf32> to vector<196x1xf32>
    %c0_21 = arith.constant 0 : index
    %c0_22 = arith.constant 0 : index
    %c0_23 = arith.constant 0 : index
    %23 = vector.load %arg7[%c0_21, %c0_22, %c0_23] : memref<16x196x10xf32, #tpu.memory_space<vmem>>, vector<1x196x10xf32>
    %24 = vector.shape_cast %23 : vector<1x196x10xf32> to vector<196x10xf32>
    %25 = vector.broadcast %22 : vector<196x1xf32> to vector<196x10xf32>
    %26 = arith.mulf %25, %24 : vector<196x10xf32>
    %27 = vector.extract_strided_slice %21 {offsets = [0, 1], sizes = [196, 1], strides = [1, 1]} : vector<196x16xf32> to vector<196x1xf32>
    %c1 = arith.constant 1 : index
    %c0_24 = arith.constant 0 : index
    %c0_25 = arith.constant 0 : index
    %28 = vector.load %arg7[%c1, %c0_24, %c0_25] : memref<16x196x10xf32, #tpu.memory_space<vmem>>, vector<1x196x10xf32>
    %29 = vector.shape_cast %28 : vector<1x196x10xf32> to vector<196x10xf32>
    %30 = vector.broadcast %27 : vector<196x1xf32> to vector<196x10xf32>
    %31 = arith.mulf %30, %29 : vector<196x10xf32>
    %32 = arith.addf %26, %31 : vector<196x10xf32>
    %33 = vector.extract_strided_slice %21 {offsets = [0, 2], sizes = [196, 1], strides = [1, 1]} : vector<196x16xf32> to vector<196x1xf32>
    %c2 = arith.constant 2 : index
    %c0_26 = arith.constant 0 : index
    %c0_27 = arith.constant 0 : index
    %34 = vector.load %arg7[%c2, %c0_26, %c0_27] : memref<16x196x10xf32, #tpu.memory_space<vmem>>, vector<1x196x10xf32>
    %35 = vector.shape_cast %34 : vector<1x196x10xf32> to vector<196x10xf32>
    %36 = vector.broadcast %33 : vector<196x1xf32> to vector<196x10xf32>
    %37 = arith.mulf %36, %35 : vector<196x10xf32>
    %38 = arith.addf %32, %37 : vector<196x10xf32>
    %39 = vector.extract_strided_slice %21 {offsets = [0, 3], sizes = [196, 1], strides = [1, 1]} : vector<196x16xf32> to vector<196x1xf32>
    %c3 = arith.constant 3 : index
    %c0_28 = arith.constant 0 : index
    %c0_29 = arith.constant 0 : index
    %40 = vector.load %arg7[%c3, %c0_28, %c0_29] : memref<16x196x10xf32, #tpu.memory_space<vmem>>, vector<1x196x10xf32>
    %41 = vector.shape_cast %40 : vector<1x196x10xf32> to vector<196x10xf32>
    %42 = vector.broadcast %39 : vector<196x1xf32> to vector<196x10xf32>
    %43 = arith.mulf %42, %41 : vector<196x10xf32>
    %44 = arith.addf %38, %43 : vector<196x10xf32>
    %45 = vector.extract_strided_slice %21 {offsets = [0, 4], sizes = [196, 1], strides = [1, 1]} : vector<196x16xf32> to vector<196x1xf32>
    %c4 = arith.constant 4 : index
    %c0_30 = arith.constant 0 : index
    %c0_31 = arith.constant 0 : index
    %46 = vector.load %arg7[%c4, %c0_30, %c0_31] : memref<16x196x10xf32, #tpu.memory_space<vmem>>, vector<1x196x10xf32>
    %47 = vector.shape_cast %46 : vector<1x196x10xf32> to vector<196x10xf32>
    %48 = vector.broadcast %45 : vector<196x1xf32> to vector<196x10xf32>
    %49 = arith.mulf %48, %47 : vector<196x10xf32>
    %50 = arith.addf %44, %49 : vector<196x10xf32>
    %51 = vector.extract_strided_slice %21 {offsets = [0, 5], sizes = [196, 1], strides = [1, 1]} : vector<196x16xf32> to vector<196x1xf32>
    %c5 = arith.constant 5 : index
    %c0_32 = arith.constant 0 : index
    %c0_33 = arith.constant 0 : index
    %52 = vector.load %arg7[%c5, %c0_32, %c0_33] : memref<16x196x10xf32, #tpu.memory_space<vmem>>, vector<1x196x10xf32>
    %53 = vector.shape_cast %52 : vector<1x196x10xf32> to vector<196x10xf32>
    %54 = vector.broadcast %51 : vector<196x1xf32> to vector<196x10xf32>
    %55 = arith.mulf %54, %53 : vector<196x10xf32>
    %56 = arith.addf %50, %55 : vector<196x10xf32>
    %57 = vector.extract_strided_slice %21 {offsets = [0, 6], sizes = [196, 1], strides = [1, 1]} : vector<196x16xf32> to vector<196x1xf32>
    %c6 = arith.constant 6 : index
    %c0_34 = arith.constant 0 : index
    %c0_35 = arith.constant 0 : index
    %58 = vector.load %arg7[%c6, %c0_34, %c0_35] : memref<16x196x10xf32, #tpu.memory_space<vmem>>, vector<1x196x10xf32>
    %59 = vector.shape_cast %58 : vector<1x196x10xf32> to vector<196x10xf32>
    %60 = vector.broadcast %57 : vector<196x1xf32> to vector<196x10xf32>
    %61 = arith.mulf %60, %59 : vector<196x10xf32>
    %62 = arith.addf %56, %61 : vector<196x10xf32>
    %63 = vector.extract_strided_slice %21 {offsets = [0, 7], sizes = [196, 1], strides = [1, 1]} : vector<196x16xf32> to vector<196x1xf32>
    %c7 = arith.constant 7 : index
    %c0_36 = arith.constant 0 : index
    %c0_37 = arith.constant 0 : index
    %64 = vector.load %arg7[%c7, %c0_36, %c0_37] : memref<16x196x10xf32, #tpu.memory_space<vmem>>, vector<1x196x10xf32>
    %65 = vector.shape_cast %64 : vector<1x196x10xf32> to vector<196x10xf32>
    %66 = vector.broadcast %63 : vector<196x1xf32> to vector<196x10xf32>
    %67 = arith.mulf %66, %65 : vector<196x10xf32>
    %68 = arith.addf %62, %67 : vector<196x10xf32>
    %69 = vector.extract_strided_slice %21 {offsets = [0, 8], sizes = [196, 1], strides = [1, 1]} : vector<196x16xf32> to vector<196x1xf32>
    %c8 = arith.constant 8 : index
    %c0_38 = arith.constant 0 : index
    %c0_39 = arith.constant 0 : index
    %70 = vector.load %arg7[%c8, %c0_38, %c0_39] : memref<16x196x10xf32, #tpu.memory_space<vmem>>, vector<1x196x10xf32>
    %71 = vector.shape_cast %70 : vector<1x196x10xf32> to vector<196x10xf32>
    %72 = vector.broadcast %69 : vector<196x1xf32> to vector<196x10xf32>
    %73 = arith.mulf %72, %71 : vector<196x10xf32>
    %74 = arith.addf %68, %73 : vector<196x10xf32>
    %75 = vector.extract_strided_slice %21 {offsets = [0, 9], sizes = [196, 1], strides = [1, 1]} : vector<196x16xf32> to vector<196x1xf32>
    %c9 = arith.constant 9 : index
    %c0_40 = arith.constant 0 : index
    %c0_41 = arith.constant 0 : index
    %76 = vector.load %arg7[%c9, %c0_40, %c0_41] : memref<16x196x10xf32, #tpu.memory_space<vmem>>, vector<1x196x10xf32>
    %77 = vector.shape_cast %76 : vector<1x196x10xf32> to vector<196x10xf32>
    %78 = vector.broadcast %75 : vector<196x1xf32> to vector<196x10xf32>
    %79 = arith.mulf %78, %77 : vector<196x10xf32>
    %80 = arith.addf %74, %79 : vector<196x10xf32>
    %81 = vector.extract_strided_slice %21 {offsets = [0, 10], sizes = [196, 1], strides = [1, 1]} : vector<196x16xf32> to vector<196x1xf32>
    %c10 = arith.constant 10 : index
    %c0_42 = arith.constant 0 : index
    %c0_43 = arith.constant 0 : index
    %82 = vector.load %arg7[%c10, %c0_42, %c0_43] : memref<16x196x10xf32, #tpu.memory_space<vmem>>, vector<1x196x10xf32>
    %83 = vector.shape_cast %82 : vector<1x196x10xf32> to vector<196x10xf32>
    %84 = vector.broadcast %81 : vector<196x1xf32> to vector<196x10xf32>
    %85 = arith.mulf %84, %83 : vector<196x10xf32>
    %86 = arith.addf %80, %85 : vector<196x10xf32>
    %87 = vector.extract_strided_slice %21 {offsets = [0, 11], sizes = [196, 1], strides = [1, 1]} : vector<196x16xf32> to vector<196x1xf32>
    %c11 = arith.constant 11 : index
    %c0_44 = arith.constant 0 : index
    %c0_45 = arith.constant 0 : index
    %88 = vector.load %arg7[%c11, %c0_44, %c0_45] : memref<16x196x10xf32, #tpu.memory_space<vmem>>, vector<1x196x10xf32>
    %89 = vector.shape_cast %88 : vector<1x196x10xf32> to vector<196x10xf32>
    %90 = vector.broadcast %87 : vector<196x1xf32> to vector<196x10xf32>
    %91 = arith.mulf %90, %89 : vector<196x10xf32>
    %92 = arith.addf %86, %91 : vector<196x10xf32>
    %93 = vector.extract_strided_slice %21 {offsets = [0, 12], sizes = [196, 1], strides = [1, 1]} : vector<196x16xf32> to vector<196x1xf32>
    %c12 = arith.constant 12 : index
    %c0_46 = arith.constant 0 : index
    %c0_47 = arith.constant 0 : index
    %94 = vector.load %arg7[%c12, %c0_46, %c0_47] : memref<16x196x10xf32, #tpu.memory_space<vmem>>, vector<1x196x10xf32>
    %95 = vector.shape_cast %94 : vector<1x196x10xf32> to vector<196x10xf32>
    %96 = vector.broadcast %93 : vector<196x1xf32> to vector<196x10xf32>
    %97 = arith.mulf %96, %95 : vector<196x10xf32>
    %98 = arith.addf %92, %97 : vector<196x10xf32>
    %99 = vector.extract_strided_slice %21 {offsets = [0, 13], sizes = [196, 1], strides = [1, 1]} : vector<196x16xf32> to vector<196x1xf32>
    %c13 = arith.constant 13 : index
    %c0_48 = arith.constant 0 : index
    %c0_49 = arith.constant 0 : index
    %100 = vector.load %arg7[%c13, %c0_48, %c0_49] : memref<16x196x10xf32, #tpu.memory_space<vmem>>, vector<1x196x10xf32>
    %101 = vector.shape_cast %100 : vector<1x196x10xf32> to vector<196x10xf32>
    %102 = vector.broadcast %99 : vector<196x1xf32> to vector<196x10xf32>
    %103 = arith.mulf %102, %101 : vector<196x10xf32>
    %104 = arith.addf %98, %103 : vector<196x10xf32>
    %105 = vector.extract_strided_slice %21 {offsets = [0, 14], sizes = [196, 1], strides = [1, 1]} : vector<196x16xf32> to vector<196x1xf32>
    %c14 = arith.constant 14 : index
    %c0_50 = arith.constant 0 : index
    %c0_51 = arith.constant 0 : index
    %106 = vector.load %arg7[%c14, %c0_50, %c0_51] : memref<16x196x10xf32, #tpu.memory_space<vmem>>, vector<1x196x10xf32>
    %107 = vector.shape_cast %106 : vector<1x196x10xf32> to vector<196x10xf32>
    %108 = vector.broadcast %105 : vector<196x1xf32> to vector<196x10xf32>
    %109 = arith.mulf %108, %107 : vector<196x10xf32>
    %110 = arith.addf %104, %109 : vector<196x10xf32>
    %111 = vector.extract_strided_slice %21 {offsets = [0, 15], sizes = [196, 1], strides = [1, 1]} : vector<196x16xf32> to vector<196x1xf32>
    %c15 = arith.constant 15 : index
    %c0_52 = arith.constant 0 : index
    %c0_53 = arith.constant 0 : index
    %112 = vector.load %arg7[%c15, %c0_52, %c0_53] : memref<16x196x10xf32, #tpu.memory_space<vmem>>, vector<1x196x10xf32>
    %113 = vector.shape_cast %112 : vector<1x196x10xf32> to vector<196x10xf32>
    %114 = vector.broadcast %111 : vector<196x1xf32> to vector<196x10xf32>
    %115 = arith.mulf %114, %113 : vector<196x10xf32>
    %116 = arith.addf %110, %115 : vector<196x10xf32>
    %cst_54 = arith.constant dense<0.000000e+00> : vector<10xf32>
    %117 = vector.multi_reduction <add>, %116, %cst_54 [0] : vector<196x10xf32> to vector<10xf32>
    %118 = vector.shape_cast %117 : vector<10xf32> to vector<1x10xf32>
    %119 = arith.addf %118, %2 : vector<1x10xf32>
    %c0_55 = arith.constant 0 : index
    %c0_56 = arith.constant 0 : index
    %120 = vector.load %arg9[%c0_55, %c0_56] : memref<2x10xf32, #tpu.memory_space<vmem>>, vector<1x10xf32>
    tpu.vector_store %arg9[%c0_55, %c0_56], %119 {strides = array<i32>} : memref<2x10xf32, #tpu.memory_space<vmem>>, vector<1x10xf32>,
    %c1_57 = arith.constant 1 : index
    %c0_58 = arith.constant 0 : index
    %c0_59 = arith.constant 0 : index
    %121 = vector.load %arg1[%c1_57, %c0_58, %c0_59] : memref<2x196x27xf32, #tpu.memory_space<vmem>>, vector<1x196x27xf32>
    %122 = vector.shape_cast %121 : vector<1x196x27xf32> to vector<196x27xf32>
    %cst_60 = arith.constant dense<0.000000e+00> : vector<196x16xf32>
    %123 = tpu.matmul %122, %0, %cst_60 {dimension_numbers = #tpu.dot_dimension_numbers<[1], [0], [0], [1], [0, 0, 1, 1], [], []>} : vector<196x27xf32>, vector<27x16xf32>, vector<196x16xf32> -> vector<196x16xf32>
    %c1_61 = arith.constant 1 : index
    %c0_62 = arith.constant 0 : index
    %c0_63 = arith.constant 0 : index
    %124 = vector.load %arg2[%c1_61, %c0_62, %c0_63] : memref<2x196x27xf32, #tpu.memory_space<vmem>>, vector<1x196x27xf32>
    %125 = vector.shape_cast %124 : vector<1x196x27xf32> to vector<196x27xf32>
    %cst_64 = arith.constant dense<0.000000e+00> : vector<196x16xf32>
    %126 = tpu.matmul %125, %0, %cst_64 {dimension_numbers = #tpu.dot_dimension_numbers<[1], [0], [0], [1], [0, 0, 1, 1], [], []>} : vector<196x27xf32>, vector<27x16xf32>, vector<196x16xf32> -> vector<196x16xf32>
    %c1_65 = arith.constant 1 : index
    %c0_66 = arith.constant 0 : index
    %c0_67 = arith.constant 0 : index
    %127 = vector.load %arg3[%c1_65, %c0_66, %c0_67] : memref<2x196x27xf32, #tpu.memory_space<vmem>>, vector<1x196x27xf32>
    %128 = vector.shape_cast %127 : vector<1x196x27xf32> to vector<196x27xf32>
    %cst_68 = arith.constant dense<0.000000e+00> : vector<196x16xf32>
    %129 = tpu.matmul %128, %0, %cst_68 {dimension_numbers = #tpu.dot_dimension_numbers<[1], [0], [0], [1], [0, 0, 1, 1], [], []>} : vector<196x27xf32>, vector<27x16xf32>, vector<196x16xf32> -> vector<196x16xf32>
    %c1_69 = arith.constant 1 : index
    %c0_70 = arith.constant 0 : index
    %c0_71 = arith.constant 0 : index
    %130 = vector.load %arg4[%c1_69, %c0_70, %c0_71] : memref<2x196x27xf32, #tpu.memory_space<vmem>>, vector<1x196x27xf32>
    %131 = vector.shape_cast %130 : vector<1x196x27xf32> to vector<196x27xf32>
    %cst_72 = arith.constant dense<0.000000e+00> : vector<196x16xf32>
    %132 = tpu.matmul %131, %0, %cst_72 {dimension_numbers = #tpu.dot_dimension_numbers<[1], [0], [0], [1], [0, 0, 1, 1], [], []>} : vector<196x27xf32>, vector<27x16xf32>, vector<196x16xf32> -> vector<196x16xf32>
    %133 = arith.maximumf %123, %126 : vector<196x16xf32>
    %134 = arith.maximumf %129, %132 : vector<196x16xf32>
    %135 = arith.maximumf %133, %134 : vector<196x16xf32>
    %136 = vector.broadcast %1 : vector<1x16xf32> to vector<196x16xf32>
    %137 = arith.addf %135, %136 : vector<196x16xf32>
    %cst_73 = arith.constant 0.000000e+00 : f32
    %138 = vector.broadcast %cst_73 : f32 to vector<196x16xf32>
    %139 = arith.maximumf %137, %138 : vector<196x16xf32>
    %140 = vector.extract_strided_slice %139 {offsets = [0, 0], sizes = [196, 1], strides = [1, 1]} : vector<196x16xf32> to vector<196x1xf32>
    %c0_74 = arith.constant 0 : index
    %c0_75 = arith.constant 0 : index
    %c0_76 = arith.constant 0 : index
    %141 = vector.load %arg7[%c0_74, %c0_75, %c0_76] : memref<16x196x10xf32, #tpu.memory_space<vmem>>, vector<1x196x10xf32>
    %142 = vector.shape_cast %141 : vector<1x196x10xf32> to vector<196x10xf32>
    %143 = vector.broadcast %140 : vector<196x1xf32> to vector<196x10xf32>
    %144 = arith.mulf %143, %142 : vector<196x10xf32>
    %145 = vector.extract_strided_slice %139 {offsets = [0, 1], sizes = [196, 1], strides = [1, 1]} : vector<196x16xf32> to vector<196x1xf32>
    %c1_77 = arith.constant 1 : index
    %c0_78 = arith.constant 0 : index
    %c0_79 = arith.constant 0 : index
    %146 = vector.load %arg7[%c1_77, %c0_78, %c0_79] : memref<16x196x10xf32, #tpu.memory_space<vmem>>, vector<1x196x10xf32>
    %147 = vector.shape_cast %146 : vector<1x196x10xf32> to vector<196x10xf32>
    %148 = vector.broadcast %145 : vector<196x1xf32> to vector<196x10xf32>
    %149 = arith.mulf %148, %147 : vector<196x10xf32>
    %150 = arith.addf %144, %149 : vector<196x10xf32>
    %151 = vector.extract_strided_slice %139 {offsets = [0, 2], sizes = [196, 1], strides = [1, 1]} : vector<196x16xf32> to vector<196x1xf32>
    %c2_80 = arith.constant 2 : index
    %c0_81 = arith.constant 0 : index
    %c0_82 = arith.constant 0 : index
    %152 = vector.load %arg7[%c2_80, %c0_81, %c0_82] : memref<16x196x10xf32, #tpu.memory_space<vmem>>, vector<1x196x10xf32>
    %153 = vector.shape_cast %152 : vector<1x196x10xf32> to vector<196x10xf32>
    %154 = vector.broadcast %151 : vector<196x1xf32> to vector<196x10xf32>
    %155 = arith.mulf %154, %153 : vector<196x10xf32>
    %156 = arith.addf %150, %155 : vector<196x10xf32>
    %157 = vector.extract_strided_slice %139 {offsets = [0, 3], sizes = [196, 1], strides = [1, 1]} : vector<196x16xf32> to vector<196x1xf32>
    %c3_83 = arith.constant 3 : index
    %c0_84 = arith.constant 0 : index
    %c0_85 = arith.constant 0 : index
    %158 = vector.load %arg7[%c3_83, %c0_84, %c0_85] : memref<16x196x10xf32, #tpu.memory_space<vmem>>, vector<1x196x10xf32>
    %159 = vector.shape_cast %158 : vector<1x196x10xf32> to vector<196x10xf32>
    %160 = vector.broadcast %157 : vector<196x1xf32> to vector<196x10xf32>
    %161 = arith.mulf %160, %159 : vector<196x10xf32>
    %162 = arith.addf %156, %161 : vector<196x10xf32>
    %163 = vector.extract_strided_slice %139 {offsets = [0, 4], sizes = [196, 1], strides = [1, 1]} : vector<196x16xf32> to vector<196x1xf32>
    %c4_86 = arith.constant 4 : index
    %c0_87 = arith.constant 0 : index
    %c0_88 = arith.constant 0 : index
    %164 = vector.load %arg7[%c4_86, %c0_87, %c0_88] : memref<16x196x10xf32, #tpu.memory_space<vmem>>, vector<1x196x10xf32>
    %165 = vector.shape_cast %164 : vector<1x196x10xf32> to vector<196x10xf32>
    %166 = vector.broadcast %163 : vector<196x1xf32> to vector<196x10xf32>
    %167 = arith.mulf %166, %165 : vector<196x10xf32>
    %168 = arith.addf %162, %167 : vector<196x10xf32>
    %169 = vector.extract_strided_slice %139 {offsets = [0, 5], sizes = [196, 1], strides = [1, 1]} : vector<196x16xf32> to vector<196x1xf32>
    %c5_89 = arith.constant 5 : index
    %c0_90 = arith.constant 0 : index
    %c0_91 = arith.constant 0 : index
    %170 = vector.load %arg7[%c5_89, %c0_90, %c0_91] : memref<16x196x10xf32, #tpu.memory_space<vmem>>, vector<1x196x10xf32>
    %171 = vector.shape_cast %170 : vector<1x196x10xf32> to vector<196x10xf32>
    %172 = vector.broadcast %169 : vector<196x1xf32> to vector<196x10xf32>
    %173 = arith.mulf %172, %171 : vector<196x10xf32>
    %174 = arith.addf %168, %173 : vector<196x10xf32>
    %175 = vector.extract_strided_slice %139 {offsets = [0, 6], sizes = [196, 1], strides = [1, 1]} : vector<196x16xf32> to vector<196x1xf32>
    %c6_92 = arith.constant 6 : index
    %c0_93 = arith.constant 0 : index
    %c0_94 = arith.constant 0 : index
    %176 = vector.load %arg7[%c6_92, %c0_93, %c0_94] : memref<16x196x10xf32, #tpu.memory_space<vmem>>, vector<1x196x10xf32>
    %177 = vector.shape_cast %176 : vector<1x196x10xf32> to vector<196x10xf32>
    %178 = vector.broadcast %175 : vector<196x1xf32> to vector<196x10xf32>
    %179 = arith.mulf %178, %177 : vector<196x10xf32>
    %180 = arith.addf %174, %179 : vector<196x10xf32>
    %181 = vector.extract_strided_slice %139 {offsets = [0, 7], sizes = [196, 1], strides = [1, 1]} : vector<196x16xf32> to vector<196x1xf32>
    %c7_95 = arith.constant 7 : index
    %c0_96 = arith.constant 0 : index
    %c0_97 = arith.constant 0 : index
    %182 = vector.load %arg7[%c7_95, %c0_96, %c0_97] : memref<16x196x10xf32, #tpu.memory_space<vmem>>, vector<1x196x10xf32>
    %183 = vector.shape_cast %182 : vector<1x196x10xf32> to vector<196x10xf32>
    %184 = vector.broadcast %181 : vector<196x1xf32> to vector<196x10xf32>
    %185 = arith.mulf %184, %183 : vector<196x10xf32>
    %186 = arith.addf %180, %185 : vector<196x10xf32>
    %187 = vector.extract_strided_slice %139 {offsets = [0, 8], sizes = [196, 1], strides = [1, 1]} : vector<196x16xf32> to vector<196x1xf32>
    %c8_98 = arith.constant 8 : index
    %c0_99 = arith.constant 0 : index
    %c0_100 = arith.constant 0 : index
    %188 = vector.load %arg7[%c8_98, %c0_99, %c0_100] : memref<16x196x10xf32, #tpu.memory_space<vmem>>, vector<1x196x10xf32>
    %189 = vector.shape_cast %188 : vector<1x196x10xf32> to vector<196x10xf32>
    %190 = vector.broadcast %187 : vector<196x1xf32> to vector<196x10xf32>
    %191 = arith.mulf %190, %189 : vector<196x10xf32>
    %192 = arith.addf %186, %191 : vector<196x10xf32>
    %193 = vector.extract_strided_slice %139 {offsets = [0, 9], sizes = [196, 1], strides = [1, 1]} : vector<196x16xf32> to vector<196x1xf32>
    %c9_101 = arith.constant 9 : index
    %c0_102 = arith.constant 0 : index
    %c0_103 = arith.constant 0 : index
    %194 = vector.load %arg7[%c9_101, %c0_102, %c0_103] : memref<16x196x10xf32, #tpu.memory_space<vmem>>, vector<1x196x10xf32>
    %195 = vector.shape_cast %194 : vector<1x196x10xf32> to vector<196x10xf32>
    %196 = vector.broadcast %193 : vector<196x1xf32> to vector<196x10xf32>
    %197 = arith.mulf %196, %195 : vector<196x10xf32>
    %198 = arith.addf %192, %197 : vector<196x10xf32>
    %199 = vector.extract_strided_slice %139 {offsets = [0, 10], sizes = [196, 1], strides = [1, 1]} : vector<196x16xf32> to vector<196x1xf32>
    %c10_104 = arith.constant 10 : index
    %c0_105 = arith.constant 0 : index
    %c0_106 = arith.constant 0 : index
    %200 = vector.load %arg7[%c10_104, %c0_105, %c0_106] : memref<16x196x10xf32, #tpu.memory_space<vmem>>, vector<1x196x10xf32>
    %201 = vector.shape_cast %200 : vector<1x196x10xf32> to vector<196x10xf32>
    %202 = vector.broadcast %199 : vector<196x1xf32> to vector<196x10xf32>
    %203 = arith.mulf %202, %201 : vector<196x10xf32>
    %204 = arith.addf %198, %203 : vector<196x10xf32>
    %205 = vector.extract_strided_slice %139 {offsets = [0, 11], sizes = [196, 1], strides = [1, 1]} : vector<196x16xf32> to vector<196x1xf32>
    %c11_107 = arith.constant 11 : index
    %c0_108 = arith.constant 0 : index
    %c0_109 = arith.constant 0 : index
    %206 = vector.load %arg7[%c11_107, %c0_108, %c0_109] : memref<16x196x10xf32, #tpu.memory_space<vmem>>, vector<1x196x10xf32>
    %207 = vector.shape_cast %206 : vector<1x196x10xf32> to vector<196x10xf32>
    %208 = vector.broadcast %205 : vector<196x1xf32> to vector<196x10xf32>
    %209 = arith.mulf %208, %207 : vector<196x10xf32>
    %210 = arith.addf %204, %209 : vector<196x10xf32>
    %211 = vector.extract_strided_slice %139 {offsets = [0, 12], sizes = [196, 1], strides = [1, 1]} : vector<196x16xf32> to vector<196x1xf32>
    %c12_110 = arith.constant 12 : index
    %c0_111 = arith.constant 0 : index
    %c0_112 = arith.constant 0 : index
    %212 = vector.load %arg7[%c12_110, %c0_111, %c0_112] : memref<16x196x10xf32, #tpu.memory_space<vmem>>, vector<1x196x10xf32>
    %213 = vector.shape_cast %212 : vector<1x196x10xf32> to vector<196x10xf32>
    %214 = vector.broadcast %211 : vector<196x1xf32> to vector<196x10xf32>
    %215 = arith.mulf %214, %213 : vector<196x10xf32>
    %216 = arith.addf %210, %215 : vector<196x10xf32>
    %217 = vector.extract_strided_slice %139 {offsets = [0, 13], sizes = [196, 1], strides = [1, 1]} : vector<196x16xf32> to vector<196x1xf32>
    %c13_113 = arith.constant 13 : index
    %c0_114 = arith.constant 0 : index
    %c0_115 = arith.constant 0 : index
    %218 = vector.load %arg7[%c13_113, %c0_114, %c0_115] : memref<16x196x10xf32, #tpu.memory_space<vmem>>, vector<1x196x10xf32>
    %219 = vector.shape_cast %218 : vector<1x196x10xf32> to vector<196x10xf32>
    %220 = vector.broadcast %217 : vector<196x1xf32> to vector<196x10xf32>
    %221 = arith.mulf %220, %219 : vector<196x10xf32>
    %222 = arith.addf %216, %221 : vector<196x10xf32>
    %223 = vector.extract_strided_slice %139 {offsets = [0, 14], sizes = [196, 1], strides = [1, 1]} : vector<196x16xf32> to vector<196x1xf32>
    %c14_116 = arith.constant 14 : index
    %c0_117 = arith.constant 0 : index
    %c0_118 = arith.constant 0 : index
    %224 = vector.load %arg7[%c14_116, %c0_117, %c0_118] : memref<16x196x10xf32, #tpu.memory_space<vmem>>, vector<1x196x10xf32>
    %225 = vector.shape_cast %224 : vector<1x196x10xf32> to vector<196x10xf32>
    %226 = vector.broadcast %223 : vector<196x1xf32> to vector<196x10xf32>
    %227 = arith.mulf %226, %225 : vector<196x10xf32>
    %228 = arith.addf %222, %227 : vector<196x10xf32>
    %229 = vector.extract_strided_slice %139 {offsets = [0, 15], sizes = [196, 1], strides = [1, 1]} : vector<196x16xf32> to vector<196x1xf32>
    %c15_119 = arith.constant 15 : index
    %c0_120 = arith.constant 0 : index
    %c0_121 = arith.constant 0 : index
    %230 = vector.load %arg7[%c15_119, %c0_120, %c0_121] : memref<16x196x10xf32, #tpu.memory_space<vmem>>, vector<1x196x10xf32>
    %231 = vector.shape_cast %230 : vector<1x196x10xf32> to vector<196x10xf32>
    %232 = vector.broadcast %229 : vector<196x1xf32> to vector<196x10xf32>
    %233 = arith.mulf %232, %231 : vector<196x10xf32>
    %234 = arith.addf %228, %233 : vector<196x10xf32>
    %cst_122 = arith.constant dense<0.000000e+00> : vector<10xf32>
    %235 = vector.multi_reduction <add>, %234, %cst_122 [0] : vector<196x10xf32> to vector<10xf32>
    %236 = vector.shape_cast %235 : vector<10xf32> to vector<1x10xf32>
    %237 = arith.addf %236, %2 : vector<1x10xf32>
    %c1_123 = arith.constant 1 : index
    %c0_124 = arith.constant 0 : index
    %238 = vector.load %arg9[%c1_123, %c0_124] : memref<2x10xf32, #tpu.memory_space<vmem>>, vector<1x10xf32>
    tpu.vector_store %arg9[%c1_123, %c0_124], %237 {strides = array<i32>} : memref<2x10xf32, #tpu.memory_space<vmem>>, vector<1x10xf32>,
    return
  }
  func.func @transform_0(%arg0: i32) -> (i32, i32, i32) {
    %c0_i32 = arith.constant 0 : i32
    %c0_i32_0 = arith.constant 0 : i32
    %c0_i32_1 = arith.constant 0 : i32
    %c0_i32_2 = arith.constant 0 : i32
    return %c0_i32, %c0_i32_0, %c0_i32_1 : i32, i32, i32
  }
  func.func @transform_1(%arg0: i32) -> (i32, i32, i32) {
    %c0_i32 = arith.constant 0 : i32
    %c0_i32_0 = arith.constant 0 : i32
    %c0_i32_1 = arith.constant 0 : i32
    %c0_i32_2 = arith.constant 0 : i32
    return %c0_i32, %c0_i32_0, %c0_i32_1 : i32, i32, i32
  }
  func.func @transform_2(%arg0: i32) -> (i32, i32, i32) {
    %c0_i32 = arith.constant 0 : i32
    %c0_i32_0 = arith.constant 0 : i32
    %c0_i32_1 = arith.constant 0 : i32
    %c0_i32_2 = arith.constant 0 : i32
    return %c0_i32, %c0_i32_0, %c0_i32_1 : i32, i32, i32
  }
  func.func @transform_3(%arg0: i32) -> (i32, i32, i32) {
    %c0_i32 = arith.constant 0 : i32
    %c0_i32_0 = arith.constant 0 : i32
    %c0_i32_1 = arith.constant 0 : i32
    %c0_i32_2 = arith.constant 0 : i32
    return %c0_i32, %c0_i32_0, %c0_i32_1 : i32, i32, i32
  }
  func.func @transform_4(%arg0: i32) -> (i32, i32) {
    %c0_i32 = arith.constant 0 : i32
    %c0_i32_0 = arith.constant 0 : i32
    %c0_i32_1 = arith.constant 0 : i32
    return %c0_i32, %c0_i32_0 : i32, i32
  }
  func.func @transform_5(%arg0: i32) -> (i32, i32) {
    %c0_i32 = arith.constant 0 : i32
    %c0_i32_0 = arith.constant 0 : i32
    %c0_i32_1 = arith.constant 0 : i32
    return %c0_i32, %c0_i32_0 : i32, i32
  }
  func.func @transform_6(%arg0: i32) -> (i32, i32, i32) {
    %c0_i32 = arith.constant 0 : i32
    %c0_i32_0 = arith.constant 0 : i32
    %c0_i32_1 = arith.constant 0 : i32
    %c0_i32_2 = arith.constant 0 : i32
    return %c0_i32, %c0_i32_0, %c0_i32_1 : i32, i32, i32
  }
  func.func @transform_7(%arg0: i32) -> (i32, i32) {
    %c0_i32 = arith.constant 0 : i32
    %c0_i32_0 = arith.constant 0 : i32
    %c0_i32_1 = arith.constant 0 : i32
    return %c0_i32, %c0_i32_0 : i32, i32
  }
  func.func @transform_8(%arg0: i32) -> (i32, i32) {
    %c0_i32 = arith.constant 0 : i32
    %c0_i32_0 = arith.constant 0 : i32
    %c0_i32_1 = arith.constant 0 : i32
    return %c0_i32, %c0_i32_0 : i32, i32
  }
}

</mosaic_0001>

<llo_original>
// kernel: simple_cnn_forward.1
$region0: #{simple_cnn_forward.1}
  #allocation0 [shape = 'u32[]', space=smem, size = 0x4, offset = 0x4, fixed_abs, tag = 'smem constant byte address 0x4 - core index']
  #allocation1 [shape = 'u32[144,128]{1,0:T(1,128)}', space=vmem, size = 0x12000, scoped, tag = 'internal scratch']
  %s0 = inlined_call_operand.vmem [shape: f32[2,196,27], index: 0, kind: input, shape index: {}]
  %s1 = inlined_call_operand.vmem [shape: f32[2,196,27], index: 1, kind: input, shape index: {}]
  %s2 = inlined_call_operand.vmem [shape: f32[2,196,27], index: 2, kind: input, shape index: {}]
  %s3 = inlined_call_operand.vmem [shape: f32[2,196,27], index: 3, kind: input, shape index: {}]
  %s4 = inlined_call_operand.vmem [shape: f32[27,16], index: 4, kind: input, shape index: {}]
  %s5 = inlined_call_operand.vmem [shape: f32[1,16], index: 5, kind: input, shape index: {}]
  %s6 = inlined_call_operand.vmem [shape: f32[16,196,10], index: 6, kind: input, shape index: {}]
  %s7 = inlined_call_operand.vmem [shape: f32[1,10], index: 7, kind: input, shape index: {}]
  %s8 = inlined_call_operand.hbm [shape: f32[2,10], index: 8, kind: output, shape index: {}]
  %s9 = sld [smem:[#allocation0]]
  $region42: #{simple_cnn_forward.1} parent=0
    _
  %s11 = ssub.s32 1, %s9
  %s12 = scalar_select 0, %s11, %s9
  $region1: #{simple_cnn_forward.1} parent=0
    #allocation2 [shape = 'u8[1024]{0}', space=vmem, size = 0x400, scoped, tag = 'output window, operand 0, single buffered']
    #allocation3 [shape = 's32[1]{0}', space=sflag, size = 0x4, scoped, tag = 'scoped memory for simple_cnn_forward.1']
    %13 = vsyncpa [#allocation3], 0
    // Predicated region
    $region2: #{simple_cnn_forward.1} parent=1 // pred_check
      _
    $region3: #{simple_cnn_forward.1} parent=1 // pred_check_branch
      %15 = sbr.rel (0) target = $region5
    $region4: #{simple_cnn_forward.1} parent=1 // pred_region
      _
    $region5: #{simple_cnn_forward.1} parent=1 // pred_fallthru
      _
    // Predicated region
    $region6: #{simple_cnn_forward.1} parent=1 // pred_check
      _
    $region7: #{simple_cnn_forward.1} parent=1 // pred_check_branch
      %17 = sbr.rel (0) target = $region9
    $region8: #{simple_cnn_forward.1} parent=1 // pred_region
      _
    $region9: #{simple_cnn_forward.1} parent=1 // pred_fallthru
      _
    // Predicated region
    $region10: #{simple_cnn_forward.1} parent=1 // pred_check
      _
    $region11: #{simple_cnn_forward.1} parent=1 // pred_check_branch
      %19 = sbr.rel (0) target = $region13
    $region12: #{simple_cnn_forward.1} parent=1 // pred_region
      _
    $region13: #{simple_cnn_forward.1} parent=1 // pred_fallthru
      _
    // Predicated region
    $region14: #{simple_cnn_forward.1} parent=1 // pred_check
      _
    $region15: #{simple_cnn_forward.1} parent=1 // pred_check_branch
      %21 = sbr.rel (0) target = $region17
    $region16: #{simple_cnn_forward.1} parent=1 // pred_region
      _
    $region17: #{simple_cnn_forward.1} parent=1 // pred_fallthru
      _
    // Predicated region
    $region18: #{simple_cnn_forward.1} parent=1 // pred_check
      _
    $region19: #{simple_cnn_forward.1} parent=1 // pred_check_branch
      %23 = sbr.rel (0) target = $region21
    $region20: #{simple_cnn_forward.1} parent=1 // pred_region
      _
    $region21: #{simple_cnn_forward.1} parent=1 // pred_fallthru
      _
    // Predicated region
    $region22: #{simple_cnn_forward.1} parent=1 // pred_check
      _
    $region23: #{simple_cnn_forward.1} parent=1 // pred_check_branch
      %25 = sbr.rel (0) target = $region25
    $region24: #{simple_cnn_forward.1} parent=1 // pred_region
      _
    $region25: #{simple_cnn_forward.1} parent=1 // pred_fallthru
      _
    // Predicated region
    $region26: #{simple_cnn_forward.1} parent=1 // pred_check
      _
    $region27: #{simple_cnn_forward.1} parent=1 // pred_check_branch
      %27 = sbr.rel (0) target = $region29
    $region28: #{simple_cnn_forward.1} parent=1 // pred_region
      _
    $region29: #{simple_cnn_forward.1} parent=1 // pred_fallthru
      _
    // Predicated region
    $region30: #{simple_cnn_forward.1} parent=1 // pred_check
      _
    $region31: #{simple_cnn_forward.1} parent=1 // pred_check_branch
      %29 = sbr.rel (0) target = $region33
    $region32: #{simple_cnn_forward.1} parent=1 // pred_region
      _
    $region33: #{simple_cnn_forward.1} parent=1 // pred_fallthru
      _
    %v30 = vld [vmem:[%s4] sm:$0xff]
    %v31 = vld [vmem:[%s4 + $0x8] sm:$0xff]
    %v32 = vld [vmem:[%s4 + $0x10] sm:$0xff]
    %v33 = vld [vmem:[%s4 + $0x18] sm:$0x7]
    %v34 = vld [vmem:[%s5] sm:$0x1]
    %v35 = vld [vmem:[%s7] sm:$0x1]
    %v36 = vld [vmem:[%s0] sm:$0xff]
    %v37 = vld [vmem:[%s0 + $0x8] sm:$0xff]
    %v38 = vld [vmem:[%s0 + $0x10] sm:$0xff]
    %v39 = vld [vmem:[%s0 + $0x18] sm:$0xff]
    %v40 = vld [vmem:[%s0 + $0x20] sm:$0xff]
    %v41 = vld [vmem:[%s0 + $0x28] sm:$0xff]
    %v42 = vld [vmem:[%s0 + $0x30] sm:$0xff]
    %v43 = vld [vmem:[%s0 + $0x38] sm:$0xff]
    %v44 = vld [vmem:[%s0 + $0x40] sm:$0xff]
    %v45 = vld [vmem:[%s0 + $0x48] sm:$0xff]
    %v46 = vld [vmem:[%s0 + $0x50] sm:$0xff]
    %v47 = vld [vmem:[%s0 + $0x58] sm:$0xff]
    %v48 = vld [vmem:[%s0 + $0x60] sm:$0xff]
    %v49 = vld [vmem:[%s0 + $0x68] sm:$0xff]
    %v50 = vld [vmem:[%s0 + $0x70] sm:$0xff]
    %v51 = vld [vmem:[%s0 + $0x78] sm:$0xff]
    %v52 = vld [vmem:[%s0 + $0x80] sm:$0xff]
    %v53 = vld [vmem:[%s0 + $0x88] sm:$0xff]
    %v54 = vld [vmem:[%s0 + $0x90] sm:$0xff]
    %v55 = vld [vmem:[%s0 + $0x98] sm:$0xff]
    %v56 = vld [vmem:[%s0 + $0xa0] sm:$0xff]
    %v57 = vld [vmem:[%s0 + $0xa8] sm:$0xff]
    %v58 = vld [vmem:[%s0 + $0xb0] sm:$0xff]
    %v59 = vld [vmem:[%s0 + $0xb8] sm:$0xff]
    %v60 = vld [vmem:[%s0 + $0xc0] sm:$0xf]
    %vm61 = vcmask 220160
    %v63 = vsel %vm61, %v36, 0
    %v66 = vsel %vm61, %v37, 0
    %v69 = vsel %vm61, %v38, 0
    %v72 = vsel %vm61, %v39, 0
    %v75 = vsel %vm61, %v40, 0
    %v78 = vsel %vm61, %v41, 0
    %v81 = vsel %vm61, %v42, 0
    %v84 = vsel %vm61, %v43, 0
    %v87 = vsel %vm61, %v44, 0
    %v90 = vsel %vm61, %v45, 0
    %v93 = vsel %vm61, %v46, 0
    %v96 = vsel %vm61, %v47, 0
    %v99 = vsel %vm61, %v48, 0
    %v102 = vsel %vm61, %v49, 0
    %v105 = vsel %vm61, %v50, 0
    %v108 = vsel %vm61, %v51, 0
    %v111 = vsel %vm61, %v52, 0
    %v114 = vsel %vm61, %v53, 0
    %v117 = vsel %vm61, %v54, 0
    %v120 = vsel %vm61, %v55, 0
    %v123 = vsel %vm61, %v56, 0
    %v126 = vsel %vm61, %v57, 0
    %v129 = vsel %vm61, %v58, 0
    %v132 = vsel %vm61, %v59, 0
    %v135 = vsel %vm61, %v60, 0
    %vm137 = vcmask 1042432
    %v139 = vsel %vm137, %v33, 0
    %141 = vmatprep.subr.mxu0 0.0
    %142 = vmatpush1.msra.mxu0 %v30
    %143 = vmatprep.subr.mxu0 0.0
    %144 = vmatpush1.msra.mxu0 %v31
    %145 = vmatprep.subr.mxu0 0.0
    %146 = vmatpush1.msra.mxu0 %v32
    %147 = vmatprep.subr.mxu0 0.0
    %148 = vmatpush1.msra.mxu0 %v139
    %149 = vmatprep.subr.mxu0 0.0
    %150 = vmatpush1.msra.mxu0 0.0
    %151 = vmatprep.subr.mxu0 0.0
    %152 = vmatpush1.msra.mxu0 0.0
    %153 = vmatprep.subr.mxu0 0.0
    %154 = vmatpush1.msra.mxu0 0.0
    %155 = vmatprep.subr.mxu0 0.0
    %156 = vmatpush1.msra.mxu0 0.0
    %157 = vmatprep.subr.mxu0 0.0
    %158 = vmatpush1.msra.mxu0 0.0
    %159 = vmatprep.subr.mxu0 0.0
    %160 = vmatpush1.msra.mxu0 0.0
    %161 = vmatprep.subr.mxu0 0.0
    %162 = vmatpush1.msra.mxu0 0.0
    %163 = vmatprep.subr.mxu0 0.0
    %164 = vmatpush1.msra.mxu0 0.0
    %165 = vmatprep.subr.mxu0 0.0
    %166 = vmatpush1.msra.mxu0 0.0
    %167 = vmatprep.subr.mxu0 0.0
    %168 = vmatpush1.msra.mxu0 0.0
    %169 = vmatprep.subr.mxu0 0.0
    %170 = vmatpush1.msra.mxu0 0.0
    %171 = vmatprep.subr.mxu0 0.0
    %172 = vmatpush1.msra.mxu0 0.0
    %173 = vmatprep.subr.mxu0 0.0
    %174 = vmatpush1.msra.mxu0 0.0
    %175 = vmatprep.subr.mxu0 0.0
    %176 = vmatpush1.msra.mxu0 0.0
    %177 = vmatprep.subr.mxu0 0.0
    %178 = vmatpush1.msra.mxu0 0.0
    %179 = vmatprep.subr.mxu0 0.0
    %180 = vmatpush1.msra.mxu0 0.0
    %181 = vmatprep.subr.mxu0 0.0
    %182 = vmatpush1.msra.mxu0 0.0
    %183 = vmatprep.subr.mxu0 0.0
    %184 = vmatpush1.msra.mxu0 0.0
    %185 = vmatprep.subr.mxu0 0.0
    %186 = vmatpush1.msra.mxu0 0.0
    %187 = vmatprep.subr.mxu0 0.0
    %188 = vmatpush1.msra.mxu0 0.0
    %189 = vmatprep.subr.mxu0 0.0
    %190 = vmatpush1.msra.mxu0 0.0
    %191 = vmatprep.subr.mxu0 0.0
    %192 = vmatpush1.msra.mxu0 0.0
    %193 = vmatprep.subr.mxu0 0.0
    %194 = vmatpush1.msra.mxu0 0.0
    %195 = vmatprep.subr.mxu0 0.0
    %196 = vmatpush1.msra.mxu0 0.0
    %197 = vmatprep.subr.mxu0 0.0
    %198 = vmatpush1.msra.mxu0 0.0
    %199 = vmatprep.subr.mxu0 0.0
    %200 = vmatpush1.msra.mxu0 0.0
    %201 = vmatprep.subr.mxu0 0.0
    %202 = vmatpush1.msra.mxu0 0.0
    %203 = vmatprep.subr.mxu0 0.0
    %204 = vmatpush1.msra.mxu0 0.0
    %205 = vmatprep.mubr.f32.mxu0 0.0
    %206 = vmatmul.mubr.f32.gmra.mrb[0].mxu0 %v63
    %v207 = vpop.f32.mrb[0].mxu0
    %v208 = vadd.f32 0.0, %v207
    %v209 = vpop.f32.mrb[0].mxu0
    %210 = vmatprep.mubr.f32.mxu0 0.0
    %211 = vmatmul.mubr.f32.gmra.mrb[0].mxu0 %v66
    %v212 = vpop.f32.mrb[0].mxu0
    %v213 = vadd.f32 0.0, %v212
    %v214 = vpop.f32.mrb[0].mxu0
    %215 = vmatprep.mubr.f32.mxu0 0.0
    %216 = vmatmul.mubr.f32.gmra.mrb[0].mxu0 %v69
    %v217 = vpop.f32.mrb[0].mxu0
    %v218 = vadd.f32 0.0, %v217
    %v219 = vpop.f32.mrb[0].mxu0
    %220 = vmatprep.mubr.f32.mxu0 0.0
    %221 = vmatmul.mubr.f32.gmra.mrb[0].mxu0 %v72
    %v222 = vpop.f32.mrb[0].mxu0
    %v223 = vadd.f32 0.0, %v222
    %v224 = vpop.f32.mrb[0].mxu0
    %225 = vmatprep.mubr.f32.mxu0 0.0
    %226 = vmatmul.mubr.f32.gmra.mrb[0].mxu0 %v75
    %v227 = vpop.f32.mrb[0].mxu0
    %v228 = vadd.f32 0.0, %v227
    %v229 = vpop.f32.mrb[0].mxu0
    %230 = vmatprep.mubr.f32.mxu0 0.0
    %231 = vmatmul.mubr.f32.gmra.mrb[0].mxu0 %v78
    %v232 = vpop.f32.mrb[0].mxu0
    %v233 = vadd.f32 0.0, %v232
    %v234 = vpop.f32.mrb[0].mxu0
    %235 = vmatprep.mubr.f32.mxu0 0.0
    %236 = vmatmul.mubr.f32.gmra.mrb[0].mxu0 %v81
    %v237 = vpop.f32.mrb[0].mxu0
    %v238 = vadd.f32 0.0, %v237
    %v239 = vpop.f32.mrb[0].mxu0
    %240 = vmatprep.mubr.f32.mxu0 0.0
    %241 = vmatmul.mubr.f32.gmra.mrb[0].mxu0 %v84
    %v242 = vpop.f32.mrb[0].mxu0
    %v243 = vadd.f32 0.0, %v242
    %v244 = vpop.f32.mrb[0].mxu0
    %245 = vmatprep.mubr.f32.mxu0 0.0
    %246 = vmatmul.mubr.f32.gmra.mrb[0].mxu0 %v87
    %v247 = vpop.f32.mrb[0].mxu0
    %v248 = vadd.f32 0.0, %v247
    %v249 = vpop.f32.mrb[0].mxu0
    %250 = vmatprep.mubr.f32.mxu0 0.0
    %251 = vmatmul.mubr.f32.gmra.mrb[0].mxu0 %v90
    %v252 = vpop.f32.mrb[0].mxu0
    %v253 = vadd.f32 0.0, %v252
    %v254 = vpop.f32.mrb[0].mxu0
    %255 = vmatprep.mubr.f32.mxu0 0.0
    %256 = vmatmul.mubr.f32.gmra.mrb[0].mxu0 %v93
    %v257 = vpop.f32.mrb[0].mxu0
    %v258 = vadd.f32 0.0, %v257
    %v259 = vpop.f32.mrb[0].mxu0
    %260 = vmatprep.mubr.f32.mxu0 0.0
    %261 = vmatmul.mubr.f32.gmra.mrb[0].mxu0 %v96
    %v262 = vpop.f32.mrb[0].mxu0
    %v263 = vadd.f32 0.0, %v262
    %v264 = vpop.f32.mrb[0].mxu0
    %265 = vmatprep.mubr.f32.mxu0 0.0
    %266 = vmatmul.mubr.f32.gmra.mrb[0].mxu0 %v99
    %v267 = vpop.f32.mrb[0].mxu0
    %v268 = vadd.f32 0.0, %v267
    %v269 = vpop.f32.mrb[0].mxu0
    %270 = vmatprep.mubr.f32.mxu0 0.0
    %271 = vmatmul.mubr.f32.gmra.mrb[0].mxu0 %v102
    %v272 = vpop.f32.mrb[0].mxu0
    %v273 = vadd.f32 0.0, %v272
    %v274 = vpop.f32.mrb[0].mxu0
    %275 = vmatprep.mubr.f32.mxu0 0.0
    %276 = vmatmul.mubr.f32.gmra.mrb[0].mxu0 %v105
    %v277 = vpop.f32.mrb[0].mxu0
    %v278 = vadd.f32 0.0, %v277
    %v279 = vpop.f32.mrb[0].mxu0
    %280 = vmatprep.mubr.f32.mxu0 0.0
    %281 = vmatmul.mubr.f32.gmra.mrb[0].mxu0 %v108
    %v282 = vpop.f32.mrb[0].mxu0
    %v283 = vadd.f32 0.0, %v282
    %v284 = vpop.f32.mrb[0].mxu0
    %285 = vmatprep.mubr.f32.mxu0 0.0
    %286 = vmatmul.mubr.f32.gmra.mrb[0].mxu0 %v111
    %v287 = vpop.f32.mrb[0].mxu0
    %v288 = vadd.f32 0.0, %v287
    %v289 = vpop.f32.mrb[0].mxu0
    %290 = vmatprep.mubr.f32.mxu0 0.0
    %291 = vmatmul.mubr.f32.gmra.mrb[0].mxu0 %v114
    %v292 = vpop.f32.mrb[0].mxu0
    %v293 = vadd.f32 0.0, %v292
    %v294 = vpop.f32.mrb[0].mxu0
    %295 = vmatprep.mubr.f32.mxu0 0.0
    %296 = vmatmul.mubr.f32.gmra.mrb[0].mxu0 %v117
    %v297 = vpop.f32.mrb[0].mxu0
    %v298 = vadd.f32 0.0, %v297
    %v299 = vpop.f32.mrb[0].mxu0
    %300 = vmatprep.mubr.f32.mxu0 0.0
    %301 = vmatmul.mubr.f32.gmra.mrb[0].mxu0 %v120
    %v302 = vpop.f32.mrb[0].mxu0
    %v303 = vadd.f32 0.0, %v302
    %v304 = vpop.f32.mrb[0].mxu0
    %305 = vmatprep.mubr.f32.mxu0 0.0
    %306 = vmatmul.mubr.f32.gmra.mrb[0].mxu0 %v123
    %v307 = vpop.f32.mrb[0].mxu0
    %v308 = vadd.f32 0.0, %v307
    %v309 = vpop.f32.mrb[0].mxu0
    %310 = vmatprep.mubr.f32.mxu0 0.0
    %311 = vmatmul.mubr.f32.gmra.mrb[0].mxu0 %v126
    %v312 = vpop.f32.mrb[0].mxu0
    %v313 = vadd.f32 0.0, %v312
    %v314 = vpop.f32.mrb[0].mxu0
    %315 = vmatprep.mubr.f32.mxu0 0.0
    %316 = vmatmul.mubr.f32.gmra.mrb[0].mxu0 %v129
    %v317 = vpop.f32.mrb[0].mxu0
    %v318 = vadd.f32 0.0, %v317
    %v319 = vpop.f32.mrb[0].mxu0
    %320 = vmatprep.mubr.f32.mxu0 0.0
    %321 = vmatmul.mubr.f32.gmra.mrb[0].mxu0 %v132
    %v322 = vpop.f32.mrb[0].mxu0
    %v323 = vadd.f32 0.0, %v322
    %v324 = vpop.f32.mrb[0].mxu0
    %325 = vmatprep.mubr.f32.mxu0 0.0
    %326 = vmatmul.mubr.f32.gmra.mrb[0].mxu0 %v135
    %v327 = vpop.f32.mrb[0].mxu0
    %v328 = vadd.f32 0.0, %v327
    %v329 = vpop.f32.mrb[0].mxu0
    %330 = vdwg.mxu0
    %v331 = vld [vmem:[%s1] sm:$0xff]
    %v332 = vld [vmem:[%s1 + $0x8] sm:$0xff]
    %v333 = vld [vmem:[%s1 + $0x10] sm:$0xff]
    %v334 = vld [vmem:[%s1 + $0x18] sm:$0xff]
    %v335 = vld [vmem:[%s1 + $0x20] sm:$0xff]
    %v336 = vld [vmem:[%s1 + $0x28] sm:$0xff]
    %v337 = vld [vmem:[%s1 + $0x30] sm:$0xff]
    %v338 = vld [vmem:[%s1 + $0x38] sm:$0xff]
    %v339 = vld [vmem:[%s1 + $0x40] sm:$0xff]
    %v340 = vld [vmem:[%s1 + $0x48] sm:$0xff]
    %v341 = vld [vmem:[%s1 + $0x50] sm:$0xff]
    %v342 = vld [vmem:[%s1 + $0x58] sm:$0xff]
    %v343 = vld [vmem:[%s1 + $0x60] sm:$0xff]
    %v344 = vld [vmem:[%s1 + $0x68] sm:$0xff]
    %v345 = vld [vmem:[%s1 + $0x70] sm:$0xff]
    %v346 = vld [vmem:[%s1 + $0x78] sm:$0xff]
    %v347 = vld [vmem:[%s1 + $0x80] sm:$0xff]
    %v348 = vld [vmem:[%s1 + $0x88] sm:$0xff]
    %v349 = vld [vmem:[%s1 + $0x90] sm:$0xff]
    %v350 = vld [vmem:[%s1 + $0x98] sm:$0xff]
    %v351 = vld [vmem:[%s1 + $0xa0] sm:$0xff]
    %v352 = vld [vmem:[%s1 + $0xa8] sm:$0xff]
    %v353 = vld [vmem:[%s1 + $0xb0] sm:$0xff]
    %v354 = vld [vmem:[%s1 + $0xb8] sm:$0xff]
    %v355 = vld [vmem:[%s1 + $0xc0] sm:$0xf]
    %v357 = vsel %vm61, %v331, 0
    %v360 = vsel %vm61, %v332, 0
    %v363 = vsel %vm61, %v333, 0
    %v366 = vsel %vm61, %v334, 0
    %v369 = vsel %vm61, %v335, 0
    %v372 = vsel %vm61, %v336, 0
    %v375 = vsel %vm61, %v337, 0
    %v378 = vsel %vm61, %v338, 0
    %v381 = vsel %vm61, %v339, 0
    %v384 = vsel %vm61, %v340, 0
    %v387 = vsel %vm61, %v341, 0
    %v390 = vsel %vm61, %v342, 0
    %v393 = vsel %vm61, %v343, 0
    %v396 = vsel %vm61, %v344, 0
    %v399 = vsel %vm61, %v345, 0
    %v402 = vsel %vm61, %v346, 0
    %v405 = vsel %vm61, %v347, 0
    %v408 = vsel %vm61, %v348, 0
    %v411 = vsel %vm61, %v349, 0
    %v414 = vsel %vm61, %v350, 0
    %v417 = vsel %vm61, %v351, 0
    %v420 = vsel %vm61, %v352, 0
    %v423 = vsel %vm61, %v353, 0
    %v426 = vsel %vm61, %v354, 0
    %v429 = vsel %vm61, %v355, 0
    %431 = vmatprep.subr.mxu0 0.0
    %432 = vmatpush1.msra.mxu0 %v30
    %433 = vmatprep.subr.mxu0 0.0
    %434 = vmatpush1.msra.mxu0 %v31
    %435 = vmatprep.subr.mxu0 0.0
    %436 = vmatpush1.msra.mxu0 %v32
    %437 = vmatprep.subr.mxu0 0.0
    %438 = vmatpush1.msra.mxu0 %v139
    %439 = vmatprep.subr.mxu0 0.0
    %440 = vmatpush1.msra.mxu0 0.0
    %441 = vmatprep.subr.mxu0 0.0
    %442 = vmatpush1.msra.mxu0 0.0
    %443 = vmatprep.subr.mxu0 0.0
    %444 = vmatpush1.msra.mxu0 0.0
    %445 = vmatprep.subr.mxu0 0.0
    %446 = vmatpush1.msra.mxu0 0.0
    %447 = vmatprep.subr.mxu0 0.0
    %448 = vmatpush1.msra.mxu0 0.0
    %449 = vmatprep.subr.mxu0 0.0
    %450 = vmatpush1.msra.mxu0 0.0
    %451 = vmatprep.subr.mxu0 0.0
    %452 = vmatpush1.msra.mxu0 0.0
    %453 = vmatprep.subr.mxu0 0.0
    %454 = vmatpush1.msra.mxu0 0.0
    %455 = vmatprep.subr.mxu0 0.0
    %456 = vmatpush1.msra.mxu0 0.0
    %457 = vmatprep.subr.mxu0 0.0
    %458 = vmatpush1.msra.mxu0 0.0
    %459 = vmatprep.subr.mxu0 0.0
    %460 = vmatpush1.msra.mxu0 0.0
    %461 = vmatprep.subr.mxu0 0.0
    %462 = vmatpush1.msra.mxu0 0.0
    %463 = vmatprep.subr.mxu0 0.0
    %464 = vmatpush1.msra.mxu0 0.0
    %465 = vmatprep.subr.mxu0 0.0
    %466 = vmatpush1.msra.mxu0 0.0
    %467 = vmatprep.subr.mxu0 0.0
    %468 = vmatpush1.msra.mxu0 0.0
    %469 = vmatprep.subr.mxu0 0.0
    %470 = vmatpush1.msra.mxu0 0.0
    %471 = vmatprep.subr.mxu0 0.0
    %472 = vmatpush1.msra.mxu0 0.0
    %473 = vmatprep.subr.mxu0 0.0
    %474 = vmatpush1.msra.mxu0 0.0
    %475 = vmatprep.subr.mxu0 0.0
    %476 = vmatpush1.msra.mxu0 0.0
    %477 = vmatprep.subr.mxu0 0.0
    %478 = vmatpush1.msra.mxu0 0.0
    %479 = vmatprep.subr.mxu0 0.0
    %480 = vmatpush1.msra.mxu0 0.0
    %481 = vmatprep.subr.mxu0 0.0
    %482 = vmatpush1.msra.mxu0 0.0
    %483 = vmatprep.subr.mxu0 0.0
    %484 = vmatpush1.msra.mxu0 0.0
    %485 = vmatprep.subr.mxu0 0.0
    %486 = vmatpush1.msra.mxu0 0.0
    %487 = vmatprep.subr.mxu0 0.0
    %488 = vmatpush1.msra.mxu0 0.0
    %489 = vmatprep.subr.mxu0 0.0
    %490 = vmatpush1.msra.mxu0 0.0
    %491 = vmatprep.subr.mxu0 0.0
    %492 = vmatpush1.msra.mxu0 0.0
    %493 = vmatprep.subr.mxu0 0.0
    %494 = vmatpush1.msra.mxu0 0.0
    %495 = vmatprep.mubr.f32.mxu0 0.0
    %496 = vmatmul.mubr.f32.gmra.mrb[0].mxu0 %v357
    %v497 = vpop.f32.mrb[0].mxu0
    %v498 = vadd.f32 0.0, %v497
    %v499 = vpop.f32.mrb[0].mxu0
    %500 = vmatprep.mubr.f32.mxu0 0.0
    %501 = vmatmul.mubr.f32.gmra.mrb[0].mxu0 %v360
    %v502 = vpop.f32.mrb[0].mxu0
    %v503 = vadd.f32 0.0, %v502
    %v504 = vpop.f32.mrb[0].mxu0
    %505 = vmatprep.mubr.f32.mxu0 0.0
    %506 = vmatmul.mubr.f32.gmra.mrb[0].mxu0 %v363
    %v507 = vpop.f32.mrb[0].mxu0
    %v508 = vadd.f32 0.0, %v507
    %v509 = vpop.f32.mrb[0].mxu0
    %510 = vmatprep.mubr.f32.mxu0 0.0
    %511 = vmatmul.mubr.f32.gmra.mrb[0].mxu0 %v366
    %v512 = vpop.f32.mrb[0].mxu0
    %v513 = vadd.f32 0.0, %v512
    %v514 = vpop.f32.mrb[0].mxu0
    %515 = vmatprep.mubr.f32.mxu0 0.0
    %516 = vmatmul.mubr.f32.gmra.mrb[0].mxu0 %v369
    %v517 = vpop.f32.mrb[0].mxu0
    %v518 = vadd.f32 0.0, %v517
    %v519 = vpop.f32.mrb[0].mxu0
    %520 = vmatprep.mubr.f32.mxu0 0.0
    %521 = vmatmul.mubr.f32.gmra.mrb[0].mxu0 %v372
    %v522 = vpop.f32.mrb[0].mxu0
    %v523 = vadd.f32 0.0, %v522
    %v524 = vpop.f32.mrb[0].mxu0
    %525 = vmatprep.mubr.f32.mxu0 0.0
    %526 = vmatmul.mubr.f32.gmra.mrb[0].mxu0 %v375
    %v527 = vpop.f32.mrb[0].mxu0
    %v528 = vadd.f32 0.0, %v527
    %v529 = vpop.f32.mrb[0].mxu0
    %530 = vmatprep.mubr.f32.mxu0 0.0
    %531 = vmatmul.mubr.f32.gmra.mrb[0].mxu0 %v378
    %v532 = vpop.f32.mrb[0].mxu0
    %v533 = vadd.f32 0.0, %v532
    %v534 = vpop.f32.mrb[0].mxu0
    %535 = vmatprep.mubr.f32.mxu0 0.0
    %536 = vmatmul.mubr.f32.gmra.mrb[0].mxu0 %v381
    %v537 = vpop.f32.mrb[0].mxu0
    %v538 = vadd.f32 0.0, %v537
    %v539 = vpop.f32.mrb[0].mxu0
    %540 = vmatprep.mubr.f32.mxu0 0.0
    %541 = vmatmul.mubr.f32.gmra.mrb[0].mxu0 %v384
    %v542 = vpop.f32.mrb[0].mxu0
    %v543 = vadd.f32 0.0, %v542
    %v544 = vpop.f32.mrb[0].mxu0
    %545 = vmatprep.mubr.f32.mxu0 0.0
    %546 = vmatmul.mubr.f32.gmra.mrb[0].mxu0 %v387
    %v547 = vpop.f32.mrb[0].mxu0
    %v548 = vadd.f32 0.0, %v547
    %v549 = vpop.f32.mrb[0].mxu0
    %550 = vmatprep.mubr.f32.mxu0 0.0
    %551 = vmatmul.mubr.f32.gmra.mrb[0].mxu0 %v390
    %v552 = vpop.f32.mrb[0].mxu0
    %v553 = vadd.f32 0.0, %v552
    %v554 = vpop.f32.mrb[0].mxu0
    %555 = vmatprep.mubr.f32.mxu0 0.0
    %556 = vmatmul.mubr.f32.gmra.mrb[0].mxu0 %v393
    %v557 = vpop.f32.mrb[0].mxu0
    %v558 = vadd.f32 0.0, %v557
    %v559 = vpop.f32.mrb[0].mxu0
    %560 = vmatprep.mubr.f32.mxu0 0.0
    %561 = vmatmul.mubr.f32.gmra.mrb[0].mxu0 %v396
    %v562 = vpop.f32.mrb[0].mxu0
    %v563 = vadd.f32 0.0, %v562
    %v564 = vpop.f32.mrb[0].mxu0
    %565 = vmatprep.mubr.f32.mxu0 0.0
    %566 = vmatmul.mubr.f32.gmra.mrb[0].mxu0 %v399
    %v567 = vpop.f32.mrb[0].mxu0
    %v568 = vadd.f32 0.0, %v567
    %v569 = vpop.f32.mrb[0].mxu0
    %570 = vmatprep.mubr.f32.mxu0 0.0
    %571 = vmatmul.mubr.f32.gmra.mrb[0].mxu0 %v402
    %v572 = vpop.f32.mrb[0].mxu0
    %v573 = vadd.f32 0.0, %v572
    %v574 = vpop.f32.mrb[0].mxu0
    %575 = vmatprep.mubr.f32.mxu0 0.0
    %576 = vmatmul.mubr.f32.gmra.mrb[0].mxu0 %v405
    %v577 = vpop.f32.mrb[0].mxu0
    %v578 = vadd.f32 0.0, %v577
    %v579 = vpop.f32.mrb[0].mxu0
    %580 = vmatprep.mubr.f32.mxu0 0.0
    %581 = vmatmul.mubr.f32.gmra.mrb[0].mxu0 %v408
    %v582 = vpop.f32.mrb[0].mxu0
    %v583 = vadd.f32 0.0, %v582
    %v584 = vpop.f32.mrb[0].mxu0
    %585 = vmatprep.mubr.f32.mxu0 0.0
    %586 = vmatmul.mubr.f32.gmra.mrb[0].mxu0 %v411
    %v587 = vpop.f32.mrb[0].mxu0
    %v588 = vadd.f32 0.0, %v587
    %v589 = vpop.f32.mrb[0].mxu0
    %590 = vmatprep.mubr.f32.mxu0 0.0
    %591 = vmatmul.mubr.f32.gmra.mrb[0].mxu0 %v414
    %v592 = vpop.f32.mrb[0].mxu0
    %v593 = vadd.f32 0.0, %v592
    %v594 = vpop.f32.mrb[0].mxu0
    %595 = vmatprep.mubr.f32.mxu0 0.0
    %596 = vmatmul.mubr.f32.gmra.mrb[0].mxu0 %v417
    %v597 = vpop.f32.mrb[0].mxu0
    %v598 = vadd.f32 0.0, %v597
    %v599 = vpop.f32.mrb[0].mxu0
    %600 = vmatprep.mubr.f32.mxu0 0.0
    %601 = vmatmul.mubr.f32.gmra.mrb[0].mxu0 %v420
    %v602 = vpop.f32.mrb[0].mxu0
    %v603 = vadd.f32 0.0, %v602
    %v604 = vpop.f32.mrb[0].mxu0
    %605 = vmatprep.mubr.f32.mxu0 0.0
    %606 = vmatmul.mubr.f32.gmra.mrb[0].mxu0 %v423
    %v607 = vpop.f32.mrb[0].mxu0
    %v608 = vadd.f32 0.0, %v607
    %v609 = vpop.f32.mrb[0].mxu0
    %610 = vmatprep.mubr.f32.mxu0 0.0
    %611 = vmatmul.mubr.f32.gmra.mrb[0].mxu0 %v426
    %v612 = vpop.f32.mrb[0].mxu0
    %v613 = vadd.f32 0.0, %v612
    %v614 = vpop.f32.mrb[0].mxu0
    %615 = vmatprep.mubr.f32.mxu0 0.0
    %616 = vmatmul.mubr.f32.gmra.mrb[0].mxu0 %v429
    %v617 = vpop.f32.mrb[0].mxu0
    %v618 = vadd.f32 0.0, %v617
    %v619 = vpop.f32.mrb[0].mxu0
    %620 = vdwg.mxu0
    %v621 = vld [vmem:[%s2] sm:$0xff]
    %v622 = vld [vmem:[%s2 + $0x8] sm:$0xff]
    %v623 = vld [vmem:[%s2 + $0x10] sm:$0xff]
    %v624 = vld [vmem:[%s2 + $0x18] sm:$0xff]
    %v625 = vld [vmem:[%s2 + $0x20] sm:$0xff]
    %v626 = vld [vmem:[%s2 + $0x28] sm:$0xff]
    %v627 = vld [vmem:[%s2 + $0x30] sm:$0xff]
    %v628 = vld [vmem:[%s2 + $0x38] sm:$0xff]
    %v629 = vld [vmem:[%s2 + $0x40] sm:$0xff]
    %v630 = vld [vmem:[%s2 + $0x48] sm:$0xff]
    %v631 = vld [vmem:[%s2 + $0x50] sm:$0xff]
    %v632 = vld [vmem:[%s2 + $0x58] sm:$0xff]
    %v633 = vld [vmem:[%s2 + $0x60] sm:$0xff]
    %v634 = vld [vmem:[%s2 + $0x68] sm:$0xff]
    %v635 = vld [vmem:[%s2 + $0x70] sm:$0xff]
    %v636 = vld [vmem:[%s2 + $0x78] sm:$0xff]
    %v637 = vld [vmem:[%s2 + $0x80] sm:$0xff]
    %v638 = vld [vmem:[%s2 + $0x88] sm:$0xff]
    %v639 = vld [vmem:[%s2 + $0x90] sm:$0xff]
    %v640 = vld [vmem:[%s2 + $0x98] sm:$0xff]
    %v641 = vld [vmem:[%s2 + $0xa0] sm:$0xff]
    %v642 = vld [vmem:[%s2 + $0xa8] sm:$0xff]
    %v643 = vld [vmem:[%s2 + $0xb0] sm:$0xff]
    %v644 = vld [vmem:[%s2 + $0xb8] sm:$0xff]
    %v645 = vld [vmem:[%s2 + $0xc0] sm:$0xf]
    %v647 = vsel %vm61, %v621, 0
    %v650 = vsel %vm61, %v622, 0
    %v653 = vsel %vm61, %v623, 0
    %v656 = vsel %vm61, %v624, 0
    %v659 = vsel %vm61, %v625, 0
    %v662 = vsel %vm61, %v626, 0
    %v665 = vsel %vm61, %v627, 0
    %v668 = vsel %vm61, %v628, 0
    %v671 = vsel %vm61, %v629, 0
    %v674 = vsel %vm61, %v630, 0
    %v677 = vsel %vm61, %v631, 0
    %v680 = vsel %vm61, %v632, 0
    %v683 = vsel %vm61, %v633, 0
    %v686 = vsel %vm61, %v634, 0
    %v689 = vsel %vm61, %v635, 0
    %v692 = vsel %vm61, %v636, 0
    %v695 = vsel %vm61, %v637, 0
    %v698 = vsel %vm61, %v638, 0
    %v701 = vsel %vm61, %v639, 0
    %v704 = vsel %vm61, %v640, 0
    %v707 = vsel %vm61, %v641, 0
    %v710 = vsel %vm61, %v642, 0
    %v713 = vsel %vm61, %v643, 0
    %v716 = vsel %vm61, %v644, 0
    %v719 = vsel %vm61, %v645, 0
    %721 = vmatprep.subr.mxu0 0.0
    %722 = vmatpush1.msra.mxu0 %v30
    %723 = vmatprep.subr.mxu0 0.0
    %724 = vmatpush1.msra.mxu0 %v31
    %725 = vmatprep.subr.mxu0 0.0
    %726 = vmatpush1.msra.mxu0 %v32
    %727 = vmatprep.subr.mxu0 0.0
    %728 = vmatpush1.msra.mxu0 %v139
    %729 = vmatprep.subr.mxu0 0.0
    %730 = vmatpush1.msra.mxu0 0.0
    %731 = vmatprep.subr.mxu0 0.0
    %732 = vmatpush1.msra.mxu0 0.0
    %733 = vmatprep.subr.mxu0 0.0
    %734 = vmatpush1.msra.mxu0 0.0
    %735 = vmatprep.subr.mxu0 0.0
    %736 = vmatpush1.msra.mxu0 0.0
    %737 = vmatprep.subr.mxu0 0.0
    %738 = vmatpush1.msra.mxu0 0.0
    %739 = vmatprep.subr.mxu0 0.0
    %740 = vmatpush1.msra.mxu0 0.0
    %741 = vmatprep.subr.mxu0 0.0
    %742 = vmatpush1.msra.mxu0 0.0
    %743 = vmatprep.subr.mxu0 0.0
    %744 = vmatpush1.msra.mxu0 0.0
    %745 = vmatprep.subr.mxu0 0.0
    %746 = vmatpush1.msra.mxu0 0.0
    %747 = vmatprep.subr.mxu0 0.0
    %748 = vmatpush1.msra.mxu0 0.0
    %749 = vmatprep.subr.mxu0 0.0
    %750 = vmatpush1.msra.mxu0 0.0
    %751 = vmatprep.subr.mxu0 0.0
    %752 = vmatpush1.msra.mxu0 0.0
    %753 = vmatprep.subr.mxu0 0.0
    %754 = vmatpush1.msra.mxu0 0.0
    %755 = vmatprep.subr.mxu0 0.0
    %756 = vmatpush1.msra.mxu0 0.0
    %757 = vmatprep.subr.mxu0 0.0
    %758 = vmatpush1.msra.mxu0 0.0
    %759 = vmatprep.subr.mxu0 0.0
    %760 = vmatpush1.msra.mxu0 0.0
    %761 = vmatprep.subr.mxu0 0.0
    %762 = vmatpush1.msra.mxu0 0.0
    %763 = vmatprep.subr.mxu0 0.0
    %764 = vmatpush1.msra.mxu0 0.0
    %765 = vmatprep.subr.mxu0 0.0
    %766 = vmatpush1.msra.mxu0 0.0
    %767 = vmatprep.subr.mxu0 0.0
    %768 = vmatpush1.msra.mxu0 0.0
    %769 = vmatprep.subr.mxu0 0.0
    %770 = vmatpush1.msra.mxu0 0.0
    %771 = vmatprep.subr.mxu0 0.0
    %772 = vmatpush1.msra.mxu0 0.0
    %773 = vmatprep.subr.mxu0 0.0
    %774 = vmatpush1.msra.mxu0 0.0
    %775 = vmatprep.subr.mxu0 0.0
    %776 = vmatpush1.msra.mxu0 0.0
    %777 = vmatprep.subr.mxu0 0.0
    %778 = vmatpush1.msra.mxu0 0.0
    %779 = vmatprep.subr.mxu0 0.0
    %780 = vmatpush1.msra.mxu0 0.0
    %781 = vmatprep.subr.mxu0 0.0
    %782 = vmatpush1.msra.mxu0 0.0
    %783 = vmatprep.subr.mxu0 0.0
    %784 = vmatpush1.msra.mxu0 0.0
    %785 = vmatprep.mubr.f32.mxu0 0.0
    %786 = vmatmul.mubr.f32.gmra.mrb[0].mxu0 %v647
    %v787 = vpop.f32.mrb[0].mxu0
    %v788 = vadd.f32 0.0, %v787
    %v789 = vpop.f32.mrb[0].mxu0
    %790 = vmatprep.mubr.f32.mxu0 0.0
    %791 = vmatmul.mubr.f32.gmra.mrb[0].mxu0 %v650
    %v792 = vpop.f32.mrb[0].mxu0
    %v793 = vadd.f32 0.0, %v792
    %v794 = vpop.f32.mrb[0].mxu0
    %795 = vmatprep.mubr.f32.mxu0 0.0
    %796 = vmatmul.mubr.f32.gmra.mrb[0].mxu0 %v653
    %v797 = vpop.f32.mrb[0].mxu0
    %v798 = vadd.f32 0.0, %v797
    %v799 = vpop.f32.mrb[0].mxu0
    %800 = vmatprep.mubr.f32.mxu0 0.0
    %801 = vmatmul.mubr.f32.gmra.mrb[0].mxu0 %v656
    %v802 = vpop.f32.mrb[0].mxu0
    %v803 = vadd.f32 0.0, %v802
    %v804 = vpop.f32.mrb[0].mxu0
    %805 = vmatprep.mubr.f32.mxu0 0.0
    %806 = vmatmul.mubr.f32.gmra.mrb[0].mxu0 %v659
    %v807 = vpop.f32.mrb[0].mxu0
    %v808 = vadd.f32 0.0, %v807
    %v809 = vpop.f32.mrb[0].mxu0
    %810 = vmatprep.mubr.f32.mxu0 0.0
    %811 = vmatmul.mubr.f32.gmra.mrb[0].mxu0 %v662
    %v812 = vpop.f32.mrb[0].mxu0
    %v813 = vadd.f32 0.0, %v812
    %v814 = vpop.f32.mrb[0].mxu0
    %815 = vmatprep.mubr.f32.mxu0 0.0
    %816 = vmatmul.mubr.f32.gmra.mrb[0].mxu0 %v665
    %v817 = vpop.f32.mrb[0].mxu0
    %v818 = vadd.f32 0.0, %v817
    %v819 = vpop.f32.mrb[0].mxu0
    %820 = vmatprep.mubr.f32.mxu0 0.0
    %821 = vmatmul.mubr.f32.gmra.mrb[0].mxu0 %v668
    %v822 = vpop.f32.mrb[0].mxu0
    %v823 = vadd.f32 0.0, %v822
    %v824 = vpop.f32.mrb[0].mxu0
    %825 = vmatprep.mubr.f32.mxu0 0.0
    %826 = vmatmul.mubr.f32.gmra.mrb[0].mxu0 %v671
    %v827 = vpop.f32.mrb[0].mxu0
    %v828 = vadd.f32 0.0, %v827
    %v829 = vpop.f32.mrb[0].mxu0
    %830 = vmatprep.mubr.f32.mxu0 0.0
    %831 = vmatmul.mubr.f32.gmra.mrb[0].mxu0 %v674
    %v832 = vpop.f32.mrb[0].mxu0
    %v833 = vadd.f32 0.0, %v832
    %v834 = vpop.f32.mrb[0].mxu0
    %835 = vmatprep.mubr.f32.mxu0 0.0
    %836 = vmatmul.mubr.f32.gmra.mrb[0].mxu0 %v677
    %v837 = vpop.f32.mrb[0].mxu0
    %v838 = vadd.f32 0.0, %v837
    %v839 = vpop.f32.mrb[0].mxu0
    %840 = vmatprep.mubr.f32.mxu0 0.0
    %841 = vmatmul.mubr.f32.gmra.mrb[0].mxu0 %v680
    %v842 = vpop.f32.mrb[0].mxu0
    %v843 = vadd.f32 0.0, %v842
    %v844 = vpop.f32.mrb[0].mxu0
    %845 = vmatprep.mubr.f32.mxu0 0.0
    %846 = vmatmul.mubr.f32.gmra.mrb[0].mxu0 %v683
    %v847 = vpop.f32.mrb[0].mxu0
    %v848 = vadd.f32 0.0, %v847
    %v849 = vpop.f32.mrb[0].mxu0
    %850 = vmatprep.mubr.f32.mxu0 0.0
    %851 = vmatmul.mubr.f32.gmra.mrb[0].mxu0 %v686
    %v852 = vpop.f32.mrb[0].mxu0
    %v853 = vadd.f32 0.0, %v852
    %v854 = vpop.f32.mrb[0].mxu0
    %855 = vmatprep.mubr.f32.mxu0 0.0
    %856 = vmatmul.mubr.f32.gmra.mrb[0].mxu0 %v689
    %v857 = vpop.f32.mrb[0].mxu0
    %v858 = vadd.f32 0.0, %v857
    %v859 = vpop.f32.mrb[0].mxu0
    %860 = vmatprep.mubr.f32.mxu0 0.0
    %861 = vmatmul.mubr.f32.gmra.mrb[0].mxu0 %v692
    %v862 = vpop.f32.mrb[0].mxu0
    %v863 = vadd.f32 0.0, %v862
    %v864 = vpop.f32.mrb[0].mxu0
    %865 = vmatprep.mubr.f32.mxu0 0.0
    %866 = vmatmul.mubr.f32.gmra.mrb[0].mxu0 %v695
    %v867 = vpop.f32.mrb[0].mxu0
    %v868 = vadd.f32 0.0, %v867
    %v869 = vpop.f32.mrb[0].mxu0
    %870 = vmatprep.mubr.f32.mxu0 0.0
    %871 = vmatmul.mubr.f32.gmra.mrb[0].mxu0 %v698
    %v872 = vpop.f32.mrb[0].mxu0
    %v873 = vadd.f32 0.0, %v872
    %v874 = vpop.f32.mrb[0].mxu0
    %875 = vmatprep.mubr.f32.mxu0 0.0
    %876 = vmatmul.mubr.f32.gmra.mrb[0].mxu0 %v701
    %v877 = vpop.f32.mrb[0].mxu0
    %v878 = vadd.f32 0.0, %v877
    %v879 = vpop.f32.mrb[0].mxu0
    %880 = vmatprep.mubr.f32.mxu0 0.0
    %881 = vmatmul.mubr.f32.gmra.mrb[0].mxu0 %v704
    %v882 = vpop.f32.mrb[0].mxu0
    %v883 = vadd.f32 0.0, %v882
    %v884 = vpop.f32.mrb[0].mxu0
    %885 = vmatprep.mubr.f32.mxu0 0.0
    %886 = vmatmul.mubr.f32.gmra.mrb[0].mxu0 %v707
    %v887 = vpop.f32.mrb[0].mxu0
    %v888 = vadd.f32 0.0, %v887
    %v889 = vpop.f32.mrb[0].mxu0
    %890 = vmatprep.mubr.f32.mxu0 0.0
    %891 = vmatmul.mubr.f32.gmra.mrb[0].mxu0 %v710
    %v892 = vpop.f32.mrb[0].mxu0
    %v893 = vadd.f32 0.0, %v892
    %v894 = vpop.f32.mrb[0].mxu0
    %895 = vmatprep.mubr.f32.mxu0 0.0
    %896 = vmatmul.mubr.f32.gmra.mrb[0].mxu0 %v713
    %v897 = vpop.f32.mrb[0].mxu0
    %v898 = vadd.f32 0.0, %v897
    %v899 = vpop.f32.mrb[0].mxu0
    %900 = vmatprep.mubr.f32.mxu0 0.0
    %901 = vmatmul.mubr.f32.gmra.mrb[0].mxu0 %v716
    %v902 = vpop.f32.mrb[0].mxu0
    %v903 = vadd.f32 0.0, %v902
    %v904 = vpop.f32.mrb[0].mxu0
    %905 = vmatprep.mubr.f32.mxu0 0.0
    %906 = vmatmul.mubr.f32.gmra.mrb[0].mxu0 %v719
    %v907 = vpop.f32.mrb[0].mxu0
    %v908 = vadd.f32 0.0, %v907
    %v909 = vpop.f32.mrb[0].mxu0
    %910 = vdwg.mxu0
    %v911 = vld [vmem:[%s3] sm:$0xff]
    %v912 = vld [vmem:[%s3 + $0x8] sm:$0xff]
    %v913 = vld [vmem:[%s3 + $0x10] sm:$0xff]
    %v914 = vld [vmem:[%s3 + $0x18] sm:$0xff]
    %v915 = vld [vmem:[%s3 + $0x20] sm:$0xff]
    %v916 = vld [vmem:[%s3 + $0x28] sm:$0xff]
    %v917 = vld [vmem:[%s3 + $0x30] sm:$0xff]
    %v918 = vld [vmem:[%s3 + $0x38] sm:$0xff]
    %v919 = vld [vmem:[%s3 + $0x40] sm:$0xff]
    %v920 = vld [vmem:[%s3 + $0x48] sm:$0xff]
    %v921 = vld [vmem:[%s3 + $0x50] sm:$0xff]
    %v922 = vld [vmem:[%s3 + $0x58] sm:$0xff]
    %v923 = vld [vmem:[%s3 + $0x60] sm:$0xff]
    %v924 = vld [vmem:[%s3 + $0x68] sm:$0xff]
    %v925 = vld [vmem:[%s3 + $0x70] sm:$0xff]
    %v926 = vld [vmem:[%s3 + $0x78] sm:$0xff]
    %v927 = vld [vmem:[%s3 + $0x80] sm:$0xff]
    %v928 = vld [vmem:[%s3 + $0x88] sm:$0xff]
    %v929 = vld [vmem:[%s3 + $0x90] sm:$0xff]
    %v930 = vld [vmem:[%s3 + $0x98] sm:$0xff]
    %v931 = vld [vmem:[%s3 + $0xa0] sm:$0xff]
    %v932 = vld [vmem:[%s3 + $0xa8] sm:$0xff]
    %v933 = vld [vmem:[%s3 + $0xb0] sm:$0xff]
    %v934 = vld [vmem:[%s3 + $0xb8] sm:$0xff]
    %v935 = vld [vmem:[%s3 + $0xc0] sm:$0xf]
    %v937 = vsel %vm61, %v911, 0
    %v940 = vsel %vm61, %v912, 0
    %v943 = vsel %vm61, %v913, 0
    %v946 = vsel %vm61, %v914, 0
    %v949 = vsel %vm61, %v915, 0
    %v952 = vsel %vm61, %v916, 0
    %v955 = vsel %vm61, %v917, 0
    %v958 = vsel %vm61, %v918, 0
    %v961 = vsel %vm61, %v919, 0
    %v964 = vsel %vm61, %v920, 0
    %v967 = vsel %vm61, %v921, 0
    %v970 = vsel %vm61, %v922, 0
    %v973 = vsel %vm61, %v923, 0
    %v976 = vsel %vm61, %v924, 0
    %v979 = vsel %vm61, %v925, 0
    %v982 = vsel %vm61, %v926, 0
    %v985 = vsel %vm61, %v927, 0
    %v988 = vsel %vm61, %v928, 0
    %v991 = vsel %vm61, %v929, 0
    %v994 = vsel %vm61, %v930, 0
    %v997 = vsel %vm61, %v931, 0
    %v1000 = vsel %vm61, %v932, 0
    %v1003 = vsel %vm61, %v933, 0
    %v1006 = vsel %vm61, %v934, 0
    %v1009 = vsel %vm61, %v935, 0
    %1011 = vmatprep.subr.mxu0 0.0
    %1012 = vmatpush1.msra.mxu0 %v30
    %1013 = vmatprep.subr.mxu0 0.0
    %1014 = vmatpush1.msra.mxu0 %v31
    %1015 = vmatprep.subr.mxu0 0.0
    %1016 = vmatpush1.msra.mxu0 %v32
    %1017 = vmatprep.subr.mxu0 0.0
    %1018 = vmatpush1.msra.mxu0 %v139
    %1019 = vmatprep.subr.mxu0 0.0
    %1020 = vmatpush1.msra.mxu0 0.0
    %1021 = vmatprep.subr.mxu0 0.0
    %1022 = vmatpush1.msra.mxu0 0.0
    %1023 = vmatprep.subr.mxu0 0.0
    %1024 = vmatpush1.msra.mxu0 0.0
    %1025 = vmatprep.subr.mxu0 0.0
    %1026 = vmatpush1.msra.mxu0 0.0
    %1027 = vmatprep.subr.mxu0 0.0
    %1028 = vmatpush1.msra.mxu0 0.0
    %1029 = vmatprep.subr.mxu0 0.0
    %1030 = vmatpush1.msra.mxu0 0.0
    %1031 = vmatprep.subr.mxu0 0.0
    %1032 = vmatpush1.msra.mxu0 0.0
    %1033 = vmatprep.subr.mxu0 0.0
    %1034 = vmatpush1.msra.mxu0 0.0
    %1035 = vmatprep.subr.mxu0 0.0
    %1036 = vmatpush1.msra.mxu0 0.0
    %1037 = vmatprep.subr.mxu0 0.0
    %1038 = vmatpush1.msra.mxu0 0.0
    %1039 = vmatprep.subr.mxu0 0.0
    %1040 = vmatpush1.msra.mxu0 0.0
    %1041 = vmatprep.subr.mxu0 0.0
    %1042 = vmatpush1.msra.mxu0 0.0
    %1043 = vmatprep.subr.mxu0 0.0
    %1044 = vmatpush1.msra.mxu0 0.0
    %1045 = vmatprep.subr.mxu0 0.0
    %1046 = vmatpush1.msra.mxu0 0.0
    %1047 = vmatprep.subr.mxu0 0.0
    %1048 = vmatpush1.msra.mxu0 0.0
    %1049 = vmatprep.subr.mxu0 0.0
    %1050 = vmatpush1.msra.mxu0 0.0
    %1051 = vmatprep.subr.mxu0 0.0
    %1052 = vmatpush1.msra.mxu0 0.0
    %1053 = vmatprep.subr.mxu0 0.0
    %1054 = vmatpush1.msra.mxu0 0.0
    %1055 = vmatprep.subr.mxu0 0.0
    %1056 = vmatpush1.msra.mxu0 0.0
    %1057 = vmatprep.subr.mxu0 0.0
    %1058 = vmatpush1.msra.mxu0 0.0
    %1059 = vmatprep.subr.mxu0 0.0
    %1060 = vmatpush1.msra.mxu0 0.0
    %1061 = vmatprep.subr.mxu0 0.0
    %1062 = vmatpush1.msra.mxu0 0.0
    %1063 = vmatprep.subr.mxu0 0.0
    %1064 = vmatpush1.msra.mxu0 0.0
    %1065 = vmatprep.subr.mxu0 0.0
    %1066 = vmatpush1.msra.mxu0 0.0
    %1067 = vmatprep.subr.mxu0 0.0
    %1068 = vmatpush1.msra.mxu0 0.0
    %1069 = vmatprep.subr.mxu0 0.0
    %1070 = vmatpush1.msra.mxu0 0.0
    %1071 = vmatprep.subr.mxu0 0.0
    %1072 = vmatpush1.msra.mxu0 0.0
    %1073 = vmatprep.subr.mxu0 0.0
    %1074 = vmatpush1.msra.mxu0 0.0
    %1075 = vmatprep.mubr.f32.mxu0 0.0
    %1076 = vmatmul.mubr.f32.gmra.mrb[0].mxu0 %v937
    %v1077 = vpop.f32.mrb[0].mxu0
    %v1078 = vadd.f32 0.0, %v1077
    %v1079 = vpop.f32.mrb[0].mxu0
    %1080 = vmatprep.mubr.f32.mxu0 0.0
    %1081 = vmatmul.mubr.f32.gmra.mrb[0].mxu0 %v940
    %v1082 = vpop.f32.mrb[0].mxu0
    %v1083 = vadd.f32 0.0, %v1082
    %v1084 = vpop.f32.mrb[0].mxu0
    %1085 = vmatprep.mubr.f32.mxu0 0.0
    %1086 = vmatmul.mubr.f32.gmra.mrb[0].mxu0 %v943
    %v1087 = vpop.f32.mrb[0].mxu0
    %v1088 = vadd.f32 0.0, %v1087
    %v1089 = vpop.f32.mrb[0].mxu0
    %1090 = vmatprep.mubr.f32.mxu0 0.0
    %1091 = vmatmul.mubr.f32.gmra.mrb[0].mxu0 %v946
    %v1092 = vpop.f32.mrb[0].mxu0
    %v1093 = vadd.f32 0.0, %v1092
    %v1094 = vpop.f32.mrb[0].mxu0
    %1095 = vmatprep.mubr.f32.mxu0 0.0
    %1096 = vmatmul.mubr.f32.gmra.mrb[0].mxu0 %v949
    %v1097 = vpop.f32.mrb[0].mxu0
    %v1098 = vadd.f32 0.0, %v1097
    %v1099 = vpop.f32.mrb[0].mxu0
    %1100 = vmatprep.mubr.f32.mxu0 0.0
    %1101 = vmatmul.mubr.f32.gmra.mrb[0].mxu0 %v952
    %v1102 = vpop.f32.mrb[0].mxu0
    %v1103 = vadd.f32 0.0, %v1102
    %v1104 = vpop.f32.mrb[0].mxu0
    %1105 = vmatprep.mubr.f32.mxu0 0.0
    %1106 = vmatmul.mubr.f32.gmra.mrb[0].mxu0 %v955
    %v1107 = vpop.f32.mrb[0].mxu0
    %v1108 = vadd.f32 0.0, %v1107
    %v1109 = vpop.f32.mrb[0].mxu0
    %1110 = vmatprep.mubr.f32.mxu0 0.0
    %1111 = vmatmul.mubr.f32.gmra.mrb[0].mxu0 %v958
    %v1112 = vpop.f32.mrb[0].mxu0
    %v1113 = vadd.f32 0.0, %v1112
    %v1114 = vpop.f32.mrb[0].mxu0
    %1115 = vmatprep.mubr.f32.mxu0 0.0
    %1116 = vmatmul.mubr.f32.gmra.mrb[0].mxu0 %v961
    %v1117 = vpop.f32.mrb[0].mxu0
    %v1118 = vadd.f32 0.0, %v1117
    %v1119 = vpop.f32.mrb[0].mxu0
    %1120 = vmatprep.mubr.f32.mxu0 0.0
    %1121 = vmatmul.mubr.f32.gmra.mrb[0].mxu0 %v964
    %v1122 = vpop.f32.mrb[0].mxu0
    %v1123 = vadd.f32 0.0, %v1122
    %v1124 = vpop.f32.mrb[0].mxu0
    %1125 = vmatprep.mubr.f32.mxu0 0.0
    %1126 = vmatmul.mubr.f32.gmra.mrb[0].mxu0 %v967
    %v1127 = vpop.f32.mrb[0].mxu0
    %v1128 = vadd.f32 0.0, %v1127
    %v1129 = vpop.f32.mrb[0].mxu0
    %1130 = vmatprep.mubr.f32.mxu0 0.0
    %1131 = vmatmul.mubr.f32.gmra.mrb[0].mxu0 %v970
    %v1132 = vpop.f32.mrb[0].mxu0
    %v1133 = vadd.f32 0.0, %v1132
    %v1134 = vpop.f32.mrb[0].mxu0
    %1135 = vmatprep.mubr.f32.mxu0 0.0
    %1136 = vmatmul.mubr.f32.gmra.mrb[0].mxu0 %v973
    %v1137 = vpop.f32.mrb[0].mxu0
    %v1138 = vadd.f32 0.0, %v1137
    %v1139 = vpop.f32.mrb[0].mxu0
    %1140 = vmatprep.mubr.f32.mxu0 0.0
    %1141 = vmatmul.mubr.f32.gmra.mrb[0].mxu0 %v976
    %v1142 = vpop.f32.mrb[0].mxu0
    %v1143 = vadd.f32 0.0, %v1142
    %v1144 = vpop.f32.mrb[0].mxu0
    %1145 = vmatprep.mubr.f32.mxu0 0.0
    %1146 = vmatmul.mubr.f32.gmra.mrb[0].mxu0 %v979
    %v1147 = vpop.f32.mrb[0].mxu0
    %v1148 = vadd.f32 0.0, %v1147
    %v1149 = vpop.f32.mrb[0].mxu0
    %1150 = vmatprep.mubr.f32.mxu0 0.0
    %1151 = vmatmul.mubr.f32.gmra.mrb[0].mxu0 %v982
    %v1152 = vpop.f32.mrb[0].mxu0
    %v1153 = vadd.f32 0.0, %v1152
    %v1154 = vpop.f32.mrb[0].mxu0
    %1155 = vmatprep.mubr.f32.mxu0 0.0
    %1156 = vmatmul.mubr.f32.gmra.mrb[0].mxu0 %v985
    %v1157 = vpop.f32.mrb[0].mxu0
    %v1158 = vadd.f32 0.0, %v1157
    %v1159 = vpop.f32.mrb[0].mxu0
    %1160 = vmatprep.mubr.f32.mxu0 0.0
    %1161 = vmatmul.mubr.f32.gmra.mrb[0].mxu0 %v988
    %v1162 = vpop.f32.mrb[0].mxu0
    %v1163 = vadd.f32 0.0, %v1162
    %v1164 = vpop.f32.mrb[0].mxu0
    %1165 = vmatprep.mubr.f32.mxu0 0.0
    %1166 = vmatmul.mubr.f32.gmra.mrb[0].mxu0 %v991
    %v1167 = vpop.f32.mrb[0].mxu0
    %v1168 = vadd.f32 0.0, %v1167
    %v1169 = vpop.f32.mrb[0].mxu0
    %1170 = vmatprep.mubr.f32.mxu0 0.0
    %1171 = vmatmul.mubr.f32.gmra.mrb[0].mxu0 %v994
    %v1172 = vpop.f32.mrb[0].mxu0
    %v1173 = vadd.f32 0.0, %v1172
    %v1174 = vpop.f32.mrb[0].mxu0
    %1175 = vmatprep.mubr.f32.mxu0 0.0
    %1176 = vmatmul.mubr.f32.gmra.mrb[0].mxu0 %v997
    %v1177 = vpop.f32.mrb[0].mxu0
    %v1178 = vadd.f32 0.0, %v1177
    %v1179 = vpop.f32.mrb[0].mxu0
    %1180 = vmatprep.mubr.f32.mxu0 0.0
    %1181 = vmatmul.mubr.f32.gmra.mrb[0].mxu0 %v1000
    %v1182 = vpop.f32.mrb[0].mxu0
    %v1183 = vadd.f32 0.0, %v1182
    %v1184 = vpop.f32.mrb[0].mxu0
    %1185 = vmatprep.mubr.f32.mxu0 0.0
    %1186 = vmatmul.mubr.f32.gmra.mrb[0].mxu0 %v1003
    %v1187 = vpop.f32.mrb[0].mxu0
    %v1188 = vadd.f32 0.0, %v1187
    %v1189 = vpop.f32.mrb[0].mxu0
    %1190 = vmatprep.mubr.f32.mxu0 0.0
    %1191 = vmatmul.mubr.f32.gmra.mrb[0].mxu0 %v1006
    %v1192 = vpop.f32.mrb[0].mxu0
    %v1193 = vadd.f32 0.0, %v1192
    %v1194 = vpop.f32.mrb[0].mxu0
    %1195 = vmatprep.mubr.f32.mxu0 0.0
    %1196 = vmatmul.mubr.f32.gmra.mrb[0].mxu0 %v1009
    %v1197 = vpop.f32.mrb[0].mxu0
    %v1198 = vadd.f32 0.0, %v1197
    %v1199 = vpop.f32.mrb[0].mxu0
    %1200 = vdwg.mxu0
    %v1201 = vmax.f32 %v208, %v498
    %v1202 = vmax.f32 %v213, %v503
    %v1203 = vmax.f32 %v218, %v508
    %v1204 = vmax.f32 %v223, %v513
    %v1205 = vmax.f32 %v228, %v518
    %v1206 = vmax.f32 %v233, %v523
    %v1207 = vmax.f32 %v238, %v528
    %v1208 = vmax.f32 %v243, %v533
    %v1209 = vmax.f32 %v248, %v538
    %v1210 = vmax.f32 %v253, %v543
    %v1211 = vmax.f32 %v258, %v548
    %v1212 = vmax.f32 %v263, %v553
    %v1213 = vmax.f32 %v268, %v558
    %v1214 = vmax.f32 %v273, %v563
    %v1215 = vmax.f32 %v278, %v568
    %v1216 = vmax.f32 %v283, %v573
    %v1217 = vmax.f32 %v288, %v578
    %v1218 = vmax.f32 %v293, %v583
    %v1219 = vmax.f32 %v298, %v588
    %v1220 = vmax.f32 %v303, %v593
    %v1221 = vmax.f32 %v308, %v598
    %v1222 = vmax.f32 %v313, %v603
    %v1223 = vmax.f32 %v318, %v608
    %v1224 = vmax.f32 %v323, %v613
    %v1225 = vmax.f32 %v328, %v618
    %v1226 = vmax.f32 %v788, %v1078
    %v1227 = vmax.f32 %v793, %v1083
    %v1228 = vmax.f32 %v798, %v1088
    %v1229 = vmax.f32 %v803, %v1093
    %v1230 = vmax.f32 %v808, %v1098
    %v1231 = vmax.f32 %v813, %v1103
    %v1232 = vmax.f32 %v818, %v1108
    %v1233 = vmax.f32 %v823, %v1113
    %v1234 = vmax.f32 %v828, %v1118
    %v1235 = vmax.f32 %v833, %v1123
    %v1236 = vmax.f32 %v838, %v1128
    %v1237 = vmax.f32 %v843, %v1133
    %v1238 = vmax.f32 %v848, %v1138
    %v1239 = vmax.f32 %v853, %v1143
    %v1240 = vmax.f32 %v858, %v1148
    %v1241 = vmax.f32 %v863, %v1153
    %v1242 = vmax.f32 %v868, %v1158
    %v1243 = vmax.f32 %v873, %v1163
    %v1244 = vmax.f32 %v878, %v1168
    %v1245 = vmax.f32 %v883, %v1173
    %v1246 = vmax.f32 %v888, %v1178
    %v1247 = vmax.f32 %v893, %v1183
    %v1248 = vmax.f32 %v898, %v1188
    %v1249 = vmax.f32 %v903, %v1193
    %v1250 = vmax.f32 %v908, %v1198
    %v1251 = vmax.f32 %v1201, %v1226
    %v1252 = vmax.f32 %v1202, %v1227
    %v1253 = vmax.f32 %v1203, %v1228
    %v1254 = vmax.f32 %v1204, %v1229
    %v1255 = vmax.f32 %v1205, %v1230
    %v1256 = vmax.f32 %v1206, %v1231
    %v1257 = vmax.f32 %v1207, %v1232
    %v1258 = vmax.f32 %v1208, %v1233
    %v1259 = vmax.f32 %v1209, %v1234
    %v1260 = vmax.f32 %v1210, %v1235
    %v1261 = vmax.f32 %v1211, %v1236
    %v1262 = vmax.f32 %v1212, %v1237
    %v1263 = vmax.f32 %v1213, %v1238
    %v1264 = vmax.f32 %v1214, %v1239
    %v1265 = vmax.f32 %v1215, %v1240
    %v1266 = vmax.f32 %v1216, %v1241
    %v1267 = vmax.f32 %v1217, %v1242
    %v1268 = vmax.f32 %v1218, %v1243
    %v1269 = vmax.f32 %v1219, %v1244
    %v1270 = vmax.f32 %v1220, %v1245
    %v1271 = vmax.f32 %v1221, %v1246
    %v1272 = vmax.f32 %v1222, %v1247
    %v1273 = vmax.f32 %v1223, %v1248
    %v1274 = vmax.f32 %v1224, %v1249
    %v1275 = vmax.f32 %v1225, %v1250
    %v1277 = vlaneseq
    %v1278 = vshrl.u32 %v1277, 7
    %v1279 = vsub.s32 0, %v1278
    %v1280 = vrot.slane %v34, %v1279
    %v1282 = vadd.f32 %v1251, %v1280
    %v1283 = vadd.f32 %v1252, %v1280
    %v1284 = vadd.f32 %v1253, %v1280
    %v1285 = vadd.f32 %v1254, %v1280
    %v1286 = vadd.f32 %v1255, %v1280
    %v1287 = vadd.f32 %v1256, %v1280
    %v1288 = vadd.f32 %v1257, %v1280
    %v1289 = vadd.f32 %v1258, %v1280
    %v1290 = vadd.f32 %v1259, %v1280
    %v1291 = vadd.f32 %v1260, %v1280
    %v1292 = vadd.f32 %v1261, %v1280
    %v1293 = vadd.f32 %v1262, %v1280
    %v1294 = vadd.f32 %v1263, %v1280
    %v1295 = vadd.f32 %v1264, %v1280
    %v1296 = vadd.f32 %v1265, %v1280
    %v1297 = vadd.f32 %v1266, %v1280
    %v1298 = vadd.f32 %v1267, %v1280
    %v1299 = vadd.f32 %v1268, %v1280
    %v1300 = vadd.f32 %v1269, %v1280
    %v1301 = vadd.f32 %v1270, %v1280
    %v1302 = vadd.f32 %v1271, %v1280
    %v1303 = vadd.f32 %v1272, %v1280
    %v1304 = vadd.f32 %v1273, %v1280
    %v1305 = vadd.f32 %v1274, %v1280
    %v1306 = vadd.f32 %v1275, %v1280
    %v1307 = vmax.f32 %v1282, 0.0
    %v1308 = vmax.f32 %v1283, 0.0
    %v1309 = vmax.f32 %v1284, 0.0
    %v1310 = vmax.f32 %v1285, 0.0
    %v1311 = vmax.f32 %v1286, 0.0
    %v1312 = vmax.f32 %v1287, 0.0
    %v1313 = vmax.f32 %v1288, 0.0
    %v1314 = vmax.f32 %v1289, 0.0
    %v1315 = vmax.f32 %v1290, 0.0
    %v1316 = vmax.f32 %v1291, 0.0
    %v1317 = vmax.f32 %v1292, 0.0
    %v1318 = vmax.f32 %v1293, 0.0
    %v1319 = vmax.f32 %v1294, 0.0
    %v1320 = vmax.f32 %v1295, 0.0
    %v1321 = vmax.f32 %v1296, 0.0
    %v1322 = vmax.f32 %v1297, 0.0
    %v1323 = vmax.f32 %v1298, 0.0
    %v1324 = vmax.f32 %v1299, 0.0
    %v1325 = vmax.f32 %v1300, 0.0
    %v1326 = vmax.f32 %v1301, 0.0
    %v1327 = vmax.f32 %v1302, 0.0
    %v1328 = vmax.f32 %v1303, 0.0
    %v1329 = vmax.f32 %v1304, 0.0
    %v1330 = vmax.f32 %v1305, 0.0
    %v1331 = vmax.f32 %v1306, 0.0
    %v1332 = vld [vmem:[%s6] sm:$0xff]
    %v1333 = vld [vmem:[%s6 + $0x8] sm:$0xff]
    %v1334 = vld [vmem:[%s6 + $0x10] sm:$0xff]
    %v1335 = vld [vmem:[%s6 + $0x18] sm:$0xff]
    %v1336 = vld [vmem:[%s6 + $0x20] sm:$0xff]
    %v1337 = vld [vmem:[%s6 + $0x28] sm:$0xff]
    %v1338 = vld [vmem:[%s6 + $0x30] sm:$0xff]
    %v1339 = vld [vmem:[%s6 + $0x38] sm:$0xff]
    %v1340 = vld [vmem:[%s6 + $0x40] sm:$0xff]
    %v1341 = vld [vmem:[%s6 + $0x48] sm:$0xff]
    %v1342 = vld [vmem:[%s6 + $0x50] sm:$0xff]
    %v1343 = vld [vmem:[%s6 + $0x58] sm:$0xff]
    %v1344 = vld [vmem:[%s6 + $0x60] sm:$0xff]
    %v1345 = vld [vmem:[%s6 + $0x68] sm:$0xff]
    %v1346 = vld [vmem:[%s6 + $0x70] sm:$0xff]
    %v1347 = vld [vmem:[%s6 + $0x78] sm:$0xff]
    %v1348 = vld [vmem:[%s6 + $0x80] sm:$0xff]
    %v1349 = vld [vmem:[%s6 + $0x88] sm:$0xff]
    %v1350 = vld [vmem:[%s6 + $0x90] sm:$0xff]
    %v1351 = vld [vmem:[%s6 + $0x98] sm:$0xff]
    %v1352 = vld [vmem:[%s6 + $0xa0] sm:$0xff]
    %v1353 = vld [vmem:[%s6 + $0xa8] sm:$0xff]
    %v1354 = vld [vmem:[%s6 + $0xb0] sm:$0xff]
    %v1355 = vld [vmem:[%s6 + $0xb8] sm:$0xff]
    %v1356 = vld [vmem:[%s6 + $0xc0] sm:$0xf]
    %1358 = vset.pattern.permute.xlu0 0
    %1359 = vperm.xlu0 %1358, %v1307
    %v1360 = vpop.permute.xlu0 %1359
    %1363 = vset.pattern.permute.xlu0 0
    %1364 = vperm.xlu0 %1363, %v1308
    %v1365 = vpop.permute.xlu0 %1364
    %1368 = vset.pattern.permute.xlu0 0
    %1369 = vperm.xlu0 %1368, %v1309
    %v1370 = vpop.permute.xlu0 %1369
    %1373 = vset.pattern.permute.xlu0 0
    %1374 = vperm.xlu0 %1373, %v1310
    %v1375 = vpop.permute.xlu0 %1374
    %1378 = vset.pattern.permute.xlu0 0
    %1379 = vperm.xlu0 %1378, %v1311
    %v1380 = vpop.permute.xlu0 %1379
    %1383 = vset.pattern.permute.xlu0 0
    %1384 = vperm.xlu0 %1383, %v1312
    %v1385 = vpop.permute.xlu0 %1384
    %1388 = vset.pattern.permute.xlu0 0
    %1389 = vperm.xlu0 %1388, %v1313
    %v1390 = vpop.permute.xlu0 %1389
    %1393 = vset.pattern.permute.xlu0 0
    %1394 = vperm.xlu0 %1393, %v1314
    %v1395 = vpop.permute.xlu0 %1394
    %1398 = vset.pattern.permute.xlu0 0
    %1399 = vperm.xlu0 %1398, %v1315
    %v1400 = vpop.permute.xlu0 %1399
    %1403 = vset.pattern.permute.xlu0 0
    %1404 = vperm.xlu0 %1403, %v1316
    %v1405 = vpop.permute.xlu0 %1404
    %1408 = vset.pattern.permute.xlu0 0
    %1409 = vperm.xlu0 %1408, %v1317
    %v1410 = vpop.permute.xlu0 %1409
    %1413 = vset.pattern.permute.xlu0 0
    %1414 = vperm.xlu0 %1413, %v1318
    %v1415 = vpop.permute.xlu0 %1414
    %1418 = vset.pattern.permute.xlu0 0
    %1419 = vperm.xlu0 %1418, %v1319
    %v1420 = vpop.permute.xlu0 %1419
    %1423 = vset.pattern.permute.xlu0 0
    %1424 = vperm.xlu0 %1423, %v1320
    %v1425 = vpop.permute.xlu0 %1424
    %1428 = vset.pattern.permute.xlu0 0
    %1429 = vperm.xlu0 %1428, %v1321
    %v1430 = vpop.permute.xlu0 %1429
    %1433 = vset.pattern.permute.xlu0 0
    %1434 = vperm.xlu0 %1433, %v1322
    %v1435 = vpop.permute.xlu0 %1434
    %1438 = vset.pattern.permute.xlu0 0
    %1439 = vperm.xlu0 %1438, %v1323
    %v1440 = vpop.permute.xlu0 %1439
    %1443 = vset.pattern.permute.xlu0 0
    %1444 = vperm.xlu0 %1443, %v1324
    %v1445 = vpop.permute.xlu0 %1444
    %1448 = vset.pattern.permute.xlu0 0
    %1449 = vperm.xlu0 %1448, %v1325
    %v1450 = vpop.permute.xlu0 %1449
    %1453 = vset.pattern.permute.xlu0 0
    %1454 = vperm.xlu0 %1453, %v1326
    %v1455 = vpop.permute.xlu0 %1454
    %1458 = vset.pattern.permute.xlu0 0
    %1459 = vperm.xlu0 %1458, %v1327
    %v1460 = vpop.permute.xlu0 %1459
    %1463 = vset.pattern.permute.xlu0 0
    %1464 = vperm.xlu0 %1463, %v1328
    %v1465 = vpop.permute.xlu0 %1464
    %1468 = vset.pattern.permute.xlu0 0
    %1469 = vperm.xlu0 %1468, %v1329
    %v1470 = vpop.permute.xlu0 %1469
    %1473 = vset.pattern.permute.xlu0 0
    %1474 = vperm.xlu0 %1473, %v1330
    %v1475 = vpop.permute.xlu0 %1474
    %1478 = vset.pattern.permute.xlu0 0
    %1479 = vperm.xlu0 %1478, %v1331
    %v1480 = vpop.permute.xlu0 %1479
    %v1482 = vmul.f32 %v1360, %v1332
    %v1483 = vmul.f32 %v1365, %v1333
    %v1484 = vmul.f32 %v1370, %v1334
    %v1485 = vmul.f32 %v1375, %v1335
    %v1486 = vmul.f32 %v1380, %v1336
    %v1487 = vmul.f32 %v1385, %v1337
    %v1488 = vmul.f32 %v1390, %v1338
    %v1489 = vmul.f32 %v1395, %v1339
    %v1490 = vmul.f32 %v1400, %v1340
    %v1491 = vmul.f32 %v1405, %v1341
    %v1492 = vmul.f32 %v1410, %v1342
    %v1493 = vmul.f32 %v1415, %v1343
    %v1494 = vmul.f32 %v1420, %v1344
    %v1495 = vmul.f32 %v1425, %v1345
    %v1496 = vmul.f32 %v1430, %v1346
    %v1497 = vmul.f32 %v1435, %v1347
    %v1498 = vmul.f32 %v1440, %v1348
    %v1499 = vmul.f32 %v1445, %v1349
    %v1500 = vmul.f32 %v1450, %v1350
    %v1501 = vmul.f32 %v1455, %v1351
    %v1502 = vmul.f32 %v1460, %v1352
    %v1503 = vmul.f32 %v1465, %v1353
    %v1504 = vmul.f32 %v1470, %v1354
    %v1505 = vmul.f32 %v1475, %v1355
    %v1506 = vmul.f32 %v1480, %v1356
    %s1507 = scalar_lea.vmem %s6, 200
    %v1508 = vld [vmem:[%s1507] sm:$0xff]
    %v1509 = vld [vmem:[%s1507 + $0x8] sm:$0xff]
    %v1510 = vld [vmem:[%s1507 + $0x10] sm:$0xff]
    %v1511 = vld [vmem:[%s1507 + $0x18] sm:$0xff]
    %v1512 = vld [vmem:[%s1507 + $0x20] sm:$0xff]
    %v1513 = vld [vmem:[%s1507 + $0x28] sm:$0xff]
    %v1514 = vld [vmem:[%s1507 + $0x30] sm:$0xff]
    %v1515 = vld [vmem:[%s1507 + $0x38] sm:$0xff]
    %v1516 = vld [vmem:[%s1507 + $0x40] sm:$0xff]
    %v1517 = vld [vmem:[%s1507 + $0x48] sm:$0xff]
    %v1518 = vld [vmem:[%s1507 + $0x50] sm:$0xff]
    %v1519 = vld [vmem:[%s1507 + $0x58] sm:$0xff]
    %v1520 = vld [vmem:[%s1507 + $0x60] sm:$0xff]
    %v1521 = vld [vmem:[%s1507 + $0x68] sm:$0xff]
    %v1522 = vld [vmem:[%s1507 + $0x70] sm:$0xff]
    %v1523 = vld [vmem:[%s1507 + $0x78] sm:$0xff]
    %v1524 = vld [vmem:[%s1507 + $0x80] sm:$0xff]
    %v1525 = vld [vmem:[%s1507 + $0x88] sm:$0xff]
    %v1526 = vld [vmem:[%s1507 + $0x90] sm:$0xff]
    %v1527 = vld [vmem:[%s1507 + $0x98] sm:$0xff]
    %v1528 = vld [vmem:[%s1507 + $0xa0] sm:$0xff]
    %v1529 = vld [vmem:[%s1507 + $0xa8] sm:$0xff]
    %v1530 = vld [vmem:[%s1507 + $0xb0] sm:$0xff]
    %v1531 = vld [vmem:[%s1507 + $0xb8] sm:$0xff]
    %v1532 = vld [vmem:[%s1507 + $0xc0] sm:$0xf]
    %1533 = vset.pattern.permute.xlu0 1
    %1534 = vperm.xlu0 %1533, %v1307
    %v1535 = vpop.permute.xlu0 %1534
    %1537 = vset.pattern.permute.xlu0 1
    %1538 = vperm.xlu0 %1537, %v1308
    %v1539 = vpop.permute.xlu0 %1538
    %1541 = vset.pattern.permute.xlu0 1
    %1542 = vperm.xlu0 %1541, %v1309
    %v1543 = vpop.permute.xlu0 %1542
    %1545 = vset.pattern.permute.xlu0 1
    %1546 = vperm.xlu0 %1545, %v1310
    %v1547 = vpop.permute.xlu0 %1546
    %1549 = vset.pattern.permute.xlu0 1
    %1550 = vperm.xlu0 %1549, %v1311
    %v1551 = vpop.permute.xlu0 %1550
    %1553 = vset.pattern.permute.xlu0 1
    %1554 = vperm.xlu0 %1553, %v1312
    %v1555 = vpop.permute.xlu0 %1554
    %1557 = vset.pattern.permute.xlu0 1
    %1558 = vperm.xlu0 %1557, %v1313
    %v1559 = vpop.permute.xlu0 %1558
    %1561 = vset.pattern.permute.xlu0 1
    %1562 = vperm.xlu0 %1561, %v1314
    %v1563 = vpop.permute.xlu0 %1562
    %1565 = vset.pattern.permute.xlu0 1
    %1566 = vperm.xlu0 %1565, %v1315
    %v1567 = vpop.permute.xlu0 %1566
    %1569 = vset.pattern.permute.xlu0 1
    %1570 = vperm.xlu0 %1569, %v1316
    %v1571 = vpop.permute.xlu0 %1570
    %1573 = vset.pattern.permute.xlu0 1
    %1574 = vperm.xlu0 %1573, %v1317
    %v1575 = vpop.permute.xlu0 %1574
    %1577 = vset.pattern.permute.xlu0 1
    %1578 = vperm.xlu0 %1577, %v1318
    %v1579 = vpop.permute.xlu0 %1578
    %1581 = vset.pattern.permute.xlu0 1
    %1582 = vperm.xlu0 %1581, %v1319
    %v1583 = vpop.permute.xlu0 %1582
    %1585 = vset.pattern.permute.xlu0 1
    %1586 = vperm.xlu0 %1585, %v1320
    %v1587 = vpop.permute.xlu0 %1586
    %1589 = vset.pattern.permute.xlu0 1
    %1590 = vperm.xlu0 %1589, %v1321
    %v1591 = vpop.permute.xlu0 %1590
    %1593 = vset.pattern.permute.xlu0 1
    %1594 = vperm.xlu0 %1593, %v1322
    %v1595 = vpop.permute.xlu0 %1594
    %1597 = vset.pattern.permute.xlu0 1
    %1598 = vperm.xlu0 %1597, %v1323
    %v1599 = vpop.permute.xlu0 %1598
    %1601 = vset.pattern.permute.xlu0 1
    %1602 = vperm.xlu0 %1601, %v1324
    %v1603 = vpop.permute.xlu0 %1602
    %1605 = vset.pattern.permute.xlu0 1
    %1606 = vperm.xlu0 %1605, %v1325
    %v1607 = vpop.permute.xlu0 %1606
    %1609 = vset.pattern.permute.xlu0 1
    %1610 = vperm.xlu0 %1609, %v1326
    %v1611 = vpop.permute.xlu0 %1610
    %1613 = vset.pattern.permute.xlu0 1
    %1614 = vperm.xlu0 %1613, %v1327
    %v1615 = vpop.permute.xlu0 %1614
    %1617 = vset.pattern.permute.xlu0 1
    %1618 = vperm.xlu0 %1617, %v1328
    %v1619 = vpop.permute.xlu0 %1618
    %1621 = vset.pattern.permute.xlu0 1
    %1622 = vperm.xlu0 %1621, %v1329
    %v1623 = vpop.permute.xlu0 %1622
    %1625 = vset.pattern.permute.xlu0 1
    %1626 = vperm.xlu0 %1625, %v1330
    %v1627 = vpop.permute.xlu0 %1626
    %1629 = vset.pattern.permute.xlu0 1
    %1630 = vperm.xlu0 %1629, %v1331
    %v1631 = vpop.permute.xlu0 %1630
    %v1633 = vmul.f32 %v1535, %v1508
    %v1634 = vmul.f32 %v1539, %v1509
    %v1635 = vmul.f32 %v1543, %v1510
    %v1636 = vmul.f32 %v1547, %v1511
    %v1637 = vmul.f32 %v1551, %v1512
    %v1638 = vmul.f32 %v1555, %v1513
    %v1639 = vmul.f32 %v1559, %v1514
    %v1640 = vmul.f32 %v1563, %v1515
    %v1641 = vmul.f32 %v1567, %v1516
    %v1642 = vmul.f32 %v1571, %v1517
    %v1643 = vmul.f32 %v1575, %v1518
    %v1644 = vmul.f32 %v1579, %v1519
    %v1645 = vmul.f32 %v1583, %v1520
    %v1646 = vmul.f32 %v1587, %v1521
    %v1647 = vmul.f32 %v1591, %v1522
    %v1648 = vmul.f32 %v1595, %v1523
    %v1649 = vmul.f32 %v1599, %v1524
    %v1650 = vmul.f32 %v1603, %v1525
    %v1651 = vmul.f32 %v1607, %v1526
    %v1652 = vmul.f32 %v1611, %v1527
    %v1653 = vmul.f32 %v1615, %v1528
    %v1654 = vmul.f32 %v1619, %v1529
    %v1655 = vmul.f32 %v1623, %v1530
    %v1656 = vmul.f32 %v1627, %v1531
    %v1657 = vmul.f32 %v1631, %v1532
    %v1658 = vadd.f32 %v1482, %v1633
    %v1659 = vadd.f32 %v1483, %v1634
    %v1660 = vadd.f32 %v1484, %v1635
    %v1661 = vadd.f32 %v1485, %v1636
    %v1662 = vadd.f32 %v1486, %v1637
    %v1663 = vadd.f32 %v1487, %v1638
    %v1664 = vadd.f32 %v1488, %v1639
    %v1665 = vadd.f32 %v1489, %v1640
    %v1666 = vadd.f32 %v1490, %v1641
    %v1667 = vadd.f32 %v1491, %v1642
    %v1668 = vadd.f32 %v1492, %v1643
    %v1669 = vadd.f32 %v1493, %v1644
    %v1670 = vadd.f32 %v1494, %v1645
    %v1671 = vadd.f32 %v1495, %v1646
    %v1672 = vadd.f32 %v1496, %v1647
    %v1673 = vadd.f32 %v1497, %v1648
    %v1674 = vadd.f32 %v1498, %v1649
    %v1675 = vadd.f32 %v1499, %v1650
    %v1676 = vadd.f32 %v1500, %v1651
    %v1677 = vadd.f32 %v1501, %v1652
    %v1678 = vadd.f32 %v1502, %v1653
    %v1679 = vadd.f32 %v1503, %v1654
    %v1680 = vadd.f32 %v1504, %v1655
    %v1681 = vadd.f32 %v1505, %v1656
    %v1682 = vadd.f32 %v1506, %v1657
    %s1683 = scalar_lea.vmem %s6, 400
    %v1684 = vld [vmem:[%s1683] sm:$0xff]
    %v1685 = vld [vmem:[%s1683 + $0x8] sm:$0xff]
    %v1686 = vld [vmem:[%s1683 + $0x10] sm:$0xff]
    %v1687 = vld [vmem:[%s1683 + $0x18] sm:$0xff]
    %v1688 = vld [vmem:[%s1683 + $0x20] sm:$0xff]
    %v1689 = vld [vmem:[%s1683 + $0x28] sm:$0xff]
    %v1690 = vld [vmem:[%s1683 + $0x30] sm:$0xff]
    %v1691 = vld [vmem:[%s1683 + $0x38] sm:$0xff]
    %v1692 = vld [vmem:[%s1683 + $0x40] sm:$0xff]
    %v1693 = vld [vmem:[%s1683 + $0x48] sm:$0xff]
    %v1694 = vld [vmem:[%s1683 + $0x50] sm:$0xff]
    %v1695 = vld [vmem:[%s1683 + $0x58] sm:$0xff]
    %v1696 = vld [vmem:[%s1683 + $0x60] sm:$0xff]
    %v1697 = vld [vmem:[%s1683 + $0x68] sm:$0xff]
    %v1698 = vld [vmem:[%s1683 + $0x70] sm:$0xff]
    %v1699 = vld [vmem:[%s1683 + $0x78] sm:$0xff]
    %v1700 = vld [vmem:[%s1683 + $0x80] sm:$0xff]
    %v1701 = vld [vmem:[%s1683 + $0x88] sm:$0xff]
    %v1702 = vld [vmem:[%s1683 + $0x90] sm:$0xff]
    %v1703 = vld [vmem:[%s1683 + $0x98] sm:$0xff]
    %v1704 = vld [vmem:[%s1683 + $0xa0] sm:$0xff]
    %v1705 = vld [vmem:[%s1683 + $0xa8] sm:$0xff]
    %v1706 = vld [vmem:[%s1683 + $0xb0] sm:$0xff]
    %v1707 = vld [vmem:[%s1683 + $0xb8] sm:$0xff]
    %v1708 = vld [vmem:[%s1683 + $0xc0] sm:$0xf]
    %1709 = vset.pattern.permute.xlu0 2
    %1710 = vperm.xlu0 %1709, %v1307
    %v1711 = vpop.permute.xlu0 %1710
    %1713 = vset.pattern.permute.xlu0 2
    %1714 = vperm.xlu0 %1713, %v1308
    %v1715 = vpop.permute.xlu0 %1714
    %1717 = vset.pattern.permute.xlu0 2
    %1718 = vperm.xlu0 %1717, %v1309
    %v1719 = vpop.permute.xlu0 %1718
    %1721 = vset.pattern.permute.xlu0 2
    %1722 = vperm.xlu0 %1721, %v1310
    %v1723 = vpop.permute.xlu0 %1722
    %1725 = vset.pattern.permute.xlu0 2
    %1726 = vperm.xlu0 %1725, %v1311
    %v1727 = vpop.permute.xlu0 %1726
    %1729 = vset.pattern.permute.xlu0 2
    %1730 = vperm.xlu0 %1729, %v1312
    %v1731 = vpop.permute.xlu0 %1730
    %1733 = vset.pattern.permute.xlu0 2
    %1734 = vperm.xlu0 %1733, %v1313
    %v1735 = vpop.permute.xlu0 %1734
    %1737 = vset.pattern.permute.xlu0 2
    %1738 = vperm.xlu0 %1737, %v1314
    %v1739 = vpop.permute.xlu0 %1738
    %1741 = vset.pattern.permute.xlu0 2
    %1742 = vperm.xlu0 %1741, %v1315
    %v1743 = vpop.permute.xlu0 %1742
    %1745 = vset.pattern.permute.xlu0 2
    %1746 = vperm.xlu0 %1745, %v1316
    %v1747 = vpop.permute.xlu0 %1746
    %1749 = vset.pattern.permute.xlu0 2
    %1750 = vperm.xlu0 %1749, %v1317
    %v1751 = vpop.permute.xlu0 %1750
    %1753 = vset.pattern.permute.xlu0 2
    %1754 = vperm.xlu0 %1753, %v1318
    %v1755 = vpop.permute.xlu0 %1754
    %1757 = vset.pattern.permute.xlu0 2
    %1758 = vperm.xlu0 %1757, %v1319
    %v1759 = vpop.permute.xlu0 %1758
    %1761 = vset.pattern.permute.xlu0 2
    %1762 = vperm.xlu0 %1761, %v1320
    %v1763 = vpop.permute.xlu0 %1762
    %1765 = vset.pattern.permute.xlu0 2
    %1766 = vperm.xlu0 %1765, %v1321
    %v1767 = vpop.permute.xlu0 %1766
    %1769 = vset.pattern.permute.xlu0 2
    %1770 = vperm.xlu0 %1769, %v1322
    %v1771 = vpop.permute.xlu0 %1770
    %1773 = vset.pattern.permute.xlu0 2
    %1774 = vperm.xlu0 %1773, %v1323
    %v1775 = vpop.permute.xlu0 %1774
    %1777 = vset.pattern.permute.xlu0 2
    %1778 = vperm.xlu0 %1777, %v1324
    %v1779 = vpop.permute.xlu0 %1778
    %1781 = vset.pattern.permute.xlu0 2
    %1782 = vperm.xlu0 %1781, %v1325
    %v1783 = vpop.permute.xlu0 %1782
    %1785 = vset.pattern.permute.xlu0 2
    %1786 = vperm.xlu0 %1785, %v1326
    %v1787 = vpop.permute.xlu0 %1786
    %1789 = vset.pattern.permute.xlu0 2
    %1790 = vperm.xlu0 %1789, %v1327
    %v1791 = vpop.permute.xlu0 %1790
    %1793 = vset.pattern.permute.xlu0 2
    %1794 = vperm.xlu0 %1793, %v1328
    %v1795 = vpop.permute.xlu0 %1794
    %1797 = vset.pattern.permute.xlu0 2
    %1798 = vperm.xlu0 %1797, %v1329
    %v1799 = vpop.permute.xlu0 %1798
    %1801 = vset.pattern.permute.xlu0 2
    %1802 = vperm.xlu0 %1801, %v1330
    %v1803 = vpop.permute.xlu0 %1802
    %1805 = vset.pattern.permute.xlu0 2
    %1806 = vperm.xlu0 %1805, %v1331
    %v1807 = vpop.permute.xlu0 %1806
    %v1809 = vmul.f32 %v1711, %v1684
    %v1810 = vmul.f32 %v1715, %v1685
    %v1811 = vmul.f32 %v1719, %v1686
    %v1812 = vmul.f32 %v1723, %v1687
    %v1813 = vmul.f32 %v1727, %v1688
    %v1814 = vmul.f32 %v1731, %v1689
    %v1815 = vmul.f32 %v1735, %v1690
    %v1816 = vmul.f32 %v1739, %v1691
    %v1817 = vmul.f32 %v1743, %v1692
    %v1818 = vmul.f32 %v1747, %v1693
    %v1819 = vmul.f32 %v1751, %v1694
    %v1820 = vmul.f32 %v1755, %v1695
    %v1821 = vmul.f32 %v1759, %v1696
    %v1822 = vmul.f32 %v1763, %v1697
    %v1823 = vmul.f32 %v1767, %v1698
    %v1824 = vmul.f32 %v1771, %v1699
    %v1825 = vmul.f32 %v1775, %v1700
    %v1826 = vmul.f32 %v1779, %v1701
    %v1827 = vmul.f32 %v1783, %v1702
    %v1828 = vmul.f32 %v1787, %v1703
    %v1829 = vmul.f32 %v1791, %v1704
    %v1830 = vmul.f32 %v1795, %v1705
    %v1831 = vmul.f32 %v1799, %v1706
    %v1832 = vmul.f32 %v1803, %v1707
    %v1833 = vmul.f32 %v1807, %v1708
    %v1834 = vadd.f32 %v1658, %v1809
    %v1835 = vadd.f32 %v1659, %v1810
    %v1836 = vadd.f32 %v1660, %v1811
    %v1837 = vadd.f32 %v1661, %v1812
    %v1838 = vadd.f32 %v1662, %v1813
    %v1839 = vadd.f32 %v1663, %v1814
    %v1840 = vadd.f32 %v1664, %v1815
    %v1841 = vadd.f32 %v1665, %v1816
    %v1842 = vadd.f32 %v1666, %v1817
    %v1843 = vadd.f32 %v1667, %v1818
    %v1844 = vadd.f32 %v1668, %v1819
    %v1845 = vadd.f32 %v1669, %v1820
    %v1846 = vadd.f32 %v1670, %v1821
    %v1847 = vadd.f32 %v1671, %v1822
    %v1848 = vadd.f32 %v1672, %v1823
    %v1849 = vadd.f32 %v1673, %v1824
    %v1850 = vadd.f32 %v1674, %v1825
    %v1851 = vadd.f32 %v1675, %v1826
    %v1852 = vadd.f32 %v1676, %v1827
    %v1853 = vadd.f32 %v1677, %v1828
    %v1854 = vadd.f32 %v1678, %v1829
    %v1855 = vadd.f32 %v1679, %v1830
    %v1856 = vadd.f32 %v1680, %v1831
    %v1857 = vadd.f32 %v1681, %v1832
    %v1858 = vadd.f32 %v1682, %v1833
    %s1859 = scalar_lea.vmem %s6, 600
    %v1860 = vld [vmem:[%s1859] sm:$0xff]
    %v1861 = vld [vmem:[%s1859 + $0x8] sm:$0xff]
    %v1862 = vld [vmem:[%s1859 + $0x10] sm:$0xff]
    %v1863 = vld [vmem:[%s1859 + $0x18] sm:$0xff]
    %v1864 = vld [vmem:[%s1859 + $0x20] sm:$0xff]
    %v1865 = vld [vmem:[%s1859 + $0x28] sm:$0xff]
    %v1866 = vld [vmem:[%s1859 + $0x30] sm:$0xff]
    %v1867 = vld [vmem:[%s1859 + $0x38] sm:$0xff]
    %v1868 = vld [vmem:[%s1859 + $0x40] sm:$0xff]
    %v1869 = vld [vmem:[%s1859 + $0x48] sm:$0xff]
    %v1870 = vld [vmem:[%s1859 + $0x50] sm:$0xff]
    %v1871 = vld [vmem:[%s1859 + $0x58] sm:$0xff]
    %v1872 = vld [vmem:[%s1859 + $0x60] sm:$0xff]
    %v1873 = vld [vmem:[%s1859 + $0x68] sm:$0xff]
    %v1874 = vld [vmem:[%s1859 + $0x70] sm:$0xff]
    %v1875 = vld [vmem:[%s1859 + $0x78] sm:$0xff]
    %v1876 = vld [vmem:[%s1859 + $0x80] sm:$0xff]
    %v1877 = vld [vmem:[%s1859 + $0x88] sm:$0xff]
    %v1878 = vld [vmem:[%s1859 + $0x90] sm:$0xff]
    %v1879 = vld [vmem:[%s1859 + $0x98] sm:$0xff]
    %v1880 = vld [vmem:[%s1859 + $0xa0] sm:$0xff]
    %v1881 = vld [vmem:[%s1859 + $0xa8] sm:$0xff]
    %v1882 = vld [vmem:[%s1859 + $0xb0] sm:$0xff]
    %v1883 = vld [vmem:[%s1859 + $0xb8] sm:$0xff]
    %v1884 = vld [vmem:[%s1859 + $0xc0] sm:$0xf]
    %1885 = vset.pattern.permute.xlu0 3
    %1886 = vperm.xlu0 %1885, %v1307
    %v1887 = vpop.permute.xlu0 %1886
    %1889 = vset.pattern.permute.xlu0 3
    %1890 = vperm.xlu0 %1889, %v1308
    %v1891 = vpop.permute.xlu0 %1890
    %1893 = vset.pattern.permute.xlu0 3
    %1894 = vperm.xlu0 %1893, %v1309
    %v1895 = vpop.permute.xlu0 %1894
    %1897 = vset.pattern.permute.xlu0 3
    %1898 = vperm.xlu0 %1897, %v1310
    %v1899 = vpop.permute.xlu0 %1898
    %1901 = vset.pattern.permute.xlu0 3
    %1902 = vperm.xlu0 %1901, %v1311
    %v1903 = vpop.permute.xlu0 %1902
    %1905 = vset.pattern.permute.xlu0 3
    %1906 = vperm.xlu0 %1905, %v1312
    %v1907 = vpop.permute.xlu0 %1906
    %1909 = vset.pattern.permute.xlu0 3
    %1910 = vperm.xlu0 %1909, %v1313
    %v1911 = vpop.permute.xlu0 %1910
    %1913 = vset.pattern.permute.xlu0 3
    %1914 = vperm.xlu0 %1913, %v1314
    %v1915 = vpop.permute.xlu0 %1914
    %1917 = vset.pattern.permute.xlu0 3
    %1918 = vperm.xlu0 %1917, %v1315
    %v1919 = vpop.permute.xlu0 %1918
    %1921 = vset.pattern.permute.xlu0 3
    %1922 = vperm.xlu0 %1921, %v1316
    %v1923 = vpop.permute.xlu0 %1922
    %1925 = vset.pattern.permute.xlu0 3
    %1926 = vperm.xlu0 %1925, %v1317
    %v1927 = vpop.permute.xlu0 %1926
    %1929 = vset.pattern.permute.xlu0 3
    %1930 = vperm.xlu0 %1929, %v1318
    %v1931 = vpop.permute.xlu0 %1930
    %1933 = vset.pattern.permute.xlu0 3
    %1934 = vperm.xlu0 %1933, %v1319
    %v1935 = vpop.permute.xlu0 %1934
    %1937 = vset.pattern.permute.xlu0 3
    %1938 = vperm.xlu0 %1937, %v1320
    %v1939 = vpop.permute.xlu0 %1938
    %1941 = vset.pattern.permute.xlu0 3
    %1942 = vperm.xlu0 %1941, %v1321
    %v1943 = vpop.permute.xlu0 %1942
    %1945 = vset.pattern.permute.xlu0 3
    %1946 = vperm.xlu0 %1945, %v1322
    %v1947 = vpop.permute.xlu0 %1946
    %1949 = vset.pattern.permute.xlu0 3
    %1950 = vperm.xlu0 %1949, %v1323
    %v1951 = vpop.permute.xlu0 %1950
    %1953 = vset.pattern.permute.xlu0 3
    %1954 = vperm.xlu0 %1953, %v1324
    %v1955 = vpop.permute.xlu0 %1954
    %1957 = vset.pattern.permute.xlu0 3
    %1958 = vperm.xlu0 %1957, %v1325
    %v1959 = vpop.permute.xlu0 %1958
    %1961 = vset.pattern.permute.xlu0 3
    %1962 = vperm.xlu0 %1961, %v1326
    %v1963 = vpop.permute.xlu0 %1962
    %1965 = vset.pattern.permute.xlu0 3
    %1966 = vperm.xlu0 %1965, %v1327
    %v1967 = vpop.permute.xlu0 %1966
    %1969 = vset.pattern.permute.xlu0 3
    %1970 = vperm.xlu0 %1969, %v1328
    %v1971 = vpop.permute.xlu0 %1970
    %1973 = vset.pattern.permute.xlu0 3
    %1974 = vperm.xlu0 %1973, %v1329
    %v1975 = vpop.permute.xlu0 %1974
    %1977 = vset.pattern.permute.xlu0 3
    %1978 = vperm.xlu0 %1977, %v1330
    %v1979 = vpop.permute.xlu0 %1978
    %1981 = vset.pattern.permute.xlu0 3
    %1982 = vperm.xlu0 %1981, %v1331
    %v1983 = vpop.permute.xlu0 %1982
    %v1985 = vmul.f32 %v1887, %v1860
    %v1986 = vmul.f32 %v1891, %v1861
    %v1987 = vmul.f32 %v1895, %v1862
    %v1988 = vmul.f32 %v1899, %v1863
    %v1989 = vmul.f32 %v1903, %v1864
    %v1990 = vmul.f32 %v1907, %v1865
    %v1991 = vmul.f32 %v1911, %v1866
    %v1992 = vmul.f32 %v1915, %v1867
    %v1993 = vmul.f32 %v1919, %v1868
    %v1994 = vmul.f32 %v1923, %v1869
    %v1995 = vmul.f32 %v1927, %v1870
    %v1996 = vmul.f32 %v1931, %v1871
    %v1997 = vmul.f32 %v1935, %v1872
    %v1998 = vmul.f32 %v1939, %v1873
    %v1999 = vmul.f32 %v1943, %v1874
    %v2000 = vmul.f32 %v1947, %v1875
    %v2001 = vmul.f32 %v1951, %v1876
    %v2002 = vmul.f32 %v1955, %v1877
    %v2003 = vmul.f32 %v1959, %v1878
    %v2004 = vmul.f32 %v1963, %v1879
    %v2005 = vmul.f32 %v1967, %v1880
    %v2006 = vmul.f32 %v1971, %v1881
    %v2007 = vmul.f32 %v1975, %v1882
    %v2008 = vmul.f32 %v1979, %v1883
    %v2009 = vmul.f32 %v1983, %v1884
    %v2010 = vadd.f32 %v1834, %v1985
    %v2011 = vadd.f32 %v1835, %v1986
    %v2012 = vadd.f32 %v1836, %v1987
    %v2013 = vadd.f32 %v1837, %v1988
    %v2014 = vadd.f32 %v1838, %v1989
    %v2015 = vadd.f32 %v1839, %v1990
    %v2016 = vadd.f32 %v1840, %v1991
    %v2017 = vadd.f32 %v1841, %v1992
    %v2018 = vadd.f32 %v1842, %v1993
    %v2019 = vadd.f32 %v1843, %v1994
    %v2020 = vadd.f32 %v1844, %v1995
    %v2021 = vadd.f32 %v1845, %v1996
    %v2022 = vadd.f32 %v1846, %v1997
    %v2023 = vadd.f32 %v1847, %v1998
    %v2024 = vadd.f32 %v1848, %v1999
    %v2025 = vadd.f32 %v1849, %v2000
    %v2026 = vadd.f32 %v1850, %v2001
    %v2027 = vadd.f32 %v1851, %v2002
    %v2028 = vadd.f32 %v1852, %v2003
    %v2029 = vadd.f32 %v1853, %v2004
    %v2030 = vadd.f32 %v1854, %v2005
    %v2031 = vadd.f32 %v1855, %v2006
    %v2032 = vadd.f32 %v1856, %v2007
    %v2033 = vadd.f32 %v1857, %v2008
    %v2034 = vadd.f32 %v1858, %v2009
    %s2035 = scalar_lea.vmem %s6, 800
    %v2036 = vld [vmem:[%s2035] sm:$0xff]
    %v2037 = vld [vmem:[%s2035 + $0x8] sm:$0xff]
    %v2038 = vld [vmem:[%s2035 + $0x10] sm:$0xff]
    %v2039 = vld [vmem:[%s2035 + $0x18] sm:$0xff]
    %v2040 = vld [vmem:[%s2035 + $0x20] sm:$0xff]
    %v2041 = vld [vmem:[%s2035 + $0x28] sm:$0xff]
    %v2042 = vld [vmem:[%s2035 + $0x30] sm:$0xff]
    %v2043 = vld [vmem:[%s2035 + $0x38] sm:$0xff]
    %v2044 = vld [vmem:[%s2035 + $0x40] sm:$0xff]
    %v2045 = vld [vmem:[%s2035 + $0x48] sm:$0xff]
    %v2046 = vld [vmem:[%s2035 + $0x50] sm:$0xff]
    %v2047 = vld [vmem:[%s2035 + $0x58] sm:$0xff]
    %v2048 = vld [vmem:[%s2035 + $0x60] sm:$0xff]
    %v2049 = vld [vmem:[%s2035 + $0x68] sm:$0xff]
    %v2050 = vld [vmem:[%s2035 + $0x70] sm:$0xff]
    %v2051 = vld [vmem:[%s2035 + $0x78] sm:$0xff]
    %v2052 = vld [vmem:[%s2035 + $0x80] sm:$0xff]
    %v2053 = vld [vmem:[%s2035 + $0x88] sm:$0xff]
    %v2054 = vld [vmem:[%s2035 + $0x90] sm:$0xff]
    %v2055 = vld [vmem:[%s2035 + $0x98] sm:$0xff]
    %v2056 = vld [vmem:[%s2035 + $0xa0] sm:$0xff]
    %v2057 = vld [vmem:[%s2035 + $0xa8] sm:$0xff]
    %v2058 = vld [vmem:[%s2035 + $0xb0] sm:$0xff]
    %v2059 = vld [vmem:[%s2035 + $0xb8] sm:$0xff]
    %v2060 = vld [vmem:[%s2035 + $0xc0] sm:$0xf]
    %2061 = vset.pattern.permute.xlu0 4
    %2062 = vperm.xlu0 %2061, %v1307
    %v2063 = vpop.permute.xlu0 %2062
    %2065 = vset.pattern.permute.xlu0 4
    %2066 = vperm.xlu0 %2065, %v1308
    %v2067 = vpop.permute.xlu0 %2066
    %2069 = vset.pattern.permute.xlu0 4
    %2070 = vperm.xlu0 %2069, %v1309
    %v2071 = vpop.permute.xlu0 %2070
    %2073 = vset.pattern.permute.xlu0 4
    %2074 = vperm.xlu0 %2073, %v1310
    %v2075 = vpop.permute.xlu0 %2074
    %2077 = vset.pattern.permute.xlu0 4
    %2078 = vperm.xlu0 %2077, %v1311
    %v2079 = vpop.permute.xlu0 %2078
    %2081 = vset.pattern.permute.xlu0 4
    %2082 = vperm.xlu0 %2081, %v1312
    %v2083 = vpop.permute.xlu0 %2082
    %2085 = vset.pattern.permute.xlu0 4
    %2086 = vperm.xlu0 %2085, %v1313
    %v2087 = vpop.permute.xlu0 %2086
    %2089 = vset.pattern.permute.xlu0 4
    %2090 = vperm.xlu0 %2089, %v1314
    %v2091 = vpop.permute.xlu0 %2090
    %2093 = vset.pattern.permute.xlu0 4
    %2094 = vperm.xlu0 %2093, %v1315
    %v2095 = vpop.permute.xlu0 %2094
    %2097 = vset.pattern.permute.xlu0 4
    %2098 = vperm.xlu0 %2097, %v1316
    %v2099 = vpop.permute.xlu0 %2098
    %2101 = vset.pattern.permute.xlu0 4
    %2102 = vperm.xlu0 %2101, %v1317
    %v2103 = vpop.permute.xlu0 %2102
    %2105 = vset.pattern.permute.xlu0 4
    %2106 = vperm.xlu0 %2105, %v1318
    %v2107 = vpop.permute.xlu0 %2106
    %2109 = vset.pattern.permute.xlu0 4
    %2110 = vperm.xlu0 %2109, %v1319
    %v2111 = vpop.permute.xlu0 %2110
    %2113 = vset.pattern.permute.xlu0 4
    %2114 = vperm.xlu0 %2113, %v1320
    %v2115 = vpop.permute.xlu0 %2114
    %2117 = vset.pattern.permute.xlu0 4
    %2118 = vperm.xlu0 %2117, %v1321
    %v2119 = vpop.permute.xlu0 %2118
    %2121 = vset.pattern.permute.xlu0 4
    %2122 = vperm.xlu0 %2121, %v1322
    %v2123 = vpop.permute.xlu0 %2122
    %2125 = vset.pattern.permute.xlu0 4
    %2126 = vperm.xlu0 %2125, %v1323
    %v2127 = vpop.permute.xlu0 %2126
    %2129 = vset.pattern.permute.xlu0 4
    %2130 = vperm.xlu0 %2129, %v1324
    %v2131 = vpop.permute.xlu0 %2130
    %2133 = vset.pattern.permute.xlu0 4
    %2134 = vperm.xlu0 %2133, %v1325
    %v2135 = vpop.permute.xlu0 %2134
    %2137 = vset.pattern.permute.xlu0 4
    %2138 = vperm.xlu0 %2137, %v1326
    %v2139 = vpop.permute.xlu0 %2138
    %2141 = vset.pattern.permute.xlu0 4
    %2142 = vperm.xlu0 %2141, %v1327
    %v2143 = vpop.permute.xlu0 %2142
    %2145 = vset.pattern.permute.xlu0 4
    %2146 = vperm.xlu0 %2145, %v1328
    %v2147 = vpop.permute.xlu0 %2146
    %2149 = vset.pattern.permute.xlu0 4
    %2150 = vperm.xlu0 %2149, %v1329
    %v2151 = vpop.permute.xlu0 %2150
    %2153 = vset.pattern.permute.xlu0 4
    %2154 = vperm.xlu0 %2153, %v1330
    %v2155 = vpop.permute.xlu0 %2154
    %2157 = vset.pattern.permute.xlu0 4
    %2158 = vperm.xlu0 %2157, %v1331
    %v2159 = vpop.permute.xlu0 %2158
    %v2161 = vmul.f32 %v2063, %v2036
    %v2162 = vmul.f32 %v2067, %v2037
    %v2163 = vmul.f32 %v2071, %v2038
    %v2164 = vmul.f32 %v2075, %v2039
    %v2165 = vmul.f32 %v2079, %v2040
    %v2166 = vmul.f32 %v2083, %v2041
    %v2167 = vmul.f32 %v2087, %v2042
    %v2168 = vmul.f32 %v2091, %v2043
    %v2169 = vmul.f32 %v2095, %v2044
    %v2170 = vmul.f32 %v2099, %v2045
    %v2171 = vmul.f32 %v2103, %v2046
    %v2172 = vmul.f32 %v2107, %v2047
    %v2173 = vmul.f32 %v2111, %v2048
    %v2174 = vmul.f32 %v2115, %v2049
    %v2175 = vmul.f32 %v2119, %v2050
    %v2176 = vmul.f32 %v2123, %v2051
    %v2177 = vmul.f32 %v2127, %v2052
    %v2178 = vmul.f32 %v2131, %v2053
    %v2179 = vmul.f32 %v2135, %v2054
    %v2180 = vmul.f32 %v2139, %v2055
    %v2181 = vmul.f32 %v2143, %v2056
    %v2182 = vmul.f32 %v2147, %v2057
    %v2183 = vmul.f32 %v2151, %v2058
    %v2184 = vmul.f32 %v2155, %v2059
    %v2185 = vmul.f32 %v2159, %v2060
    %v2186 = vadd.f32 %v2010, %v2161
    %v2187 = vadd.f32 %v2011, %v2162
    %v2188 = vadd.f32 %v2012, %v2163
    %v2189 = vadd.f32 %v2013, %v2164
    %v2190 = vadd.f32 %v2014, %v2165
    %v2191 = vadd.f32 %v2015, %v2166
    %v2192 = vadd.f32 %v2016, %v2167
    %v2193 = vadd.f32 %v2017, %v2168
    %v2194 = vadd.f32 %v2018, %v2169
    %v2195 = vadd.f32 %v2019, %v2170
    %v2196 = vadd.f32 %v2020, %v2171
    %v2197 = vadd.f32 %v2021, %v2172
    %v2198 = vadd.f32 %v2022, %v2173
    %v2199 = vadd.f32 %v2023, %v2174
    %v2200 = vadd.f32 %v2024, %v2175
    %v2201 = vadd.f32 %v2025, %v2176
    %v2202 = vadd.f32 %v2026, %v2177
    %v2203 = vadd.f32 %v2027, %v2178
    %v2204 = vadd.f32 %v2028, %v2179
    %v2205 = vadd.f32 %v2029, %v2180
    %v2206 = vadd.f32 %v2030, %v2181
    %v2207 = vadd.f32 %v2031, %v2182
    %v2208 = vadd.f32 %v2032, %v2183
    %v2209 = vadd.f32 %v2033, %v2184
    %v2210 = vadd.f32 %v2034, %v2185
    %s2211 = scalar_lea.vmem %s6, 1000
    %v2212 = vld [vmem:[%s2211] sm:$0xff]
    %v2213 = vld [vmem:[%s2211 + $0x8] sm:$0xff]
    %v2214 = vld [vmem:[%s2211 + $0x10] sm:$0xff]
    %v2215 = vld [vmem:[%s2211 + $0x18] sm:$0xff]
    %v2216 = vld [vmem:[%s2211 + $0x20] sm:$0xff]
    %v2217 = vld [vmem:[%s2211 + $0x28] sm:$0xff]
    %v2218 = vld [vmem:[%s2211 + $0x30] sm:$0xff]
    %v2219 = vld [vmem:[%s2211 + $0x38] sm:$0xff]
    %v2220 = vld [vmem:[%s2211 + $0x40] sm:$0xff]
    %v2221 = vld [vmem:[%s2211 + $0x48] sm:$0xff]
    %v2222 = vld [vmem:[%s2211 + $0x50] sm:$0xff]
    %v2223 = vld [vmem:[%s2211 + $0x58] sm:$0xff]
    %v2224 = vld [vmem:[%s2211 + $0x60] sm:$0xff]
    %v2225 = vld [vmem:[%s2211 + $0x68] sm:$0xff]
    %v2226 = vld [vmem:[%s2211 + $0x70] sm:$0xff]
    %v2227 = vld [vmem:[%s2211 + $0x78] sm:$0xff]
    %v2228 = vld [vmem:[%s2211 + $0x80] sm:$0xff]
    %v2229 = vld [vmem:[%s2211 + $0x88] sm:$0xff]
    %v2230 = vld [vmem:[%s2211 + $0x90] sm:$0xff]
    %v2231 = vld [vmem:[%s2211 + $0x98] sm:$0xff]
    %v2232 = vld [vmem:[%s2211 + $0xa0] sm:$0xff]
    %v2233 = vld [vmem:[%s2211 + $0xa8] sm:$0xff]
    %v2234 = vld [vmem:[%s2211 + $0xb0] sm:$0xff]
    %v2235 = vld [vmem:[%s2211 + $0xb8] sm:$0xff]
    %v2236 = vld [vmem:[%s2211 + $0xc0] sm:$0xf]
    %2237 = vset.pattern.permute.xlu0 5
    %2238 = vperm.xlu0 %2237, %v1307
    %v2239 = vpop.permute.xlu0 %2238
    %2241 = vset.pattern.permute.xlu0 5
    %2242 = vperm.xlu0 %2241, %v1308
    %v2243 = vpop.permute.xlu0 %2242
    %2245 = vset.pattern.permute.xlu0 5
    %2246 = vperm.xlu0 %2245, %v1309
    %v2247 = vpop.permute.xlu0 %2246
    %2249 = vset.pattern.permute.xlu0 5
    %2250 = vperm.xlu0 %2249, %v1310
    %v2251 = vpop.permute.xlu0 %2250
    %2253 = vset.pattern.permute.xlu0 5
    %2254 = vperm.xlu0 %2253, %v1311
    %v2255 = vpop.permute.xlu0 %2254
    %2257 = vset.pattern.permute.xlu0 5
    %2258 = vperm.xlu0 %2257, %v1312
    %v2259 = vpop.permute.xlu0 %2258
    %2261 = vset.pattern.permute.xlu0 5
    %2262 = vperm.xlu0 %2261, %v1313
    %v2263 = vpop.permute.xlu0 %2262
    %2265 = vset.pattern.permute.xlu0 5
    %2266 = vperm.xlu0 %2265, %v1314
    %v2267 = vpop.permute.xlu0 %2266
    %2269 = vset.pattern.permute.xlu0 5
    %2270 = vperm.xlu0 %2269, %v1315
    %v2271 = vpop.permute.xlu0 %2270
    %2273 = vset.pattern.permute.xlu0 5
    %2274 = vperm.xlu0 %2273, %v1316
    %v2275 = vpop.permute.xlu0 %2274
    %2277 = vset.pattern.permute.xlu0 5
    %2278 = vperm.xlu0 %2277, %v1317
    %v2279 = vpop.permute.xlu0 %2278
    %2281 = vset.pattern.permute.xlu0 5
    %2282 = vperm.xlu0 %2281, %v1318
    %v2283 = vpop.permute.xlu0 %2282
    %2285 = vset.pattern.permute.xlu0 5
    %2286 = vperm.xlu0 %2285, %v1319
    %v2287 = vpop.permute.xlu0 %2286
    %2289 = vset.pattern.permute.xlu0 5
    %2290 = vperm.xlu0 %2289, %v1320
    %v2291 = vpop.permute.xlu0 %2290
    %2293 = vset.pattern.permute.xlu0 5
    %2294 = vperm.xlu0 %2293, %v1321
    %v2295 = vpop.permute.xlu0 %2294
    %2297 = vset.pattern.permute.xlu0 5
    %2298 = vperm.xlu0 %2297, %v1322
    %v2299 = vpop.permute.xlu0 %2298
    %2301 = vset.pattern.permute.xlu0 5
    %2302 = vperm.xlu0 %2301, %v1323
    %v2303 = vpop.permute.xlu0 %2302
    %2305 = vset.pattern.permute.xlu0 5
    %2306 = vperm.xlu0 %2305, %v1324
    %v2307 = vpop.permute.xlu0 %2306
    %2309 = vset.pattern.permute.xlu0 5
    %2310 = vperm.xlu0 %2309, %v1325
    %v2311 = vpop.permute.xlu0 %2310
    %2313 = vset.pattern.permute.xlu0 5
    %2314 = vperm.xlu0 %2313, %v1326
    %v2315 = vpop.permute.xlu0 %2314
    %2317 = vset.pattern.permute.xlu0 5
    %2318 = vperm.xlu0 %2317, %v1327
    %v2319 = vpop.permute.xlu0 %2318
    %2321 = vset.pattern.permute.xlu0 5
    %2322 = vperm.xlu0 %2321, %v1328
    %v2323 = vpop.permute.xlu0 %2322
    %2325 = vset.pattern.permute.xlu0 5
    %2326 = vperm.xlu0 %2325, %v1329
    %v2327 = vpop.permute.xlu0 %2326
    %2329 = vset.pattern.permute.xlu0 5
    %2330 = vperm.xlu0 %2329, %v1330
    %v2331 = vpop.permute.xlu0 %2330
    %2333 = vset.pattern.permute.xlu0 5
    %2334 = vperm.xlu0 %2333, %v1331
    %v2335 = vpop.permute.xlu0 %2334
    %v2337 = vmul.f32 %v2239, %v2212
    %v2338 = vmul.f32 %v2243, %v2213
    %v2339 = vmul.f32 %v2247, %v2214
    %v2340 = vmul.f32 %v2251, %v2215
    %v2341 = vmul.f32 %v2255, %v2216
    %v2342 = vmul.f32 %v2259, %v2217
    %v2343 = vmul.f32 %v2263, %v2218
    %v2344 = vmul.f32 %v2267, %v2219
    %v2345 = vmul.f32 %v2271, %v2220
    %v2346 = vmul.f32 %v2275, %v2221
    %v2347 = vmul.f32 %v2279, %v2222
    %v2348 = vmul.f32 %v2283, %v2223
    %v2349 = vmul.f32 %v2287, %v2224
    %v2350 = vmul.f32 %v2291, %v2225
    %v2351 = vmul.f32 %v2295, %v2226
    %v2352 = vmul.f32 %v2299, %v2227
    %v2353 = vmul.f32 %v2303, %v2228
    %v2354 = vmul.f32 %v2307, %v2229
    %v2355 = vmul.f32 %v2311, %v2230
    %v2356 = vmul.f32 %v2315, %v2231
    %v2357 = vmul.f32 %v2319, %v2232
    %v2358 = vmul.f32 %v2323, %v2233
    %v2359 = vmul.f32 %v2327, %v2234
    %v2360 = vmul.f32 %v2331, %v2235
    %v2361 = vmul.f32 %v2335, %v2236
    %v2362 = vadd.f32 %v2186, %v2337
    %v2363 = vadd.f32 %v2187, %v2338
    %v2364 = vadd.f32 %v2188, %v2339
    %v2365 = vadd.f32 %v2189, %v2340
    %v2366 = vadd.f32 %v2190, %v2341
    %v2367 = vadd.f32 %v2191, %v2342
    %v2368 = vadd.f32 %v2192, %v2343
    %v2369 = vadd.f32 %v2193, %v2344
    %v2370 = vadd.f32 %v2194, %v2345
    %v2371 = vadd.f32 %v2195, %v2346
    %v2372 = vadd.f32 %v2196, %v2347
    %v2373 = vadd.f32 %v2197, %v2348
    %v2374 = vadd.f32 %v2198, %v2349
    %v2375 = vadd.f32 %v2199, %v2350
    %v2376 = vadd.f32 %v2200, %v2351
    %v2377 = vadd.f32 %v2201, %v2352
    %v2378 = vadd.f32 %v2202, %v2353
    %v2379 = vadd.f32 %v2203, %v2354
    %v2380 = vadd.f32 %v2204, %v2355
    %v2381 = vadd.f32 %v2205, %v2356
    %v2382 = vadd.f32 %v2206, %v2357
    %v2383 = vadd.f32 %v2207, %v2358
    %v2384 = vadd.f32 %v2208, %v2359
    %v2385 = vadd.f32 %v2209, %v2360
    %v2386 = vadd.f32 %v2210, %v2361
    %s2387 = scalar_lea.vmem %s6, 1200
    %v2388 = vld [vmem:[%s2387] sm:$0xff]
    %v2389 = vld [vmem:[%s2387 + $0x8] sm:$0xff]
    %v2390 = vld [vmem:[%s2387 + $0x10] sm:$0xff]
    %v2391 = vld [vmem:[%s2387 + $0x18] sm:$0xff]
    %v2392 = vld [vmem:[%s2387 + $0x20] sm:$0xff]
    %v2393 = vld [vmem:[%s2387 + $0x28] sm:$0xff]
    %v2394 = vld [vmem:[%s2387 + $0x30] sm:$0xff]
    %v2395 = vld [vmem:[%s2387 + $0x38] sm:$0xff]
    %v2396 = vld [vmem:[%s2387 + $0x40] sm:$0xff]
    %v2397 = vld [vmem:[%s2387 + $0x48] sm:$0xff]
    %v2398 = vld [vmem:[%s2387 + $0x50] sm:$0xff]
    %v2399 = vld [vmem:[%s2387 + $0x58] sm:$0xff]
    %v2400 = vld [vmem:[%s2387 + $0x60] sm:$0xff]
    %v2401 = vld [vmem:[%s2387 + $0x68] sm:$0xff]
    %v2402 = vld [vmem:[%s2387 + $0x70] sm:$0xff]
    %v2403 = vld [vmem:[%s2387 + $0x78] sm:$0xff]
    %v2404 = vld [vmem:[%s2387 + $0x80] sm:$0xff]
    %v2405 = vld [vmem:[%s2387 + $0x88] sm:$0xff]
    %v2406 = vld [vmem:[%s2387 + $0x90] sm:$0xff]
    %v2407 = vld [vmem:[%s2387 + $0x98] sm:$0xff]
    %v2408 = vld [vmem:[%s2387 + $0xa0] sm:$0xff]
    %v2409 = vld [vmem:[%s2387 + $0xa8] sm:$0xff]
    %v2410 = vld [vmem:[%s2387 + $0xb0] sm:$0xff]
    %v2411 = vld [vmem:[%s2387 + $0xb8] sm:$0xff]
    %v2412 = vld [vmem:[%s2387 + $0xc0] sm:$0xf]
    %2413 = vset.pattern.permute.xlu0 6
    %2414 = vperm.xlu0 %2413, %v1307
    %v2415 = vpop.permute.xlu0 %2414
    %2417 = vset.pattern.permute.xlu0 6
    %2418 = vperm.xlu0 %2417, %v1308
    %v2419 = vpop.permute.xlu0 %2418
    %2421 = vset.pattern.permute.xlu0 6
    %2422 = vperm.xlu0 %2421, %v1309
    %v2423 = vpop.permute.xlu0 %2422
    %2425 = vset.pattern.permute.xlu0 6
    %2426 = vperm.xlu0 %2425, %v1310
    %v2427 = vpop.permute.xlu0 %2426
    %2429 = vset.pattern.permute.xlu0 6
    %2430 = vperm.xlu0 %2429, %v1311
    %v2431 = vpop.permute.xlu0 %2430
    %2433 = vset.pattern.permute.xlu0 6
    %2434 = vperm.xlu0 %2433, %v1312
    %v2435 = vpop.permute.xlu0 %2434
    %2437 = vset.pattern.permute.xlu0 6
    %2438 = vperm.xlu0 %2437, %v1313
    %v2439 = vpop.permute.xlu0 %2438
    %2441 = vset.pattern.permute.xlu0 6
    %2442 = vperm.xlu0 %2441, %v1314
    %v2443 = vpop.permute.xlu0 %2442
    %2445 = vset.pattern.permute.xlu0 6
    %2446 = vperm.xlu0 %2445, %v1315
    %v2447 = vpop.permute.xlu0 %2446
    %2449 = vset.pattern.permute.xlu0 6
    %2450 = vperm.xlu0 %2449, %v1316
    %v2451 = vpop.permute.xlu0 %2450
    %2453 = vset.pattern.permute.xlu0 6
    %2454 = vperm.xlu0 %2453, %v1317
    %v2455 = vpop.permute.xlu0 %2454
    %2457 = vset.pattern.permute.xlu0 6
    %2458 = vperm.xlu0 %2457, %v1318
    %v2459 = vpop.permute.xlu0 %2458
    %2461 = vset.pattern.permute.xlu0 6
    %2462 = vperm.xlu0 %2461, %v1319
    %v2463 = vpop.permute.xlu0 %2462
    %2465 = vset.pattern.permute.xlu0 6
    %2466 = vperm.xlu0 %2465, %v1320
    %v2467 = vpop.permute.xlu0 %2466
    %2469 = vset.pattern.permute.xlu0 6
    %2470 = vperm.xlu0 %2469, %v1321
    %v2471 = vpop.permute.xlu0 %2470
    %2473 = vset.pattern.permute.xlu0 6
    %2474 = vperm.xlu0 %2473, %v1322
    %v2475 = vpop.permute.xlu0 %2474
    %2477 = vset.pattern.permute.xlu0 6
    %2478 = vperm.xlu0 %2477, %v1323
    %v2479 = vpop.permute.xlu0 %2478
    %2481 = vset.pattern.permute.xlu0 6
    %2482 = vperm.xlu0 %2481, %v1324
    %v2483 = vpop.permute.xlu0 %2482
    %2485 = vset.pattern.permute.xlu0 6
    %2486 = vperm.xlu0 %2485, %v1325
    %v2487 = vpop.permute.xlu0 %2486
    %2489 = vset.pattern.permute.xlu0 6
    %2490 = vperm.xlu0 %2489, %v1326
    %v2491 = vpop.permute.xlu0 %2490
    %2493 = vset.pattern.permute.xlu0 6
    %2494 = vperm.xlu0 %2493, %v1327
    %v2495 = vpop.permute.xlu0 %2494
    %2497 = vset.pattern.permute.xlu0 6
    %2498 = vperm.xlu0 %2497, %v1328
    %v2499 = vpop.permute.xlu0 %2498
    %2501 = vset.pattern.permute.xlu0 6
    %2502 = vperm.xlu0 %2501, %v1329
    %v2503 = vpop.permute.xlu0 %2502
    %2505 = vset.pattern.permute.xlu0 6
    %2506 = vperm.xlu0 %2505, %v1330
    %v2507 = vpop.permute.xlu0 %2506
    %2509 = vset.pattern.permute.xlu0 6
    %2510 = vperm.xlu0 %2509, %v1331
    %v2511 = vpop.permute.xlu0 %2510
    %v2513 = vmul.f32 %v2415, %v2388
    %v2514 = vmul.f32 %v2419, %v2389
    %v2515 = vmul.f32 %v2423, %v2390
    %v2516 = vmul.f32 %v2427, %v2391
    %v2517 = vmul.f32 %v2431, %v2392
    %v2518 = vmul.f32 %v2435, %v2393
    %v2519 = vmul.f32 %v2439, %v2394
    %v2520 = vmul.f32 %v2443, %v2395
    %v2521 = vmul.f32 %v2447, %v2396
    %v2522 = vmul.f32 %v2451, %v2397
    %v2523 = vmul.f32 %v2455, %v2398
    %v2524 = vmul.f32 %v2459, %v2399
    %v2525 = vmul.f32 %v2463, %v2400
    %v2526 = vmul.f32 %v2467, %v2401
    %v2527 = vmul.f32 %v2471, %v2402
    %v2528 = vmul.f32 %v2475, %v2403
    %v2529 = vmul.f32 %v2479, %v2404
    %v2530 = vmul.f32 %v2483, %v2405
    %v2531 = vmul.f32 %v2487, %v2406
    %v2532 = vmul.f32 %v2491, %v2407
    %v2533 = vmul.f32 %v2495, %v2408
    %v2534 = vmul.f32 %v2499, %v2409
    %v2535 = vmul.f32 %v2503, %v2410
    %v2536 = vmul.f32 %v2507, %v2411
    %v2537 = vmul.f32 %v2511, %v2412
    %v2538 = vadd.f32 %v2362, %v2513
    %v2539 = vadd.f32 %v2363, %v2514
    %v2540 = vadd.f32 %v2364, %v2515
    %v2541 = vadd.f32 %v2365, %v2516
    %v2542 = vadd.f32 %v2366, %v2517
    %v2543 = vadd.f32 %v2367, %v2518
    %v2544 = vadd.f32 %v2368, %v2519
    %v2545 = vadd.f32 %v2369, %v2520
    %v2546 = vadd.f32 %v2370, %v2521
    %v2547 = vadd.f32 %v2371, %v2522
    %v2548 = vadd.f32 %v2372, %v2523
    %v2549 = vadd.f32 %v2373, %v2524
    %v2550 = vadd.f32 %v2374, %v2525
    %v2551 = vadd.f32 %v2375, %v2526
    %v2552 = vadd.f32 %v2376, %v2527
    %v2553 = vadd.f32 %v2377, %v2528
    %v2554 = vadd.f32 %v2378, %v2529
    %v2555 = vadd.f32 %v2379, %v2530
    %v2556 = vadd.f32 %v2380, %v2531
    %v2557 = vadd.f32 %v2381, %v2532
    %v2558 = vadd.f32 %v2382, %v2533
    %v2559 = vadd.f32 %v2383, %v2534
    %v2560 = vadd.f32 %v2384, %v2535
    %v2561 = vadd.f32 %v2385, %v2536
    %v2562 = vadd.f32 %v2386, %v2537
    %s2563 = scalar_lea.vmem %s6, 1400
    %v2564 = vld [vmem:[%s2563] sm:$0xff]
    %v2565 = vld [vmem:[%s2563 + $0x8] sm:$0xff]
    %v2566 = vld [vmem:[%s2563 + $0x10] sm:$0xff]
    %v2567 = vld [vmem:[%s2563 + $0x18] sm:$0xff]
    %v2568 = vld [vmem:[%s2563 + $0x20] sm:$0xff]
    %v2569 = vld [vmem:[%s2563 + $0x28] sm:$0xff]
    %v2570 = vld [vmem:[%s2563 + $0x30] sm:$0xff]
    %v2571 = vld [vmem:[%s2563 + $0x38] sm:$0xff]
    %v2572 = vld [vmem:[%s2563 + $0x40] sm:$0xff]
    %v2573 = vld [vmem:[%s2563 + $0x48] sm:$0xff]
    %v2574 = vld [vmem:[%s2563 + $0x50] sm:$0xff]
    %v2575 = vld [vmem:[%s2563 + $0x58] sm:$0xff]
    %v2576 = vld [vmem:[%s2563 + $0x60] sm:$0xff]
    %v2577 = vld [vmem:[%s2563 + $0x68] sm:$0xff]
    %v2578 = vld [vmem:[%s2563 + $0x70] sm:$0xff]
    %v2579 = vld [vmem:[%s2563 + $0x78] sm:$0xff]
    %v2580 = vld [vmem:[%s2563 + $0x80] sm:$0xff]
    %v2581 = vld [vmem:[%s2563 + $0x88] sm:$0xff]
    %v2582 = vld [vmem:[%s2563 + $0x90] sm:$0xff]
    %v2583 = vld [vmem:[%s2563 + $0x98] sm:$0xff]
    %v2584 = vld [vmem:[%s2563 + $0xa0] sm:$0xff]
    %v2585 = vld [vmem:[%s2563 + $0xa8] sm:$0xff]
    %v2586 = vld [vmem:[%s2563 + $0xb0] sm:$0xff]
    %v2587 = vld [vmem:[%s2563 + $0xb8] sm:$0xff]
    %v2588 = vld [vmem:[%s2563 + $0xc0] sm:$0xf]
    %2589 = vset.pattern.permute.xlu0 7
    %2590 = vperm.xlu0 %2589, %v1307
    %v2591 = vpop.permute.xlu0 %2590
    %2593 = vset.pattern.permute.xlu0 7
    %2594 = vperm.xlu0 %2593, %v1308
    %v2595 = vpop.permute.xlu0 %2594
    %2597 = vset.pattern.permute.xlu0 7
    %2598 = vperm.xlu0 %2597, %v1309
    %v2599 = vpop.permute.xlu0 %2598
    %2601 = vset.pattern.permute.xlu0 7
    %2602 = vperm.xlu0 %2601, %v1310
    %v2603 = vpop.permute.xlu0 %2602
    %2605 = vset.pattern.permute.xlu0 7
    %2606 = vperm.xlu0 %2605, %v1311
    %v2607 = vpop.permute.xlu0 %2606
    %2609 = vset.pattern.permute.xlu0 7
    %2610 = vperm.xlu0 %2609, %v1312
    %v2611 = vpop.permute.xlu0 %2610
    %2613 = vset.pattern.permute.xlu0 7
    %2614 = vperm.xlu0 %2613, %v1313
    %v2615 = vpop.permute.xlu0 %2614
    %2617 = vset.pattern.permute.xlu0 7
    %2618 = vperm.xlu0 %2617, %v1314
    %v2619 = vpop.permute.xlu0 %2618
    %2621 = vset.pattern.permute.xlu0 7
    %2622 = vperm.xlu0 %2621, %v1315
    %v2623 = vpop.permute.xlu0 %2622
    %2625 = vset.pattern.permute.xlu0 7
    %2626 = vperm.xlu0 %2625, %v1316
    %v2627 = vpop.permute.xlu0 %2626
    %2629 = vset.pattern.permute.xlu0 7
    %2630 = vperm.xlu0 %2629, %v1317
    %v2631 = vpop.permute.xlu0 %2630
    %2633 = vset.pattern.permute.xlu0 7
    %2634 = vperm.xlu0 %2633, %v1318
    %v2635 = vpop.permute.xlu0 %2634
    %2637 = vset.pattern.permute.xlu0 7
    %2638 = vperm.xlu0 %2637, %v1319
    %v2639 = vpop.permute.xlu0 %2638
    %2641 = vset.pattern.permute.xlu0 7
    %2642 = vperm.xlu0 %2641, %v1320
    %v2643 = vpop.permute.xlu0 %2642
    %2645 = vset.pattern.permute.xlu0 7
    %2646 = vperm.xlu0 %2645, %v1321
    %v2647 = vpop.permute.xlu0 %2646
    %2649 = vset.pattern.permute.xlu0 7
    %2650 = vperm.xlu0 %2649, %v1322
    %v2651 = vpop.permute.xlu0 %2650
    %2653 = vset.pattern.permute.xlu0 7
    %2654 = vperm.xlu0 %2653, %v1323
    %v2655 = vpop.permute.xlu0 %2654
    %2657 = vset.pattern.permute.xlu0 7
    %2658 = vperm.xlu0 %2657, %v1324
    %v2659 = vpop.permute.xlu0 %2658
    %2661 = vset.pattern.permute.xlu0 7
    %2662 = vperm.xlu0 %2661, %v1325
    %v2663 = vpop.permute.xlu0 %2662
    %2665 = vset.pattern.permute.xlu0 7
    %2666 = vperm.xlu0 %2665, %v1326
    %v2667 = vpop.permute.xlu0 %2666
    %2669 = vset.pattern.permute.xlu0 7
    %2670 = vperm.xlu0 %2669, %v1327
    %v2671 = vpop.permute.xlu0 %2670
    %2673 = vset.pattern.permute.xlu0 7
    %2674 = vperm.xlu0 %2673, %v1328
    %v2675 = vpop.permute.xlu0 %2674
    %2677 = vset.pattern.permute.xlu0 7
    %2678 = vperm.xlu0 %2677, %v1329
    %v2679 = vpop.permute.xlu0 %2678
    %2681 = vset.pattern.permute.xlu0 7
    %2682 = vperm.xlu0 %2681, %v1330
    %v2683 = vpop.permute.xlu0 %2682
    %2685 = vset.pattern.permute.xlu0 7
    %2686 = vperm.xlu0 %2685, %v1331
    %v2687 = vpop.permute.xlu0 %2686
    %v2689 = vmul.f32 %v2591, %v2564
    %v2690 = vmul.f32 %v2595, %v2565
    %v2691 = vmul.f32 %v2599, %v2566
    %v2692 = vmul.f32 %v2603, %v2567
    %v2693 = vmul.f32 %v2607, %v2568
    %v2694 = vmul.f32 %v2611, %v2569
    %v2695 = vmul.f32 %v2615, %v2570
    %v2696 = vmul.f32 %v2619, %v2571
    %v2697 = vmul.f32 %v2623, %v2572
    %v2698 = vmul.f32 %v2627, %v2573
    %v2699 = vmul.f32 %v2631, %v2574
    %v2700 = vmul.f32 %v2635, %v2575
    %v2701 = vmul.f32 %v2639, %v2576
    %v2702 = vmul.f32 %v2643, %v2577
    %v2703 = vmul.f32 %v2647, %v2578
    %v2704 = vmul.f32 %v2651, %v2579
    %v2705 = vmul.f32 %v2655, %v2580
    %v2706 = vmul.f32 %v2659, %v2581
    %v2707 = vmul.f32 %v2663, %v2582
    %v2708 = vmul.f32 %v2667, %v2583
    %v2709 = vmul.f32 %v2671, %v2584
    %v2710 = vmul.f32 %v2675, %v2585
    %v2711 = vmul.f32 %v2679, %v2586
    %v2712 = vmul.f32 %v2683, %v2587
    %v2713 = vmul.f32 %v2687, %v2588
    %v2714 = vadd.f32 %v2538, %v2689
    %v2715 = vadd.f32 %v2539, %v2690
    %v2716 = vadd.f32 %v2540, %v2691
    %v2717 = vadd.f32 %v2541, %v2692
    %v2718 = vadd.f32 %v2542, %v2693
    %v2719 = vadd.f32 %v2543, %v2694
    %v2720 = vadd.f32 %v2544, %v2695
    %v2721 = vadd.f32 %v2545, %v2696
    %v2722 = vadd.f32 %v2546, %v2697
    %v2723 = vadd.f32 %v2547, %v2698
    %v2724 = vadd.f32 %v2548, %v2699
    %v2725 = vadd.f32 %v2549, %v2700
    %v2726 = vadd.f32 %v2550, %v2701
    %v2727 = vadd.f32 %v2551, %v2702
    %v2728 = vadd.f32 %v2552, %v2703
    %v2729 = vadd.f32 %v2553, %v2704
    %v2730 = vadd.f32 %v2554, %v2705
    %v2731 = vadd.f32 %v2555, %v2706
    %v2732 = vadd.f32 %v2556, %v2707
    %v2733 = vadd.f32 %v2557, %v2708
    %v2734 = vadd.f32 %v2558, %v2709
    %v2735 = vadd.f32 %v2559, %v2710
    %v2736 = vadd.f32 %v2560, %v2711
    %v2737 = vadd.f32 %v2561, %v2712
    %v2738 = vadd.f32 %v2562, %v2713
    %s2739 = scalar_lea.vmem %s6, 1600
    %v2740 = vld [vmem:[%s2739] sm:$0xff]
    %v2741 = vld [vmem:[%s2739 + $0x8] sm:$0xff]
    %v2742 = vld [vmem:[%s2739 + $0x10] sm:$0xff]
    %v2743 = vld [vmem:[%s2739 + $0x18] sm:$0xff]
    %v2744 = vld [vmem:[%s2739 + $0x20] sm:$0xff]
    %v2745 = vld [vmem:[%s2739 + $0x28] sm:$0xff]
    %v2746 = vld [vmem:[%s2739 + $0x30] sm:$0xff]
    %v2747 = vld [vmem:[%s2739 + $0x38] sm:$0xff]
    %v2748 = vld [vmem:[%s2739 + $0x40] sm:$0xff]
    %v2749 = vld [vmem:[%s2739 + $0x48] sm:$0xff]
    %v2750 = vld [vmem:[%s2739 + $0x50] sm:$0xff]
    %v2751 = vld [vmem:[%s2739 + $0x58] sm:$0xff]
    %v2752 = vld [vmem:[%s2739 + $0x60] sm:$0xff]
    %v2753 = vld [vmem:[%s2739 + $0x68] sm:$0xff]
    %v2754 = vld [vmem:[%s2739 + $0x70] sm:$0xff]
    %v2755 = vld [vmem:[%s2739 + $0x78] sm:$0xff]
    %v2756 = vld [vmem:[%s2739 + $0x80] sm:$0xff]
    %v2757 = vld [vmem:[%s2739 + $0x88] sm:$0xff]
    %v2758 = vld [vmem:[%s2739 + $0x90] sm:$0xff]
    %v2759 = vld [vmem:[%s2739 + $0x98] sm:$0xff]
    %v2760 = vld [vmem:[%s2739 + $0xa0] sm:$0xff]
    %v2761 = vld [vmem:[%s2739 + $0xa8] sm:$0xff]
    %v2762 = vld [vmem:[%s2739 + $0xb0] sm:$0xff]
    %v2763 = vld [vmem:[%s2739 + $0xb8] sm:$0xff]
    %v2764 = vld [vmem:[%s2739 + $0xc0] sm:$0xf]
    %2765 = vset.pattern.permute.xlu0 8
    %2766 = vperm.xlu0 %2765, %v1307
    %v2767 = vpop.permute.xlu0 %2766
    %2769 = vset.pattern.permute.xlu0 8
    %2770 = vperm.xlu0 %2769, %v1308
    %v2771 = vpop.permute.xlu0 %2770
    %2773 = vset.pattern.permute.xlu0 8
    %2774 = vperm.xlu0 %2773, %v1309
    %v2775 = vpop.permute.xlu0 %2774
    %2777 = vset.pattern.permute.xlu0 8
    %2778 = vperm.xlu0 %2777, %v1310
    %v2779 = vpop.permute.xlu0 %2778
    %2781 = vset.pattern.permute.xlu0 8
    %2782 = vperm.xlu0 %2781, %v1311
    %v2783 = vpop.permute.xlu0 %2782
    %2785 = vset.pattern.permute.xlu0 8
    %2786 = vperm.xlu0 %2785, %v1312
    %v2787 = vpop.permute.xlu0 %2786
    %2789 = vset.pattern.permute.xlu0 8
    %2790 = vperm.xlu0 %2789, %v1313
    %v2791 = vpop.permute.xlu0 %2790
    %2793 = vset.pattern.permute.xlu0 8
    %2794 = vperm.xlu0 %2793, %v1314
    %v2795 = vpop.permute.xlu0 %2794
    %2797 = vset.pattern.permute.xlu0 8
    %2798 = vperm.xlu0 %2797, %v1315
    %v2799 = vpop.permute.xlu0 %2798
    %2801 = vset.pattern.permute.xlu0 8
    %2802 = vperm.xlu0 %2801, %v1316
    %v2803 = vpop.permute.xlu0 %2802
    %2805 = vset.pattern.permute.xlu0 8
    %2806 = vperm.xlu0 %2805, %v1317
    %v2807 = vpop.permute.xlu0 %2806
    %2809 = vset.pattern.permute.xlu0 8
    %2810 = vperm.xlu0 %2809, %v1318
    %v2811 = vpop.permute.xlu0 %2810
    %2813 = vset.pattern.permute.xlu0 8
    %2814 = vperm.xlu0 %2813, %v1319
    %v2815 = vpop.permute.xlu0 %2814
    %2817 = vset.pattern.permute.xlu0 8
    %2818 = vperm.xlu0 %2817, %v1320
    %v2819 = vpop.permute.xlu0 %2818
    %2821 = vset.pattern.permute.xlu0 8
    %2822 = vperm.xlu0 %2821, %v1321
    %v2823 = vpop.permute.xlu0 %2822
    %2825 = vset.pattern.permute.xlu0 8
    %2826 = vperm.xlu0 %2825, %v1322
    %v2827 = vpop.permute.xlu0 %2826
    %2829 = vset.pattern.permute.xlu0 8
    %2830 = vperm.xlu0 %2829, %v1323
    %v2831 = vpop.permute.xlu0 %2830
    %2833 = vset.pattern.permute.xlu0 8
    %2834 = vperm.xlu0 %2833, %v1324
    %v2835 = vpop.permute.xlu0 %2834
    %2837 = vset.pattern.permute.xlu0 8
    %2838 = vperm.xlu0 %2837, %v1325
    %v2839 = vpop.permute.xlu0 %2838
    %2841 = vset.pattern.permute.xlu0 8
    %2842 = vperm.xlu0 %2841, %v1326
    %v2843 = vpop.permute.xlu0 %2842
    %2845 = vset.pattern.permute.xlu0 8
    %2846 = vperm.xlu0 %2845, %v1327
    %v2847 = vpop.permute.xlu0 %2846
    %2849 = vset.pattern.permute.xlu0 8
    %2850 = vperm.xlu0 %2849, %v1328
    %v2851 = vpop.permute.xlu0 %2850
    %2853 = vset.pattern.permute.xlu0 8
    %2854 = vperm.xlu0 %2853, %v1329
    %v2855 = vpop.permute.xlu0 %2854
    %2857 = vset.pattern.permute.xlu0 8
    %2858 = vperm.xlu0 %2857, %v1330
    %v2859 = vpop.permute.xlu0 %2858
    %2861 = vset.pattern.permute.xlu0 8
    %2862 = vperm.xlu0 %2861, %v1331
    %v2863 = vpop.permute.xlu0 %2862
    %v2865 = vmul.f32 %v2767, %v2740
    %v2866 = vmul.f32 %v2771, %v2741
    %v2867 = vmul.f32 %v2775, %v2742
    %v2868 = vmul.f32 %v2779, %v2743
    %v2869 = vmul.f32 %v2783, %v2744
    %v2870 = vmul.f32 %v2787, %v2745
    %v2871 = vmul.f32 %v2791, %v2746
    %v2872 = vmul.f32 %v2795, %v2747
    %v2873 = vmul.f32 %v2799, %v2748
    %v2874 = vmul.f32 %v2803, %v2749
    %v2875 = vmul.f32 %v2807, %v2750
    %v2876 = vmul.f32 %v2811, %v2751
    %v2877 = vmul.f32 %v2815, %v2752
    %v2878 = vmul.f32 %v2819, %v2753
    %v2879 = vmul.f32 %v2823, %v2754
    %v2880 = vmul.f32 %v2827, %v2755
    %v2881 = vmul.f32 %v2831, %v2756
    %v2882 = vmul.f32 %v2835, %v2757
    %v2883 = vmul.f32 %v2839, %v2758
    %v2884 = vmul.f32 %v2843, %v2759
    %v2885 = vmul.f32 %v2847, %v2760
    %v2886 = vmul.f32 %v2851, %v2761
    %v2887 = vmul.f32 %v2855, %v2762
    %v2888 = vmul.f32 %v2859, %v2763
    %v2889 = vmul.f32 %v2863, %v2764
    %v2890 = vadd.f32 %v2714, %v2865
    %v2891 = vadd.f32 %v2715, %v2866
    %v2892 = vadd.f32 %v2716, %v2867
    %v2893 = vadd.f32 %v2717, %v2868
    %v2894 = vadd.f32 %v2718, %v2869
    %v2895 = vadd.f32 %v2719, %v2870
    %v2896 = vadd.f32 %v2720, %v2871
    %v2897 = vadd.f32 %v2721, %v2872
    %v2898 = vadd.f32 %v2722, %v2873
    %v2899 = vadd.f32 %v2723, %v2874
    %v2900 = vadd.f32 %v2724, %v2875
    %v2901 = vadd.f32 %v2725, %v2876
    %v2902 = vadd.f32 %v2726, %v2877
    %v2903 = vadd.f32 %v2727, %v2878
    %v2904 = vadd.f32 %v2728, %v2879
    %v2905 = vadd.f32 %v2729, %v2880
    %v2906 = vadd.f32 %v2730, %v2881
    %v2907 = vadd.f32 %v2731, %v2882
    %v2908 = vadd.f32 %v2732, %v2883
    %v2909 = vadd.f32 %v2733, %v2884
    %v2910 = vadd.f32 %v2734, %v2885
    %v2911 = vadd.f32 %v2735, %v2886
    %v2912 = vadd.f32 %v2736, %v2887
    %v2913 = vadd.f32 %v2737, %v2888
    %v2914 = vadd.f32 %v2738, %v2889
    %s2915 = scalar_lea.vmem %s6, 1800
    %v2916 = vld [vmem:[%s2915] sm:$0xff]
    %v2917 = vld [vmem:[%s2915 + $0x8] sm:$0xff]
    %v2918 = vld [vmem:[%s2915 + $0x10] sm:$0xff]
    %v2919 = vld [vmem:[%s2915 + $0x18] sm:$0xff]
    %v2920 = vld [vmem:[%s2915 + $0x20] sm:$0xff]
    %v2921 = vld [vmem:[%s2915 + $0x28] sm:$0xff]
    %v2922 = vld [vmem:[%s2915 + $0x30] sm:$0xff]
    %v2923 = vld [vmem:[%s2915 + $0x38] sm:$0xff]
    %v2924 = vld [vmem:[%s2915 + $0x40] sm:$0xff]
    %v2925 = vld [vmem:[%s2915 + $0x48] sm:$0xff]
    %v2926 = vld [vmem:[%s2915 + $0x50] sm:$0xff]
    %v2927 = vld [vmem:[%s2915 + $0x58] sm:$0xff]
    %v2928 = vld [vmem:[%s2915 + $0x60] sm:$0xff]
    %v2929 = vld [vmem:[%s2915 + $0x68] sm:$0xff]
    %v2930 = vld [vmem:[%s2915 + $0x70] sm:$0xff]
    %v2931 = vld [vmem:[%s2915 + $0x78] sm:$0xff]
    %v2932 = vld [vmem:[%s2915 + $0x80] sm:$0xff]
    %v2933 = vld [vmem:[%s2915 + $0x88] sm:$0xff]
    %v2934 = vld [vmem:[%s2915 + $0x90] sm:$0xff]
    %v2935 = vld [vmem:[%s2915 + $0x98] sm:$0xff]
    %v2936 = vld [vmem:[%s2915 + $0xa0] sm:$0xff]
    %v2937 = vld [vmem:[%s2915 + $0xa8] sm:$0xff]
    %v2938 = vld [vmem:[%s2915 + $0xb0] sm:$0xff]
    %v2939 = vld [vmem:[%s2915 + $0xb8] sm:$0xff]
    %v2940 = vld [vmem:[%s2915 + $0xc0] sm:$0xf]
    %2941 = vset.pattern.permute.xlu0 9
    %2942 = vperm.xlu0 %2941, %v1307
    %v2943 = vpop.permute.xlu0 %2942
    %2945 = vset.pattern.permute.xlu0 9
    %2946 = vperm.xlu0 %2945, %v1308
    %v2947 = vpop.permute.xlu0 %2946
    %2949 = vset.pattern.permute.xlu0 9
    %2950 = vperm.xlu0 %2949, %v1309
    %v2951 = vpop.permute.xlu0 %2950
    %2953 = vset.pattern.permute.xlu0 9
    %2954 = vperm.xlu0 %2953, %v1310
    %v2955 = vpop.permute.xlu0 %2954
    %2957 = vset.pattern.permute.xlu0 9
    %2958 = vperm.xlu0 %2957, %v1311
    %v2959 = vpop.permute.xlu0 %2958
    %2961 = vset.pattern.permute.xlu0 9
    %2962 = vperm.xlu0 %2961, %v1312
    %v2963 = vpop.permute.xlu0 %2962
    %2965 = vset.pattern.permute.xlu0 9
    %2966 = vperm.xlu0 %2965, %v1313
    %v2967 = vpop.permute.xlu0 %2966
    %2969 = vset.pattern.permute.xlu0 9
    %2970 = vperm.xlu0 %2969, %v1314
    %v2971 = vpop.permute.xlu0 %2970
    %2973 = vset.pattern.permute.xlu0 9
    %2974 = vperm.xlu0 %2973, %v1315
    %v2975 = vpop.permute.xlu0 %2974
    %2977 = vset.pattern.permute.xlu0 9
    %2978 = vperm.xlu0 %2977, %v1316
    %v2979 = vpop.permute.xlu0 %2978
    %2981 = vset.pattern.permute.xlu0 9
    %2982 = vperm.xlu0 %2981, %v1317
    %v2983 = vpop.permute.xlu0 %2982
    %2985 = vset.pattern.permute.xlu0 9
    %2986 = vperm.xlu0 %2985, %v1318
    %v2987 = vpop.permute.xlu0 %2986
    %2989 = vset.pattern.permute.xlu0 9
    %2990 = vperm.xlu0 %2989, %v1319
    %v2991 = vpop.permute.xlu0 %2990
    %2993 = vset.pattern.permute.xlu0 9
    %2994 = vperm.xlu0 %2993, %v1320
    %v2995 = vpop.permute.xlu0 %2994
    %2997 = vset.pattern.permute.xlu0 9
    %2998 = vperm.xlu0 %2997, %v1321
    %v2999 = vpop.permute.xlu0 %2998
    %3001 = vset.pattern.permute.xlu0 9
    %3002 = vperm.xlu0 %3001, %v1322
    %v3003 = vpop.permute.xlu0 %3002
    %3005 = vset.pattern.permute.xlu0 9
    %3006 = vperm.xlu0 %3005, %v1323
    %v3007 = vpop.permute.xlu0 %3006
    %3009 = vset.pattern.permute.xlu0 9
    %3010 = vperm.xlu0 %3009, %v1324
    %v3011 = vpop.permute.xlu0 %3010
    %3013 = vset.pattern.permute.xlu0 9
    %3014 = vperm.xlu0 %3013, %v1325
    %v3015 = vpop.permute.xlu0 %3014
    %3017 = vset.pattern.permute.xlu0 9
    %3018 = vperm.xlu0 %3017, %v1326
    %v3019 = vpop.permute.xlu0 %3018
    %3021 = vset.pattern.permute.xlu0 9
    %3022 = vperm.xlu0 %3021, %v1327
    %v3023 = vpop.permute.xlu0 %3022
    %3025 = vset.pattern.permute.xlu0 9
    %3026 = vperm.xlu0 %3025, %v1328
    %v3027 = vpop.permute.xlu0 %3026
    %3029 = vset.pattern.permute.xlu0 9
    %3030 = vperm.xlu0 %3029, %v1329
    %v3031 = vpop.permute.xlu0 %3030
    %3033 = vset.pattern.permute.xlu0 9
    %3034 = vperm.xlu0 %3033, %v1330
    %v3035 = vpop.permute.xlu0 %3034
    %3037 = vset.pattern.permute.xlu0 9
    %3038 = vperm.xlu0 %3037, %v1331
    %v3039 = vpop.permute.xlu0 %3038
    %v3041 = vmul.f32 %v2943, %v2916
    %v3042 = vmul.f32 %v2947, %v2917
    %v3043 = vmul.f32 %v2951, %v2918
    %v3044 = vmul.f32 %v2955, %v2919
    %v3045 = vmul.f32 %v2959, %v2920
    %v3046 = vmul.f32 %v2963, %v2921
    %v3047 = vmul.f32 %v2967, %v2922
    %v3048 = vmul.f32 %v2971, %v2923
    %v3049 = vmul.f32 %v2975, %v2924
    %v3050 = vmul.f32 %v2979, %v2925
    %v3051 = vmul.f32 %v2983, %v2926
    %v3052 = vmul.f32 %v2987, %v2927
    %v3053 = vmul.f32 %v2991, %v2928
    %v3054 = vmul.f32 %v2995, %v2929
    %v3055 = vmul.f32 %v2999, %v2930
    %v3056 = vmul.f32 %v3003, %v2931
    %v3057 = vmul.f32 %v3007, %v2932
    %v3058 = vmul.f32 %v3011, %v2933
    %v3059 = vmul.f32 %v3015, %v2934
    %v3060 = vmul.f32 %v3019, %v2935
    %v3061 = vmul.f32 %v3023, %v2936
    %v3062 = vmul.f32 %v3027, %v2937
    %v3063 = vmul.f32 %v3031, %v2938
    %v3064 = vmul.f32 %v3035, %v2939
    %v3065 = vmul.f32 %v3039, %v2940
    %v3066 = vadd.f32 %v2890, %v3041
    %v3067 = vadd.f32 %v2891, %v3042
    %v3068 = vadd.f32 %v2892, %v3043
    %v3069 = vadd.f32 %v2893, %v3044
    %v3070 = vadd.f32 %v2894, %v3045
    %v3071 = vadd.f32 %v2895, %v3046
    %v3072 = vadd.f32 %v2896, %v3047
    %v3073 = vadd.f32 %v2897, %v3048
    %v3074 = vadd.f32 %v2898, %v3049
    %v3075 = vadd.f32 %v2899, %v3050
    %v3076 = vadd.f32 %v2900, %v3051
    %v3077 = vadd.f32 %v2901, %v3052
    %v3078 = vadd.f32 %v2902, %v3053
    %v3079 = vadd.f32 %v2903, %v3054
    %v3080 = vadd.f32 %v2904, %v3055
    %v3081 = vadd.f32 %v2905, %v3056
    %v3082 = vadd.f32 %v2906, %v3057
    %v3083 = vadd.f32 %v2907, %v3058
    %v3084 = vadd.f32 %v2908, %v3059
    %v3085 = vadd.f32 %v2909, %v3060
    %v3086 = vadd.f32 %v2910, %v3061
    %v3087 = vadd.f32 %v2911, %v3062
    %v3088 = vadd.f32 %v2912, %v3063
    %v3089 = vadd.f32 %v2913, %v3064
    %v3090 = vadd.f32 %v2914, %v3065
    %s3091 = scalar_lea.vmem %s6, 2000
    %v3092 = vld [vmem:[%s3091] sm:$0xff]
    %v3093 = vld [vmem:[%s3091 + $0x8] sm:$0xff]
    %v3094 = vld [vmem:[%s3091 + $0x10] sm:$0xff]
    %v3095 = vld [vmem:[%s3091 + $0x18] sm:$0xff]
    %v3096 = vld [vmem:[%s3091 + $0x20] sm:$0xff]
    %v3097 = vld [vmem:[%s3091 + $0x28] sm:$0xff]
    %v3098 = vld [vmem:[%s3091 + $0x30] sm:$0xff]
    %v3099 = vld [vmem:[%s3091 + $0x38] sm:$0xff]
    %v3100 = vld [vmem:[%s3091 + $0x40] sm:$0xff]
    %v3101 = vld [vmem:[%s3091 + $0x48] sm:$0xff]
    %v3102 = vld [vmem:[%s3091 + $0x50] sm:$0xff]
    %v3103 = vld [vmem:[%s3091 + $0x58] sm:$0xff]
    %v3104 = vld [vmem:[%s3091 + $0x60] sm:$0xff]
    %v3105 = vld [vmem:[%s3091 + $0x68] sm:$0xff]
    %v3106 = vld [vmem:[%s3091 + $0x70] sm:$0xff]
    %v3107 = vld [vmem:[%s3091 + $0x78] sm:$0xff]
    %v3108 = vld [vmem:[%s3091 + $0x80] sm:$0xff]
    %v3109 = vld [vmem:[%s3091 + $0x88] sm:$0xff]
    %v3110 = vld [vmem:[%s3091 + $0x90] sm:$0xff]
    %v3111 = vld [vmem:[%s3091 + $0x98] sm:$0xff]
    %v3112 = vld [vmem:[%s3091 + $0xa0] sm:$0xff]
    %v3113 = vld [vmem:[%s3091 + $0xa8] sm:$0xff]
    %v3114 = vld [vmem:[%s3091 + $0xb0] sm:$0xff]
    %v3115 = vld [vmem:[%s3091 + $0xb8] sm:$0xff]
    %v3116 = vld [vmem:[%s3091 + $0xc0] sm:$0xf]
    %3117 = vset.pattern.permute.xlu0 10
    %3118 = vperm.xlu0 %3117, %v1307
    %v3119 = vpop.permute.xlu0 %3118
    %3121 = vset.pattern.permute.xlu0 10
    %3122 = vperm.xlu0 %3121, %v1308
    %v3123 = vpop.permute.xlu0 %3122
    %3125 = vset.pattern.permute.xlu0 10
    %3126 = vperm.xlu0 %3125, %v1309
    %v3127 = vpop.permute.xlu0 %3126
    %3129 = vset.pattern.permute.xlu0 10
    %3130 = vperm.xlu0 %3129, %v1310
    %v3131 = vpop.permute.xlu0 %3130
    %3133 = vset.pattern.permute.xlu0 10
    %3134 = vperm.xlu0 %3133, %v1311
    %v3135 = vpop.permute.xlu0 %3134
    %3137 = vset.pattern.permute.xlu0 10
    %3138 = vperm.xlu0 %3137, %v1312
    %v3139 = vpop.permute.xlu0 %3138
    %3141 = vset.pattern.permute.xlu0 10
    %3142 = vperm.xlu0 %3141, %v1313
    %v3143 = vpop.permute.xlu0 %3142
    %3145 = vset.pattern.permute.xlu0 10
    %3146 = vperm.xlu0 %3145, %v1314
    %v3147 = vpop.permute.xlu0 %3146
    %3149 = vset.pattern.permute.xlu0 10
    %3150 = vperm.xlu0 %3149, %v1315
    %v3151 = vpop.permute.xlu0 %3150
    %3153 = vset.pattern.permute.xlu0 10
    %3154 = vperm.xlu0 %3153, %v1316
    %v3155 = vpop.permute.xlu0 %3154
    %3157 = vset.pattern.permute.xlu0 10
    %3158 = vperm.xlu0 %3157, %v1317
    %v3159 = vpop.permute.xlu0 %3158
    %3161 = vset.pattern.permute.xlu0 10
    %3162 = vperm.xlu0 %3161, %v1318
    %v3163 = vpop.permute.xlu0 %3162
    %3165 = vset.pattern.permute.xlu0 10
    %3166 = vperm.xlu0 %3165, %v1319
    %v3167 = vpop.permute.xlu0 %3166
    %3169 = vset.pattern.permute.xlu0 10
    %3170 = vperm.xlu0 %3169, %v1320
    %v3171 = vpop.permute.xlu0 %3170
    %3173 = vset.pattern.permute.xlu0 10
    %3174 = vperm.xlu0 %3173, %v1321
    %v3175 = vpop.permute.xlu0 %3174
    %3177 = vset.pattern.permute.xlu0 10
    %3178 = vperm.xlu0 %3177, %v1322
    %v3179 = vpop.permute.xlu0 %3178
    %3181 = vset.pattern.permute.xlu0 10
    %3182 = vperm.xlu0 %3181, %v1323
    %v3183 = vpop.permute.xlu0 %3182
    %3185 = vset.pattern.permute.xlu0 10
    %3186 = vperm.xlu0 %3185, %v1324
    %v3187 = vpop.permute.xlu0 %3186
    %3189 = vset.pattern.permute.xlu0 10
    %3190 = vperm.xlu0 %3189, %v1325
    %v3191 = vpop.permute.xlu0 %3190
    %3193 = vset.pattern.permute.xlu0 10
    %3194 = vperm.xlu0 %3193, %v1326
    %v3195 = vpop.permute.xlu0 %3194
    %3197 = vset.pattern.permute.xlu0 10
    %3198 = vperm.xlu0 %3197, %v1327
    %v3199 = vpop.permute.xlu0 %3198
    %3201 = vset.pattern.permute.xlu0 10
    %3202 = vperm.xlu0 %3201, %v1328
    %v3203 = vpop.permute.xlu0 %3202
    %3205 = vset.pattern.permute.xlu0 10
    %3206 = vperm.xlu0 %3205, %v1329
    %v3207 = vpop.permute.xlu0 %3206
    %3209 = vset.pattern.permute.xlu0 10
    %3210 = vperm.xlu0 %3209, %v1330
    %v3211 = vpop.permute.xlu0 %3210
    %3213 = vset.pattern.permute.xlu0 10
    %3214 = vperm.xlu0 %3213, %v1331
    %v3215 = vpop.permute.xlu0 %3214
    %v3217 = vmul.f32 %v3119, %v3092
    %v3218 = vmul.f32 %v3123, %v3093
    %v3219 = vmul.f32 %v3127, %v3094
    %v3220 = vmul.f32 %v3131, %v3095
    %v3221 = vmul.f32 %v3135, %v3096
    %v3222 = vmul.f32 %v3139, %v3097
    %v3223 = vmul.f32 %v3143, %v3098
    %v3224 = vmul.f32 %v3147, %v3099
    %v3225 = vmul.f32 %v3151, %v3100
    %v3226 = vmul.f32 %v3155, %v3101
    %v3227 = vmul.f32 %v3159, %v3102
    %v3228 = vmul.f32 %v3163, %v3103
    %v3229 = vmul.f32 %v3167, %v3104
    %v3230 = vmul.f32 %v3171, %v3105
    %v3231 = vmul.f32 %v3175, %v3106
    %v3232 = vmul.f32 %v3179, %v3107
    %v3233 = vmul.f32 %v3183, %v3108
    %v3234 = vmul.f32 %v3187, %v3109
    %v3235 = vmul.f32 %v3191, %v3110
    %v3236 = vmul.f32 %v3195, %v3111
    %v3237 = vmul.f32 %v3199, %v3112
    %v3238 = vmul.f32 %v3203, %v3113
    %v3239 = vmul.f32 %v3207, %v3114
    %v3240 = vmul.f32 %v3211, %v3115
    %v3241 = vmul.f32 %v3215, %v3116
    %v3242 = vadd.f32 %v3066, %v3217
    %v3243 = vadd.f32 %v3067, %v3218
    %v3244 = vadd.f32 %v3068, %v3219
    %v3245 = vadd.f32 %v3069, %v3220
    %v3246 = vadd.f32 %v3070, %v3221
    %v3247 = vadd.f32 %v3071, %v3222
    %v3248 = vadd.f32 %v3072, %v3223
    %v3249 = vadd.f32 %v3073, %v3224
    %v3250 = vadd.f32 %v3074, %v3225
    %v3251 = vadd.f32 %v3075, %v3226
    %v3252 = vadd.f32 %v3076, %v3227
    %v3253 = vadd.f32 %v3077, %v3228
    %v3254 = vadd.f32 %v3078, %v3229
    %v3255 = vadd.f32 %v3079, %v3230
    %v3256 = vadd.f32 %v3080, %v3231
    %v3257 = vadd.f32 %v3081, %v3232
    %v3258 = vadd.f32 %v3082, %v3233
    %v3259 = vadd.f32 %v3083, %v3234
    %v3260 = vadd.f32 %v3084, %v3235
    %v3261 = vadd.f32 %v3085, %v3236
    %v3262 = vadd.f32 %v3086, %v3237
    %v3263 = vadd.f32 %v3087, %v3238
    %v3264 = vadd.f32 %v3088, %v3239
    %v3265 = vadd.f32 %v3089, %v3240
    %v3266 = vadd.f32 %v3090, %v3241
    %s3267 = scalar_lea.vmem %s6, 2200
    %v3268 = vld [vmem:[%s3267] sm:$0xff]
    %v3269 = vld [vmem:[%s3267 + $0x8] sm:$0xff]
    %v3270 = vld [vmem:[%s3267 + $0x10] sm:$0xff]
    %v3271 = vld [vmem:[%s3267 + $0x18] sm:$0xff]
    %v3272 = vld [vmem:[%s3267 + $0x20] sm:$0xff]
    %v3273 = vld [vmem:[%s3267 + $0x28] sm:$0xff]
    %v3274 = vld [vmem:[%s3267 + $0x30] sm:$0xff]
    %v3275 = vld [vmem:[%s3267 + $0x38] sm:$0xff]
    %v3276 = vld [vmem:[%s3267 + $0x40] sm:$0xff]
    %v3277 = vld [vmem:[%s3267 + $0x48] sm:$0xff]
    %v3278 = vld [vmem:[%s3267 + $0x50] sm:$0xff]
    %v3279 = vld [vmem:[%s3267 + $0x58] sm:$0xff]
    %v3280 = vld [vmem:[%s3267 + $0x60] sm:$0xff]
    %v3281 = vld [vmem:[%s3267 + $0x68] sm:$0xff]
    %v3282 = vld [vmem:[%s3267 + $0x70] sm:$0xff]
    %v3283 = vld [vmem:[%s3267 + $0x78] sm:$0xff]
    %v3284 = vld [vmem:[%s3267 + $0x80] sm:$0xff]
    %v3285 = vld [vmem:[%s3267 + $0x88] sm:$0xff]
    %v3286 = vld [vmem:[%s3267 + $0x90] sm:$0xff]
    %v3287 = vld [vmem:[%s3267 + $0x98] sm:$0xff]
    %v3288 = vld [vmem:[%s3267 + $0xa0] sm:$0xff]
    %v3289 = vld [vmem:[%s3267 + $0xa8] sm:$0xff]
    %v3290 = vld [vmem:[%s3267 + $0xb0] sm:$0xff]
    %v3291 = vld [vmem:[%s3267 + $0xb8] sm:$0xff]
    %v3292 = vld [vmem:[%s3267 + $0xc0] sm:$0xf]
    %3293 = vset.pattern.permute.xlu0 11
    %3294 = vperm.xlu0 %3293, %v1307
    %v3295 = vpop.permute.xlu0 %3294
    %3297 = vset.pattern.permute.xlu0 11
    %3298 = vperm.xlu0 %3297, %v1308
    %v3299 = vpop.permute.xlu0 %3298
    %3301 = vset.pattern.permute.xlu0 11
    %3302 = vperm.xlu0 %3301, %v1309
    %v3303 = vpop.permute.xlu0 %3302
    %3305 = vset.pattern.permute.xlu0 11
    %3306 = vperm.xlu0 %3305, %v1310
    %v3307 = vpop.permute.xlu0 %3306
    %3309 = vset.pattern.permute.xlu0 11
    %3310 = vperm.xlu0 %3309, %v1311
    %v3311 = vpop.permute.xlu0 %3310
    %3313 = vset.pattern.permute.xlu0 11
    %3314 = vperm.xlu0 %3313, %v1312
    %v3315 = vpop.permute.xlu0 %3314
    %3317 = vset.pattern.permute.xlu0 11
    %3318 = vperm.xlu0 %3317, %v1313
    %v3319 = vpop.permute.xlu0 %3318
    %3321 = vset.pattern.permute.xlu0 11
    %3322 = vperm.xlu0 %3321, %v1314
    %v3323 = vpop.permute.xlu0 %3322
    %3325 = vset.pattern.permute.xlu0 11
    %3326 = vperm.xlu0 %3325, %v1315
    %v3327 = vpop.permute.xlu0 %3326
    %3329 = vset.pattern.permute.xlu0 11
    %3330 = vperm.xlu0 %3329, %v1316
    %v3331 = vpop.permute.xlu0 %3330
    %3333 = vset.pattern.permute.xlu0 11
    %3334 = vperm.xlu0 %3333, %v1317
    %v3335 = vpop.permute.xlu0 %3334
    %3337 = vset.pattern.permute.xlu0 11
    %3338 = vperm.xlu0 %3337, %v1318
    %v3339 = vpop.permute.xlu0 %3338
    %3341 = vset.pattern.permute.xlu0 11
    %3342 = vperm.xlu0 %3341, %v1319
    %v3343 = vpop.permute.xlu0 %3342
    %3345 = vset.pattern.permute.xlu0 11
    %3346 = vperm.xlu0 %3345, %v1320
    %v3347 = vpop.permute.xlu0 %3346
    %3349 = vset.pattern.permute.xlu0 11
    %3350 = vperm.xlu0 %3349, %v1321
    %v3351 = vpop.permute.xlu0 %3350
    %3353 = vset.pattern.permute.xlu0 11
    %3354 = vperm.xlu0 %3353, %v1322
    %v3355 = vpop.permute.xlu0 %3354
    %3357 = vset.pattern.permute.xlu0 11
    %3358 = vperm.xlu0 %3357, %v1323
    %v3359 = vpop.permute.xlu0 %3358
    %3361 = vset.pattern.permute.xlu0 11
    %3362 = vperm.xlu0 %3361, %v1324
    %v3363 = vpop.permute.xlu0 %3362
    %3365 = vset.pattern.permute.xlu0 11
    %3366 = vperm.xlu0 %3365, %v1325
    %v3367 = vpop.permute.xlu0 %3366
    %3369 = vset.pattern.permute.xlu0 11
    %3370 = vperm.xlu0 %3369, %v1326
    %v3371 = vpop.permute.xlu0 %3370
    %3373 = vset.pattern.permute.xlu0 11
    %3374 = vperm.xlu0 %3373, %v1327
    %v3375 = vpop.permute.xlu0 %3374
    %3377 = vset.pattern.permute.xlu0 11
    %3378 = vperm.xlu0 %3377, %v1328
    %v3379 = vpop.permute.xlu0 %3378
    %3381 = vset.pattern.permute.xlu0 11
    %3382 = vperm.xlu0 %3381, %v1329
    %v3383 = vpop.permute.xlu0 %3382
    %3385 = vset.pattern.permute.xlu0 11
    %3386 = vperm.xlu0 %3385, %v1330
    %v3387 = vpop.permute.xlu0 %3386
    %3389 = vset.pattern.permute.xlu0 11
    %3390 = vperm.xlu0 %3389, %v1331
    %v3391 = vpop.permute.xlu0 %3390
    %v3393 = vmul.f32 %v3295, %v3268
    %v3394 = vmul.f32 %v3299, %v3269
    %v3395 = vmul.f32 %v3303, %v3270
    %v3396 = vmul.f32 %v3307, %v3271
    %v3397 = vmul.f32 %v3311, %v3272
    %v3398 = vmul.f32 %v3315, %v3273
    %v3399 = vmul.f32 %v3319, %v3274
    %v3400 = vmul.f32 %v3323, %v3275
    %v3401 = vmul.f32 %v3327, %v3276
    %v3402 = vmul.f32 %v3331, %v3277
    %v3403 = vmul.f32 %v3335, %v3278
    %v3404 = vmul.f32 %v3339, %v3279
    %v3405 = vmul.f32 %v3343, %v3280
    %v3406 = vmul.f32 %v3347, %v3281
    %v3407 = vmul.f32 %v3351, %v3282
    %v3408 = vmul.f32 %v3355, %v3283
    %v3409 = vmul.f32 %v3359, %v3284
    %v3410 = vmul.f32 %v3363, %v3285
    %v3411 = vmul.f32 %v3367, %v3286
    %v3412 = vmul.f32 %v3371, %v3287
    %v3413 = vmul.f32 %v3375, %v3288
    %v3414 = vmul.f32 %v3379, %v3289
    %v3415 = vmul.f32 %v3383, %v3290
    %v3416 = vmul.f32 %v3387, %v3291
    %v3417 = vmul.f32 %v3391, %v3292
    %v3418 = vadd.f32 %v3242, %v3393
    %v3419 = vadd.f32 %v3243, %v3394
    %v3420 = vadd.f32 %v3244, %v3395
    %v3421 = vadd.f32 %v3245, %v3396
    %v3422 = vadd.f32 %v3246, %v3397
    %v3423 = vadd.f32 %v3247, %v3398
    %v3424 = vadd.f32 %v3248, %v3399
    %v3425 = vadd.f32 %v3249, %v3400
    %v3426 = vadd.f32 %v3250, %v3401
    %v3427 = vadd.f32 %v3251, %v3402
    %v3428 = vadd.f32 %v3252, %v3403
    %v3429 = vadd.f32 %v3253, %v3404
    %v3430 = vadd.f32 %v3254, %v3405
    %v3431 = vadd.f32 %v3255, %v3406
    %v3432 = vadd.f32 %v3256, %v3407
    %v3433 = vadd.f32 %v3257, %v3408
    %v3434 = vadd.f32 %v3258, %v3409
    %v3435 = vadd.f32 %v3259, %v3410
    %v3436 = vadd.f32 %v3260, %v3411
    %v3437 = vadd.f32 %v3261, %v3412
    %v3438 = vadd.f32 %v3262, %v3413
    %v3439 = vadd.f32 %v3263, %v3414
    %v3440 = vadd.f32 %v3264, %v3415
    %v3441 = vadd.f32 %v3265, %v3416
    %v3442 = vadd.f32 %v3266, %v3417
    %s3443 = scalar_lea.vmem %s6, 2400
    %v3444 = vld [vmem:[%s3443] sm:$0xff]
    %v3445 = vld [vmem:[%s3443 + $0x8] sm:$0xff]
    %v3446 = vld [vmem:[%s3443 + $0x10] sm:$0xff]
    %v3447 = vld [vmem:[%s3443 + $0x18] sm:$0xff]
    %v3448 = vld [vmem:[%s3443 + $0x20] sm:$0xff]
    %v3449 = vld [vmem:[%s3443 + $0x28] sm:$0xff]
    %v3450 = vld [vmem:[%s3443 + $0x30] sm:$0xff]
    %v3451 = vld [vmem:[%s3443 + $0x38] sm:$0xff]
    %v3452 = vld [vmem:[%s3443 + $0x40] sm:$0xff]
    %v3453 = vld [vmem:[%s3443 + $0x48] sm:$0xff]
    %v3454 = vld [vmem:[%s3443 + $0x50] sm:$0xff]
    %v3455 = vld [vmem:[%s3443 + $0x58] sm:$0xff]
    %v3456 = vld [vmem:[%s3443 + $0x60] sm:$0xff]
    %v3457 = vld [vmem:[%s3443 + $0x68] sm:$0xff]
    %v3458 = vld [vmem:[%s3443 + $0x70] sm:$0xff]
    %v3459 = vld [vmem:[%s3443 + $0x78] sm:$0xff]
    %v3460 = vld [vmem:[%s3443 + $0x80] sm:$0xff]
    %v3461 = vld [vmem:[%s3443 + $0x88] sm:$0xff]
    %v3462 = vld [vmem:[%s3443 + $0x90] sm:$0xff]
    %v3463 = vld [vmem:[%s3443 + $0x98] sm:$0xff]
    %v3464 = vld [vmem:[%s3443 + $0xa0] sm:$0xff]
    %v3465 = vld [vmem:[%s3443 + $0xa8] sm:$0xff]
    %v3466 = vld [vmem:[%s3443 + $0xb0] sm:$0xff]
    %v3467 = vld [vmem:[%s3443 + $0xb8] sm:$0xff]
    %v3468 = vld [vmem:[%s3443 + $0xc0] sm:$0xf]
    %3469 = vset.pattern.permute.xlu0 12
    %3470 = vperm.xlu0 %3469, %v1307
    %v3471 = vpop.permute.xlu0 %3470
    %3473 = vset.pattern.permute.xlu0 12
    %3474 = vperm.xlu0 %3473, %v1308
    %v3475 = vpop.permute.xlu0 %3474
    %3477 = vset.pattern.permute.xlu0 12
    %3478 = vperm.xlu0 %3477, %v1309
    %v3479 = vpop.permute.xlu0 %3478
    %3481 = vset.pattern.permute.xlu0 12
    %3482 = vperm.xlu0 %3481, %v1310
    %v3483 = vpop.permute.xlu0 %3482
    %3485 = vset.pattern.permute.xlu0 12
    %3486 = vperm.xlu0 %3485, %v1311
    %v3487 = vpop.permute.xlu0 %3486
    %3489 = vset.pattern.permute.xlu0 12
    %3490 = vperm.xlu0 %3489, %v1312
    %v3491 = vpop.permute.xlu0 %3490
    %3493 = vset.pattern.permute.xlu0 12
    %3494 = vperm.xlu0 %3493, %v1313
    %v3495 = vpop.permute.xlu0 %3494
    %3497 = vset.pattern.permute.xlu0 12
    %3498 = vperm.xlu0 %3497, %v1314
    %v3499 = vpop.permute.xlu0 %3498
    %3501 = vset.pattern.permute.xlu0 12
    %3502 = vperm.xlu0 %3501, %v1315
    %v3503 = vpop.permute.xlu0 %3502
    %3505 = vset.pattern.permute.xlu0 12
    %3506 = vperm.xlu0 %3505, %v1316
    %v3507 = vpop.permute.xlu0 %3506
    %3509 = vset.pattern.permute.xlu0 12
    %3510 = vperm.xlu0 %3509, %v1317
    %v3511 = vpop.permute.xlu0 %3510
    %3513 = vset.pattern.permute.xlu0 12
    %3514 = vperm.xlu0 %3513, %v1318
    %v3515 = vpop.permute.xlu0 %3514
    %3517 = vset.pattern.permute.xlu0 12
    %3518 = vperm.xlu0 %3517, %v1319
    %v3519 = vpop.permute.xlu0 %3518
    %3521 = vset.pattern.permute.xlu0 12
    %3522 = vperm.xlu0 %3521, %v1320
    %v3523 = vpop.permute.xlu0 %3522
    %3525 = vset.pattern.permute.xlu0 12
    %3526 = vperm.xlu0 %3525, %v1321
    %v3527 = vpop.permute.xlu0 %3526
    %3529 = vset.pattern.permute.xlu0 12
    %3530 = vperm.xlu0 %3529, %v1322
    %v3531 = vpop.permute.xlu0 %3530
    %3533 = vset.pattern.permute.xlu0 12
    %3534 = vperm.xlu0 %3533, %v1323
    %v3535 = vpop.permute.xlu0 %3534
    %3537 = vset.pattern.permute.xlu0 12
    %3538 = vperm.xlu0 %3537, %v1324
    %v3539 = vpop.permute.xlu0 %3538
    %3541 = vset.pattern.permute.xlu0 12
    %3542 = vperm.xlu0 %3541, %v1325
    %v3543 = vpop.permute.xlu0 %3542
    %3545 = vset.pattern.permute.xlu0 12
    %3546 = vperm.xlu0 %3545, %v1326
    %v3547 = vpop.permute.xlu0 %3546
    %3549 = vset.pattern.permute.xlu0 12
    %3550 = vperm.xlu0 %3549, %v1327
    %v3551 = vpop.permute.xlu0 %3550
    %3553 = vset.pattern.permute.xlu0 12
    %3554 = vperm.xlu0 %3553, %v1328
    %v3555 = vpop.permute.xlu0 %3554
    %3557 = vset.pattern.permute.xlu0 12
    %3558 = vperm.xlu0 %3557, %v1329
    %v3559 = vpop.permute.xlu0 %3558
    %3561 = vset.pattern.permute.xlu0 12
    %3562 = vperm.xlu0 %3561, %v1330
    %v3563 = vpop.permute.xlu0 %3562
    %3565 = vset.pattern.permute.xlu0 12
    %3566 = vperm.xlu0 %3565, %v1331
    %v3567 = vpop.permute.xlu0 %3566
    %v3569 = vmul.f32 %v3471, %v3444
    %v3570 = vmul.f32 %v3475, %v3445
    %v3571 = vmul.f32 %v3479, %v3446
    %v3572 = vmul.f32 %v3483, %v3447
    %v3573 = vmul.f32 %v3487, %v3448
    %v3574 = vmul.f32 %v3491, %v3449
    %v3575 = vmul.f32 %v3495, %v3450
    %v3576 = vmul.f32 %v3499, %v3451
    %v3577 = vmul.f32 %v3503, %v3452
    %v3578 = vmul.f32 %v3507, %v3453
    %v3579 = vmul.f32 %v3511, %v3454
    %v3580 = vmul.f32 %v3515, %v3455
    %v3581 = vmul.f32 %v3519, %v3456
    %v3582 = vmul.f32 %v3523, %v3457
    %v3583 = vmul.f32 %v3527, %v3458
    %v3584 = vmul.f32 %v3531, %v3459
    %v3585 = vmul.f32 %v3535, %v3460
    %v3586 = vmul.f32 %v3539, %v3461
    %v3587 = vmul.f32 %v3543, %v3462
    %v3588 = vmul.f32 %v3547, %v3463
    %v3589 = vmul.f32 %v3551, %v3464
    %v3590 = vmul.f32 %v3555, %v3465
    %v3591 = vmul.f32 %v3559, %v3466
    %v3592 = vmul.f32 %v3563, %v3467
    %v3593 = vmul.f32 %v3567, %v3468
    %v3594 = vadd.f32 %v3418, %v3569
    %v3595 = vadd.f32 %v3419, %v3570
    %v3596 = vadd.f32 %v3420, %v3571
    %v3597 = vadd.f32 %v3421, %v3572
    %v3598 = vadd.f32 %v3422, %v3573
    %v3599 = vadd.f32 %v3423, %v3574
    %v3600 = vadd.f32 %v3424, %v3575
    %v3601 = vadd.f32 %v3425, %v3576
    %v3602 = vadd.f32 %v3426, %v3577
    %v3603 = vadd.f32 %v3427, %v3578
    %v3604 = vadd.f32 %v3428, %v3579
    %v3605 = vadd.f32 %v3429, %v3580
    %v3606 = vadd.f32 %v3430, %v3581
    %v3607 = vadd.f32 %v3431, %v3582
    %v3608 = vadd.f32 %v3432, %v3583
    %v3609 = vadd.f32 %v3433, %v3584
    %v3610 = vadd.f32 %v3434, %v3585
    %v3611 = vadd.f32 %v3435, %v3586
    %v3612 = vadd.f32 %v3436, %v3587
    %v3613 = vadd.f32 %v3437, %v3588
    %v3614 = vadd.f32 %v3438, %v3589
    %v3615 = vadd.f32 %v3439, %v3590
    %v3616 = vadd.f32 %v3440, %v3591
    %v3617 = vadd.f32 %v3441, %v3592
    %v3618 = vadd.f32 %v3442, %v3593
    %s3619 = scalar_lea.vmem %s6, 2600
    %v3620 = vld [vmem:[%s3619] sm:$0xff]
    %v3621 = vld [vmem:[%s3619 + $0x8] sm:$0xff]
    %v3622 = vld [vmem:[%s3619 + $0x10] sm:$0xff]
    %v3623 = vld [vmem:[%s3619 + $0x18] sm:$0xff]
    %v3624 = vld [vmem:[%s3619 + $0x20] sm:$0xff]
    %v3625 = vld [vmem:[%s3619 + $0x28] sm:$0xff]
    %v3626 = vld [vmem:[%s3619 + $0x30] sm:$0xff]
    %v3627 = vld [vmem:[%s3619 + $0x38] sm:$0xff]
    %v3628 = vld [vmem:[%s3619 + $0x40] sm:$0xff]
    %v3629 = vld [vmem:[%s3619 + $0x48] sm:$0xff]
    %v3630 = vld [vmem:[%s3619 + $0x50] sm:$0xff]
    %v3631 = vld [vmem:[%s3619 + $0x58] sm:$0xff]
    %v3632 = vld [vmem:[%s3619 + $0x60] sm:$0xff]
    %v3633 = vld [vmem:[%s3619 + $0x68] sm:$0xff]
    %v3634 = vld [vmem:[%s3619 + $0x70] sm:$0xff]
    %v3635 = vld [vmem:[%s3619 + $0x78] sm:$0xff]
    %v3636 = vld [vmem:[%s3619 + $0x80] sm:$0xff]
    %v3637 = vld [vmem:[%s3619 + $0x88] sm:$0xff]
    %v3638 = vld [vmem:[%s3619 + $0x90] sm:$0xff]
    %v3639 = vld [vmem:[%s3619 + $0x98] sm:$0xff]
    %v3640 = vld [vmem:[%s3619 + $0xa0] sm:$0xff]
    %v3641 = vld [vmem:[%s3619 + $0xa8] sm:$0xff]
    %v3642 = vld [vmem:[%s3619 + $0xb0] sm:$0xff]
    %v3643 = vld [vmem:[%s3619 + $0xb8] sm:$0xff]
    %v3644 = vld [vmem:[%s3619 + $0xc0] sm:$0xf]
    %3645 = vset.pattern.permute.xlu0 13
    %3646 = vperm.xlu0 %3645, %v1307
    %v3647 = vpop.permute.xlu0 %3646
    %3649 = vset.pattern.permute.xlu0 13
    %3650 = vperm.xlu0 %3649, %v1308
    %v3651 = vpop.permute.xlu0 %3650
    %3653 = vset.pattern.permute.xlu0 13
    %3654 = vperm.xlu0 %3653, %v1309
    %v3655 = vpop.permute.xlu0 %3654
    %3657 = vset.pattern.permute.xlu0 13
    %3658 = vperm.xlu0 %3657, %v1310
    %v3659 = vpop.permute.xlu0 %3658
    %3661 = vset.pattern.permute.xlu0 13
    %3662 = vperm.xlu0 %3661, %v1311
    %v3663 = vpop.permute.xlu0 %3662
    %3665 = vset.pattern.permute.xlu0 13
    %3666 = vperm.xlu0 %3665, %v1312
    %v3667 = vpop.permute.xlu0 %3666
    %3669 = vset.pattern.permute.xlu0 13
    %3670 = vperm.xlu0 %3669, %v1313
    %v3671 = vpop.permute.xlu0 %3670
    %3673 = vset.pattern.permute.xlu0 13
    %3674 = vperm.xlu0 %3673, %v1314
    %v3675 = vpop.permute.xlu0 %3674
    %3677 = vset.pattern.permute.xlu0 13
    %3678 = vperm.xlu0 %3677, %v1315
    %v3679 = vpop.permute.xlu0 %3678
    %3681 = vset.pattern.permute.xlu0 13
    %3682 = vperm.xlu0 %3681, %v1316
    %v3683 = vpop.permute.xlu0 %3682
    %3685 = vset.pattern.permute.xlu0 13
    %3686 = vperm.xlu0 %3685, %v1317
    %v3687 = vpop.permute.xlu0 %3686
    %3689 = vset.pattern.permute.xlu0 13
    %3690 = vperm.xlu0 %3689, %v1318
    %v3691 = vpop.permute.xlu0 %3690
    %3693 = vset.pattern.permute.xlu0 13
    %3694 = vperm.xlu0 %3693, %v1319
    %v3695 = vpop.permute.xlu0 %3694
    %3697 = vset.pattern.permute.xlu0 13
    %3698 = vperm.xlu0 %3697, %v1320
    %v3699 = vpop.permute.xlu0 %3698
    %3701 = vset.pattern.permute.xlu0 13
    %3702 = vperm.xlu0 %3701, %v1321
    %v3703 = vpop.permute.xlu0 %3702
    %3705 = vset.pattern.permute.xlu0 13
    %3706 = vperm.xlu0 %3705, %v1322
    %v3707 = vpop.permute.xlu0 %3706
    %3709 = vset.pattern.permute.xlu0 13
    %3710 = vperm.xlu0 %3709, %v1323
    %v3711 = vpop.permute.xlu0 %3710
    %3713 = vset.pattern.permute.xlu0 13
    %3714 = vperm.xlu0 %3713, %v1324
    %v3715 = vpop.permute.xlu0 %3714
    %3717 = vset.pattern.permute.xlu0 13
    %3718 = vperm.xlu0 %3717, %v1325
    %v3719 = vpop.permute.xlu0 %3718
    %3721 = vset.pattern.permute.xlu0 13
    %3722 = vperm.xlu0 %3721, %v1326
    %v3723 = vpop.permute.xlu0 %3722
    %3725 = vset.pattern.permute.xlu0 13
    %3726 = vperm.xlu0 %3725, %v1327
    %v3727 = vpop.permute.xlu0 %3726
    %3729 = vset.pattern.permute.xlu0 13
    %3730 = vperm.xlu0 %3729, %v1328
    %v3731 = vpop.permute.xlu0 %3730
    %3733 = vset.pattern.permute.xlu0 13
    %3734 = vperm.xlu0 %3733, %v1329
    %v3735 = vpop.permute.xlu0 %3734
    %3737 = vset.pattern.permute.xlu0 13
    %3738 = vperm.xlu0 %3737, %v1330
    %v3739 = vpop.permute.xlu0 %3738
    %3741 = vset.pattern.permute.xlu0 13
    %3742 = vperm.xlu0 %3741, %v1331
    %v3743 = vpop.permute.xlu0 %3742
    %v3745 = vmul.f32 %v3647, %v3620
    %v3746 = vmul.f32 %v3651, %v3621
    %v3747 = vmul.f32 %v3655, %v3622
    %v3748 = vmul.f32 %v3659, %v3623
    %v3749 = vmul.f32 %v3663, %v3624
    %v3750 = vmul.f32 %v3667, %v3625
    %v3751 = vmul.f32 %v3671, %v3626
    %v3752 = vmul.f32 %v3675, %v3627
    %v3753 = vmul.f32 %v3679, %v3628
    %v3754 = vmul.f32 %v3683, %v3629
    %v3755 = vmul.f32 %v3687, %v3630
    %v3756 = vmul.f32 %v3691, %v3631
    %v3757 = vmul.f32 %v3695, %v3632
    %v3758 = vmul.f32 %v3699, %v3633
    %v3759 = vmul.f32 %v3703, %v3634
    %v3760 = vmul.f32 %v3707, %v3635
    %v3761 = vmul.f32 %v3711, %v3636
    %v3762 = vmul.f32 %v3715, %v3637
    %v3763 = vmul.f32 %v3719, %v3638
    %v3764 = vmul.f32 %v3723, %v3639
    %v3765 = vmul.f32 %v3727, %v3640
    %v3766 = vmul.f32 %v3731, %v3641
    %v3767 = vmul.f32 %v3735, %v3642
    %v3768 = vmul.f32 %v3739, %v3643
    %v3769 = vmul.f32 %v3743, %v3644
    %v3770 = vadd.f32 %v3594, %v3745
    %v3771 = vadd.f32 %v3595, %v3746
    %v3772 = vadd.f32 %v3596, %v3747
    %v3773 = vadd.f32 %v3597, %v3748
    %v3774 = vadd.f32 %v3598, %v3749
    %v3775 = vadd.f32 %v3599, %v3750
    %v3776 = vadd.f32 %v3600, %v3751
    %v3777 = vadd.f32 %v3601, %v3752
    %v3778 = vadd.f32 %v3602, %v3753
    %v3779 = vadd.f32 %v3603, %v3754
    %v3780 = vadd.f32 %v3604, %v3755
    %v3781 = vadd.f32 %v3605, %v3756
    %v3782 = vadd.f32 %v3606, %v3757
    %v3783 = vadd.f32 %v3607, %v3758
    %v3784 = vadd.f32 %v3608, %v3759
    %v3785 = vadd.f32 %v3609, %v3760
    %v3786 = vadd.f32 %v3610, %v3761
    %v3787 = vadd.f32 %v3611, %v3762
    %v3788 = vadd.f32 %v3612, %v3763
    %v3789 = vadd.f32 %v3613, %v3764
    %v3790 = vadd.f32 %v3614, %v3765
    %v3791 = vadd.f32 %v3615, %v3766
    %v3792 = vadd.f32 %v3616, %v3767
    %v3793 = vadd.f32 %v3617, %v3768
    %v3794 = vadd.f32 %v3618, %v3769
    %s3795 = scalar_lea.vmem %s6, 2800
    %v3796 = vld [vmem:[%s3795] sm:$0xff]
    %v3797 = vld [vmem:[%s3795 + $0x8] sm:$0xff]
    %v3798 = vld [vmem:[%s3795 + $0x10] sm:$0xff]
    %v3799 = vld [vmem:[%s3795 + $0x18] sm:$0xff]
    %v3800 = vld [vmem:[%s3795 + $0x20] sm:$0xff]
    %v3801 = vld [vmem:[%s3795 + $0x28] sm:$0xff]
    %v3802 = vld [vmem:[%s3795 + $0x30] sm:$0xff]
    %v3803 = vld [vmem:[%s3795 + $0x38] sm:$0xff]
    %v3804 = vld [vmem:[%s3795 + $0x40] sm:$0xff]
    %v3805 = vld [vmem:[%s3795 + $0x48] sm:$0xff]
    %v3806 = vld [vmem:[%s3795 + $0x50] sm:$0xff]
    %v3807 = vld [vmem:[%s3795 + $0x58] sm:$0xff]
    %v3808 = vld [vmem:[%s3795 + $0x60] sm:$0xff]
    %v3809 = vld [vmem:[%s3795 + $0x68] sm:$0xff]
    %v3810 = vld [vmem:[%s3795 + $0x70] sm:$0xff]
    %v3811 = vld [vmem:[%s3795 + $0x78] sm:$0xff]
    %v3812 = vld [vmem:[%s3795 + $0x80] sm:$0xff]
    %v3813 = vld [vmem:[%s3795 + $0x88] sm:$0xff]
    %v3814 = vld [vmem:[%s3795 + $0x90] sm:$0xff]
    %v3815 = vld [vmem:[%s3795 + $0x98] sm:$0xff]
    %v3816 = vld [vmem:[%s3795 + $0xa0] sm:$0xff]
    %v3817 = vld [vmem:[%s3795 + $0xa8] sm:$0xff]
    %v3818 = vld [vmem:[%s3795 + $0xb0] sm:$0xff]
    %v3819 = vld [vmem:[%s3795 + $0xb8] sm:$0xff]
    %v3820 = vld [vmem:[%s3795 + $0xc0] sm:$0xf]
    %3821 = vset.pattern.permute.xlu0 14
    %3822 = vperm.xlu0 %3821, %v1307
    %v3823 = vpop.permute.xlu0 %3822
    %3825 = vset.pattern.permute.xlu0 14
    %3826 = vperm.xlu0 %3825, %v1308
    %v3827 = vpop.permute.xlu0 %3826
    %3829 = vset.pattern.permute.xlu0 14
    %3830 = vperm.xlu0 %3829, %v1309
    %v3831 = vpop.permute.xlu0 %3830
    %3833 = vset.pattern.permute.xlu0 14
    %3834 = vperm.xlu0 %3833, %v1310
    %v3835 = vpop.permute.xlu0 %3834
    %3837 = vset.pattern.permute.xlu0 14
    %3838 = vperm.xlu0 %3837, %v1311
    %v3839 = vpop.permute.xlu0 %3838
    %3841 = vset.pattern.permute.xlu0 14
    %3842 = vperm.xlu0 %3841, %v1312
    %v3843 = vpop.permute.xlu0 %3842
    %3845 = vset.pattern.permute.xlu0 14
    %3846 = vperm.xlu0 %3845, %v1313
    %v3847 = vpop.permute.xlu0 %3846
    %3849 = vset.pattern.permute.xlu0 14
    %3850 = vperm.xlu0 %3849, %v1314
    %v3851 = vpop.permute.xlu0 %3850
    %3853 = vset.pattern.permute.xlu0 14
    %3854 = vperm.xlu0 %3853, %v1315
    %v3855 = vpop.permute.xlu0 %3854
    %3857 = vset.pattern.permute.xlu0 14
    %3858 = vperm.xlu0 %3857, %v1316
    %v3859 = vpop.permute.xlu0 %3858
    %3861 = vset.pattern.permute.xlu0 14
    %3862 = vperm.xlu0 %3861, %v1317
    %v3863 = vpop.permute.xlu0 %3862
    %3865 = vset.pattern.permute.xlu0 14
    %3866 = vperm.xlu0 %3865, %v1318
    %v3867 = vpop.permute.xlu0 %3866
    %3869 = vset.pattern.permute.xlu0 14
    %3870 = vperm.xlu0 %3869, %v1319
    %v3871 = vpop.permute.xlu0 %3870
    %3873 = vset.pattern.permute.xlu0 14
    %3874 = vperm.xlu0 %3873, %v1320
    %v3875 = vpop.permute.xlu0 %3874
    %3877 = vset.pattern.permute.xlu0 14
    %3878 = vperm.xlu0 %3877, %v1321
    %v3879 = vpop.permute.xlu0 %3878
    %3881 = vset.pattern.permute.xlu0 14
    %3882 = vperm.xlu0 %3881, %v1322
    %v3883 = vpop.permute.xlu0 %3882
    %3885 = vset.pattern.permute.xlu0 14
    %3886 = vperm.xlu0 %3885, %v1323
    %v3887 = vpop.permute.xlu0 %3886
    %3889 = vset.pattern.permute.xlu0 14
    %3890 = vperm.xlu0 %3889, %v1324
    %v3891 = vpop.permute.xlu0 %3890
    %3893 = vset.pattern.permute.xlu0 14
    %3894 = vperm.xlu0 %3893, %v1325
    %v3895 = vpop.permute.xlu0 %3894
    %3897 = vset.pattern.permute.xlu0 14
    %3898 = vperm.xlu0 %3897, %v1326
    %v3899 = vpop.permute.xlu0 %3898
    %3901 = vset.pattern.permute.xlu0 14
    %3902 = vperm.xlu0 %3901, %v1327
    %v3903 = vpop.permute.xlu0 %3902
    %3905 = vset.pattern.permute.xlu0 14
    %3906 = vperm.xlu0 %3905, %v1328
    %v3907 = vpop.permute.xlu0 %3906
    %3909 = vset.pattern.permute.xlu0 14
    %3910 = vperm.xlu0 %3909, %v1329
    %v3911 = vpop.permute.xlu0 %3910
    %3913 = vset.pattern.permute.xlu0 14
    %3914 = vperm.xlu0 %3913, %v1330
    %v3915 = vpop.permute.xlu0 %3914
    %3917 = vset.pattern.permute.xlu0 14
    %3918 = vperm.xlu0 %3917, %v1331
    %v3919 = vpop.permute.xlu0 %3918
    %v3921 = vmul.f32 %v3823, %v3796
    %v3922 = vmul.f32 %v3827, %v3797
    %v3923 = vmul.f32 %v3831, %v3798
    %v3924 = vmul.f32 %v3835, %v3799
    %v3925 = vmul.f32 %v3839, %v3800
    %v3926 = vmul.f32 %v3843, %v3801
    %v3927 = vmul.f32 %v3847, %v3802
    %v3928 = vmul.f32 %v3851, %v3803
    %v3929 = vmul.f32 %v3855, %v3804
    %v3930 = vmul.f32 %v3859, %v3805
    %v3931 = vmul.f32 %v3863, %v3806
    %v3932 = vmul.f32 %v3867, %v3807
    %v3933 = vmul.f32 %v3871, %v3808
    %v3934 = vmul.f32 %v3875, %v3809
    %v3935 = vmul.f32 %v3879, %v3810
    %v3936 = vmul.f32 %v3883, %v3811
    %v3937 = vmul.f32 %v3887, %v3812
    %v3938 = vmul.f32 %v3891, %v3813
    %v3939 = vmul.f32 %v3895, %v3814
    %v3940 = vmul.f32 %v3899, %v3815
    %v3941 = vmul.f32 %v3903, %v3816
    %v3942 = vmul.f32 %v3907, %v3817
    %v3943 = vmul.f32 %v3911, %v3818
    %v3944 = vmul.f32 %v3915, %v3819
    %v3945 = vmul.f32 %v3919, %v3820
    %v3946 = vadd.f32 %v3770, %v3921
    %v3947 = vadd.f32 %v3771, %v3922
    %v3948 = vadd.f32 %v3772, %v3923
    %v3949 = vadd.f32 %v3773, %v3924
    %v3950 = vadd.f32 %v3774, %v3925
    %v3951 = vadd.f32 %v3775, %v3926
    %v3952 = vadd.f32 %v3776, %v3927
    %v3953 = vadd.f32 %v3777, %v3928
    %v3954 = vadd.f32 %v3778, %v3929
    %v3955 = vadd.f32 %v3779, %v3930
    %v3956 = vadd.f32 %v3780, %v3931
    %v3957 = vadd.f32 %v3781, %v3932
    %v3958 = vadd.f32 %v3782, %v3933
    %v3959 = vadd.f32 %v3783, %v3934
    %v3960 = vadd.f32 %v3784, %v3935
    %v3961 = vadd.f32 %v3785, %v3936
    %v3962 = vadd.f32 %v3786, %v3937
    %v3963 = vadd.f32 %v3787, %v3938
    %v3964 = vadd.f32 %v3788, %v3939
    %v3965 = vadd.f32 %v3789, %v3940
    %v3966 = vadd.f32 %v3790, %v3941
    %v3967 = vadd.f32 %v3791, %v3942
    %v3968 = vadd.f32 %v3792, %v3943
    %v3969 = vadd.f32 %v3793, %v3944
    %v3970 = vadd.f32 %v3794, %v3945
    %s3971 = scalar_lea.vmem %s6, 3000
    %v3972 = vld [vmem:[%s3971] sm:$0xff]
    %v3973 = vld [vmem:[%s3971 + $0x8] sm:$0xff]
    %v3974 = vld [vmem:[%s3971 + $0x10] sm:$0xff]
    %v3975 = vld [vmem:[%s3971 + $0x18] sm:$0xff]
    %v3976 = vld [vmem:[%s3971 + $0x20] sm:$0xff]
    %v3977 = vld [vmem:[%s3971 + $0x28] sm:$0xff]
    %v3978 = vld [vmem:[%s3971 + $0x30] sm:$0xff]
    %v3979 = vld [vmem:[%s3971 + $0x38] sm:$0xff]
    %v3980 = vld [vmem:[%s3971 + $0x40] sm:$0xff]
    %v3981 = vld [vmem:[%s3971 + $0x48] sm:$0xff]
    %v3982 = vld [vmem:[%s3971 + $0x50] sm:$0xff]
    %v3983 = vld [vmem:[%s3971 + $0x58] sm:$0xff]
    %v3984 = vld [vmem:[%s3971 + $0x60] sm:$0xff]
    %v3985 = vld [vmem:[%s3971 + $0x68] sm:$0xff]
    %v3986 = vld [vmem:[%s3971 + $0x70] sm:$0xff]
    %v3987 = vld [vmem:[%s3971 + $0x78] sm:$0xff]
    %v3988 = vld [vmem:[%s3971 + $0x80] sm:$0xff]
    %v3989 = vld [vmem:[%s3971 + $0x88] sm:$0xff]
    %v3990 = vld [vmem:[%s3971 + $0x90] sm:$0xff]
    %v3991 = vld [vmem:[%s3971 + $0x98] sm:$0xff]
    %v3992 = vld [vmem:[%s3971 + $0xa0] sm:$0xff]
    %v3993 = vld [vmem:[%s3971 + $0xa8] sm:$0xff]
    %v3994 = vld [vmem:[%s3971 + $0xb0] sm:$0xff]
    %v3995 = vld [vmem:[%s3971 + $0xb8] sm:$0xff]
    %v3996 = vld [vmem:[%s3971 + $0xc0] sm:$0xf]
    %3997 = vset.pattern.permute.xlu0 15
    %3998 = vperm.xlu0 %3997, %v1307
    %v3999 = vpop.permute.xlu0 %3998
    %4001 = vset.pattern.permute.xlu0 15
    %4002 = vperm.xlu0 %4001, %v1308
    %v4003 = vpop.permute.xlu0 %4002
    %4005 = vset.pattern.permute.xlu0 15
    %4006 = vperm.xlu0 %4005, %v1309
    %v4007 = vpop.permute.xlu0 %4006
    %4009 = vset.pattern.permute.xlu0 15
    %4010 = vperm.xlu0 %4009, %v1310
    %v4011 = vpop.permute.xlu0 %4010
    %4013 = vset.pattern.permute.xlu0 15
    %4014 = vperm.xlu0 %4013, %v1311
    %v4015 = vpop.permute.xlu0 %4014
    %4017 = vset.pattern.permute.xlu0 15
    %4018 = vperm.xlu0 %4017, %v1312
    %v4019 = vpop.permute.xlu0 %4018
    %4021 = vset.pattern.permute.xlu0 15
    %4022 = vperm.xlu0 %4021, %v1313
    %v4023 = vpop.permute.xlu0 %4022
    %4025 = vset.pattern.permute.xlu0 15
    %4026 = vperm.xlu0 %4025, %v1314
    %v4027 = vpop.permute.xlu0 %4026
    %4029 = vset.pattern.permute.xlu0 15
    %4030 = vperm.xlu0 %4029, %v1315
    %v4031 = vpop.permute.xlu0 %4030
    %4033 = vset.pattern.permute.xlu0 15
    %4034 = vperm.xlu0 %4033, %v1316
    %v4035 = vpop.permute.xlu0 %4034
    %4037 = vset.pattern.permute.xlu0 15
    %4038 = vperm.xlu0 %4037, %v1317
    %v4039 = vpop.permute.xlu0 %4038
    %4041 = vset.pattern.permute.xlu0 15
    %4042 = vperm.xlu0 %4041, %v1318
    %v4043 = vpop.permute.xlu0 %4042
    %4045 = vset.pattern.permute.xlu0 15
    %4046 = vperm.xlu0 %4045, %v1319
    %v4047 = vpop.permute.xlu0 %4046
    %4049 = vset.pattern.permute.xlu0 15
    %4050 = vperm.xlu0 %4049, %v1320
    %v4051 = vpop.permute.xlu0 %4050
    %4053 = vset.pattern.permute.xlu0 15
    %4054 = vperm.xlu0 %4053, %v1321
    %v4055 = vpop.permute.xlu0 %4054
    %4057 = vset.pattern.permute.xlu0 15
    %4058 = vperm.xlu0 %4057, %v1322
    %v4059 = vpop.permute.xlu0 %4058
    %4061 = vset.pattern.permute.xlu0 15
    %4062 = vperm.xlu0 %4061, %v1323
    %v4063 = vpop.permute.xlu0 %4062
    %4065 = vset.pattern.permute.xlu0 15
    %4066 = vperm.xlu0 %4065, %v1324
    %v4067 = vpop.permute.xlu0 %4066
    %4069 = vset.pattern.permute.xlu0 15
    %4070 = vperm.xlu0 %4069, %v1325
    %v4071 = vpop.permute.xlu0 %4070
    %4073 = vset.pattern.permute.xlu0 15
    %4074 = vperm.xlu0 %4073, %v1326
    %v4075 = vpop.permute.xlu0 %4074
    %4077 = vset.pattern.permute.xlu0 15
    %4078 = vperm.xlu0 %4077, %v1327
    %v4079 = vpop.permute.xlu0 %4078
    %4081 = vset.pattern.permute.xlu0 15
    %4082 = vperm.xlu0 %4081, %v1328
    %v4083 = vpop.permute.xlu0 %4082
    %4085 = vset.pattern.permute.xlu0 15
    %4086 = vperm.xlu0 %4085, %v1329
    %v4087 = vpop.permute.xlu0 %4086
    %4089 = vset.pattern.permute.xlu0 15
    %4090 = vperm.xlu0 %4089, %v1330
    %v4091 = vpop.permute.xlu0 %4090
    %4093 = vset.pattern.permute.xlu0 15
    %4094 = vperm.xlu0 %4093, %v1331
    %v4095 = vpop.permute.xlu0 %4094
    %v4097 = vmul.f32 %v3999, %v3972
    %v4098 = vmul.f32 %v4003, %v3973
    %v4099 = vmul.f32 %v4007, %v3974
    %v4100 = vmul.f32 %v4011, %v3975
    %v4101 = vmul.f32 %v4015, %v3976
    %v4102 = vmul.f32 %v4019, %v3977
    %v4103 = vmul.f32 %v4023, %v3978
    %v4104 = vmul.f32 %v4027, %v3979
    %v4105 = vmul.f32 %v4031, %v3980
    %v4106 = vmul.f32 %v4035, %v3981
    %v4107 = vmul.f32 %v4039, %v3982
    %v4108 = vmul.f32 %v4043, %v3983
    %v4109 = vmul.f32 %v4047, %v3984
    %v4110 = vmul.f32 %v4051, %v3985
    %v4111 = vmul.f32 %v4055, %v3986
    %v4112 = vmul.f32 %v4059, %v3987
    %v4113 = vmul.f32 %v4063, %v3988
    %v4114 = vmul.f32 %v4067, %v3989
    %v4115 = vmul.f32 %v4071, %v3990
    %v4116 = vmul.f32 %v4075, %v3991
    %v4117 = vmul.f32 %v4079, %v3992
    %v4118 = vmul.f32 %v4083, %v3993
    %v4119 = vmul.f32 %v4087, %v3994
    %v4120 = vmul.f32 %v4091, %v3995
    %v4121 = vmul.f32 %v4095, %v3996
    %v4122 = vadd.f32 %v3946, %v4097
    %v4123 = vadd.f32 %v3947, %v4098
    %v4124 = vadd.f32 %v3948, %v4099
    %v4125 = vadd.f32 %v3949, %v4100
    %v4126 = vadd.f32 %v3950, %v4101
    %v4127 = vadd.f32 %v3951, %v4102
    %v4128 = vadd.f32 %v3952, %v4103
    %v4129 = vadd.f32 %v3953, %v4104
    %v4130 = vadd.f32 %v3954, %v4105
    %v4131 = vadd.f32 %v3955, %v4106
    %v4132 = vadd.f32 %v3956, %v4107
    %v4133 = vadd.f32 %v3957, %v4108
    %v4134 = vadd.f32 %v3958, %v4109
    %v4135 = vadd.f32 %v3959, %v4110
    %v4136 = vadd.f32 %v3960, %v4111
    %v4137 = vadd.f32 %v3961, %v4112
    %v4138 = vadd.f32 %v3962, %v4113
    %v4139 = vadd.f32 %v3963, %v4114
    %v4140 = vadd.f32 %v3964, %v4115
    %v4141 = vadd.f32 %v3965, %v4116
    %v4142 = vadd.f32 %v3966, %v4117
    %v4143 = vadd.f32 %v3967, %v4118
    %v4144 = vadd.f32 %v3968, %v4119
    %v4145 = vadd.f32 %v3969, %v4120
    %v4146 = vadd.f32 %v3970, %v4121
    %vm4147 = vcmask 80896
    %v4148 = vsel %vm4147, %v4122, 0.0
    %v4149 = vsel %vm4147, %v4123, 0.0
    %v4150 = vadd.f32 %v4148, %v4149
    %v4151 = vsel %vm4147, %v4124, 0.0
    %v4152 = vadd.f32 %v4150, %v4151
    %v4153 = vsel %vm4147, %v4125, 0.0
    %v4154 = vadd.f32 %v4152, %v4153
    %v4155 = vsel %vm4147, %v4126, 0.0
    %v4156 = vadd.f32 %v4154, %v4155
    %v4157 = vsel %vm4147, %v4127, 0.0
    %v4158 = vadd.f32 %v4156, %v4157
    %v4159 = vsel %vm4147, %v4128, 0.0
    %v4160 = vadd.f32 %v4158, %v4159
    %v4161 = vsel %vm4147, %v4129, 0.0
    %v4162 = vadd.f32 %v4160, %v4161
    %v4163 = vsel %vm4147, %v4130, 0.0
    %v4164 = vadd.f32 %v4162, %v4163
    %v4165 = vsel %vm4147, %v4131, 0.0
    %v4166 = vadd.f32 %v4164, %v4165
    %v4167 = vsel %vm4147, %v4132, 0.0
    %v4168 = vadd.f32 %v4166, %v4167
    %v4169 = vsel %vm4147, %v4133, 0.0
    %v4170 = vadd.f32 %v4168, %v4169
    %v4171 = vsel %vm4147, %v4134, 0.0
    %v4172 = vadd.f32 %v4170, %v4171
    %v4173 = vsel %vm4147, %v4135, 0.0
    %v4174 = vadd.f32 %v4172, %v4173
    %v4175 = vsel %vm4147, %v4136, 0.0
    %v4176 = vadd.f32 %v4174, %v4175
    %v4177 = vsel %vm4147, %v4137, 0.0
    %v4178 = vadd.f32 %v4176, %v4177
    %v4179 = vsel %vm4147, %v4138, 0.0
    %v4180 = vadd.f32 %v4178, %v4179
    %v4181 = vsel %vm4147, %v4139, 0.0
    %v4182 = vadd.f32 %v4180, %v4181
    %v4183 = vsel %vm4147, %v4140, 0.0
    %v4184 = vadd.f32 %v4182, %v4183
    %v4185 = vsel %vm4147, %v4141, 0.0
    %v4186 = vadd.f32 %v4184, %v4185
    %v4187 = vsel %vm4147, %v4142, 0.0
    %v4188 = vadd.f32 %v4186, %v4187
    %v4189 = vsel %vm4147, %v4143, 0.0
    %v4190 = vadd.f32 %v4188, %v4189
    %v4191 = vsel %vm4147, %v4144, 0.0
    %v4192 = vadd.f32 %v4190, %v4191
    %v4193 = vsel %vm4147, %v4145, 0.0
    %v4194 = vadd.f32 %v4192, %v4193
    %vm4195 = vcmask 76800
    %v4196 = vsel %vm4195, %v4146, 0.0
    %v4197 = vadd.f32 %v4194, %v4196
    %v4198 = vrot.slane %v4197, 4
    %v4199 = vadd.f32 %v4197, %v4198
    %v4200 = vrot.slane %v4199, 2
    %v4201 = vadd.f32 %v4199, %v4200
    %v4202 = vrot.slane %v4201, 1
    %v4203 = vadd.f32 %v4201, %v4202
    %v4204 = vadd.f32 %v4203, %v35
    %vm4205 = vcmask 73728
    %4206 = vst.msk [vmem:[#allocation2] sm:$0x1] %vm4205, %v4204
    %s4207 = scalar_lea.vmem %s0, 200
    %v4208 = vld [vmem:[%s4207] sm:$0xff]
    %v4209 = vld [vmem:[%s4207 + $0x8] sm:$0xff]
    %v4210 = vld [vmem:[%s4207 + $0x10] sm:$0xff]
    %v4211 = vld [vmem:[%s4207 + $0x18] sm:$0xff]
    %v4212 = vld [vmem:[%s4207 + $0x20] sm:$0xff]
    %v4213 = vld [vmem:[%s4207 + $0x28] sm:$0xff]
    %v4214 = vld [vmem:[%s4207 + $0x30] sm:$0xff]
    %v4215 = vld [vmem:[%s4207 + $0x38] sm:$0xff]
    %v4216 = vld [vmem:[%s4207 + $0x40] sm:$0xff]
    %v4217 = vld [vmem:[%s4207 + $0x48] sm:$0xff]
    %v4218 = vld [vmem:[%s4207 + $0x50] sm:$0xff]
    %v4219 = vld [vmem:[%s4207 + $0x58] sm:$0xff]
    %v4220 = vld [vmem:[%s4207 + $0x60] sm:$0xff]
    %v4221 = vld [vmem:[%s4207 + $0x68] sm:$0xff]
    %v4222 = vld [vmem:[%s4207 + $0x70] sm:$0xff]
    %v4223 = vld [vmem:[%s4207 + $0x78] sm:$0xff]
    %v4224 = vld [vmem:[%s4207 + $0x80] sm:$0xff]
    %v4225 = vld [vmem:[%s4207 + $0x88] sm:$0xff]
    %v4226 = vld [vmem:[%s4207 + $0x90] sm:$0xff]
    %v4227 = vld [vmem:[%s4207 + $0x98] sm:$0xff]
    %v4228 = vld [vmem:[%s4207 + $0xa0] sm:$0xff]
    %v4229 = vld [vmem:[%s4207 + $0xa8] sm:$0xff]
    %v4230 = vld [vmem:[%s4207 + $0xb0] sm:$0xff]
    %v4231 = vld [vmem:[%s4207 + $0xb8] sm:$0xff]
    %v4232 = vld [vmem:[%s4207 + $0xc0] sm:$0xf]
    %v4234 = vsel %vm61, %v4208, 0
    %v4237 = vsel %vm61, %v4209, 0
    %v4240 = vsel %vm61, %v4210, 0
    %v4243 = vsel %vm61, %v4211, 0
    %v4246 = vsel %vm61, %v4212, 0
    %v4249 = vsel %vm61, %v4213, 0
    %v4252 = vsel %vm61, %v4214, 0
    %v4255 = vsel %vm61, %v4215, 0
    %v4258 = vsel %vm61, %v4216, 0
    %v4261 = vsel %vm61, %v4217, 0
    %v4264 = vsel %vm61, %v4218, 0
    %v4267 = vsel %vm61, %v4219, 0
    %v4270 = vsel %vm61, %v4220, 0
    %v4273 = vsel %vm61, %v4221, 0
    %v4276 = vsel %vm61, %v4222, 0
    %v4279 = vsel %vm61, %v4223, 0
    %v4282 = vsel %vm61, %v4224, 0
    %v4285 = vsel %vm61, %v4225, 0
    %v4288 = vsel %vm61, %v4226, 0
    %v4291 = vsel %vm61, %v4227, 0
    %v4294 = vsel %vm61, %v4228, 0
    %v4297 = vsel %vm61, %v4229, 0
    %v4300 = vsel %vm61, %v4230, 0
    %v4303 = vsel %vm61, %v4231, 0
    %v4306 = vsel %vm61, %v4232, 0
    %4308 = vmatprep.subr.mxu0 0.0
    %4309 = vmatpush1.msra.mxu0 %v30
    %4310 = vmatprep.subr.mxu0 0.0
    %4311 = vmatpush1.msra.mxu0 %v31
    %4312 = vmatprep.subr.mxu0 0.0
    %4313 = vmatpush1.msra.mxu0 %v32
    %4314 = vmatprep.subr.mxu0 0.0
    %4315 = vmatpush1.msra.mxu0 %v139
    %4316 = vmatprep.subr.mxu0 0.0
    %4317 = vmatpush1.msra.mxu0 0.0
    %4318 = vmatprep.subr.mxu0 0.0
    %4319 = vmatpush1.msra.mxu0 0.0
    %4320 = vmatprep.subr.mxu0 0.0
    %4321 = vmatpush1.msra.mxu0 0.0
    %4322 = vmatprep.subr.mxu0 0.0
    %4323 = vmatpush1.msra.mxu0 0.0
    %4324 = vmatprep.subr.mxu0 0.0
    %4325 = vmatpush1.msra.mxu0 0.0
    %4326 = vmatprep.subr.mxu0 0.0
    %4327 = vmatpush1.msra.mxu0 0.0
    %4328 = vmatprep.subr.mxu0 0.0
    %4329 = vmatpush1.msra.mxu0 0.0
    %4330 = vmatprep.subr.mxu0 0.0
    %4331 = vmatpush1.msra.mxu0 0.0
    %4332 = vmatprep.subr.mxu0 0.0
    %4333 = vmatpush1.msra.mxu0 0.0
    %4334 = vmatprep.subr.mxu0 0.0
    %4335 = vmatpush1.msra.mxu0 0.0
    %4336 = vmatprep.subr.mxu0 0.0
    %4337 = vmatpush1.msra.mxu0 0.0
    %4338 = vmatprep.subr.mxu0 0.0
    %4339 = vmatpush1.msra.mxu0 0.0
    %4340 = vmatprep.subr.mxu0 0.0
    %4341 = vmatpush1.msra.mxu0 0.0
    %4342 = vmatprep.subr.mxu0 0.0
    %4343 = vmatpush1.msra.mxu0 0.0
    %4344 = vmatprep.subr.mxu0 0.0
    %4345 = vmatpush1.msra.mxu0 0.0
    %4346 = vmatprep.subr.mxu0 0.0
    %4347 = vmatpush1.msra.mxu0 0.0
    %4348 = vmatprep.subr.mxu0 0.0
    %4349 = vmatpush1.msra.mxu0 0.0
    %4350 = vmatprep.subr.mxu0 0.0
    %4351 = vmatpush1.msra.mxu0 0.0
    %4352 = vmatprep.subr.mxu0 0.0
    %4353 = vmatpush1.msra.mxu0 0.0
    %4354 = vmatprep.subr.mxu0 0.0
    %4355 = vmatpush1.msra.mxu0 0.0
    %4356 = vmatprep.subr.mxu0 0.0
    %4357 = vmatpush1.msra.mxu0 0.0
    %4358 = vmatprep.subr.mxu0 0.0
    %4359 = vmatpush1.msra.mxu0 0.0
    %4360 = vmatprep.subr.mxu0 0.0
    %4361 = vmatpush1.msra.mxu0 0.0
    %4362 = vmatprep.subr.mxu0 0.0
    %4363 = vmatpush1.msra.mxu0 0.0
    %4364 = vmatprep.subr.mxu0 0.0
    %4365 = vmatpush1.msra.mxu0 0.0
    %4366 = vmatprep.subr.mxu0 0.0
    %4367 = vmatpush1.msra.mxu0 0.0
    %4368 = vmatprep.subr.mxu0 0.0
    %4369 = vmatpush1.msra.mxu0 0.0
    %4370 = vmatprep.subr.mxu0 0.0
    %4371 = vmatpush1.msra.mxu0 0.0
    %4372 = vmatprep.mubr.f32.mxu0 0.0
    %4373 = vmatmul.mubr.f32.gmra.mrb[0].mxu0 %v4234
    %v4374 = vpop.f32.mrb[0].mxu0
    %v4375 = vadd.f32 0.0, %v4374
    %v4376 = vpop.f32.mrb[0].mxu0
    %4377 = vmatprep.mubr.f32.mxu0 0.0
    %4378 = vmatmul.mubr.f32.gmra.mrb[0].mxu0 %v4237
    %v4379 = vpop.f32.mrb[0].mxu0
    %v4380 = vadd.f32 0.0, %v4379
    %v4381 = vpop.f32.mrb[0].mxu0
    %4382 = vmatprep.mubr.f32.mxu0 0.0
    %4383 = vmatmul.mubr.f32.gmra.mrb[0].mxu0 %v4240
    %v4384 = vpop.f32.mrb[0].mxu0
    %v4385 = vadd.f32 0.0, %v4384
    %v4386 = vpop.f32.mrb[0].mxu0
    %4387 = vmatprep.mubr.f32.mxu0 0.0
    %4388 = vmatmul.mubr.f32.gmra.mrb[0].mxu0 %v4243
    %v4389 = vpop.f32.mrb[0].mxu0
    %v4390 = vadd.f32 0.0, %v4389
    %v4391 = vpop.f32.mrb[0].mxu0
    %4392 = vmatprep.mubr.f32.mxu0 0.0
    %4393 = vmatmul.mubr.f32.gmra.mrb[0].mxu0 %v4246
    %v4394 = vpop.f32.mrb[0].mxu0
    %v4395 = vadd.f32 0.0, %v4394
    %v4396 = vpop.f32.mrb[0].mxu0
    %4397 = vmatprep.mubr.f32.mxu0 0.0
    %4398 = vmatmul.mubr.f32.gmra.mrb[0].mxu0 %v4249
    %v4399 = vpop.f32.mrb[0].mxu0
    %v4400 = vadd.f32 0.0, %v4399
    %v4401 = vpop.f32.mrb[0].mxu0
    %4402 = vmatprep.mubr.f32.mxu0 0.0
    %4403 = vmatmul.mubr.f32.gmra.mrb[0].mxu0 %v4252
    %v4404 = vpop.f32.mrb[0].mxu0
    %v4405 = vadd.f32 0.0, %v4404
    %v4406 = vpop.f32.mrb[0].mxu0
    %4407 = vmatprep.mubr.f32.mxu0 0.0
    %4408 = vmatmul.mubr.f32.gmra.mrb[0].mxu0 %v4255
    %v4409 = vpop.f32.mrb[0].mxu0
    %v4410 = vadd.f32 0.0, %v4409
    %v4411 = vpop.f32.mrb[0].mxu0
    %4412 = vmatprep.mubr.f32.mxu0 0.0
    %4413 = vmatmul.mubr.f32.gmra.mrb[0].mxu0 %v4258
    %v4414 = vpop.f32.mrb[0].mxu0
    %v4415 = vadd.f32 0.0, %v4414
    %v4416 = vpop.f32.mrb[0].mxu0
    %4417 = vmatprep.mubr.f32.mxu0 0.0
    %4418 = vmatmul.mubr.f32.gmra.mrb[0].mxu0 %v4261
    %v4419 = vpop.f32.mrb[0].mxu0
    %v4420 = vadd.f32 0.0, %v4419
    %v4421 = vpop.f32.mrb[0].mxu0
    %4422 = vmatprep.mubr.f32.mxu0 0.0
    %4423 = vmatmul.mubr.f32.gmra.mrb[0].mxu0 %v4264
    %v4424 = vpop.f32.mrb[0].mxu0
    %v4425 = vadd.f32 0.0, %v4424
    %v4426 = vpop.f32.mrb[0].mxu0
    %4427 = vmatprep.mubr.f32.mxu0 0.0
    %4428 = vmatmul.mubr.f32.gmra.mrb[0].mxu0 %v4267
    %v4429 = vpop.f32.mrb[0].mxu0
    %v4430 = vadd.f32 0.0, %v4429
    %v4431 = vpop.f32.mrb[0].mxu0
    %4432 = vmatprep.mubr.f32.mxu0 0.0
    %4433 = vmatmul.mubr.f32.gmra.mrb[0].mxu0 %v4270
    %v4434 = vpop.f32.mrb[0].mxu0
    %v4435 = vadd.f32 0.0, %v4434
    %v4436 = vpop.f32.mrb[0].mxu0
    %4437 = vmatprep.mubr.f32.mxu0 0.0
    %4438 = vmatmul.mubr.f32.gmra.mrb[0].mxu0 %v4273
    %v4439 = vpop.f32.mrb[0].mxu0
    %v4440 = vadd.f32 0.0, %v4439
    %v4441 = vpop.f32.mrb[0].mxu0
    %4442 = vmatprep.mubr.f32.mxu0 0.0
    %4443 = vmatmul.mubr.f32.gmra.mrb[0].mxu0 %v4276
    %v4444 = vpop.f32.mrb[0].mxu0
    %v4445 = vadd.f32 0.0, %v4444
    %v4446 = vpop.f32.mrb[0].mxu0
    %4447 = vmatprep.mubr.f32.mxu0 0.0
    %4448 = vmatmul.mubr.f32.gmra.mrb[0].mxu0 %v4279
    %v4449 = vpop.f32.mrb[0].mxu0
    %v4450 = vadd.f32 0.0, %v4449
    %v4451 = vpop.f32.mrb[0].mxu0
    %4452 = vmatprep.mubr.f32.mxu0 0.0
    %4453 = vmatmul.mubr.f32.gmra.mrb[0].mxu0 %v4282
    %v4454 = vpop.f32.mrb[0].mxu0
    %v4455 = vadd.f32 0.0, %v4454
    %v4456 = vpop.f32.mrb[0].mxu0
    %4457 = vmatprep.mubr.f32.mxu0 0.0
    %4458 = vmatmul.mubr.f32.gmra.mrb[0].mxu0 %v4285
    %v4459 = vpop.f32.mrb[0].mxu0
    %v4460 = vadd.f32 0.0, %v4459
    %v4461 = vpop.f32.mrb[0].mxu0
    %4462 = vmatprep.mubr.f32.mxu0 0.0
    %4463 = vmatmul.mubr.f32.gmra.mrb[0].mxu0 %v4288
    %v4464 = vpop.f32.mrb[0].mxu0
    %v4465 = vadd.f32 0.0, %v4464
    %v4466 = vpop.f32.mrb[0].mxu0
    %4467 = vmatprep.mubr.f32.mxu0 0.0
    %4468 = vmatmul.mubr.f32.gmra.mrb[0].mxu0 %v4291
    %v4469 = vpop.f32.mrb[0].mxu0
    %v4470 = vadd.f32 0.0, %v4469
    %v4471 = vpop.f32.mrb[0].mxu0
    %4472 = vmatprep.mubr.f32.mxu0 0.0
    %4473 = vmatmul.mubr.f32.gmra.mrb[0].mxu0 %v4294
    %v4474 = vpop.f32.mrb[0].mxu0
    %v4475 = vadd.f32 0.0, %v4474
    %v4476 = vpop.f32.mrb[0].mxu0
    %4477 = vmatprep.mubr.f32.mxu0 0.0
    %4478 = vmatmul.mubr.f32.gmra.mrb[0].mxu0 %v4297
    %v4479 = vpop.f32.mrb[0].mxu0
    %v4480 = vadd.f32 0.0, %v4479
    %v4481 = vpop.f32.mrb[0].mxu0
    %4482 = vmatprep.mubr.f32.mxu0 0.0
    %4483 = vmatmul.mubr.f32.gmra.mrb[0].mxu0 %v4300
    %v4484 = vpop.f32.mrb[0].mxu0
    %v4485 = vadd.f32 0.0, %v4484
    %v4486 = vpop.f32.mrb[0].mxu0
    %4487 = vmatprep.mubr.f32.mxu0 0.0
    %4488 = vmatmul.mubr.f32.gmra.mrb[0].mxu0 %v4303
    %v4489 = vpop.f32.mrb[0].mxu0
    %v4490 = vadd.f32 0.0, %v4489
    %v4491 = vpop.f32.mrb[0].mxu0
    %4492 = vmatprep.mubr.f32.mxu0 0.0
    %4493 = vmatmul.mubr.f32.gmra.mrb[0].mxu0 %v4306
    %v4494 = vpop.f32.mrb[0].mxu0
    %v4495 = vadd.f32 0.0, %v4494
    %v4496 = vpop.f32.mrb[0].mxu0
    %4497 = vdwg.mxu0
    %s4498 = scalar_lea.vmem %s1, 200
    %v4499 = vld [vmem:[%s4498] sm:$0xff]
    %v4500 = vld [vmem:[%s4498 + $0x8] sm:$0xff]
    %v4501 = vld [vmem:[%s4498 + $0x10] sm:$0xff]
    %v4502 = vld [vmem:[%s4498 + $0x18] sm:$0xff]
    %v4503 = vld [vmem:[%s4498 + $0x20] sm:$0xff]
    %v4504 = vld [vmem:[%s4498 + $0x28] sm:$0xff]
    %v4505 = vld [vmem:[%s4498 + $0x30] sm:$0xff]
    %v4506 = vld [vmem:[%s4498 + $0x38] sm:$0xff]
    %v4507 = vld [vmem:[%s4498 + $0x40] sm:$0xff]
    %v4508 = vld [vmem:[%s4498 + $0x48] sm:$0xff]
    %v4509 = vld [vmem:[%s4498 + $0x50] sm:$0xff]
    %v4510 = vld [vmem:[%s4498 + $0x58] sm:$0xff]
    %v4511 = vld [vmem:[%s4498 + $0x60] sm:$0xff]
    %v4512 = vld [vmem:[%s4498 + $0x68] sm:$0xff]
    %v4513 = vld [vmem:[%s4498 + $0x70] sm:$0xff]
    %v4514 = vld [vmem:[%s4498 + $0x78] sm:$0xff]
    %v4515 = vld [vmem:[%s4498 + $0x80] sm:$0xff]
    %v4516 = vld [vmem:[%s4498 + $0x88] sm:$0xff]
    %v4517 = vld [vmem:[%s4498 + $0x90] sm:$0xff]
    %v4518 = vld [vmem:[%s4498 + $0x98] sm:$0xff]
    %v4519 = vld [vmem:[%s4498 + $0xa0] sm:$0xff]
    %v4520 = vld [vmem:[%s4498 + $0xa8] sm:$0xff]
    %v4521 = vld [vmem:[%s4498 + $0xb0] sm:$0xff]
    %v4522 = vld [vmem:[%s4498 + $0xb8] sm:$0xff]
    %v4523 = vld [vmem:[%s4498 + $0xc0] sm:$0xf]
    %v4525 = vsel %vm61, %v4499, 0
    %v4528 = vsel %vm61, %v4500, 0
    %v4531 = vsel %vm61, %v4501, 0
    %v4534 = vsel %vm61, %v4502, 0
    %v4537 = vsel %vm61, %v4503, 0
    %v4540 = vsel %vm61, %v4504, 0
    %v4543 = vsel %vm61, %v4505, 0
    %v4546 = vsel %vm61, %v4506, 0
    %v4549 = vsel %vm61, %v4507, 0
    %v4552 = vsel %vm61, %v4508, 0
    %v4555 = vsel %vm61, %v4509, 0
    %v4558 = vsel %vm61, %v4510, 0
    %v4561 = vsel %vm61, %v4511, 0
    %v4564 = vsel %vm61, %v4512, 0
    %v4567 = vsel %vm61, %v4513, 0
    %v4570 = vsel %vm61, %v4514, 0
    %v4573 = vsel %vm61, %v4515, 0
    %v4576 = vsel %vm61, %v4516, 0
    %v4579 = vsel %vm61, %v4517, 0
    %v4582 = vsel %vm61, %v4518, 0
    %v4585 = vsel %vm61, %v4519, 0
    %v4588 = vsel %vm61, %v4520, 0
    %v4591 = vsel %vm61, %v4521, 0
    %v4594 = vsel %vm61, %v4522, 0
    %v4597 = vsel %vm61, %v4523, 0
    %4599 = vmatprep.subr.mxu0 0.0
    %4600 = vmatpush1.msra.mxu0 %v30
    %4601 = vmatprep.subr.mxu0 0.0
    %4602 = vmatpush1.msra.mxu0 %v31
    %4603 = vmatprep.subr.mxu0 0.0
    %4604 = vmatpush1.msra.mxu0 %v32
    %4605 = vmatprep.subr.mxu0 0.0
    %4606 = vmatpush1.msra.mxu0 %v139
    %4607 = vmatprep.subr.mxu0 0.0
    %4608 = vmatpush1.msra.mxu0 0.0
    %4609 = vmatprep.subr.mxu0 0.0
    %4610 = vmatpush1.msra.mxu0 0.0
    %4611 = vmatprep.subr.mxu0 0.0
    %4612 = vmatpush1.msra.mxu0 0.0
    %4613 = vmatprep.subr.mxu0 0.0
    %4614 = vmatpush1.msra.mxu0 0.0
    %4615 = vmatprep.subr.mxu0 0.0
    %4616 = vmatpush1.msra.mxu0 0.0
    %4617 = vmatprep.subr.mxu0 0.0
    %4618 = vmatpush1.msra.mxu0 0.0
    %4619 = vmatprep.subr.mxu0 0.0
    %4620 = vmatpush1.msra.mxu0 0.0
    %4621 = vmatprep.subr.mxu0 0.0
    %4622 = vmatpush1.msra.mxu0 0.0
    %4623 = vmatprep.subr.mxu0 0.0
    %4624 = vmatpush1.msra.mxu0 0.0
    %4625 = vmatprep.subr.mxu0 0.0
    %4626 = vmatpush1.msra.mxu0 0.0
    %4627 = vmatprep.subr.mxu0 0.0
    %4628 = vmatpush1.msra.mxu0 0.0
    %4629 = vmatprep.subr.mxu0 0.0
    %4630 = vmatpush1.msra.mxu0 0.0
    %4631 = vmatprep.subr.mxu0 0.0
    %4632 = vmatpush1.msra.mxu0 0.0
    %4633 = vmatprep.subr.mxu0 0.0
    %4634 = vmatpush1.msra.mxu0 0.0
    %4635 = vmatprep.subr.mxu0 0.0
    %4636 = vmatpush1.msra.mxu0 0.0
    %4637 = vmatprep.subr.mxu0 0.0
    %4638 = vmatpush1.msra.mxu0 0.0
    %4639 = vmatprep.subr.mxu0 0.0
    %4640 = vmatpush1.msra.mxu0 0.0
    %4641 = vmatprep.subr.mxu0 0.0
    %4642 = vmatpush1.msra.mxu0 0.0
    %4643 = vmatprep.subr.mxu0 0.0
    %4644 = vmatpush1.msra.mxu0 0.0
    %4645 = vmatprep.subr.mxu0 0.0
    %4646 = vmatpush1.msra.mxu0 0.0
    %4647 = vmatprep.subr.mxu0 0.0
    %4648 = vmatpush1.msra.mxu0 0.0
    %4649 = vmatprep.subr.mxu0 0.0
    %4650 = vmatpush1.msra.mxu0 0.0
    %4651 = vmatprep.subr.mxu0 0.0
    %4652 = vmatpush1.msra.mxu0 0.0
    %4653 = vmatprep.subr.mxu0 0.0
    %4654 = vmatpush1.msra.mxu0 0.0
    %4655 = vmatprep.subr.mxu0 0.0
    %4656 = vmatpush1.msra.mxu0 0.0
    %4657 = vmatprep.subr.mxu0 0.0
    %4658 = vmatpush1.msra.mxu0 0.0
    %4659 = vmatprep.subr.mxu0 0.0
    %4660 = vmatpush1.msra.mxu0 0.0
    %4661 = vmatprep.subr.mxu0 0.0
    %4662 = vmatpush1.msra.mxu0 0.0
    %4663 = vmatprep.mubr.f32.mxu0 0.0
    %4664 = vmatmul.mubr.f32.gmra.mrb[0].mxu0 %v4525
    %v4665 = vpop.f32.mrb[0].mxu0
    %v4666 = vadd.f32 0.0, %v4665
    %v4667 = vpop.f32.mrb[0].mxu0
    %4668 = vmatprep.mubr.f32.mxu0 0.0
    %4669 = vmatmul.mubr.f32.gmra.mrb[0].mxu0 %v4528
    %v4670 = vpop.f32.mrb[0].mxu0
    %v4671 = vadd.f32 0.0, %v4670
    %v4672 = vpop.f32.mrb[0].mxu0
    %4673 = vmatprep.mubr.f32.mxu0 0.0
    %4674 = vmatmul.mubr.f32.gmra.mrb[0].mxu0 %v4531
    %v4675 = vpop.f32.mrb[0].mxu0
    %v4676 = vadd.f32 0.0, %v4675
    %v4677 = vpop.f32.mrb[0].mxu0
    %4678 = vmatprep.mubr.f32.mxu0 0.0
    %4679 = vmatmul.mubr.f32.gmra.mrb[0].mxu0 %v4534
    %v4680 = vpop.f32.mrb[0].mxu0
    %v4681 = vadd.f32 0.0, %v4680
    %v4682 = vpop.f32.mrb[0].mxu0
    %4683 = vmatprep.mubr.f32.mxu0 0.0
    %4684 = vmatmul.mubr.f32.gmra.mrb[0].mxu0 %v4537
    %v4685 = vpop.f32.mrb[0].mxu0
    %v4686 = vadd.f32 0.0, %v4685
    %v4687 = vpop.f32.mrb[0].mxu0
    %4688 = vmatprep.mubr.f32.mxu0 0.0
    %4689 = vmatmul.mubr.f32.gmra.mrb[0].mxu0 %v4540
    %v4690 = vpop.f32.mrb[0].mxu0
    %v4691 = vadd.f32 0.0, %v4690
    %v4692 = vpop.f32.mrb[0].mxu0
    %4693 = vmatprep.mubr.f32.mxu0 0.0
    %4694 = vmatmul.mubr.f32.gmra.mrb[0].mxu0 %v4543
    %v4695 = vpop.f32.mrb[0].mxu0
    %v4696 = vadd.f32 0.0, %v4695
    %v4697 = vpop.f32.mrb[0].mxu0
    %4698 = vmatprep.mubr.f32.mxu0 0.0
    %4699 = vmatmul.mubr.f32.gmra.mrb[0].mxu0 %v4546
    %v4700 = vpop.f32.mrb[0].mxu0
    %v4701 = vadd.f32 0.0, %v4700
    %v4702 = vpop.f32.mrb[0].mxu0
    %4703 = vmatprep.mubr.f32.mxu0 0.0
    %4704 = vmatmul.mubr.f32.gmra.mrb[0].mxu0 %v4549
    %v4705 = vpop.f32.mrb[0].mxu0
    %v4706 = vadd.f32 0.0, %v4705
    %v4707 = vpop.f32.mrb[0].mxu0
    %4708 = vmatprep.mubr.f32.mxu0 0.0
    %4709 = vmatmul.mubr.f32.gmra.mrb[0].mxu0 %v4552
    %v4710 = vpop.f32.mrb[0].mxu0
    %v4711 = vadd.f32 0.0, %v4710
    %v4712 = vpop.f32.mrb[0].mxu0
    %4713 = vmatprep.mubr.f32.mxu0 0.0
    %4714 = vmatmul.mubr.f32.gmra.mrb[0].mxu0 %v4555
    %v4715 = vpop.f32.mrb[0].mxu0
    %v4716 = vadd.f32 0.0, %v4715
    %v4717 = vpop.f32.mrb[0].mxu0
    %4718 = vmatprep.mubr.f32.mxu0 0.0
    %4719 = vmatmul.mubr.f32.gmra.mrb[0].mxu0 %v4558
    %v4720 = vpop.f32.mrb[0].mxu0
    %v4721 = vadd.f32 0.0, %v4720
    %v4722 = vpop.f32.mrb[0].mxu0
    %4723 = vmatprep.mubr.f32.mxu0 0.0
    %4724 = vmatmul.mubr.f32.gmra.mrb[0].mxu0 %v4561
    %v4725 = vpop.f32.mrb[0].mxu0
    %v4726 = vadd.f32 0.0, %v4725
    %v4727 = vpop.f32.mrb[0].mxu0
    %4728 = vmatprep.mubr.f32.mxu0 0.0
    %4729 = vmatmul.mubr.f32.gmra.mrb[0].mxu0 %v4564
    %v4730 = vpop.f32.mrb[0].mxu0
    %v4731 = vadd.f32 0.0, %v4730
    %v4732 = vpop.f32.mrb[0].mxu0
    %4733 = vmatprep.mubr.f32.mxu0 0.0
    %4734 = vmatmul.mubr.f32.gmra.mrb[0].mxu0 %v4567
    %v4735 = vpop.f32.mrb[0].mxu0
    %v4736 = vadd.f32 0.0, %v4735
    %v4737 = vpop.f32.mrb[0].mxu0
    %4738 = vmatprep.mubr.f32.mxu0 0.0
    %4739 = vmatmul.mubr.f32.gmra.mrb[0].mxu0 %v4570
    %v4740 = vpop.f32.mrb[0].mxu0
    %v4741 = vadd.f32 0.0, %v4740
    %v4742 = vpop.f32.mrb[0].mxu0
    %4743 = vmatprep.mubr.f32.mxu0 0.0
    %4744 = vmatmul.mubr.f32.gmra.mrb[0].mxu0 %v4573
    %v4745 = vpop.f32.mrb[0].mxu0
    %v4746 = vadd.f32 0.0, %v4745
    %v4747 = vpop.f32.mrb[0].mxu0
    %4748 = vmatprep.mubr.f32.mxu0 0.0
    %4749 = vmatmul.mubr.f32.gmra.mrb[0].mxu0 %v4576
    %v4750 = vpop.f32.mrb[0].mxu0
    %v4751 = vadd.f32 0.0, %v4750
    %v4752 = vpop.f32.mrb[0].mxu0
    %4753 = vmatprep.mubr.f32.mxu0 0.0
    %4754 = vmatmul.mubr.f32.gmra.mrb[0].mxu0 %v4579
    %v4755 = vpop.f32.mrb[0].mxu0
    %v4756 = vadd.f32 0.0, %v4755
    %v4757 = vpop.f32.mrb[0].mxu0
    %4758 = vmatprep.mubr.f32.mxu0 0.0
    %4759 = vmatmul.mubr.f32.gmra.mrb[0].mxu0 %v4582
    %v4760 = vpop.f32.mrb[0].mxu0
    %v4761 = vadd.f32 0.0, %v4760
    %v4762 = vpop.f32.mrb[0].mxu0
    %4763 = vmatprep.mubr.f32.mxu0 0.0
    %4764 = vmatmul.mubr.f32.gmra.mrb[0].mxu0 %v4585
    %v4765 = vpop.f32.mrb[0].mxu0
    %v4766 = vadd.f32 0.0, %v4765
    %v4767 = vpop.f32.mrb[0].mxu0
    %4768 = vmatprep.mubr.f32.mxu0 0.0
    %4769 = vmatmul.mubr.f32.gmra.mrb[0].mxu0 %v4588
    %v4770 = vpop.f32.mrb[0].mxu0
    %v4771 = vadd.f32 0.0, %v4770
    %v4772 = vpop.f32.mrb[0].mxu0
    %4773 = vmatprep.mubr.f32.mxu0 0.0
    %4774 = vmatmul.mubr.f32.gmra.mrb[0].mxu0 %v4591
    %v4775 = vpop.f32.mrb[0].mxu0
    %v4776 = vadd.f32 0.0, %v4775
    %v4777 = vpop.f32.mrb[0].mxu0
    %4778 = vmatprep.mubr.f32.mxu0 0.0
    %4779 = vmatmul.mubr.f32.gmra.mrb[0].mxu0 %v4594
    %v4780 = vpop.f32.mrb[0].mxu0
    %v4781 = vadd.f32 0.0, %v4780
    %v4782 = vpop.f32.mrb[0].mxu0
    %4783 = vmatprep.mubr.f32.mxu0 0.0
    %4784 = vmatmul.mubr.f32.gmra.mrb[0].mxu0 %v4597
    %v4785 = vpop.f32.mrb[0].mxu0
    %v4786 = vadd.f32 0.0, %v4785
    %v4787 = vpop.f32.mrb[0].mxu0
    %4788 = vdwg.mxu0
    %s4789 = scalar_lea.vmem %s2, 200
    %v4790 = vld [vmem:[%s4789] sm:$0xff]
    %v4791 = vld [vmem:[%s4789 + $0x8] sm:$0xff]
    %v4792 = vld [vmem:[%s4789 + $0x10] sm:$0xff]
    %v4793 = vld [vmem:[%s4789 + $0x18] sm:$0xff]
    %v4794 = vld [vmem:[%s4789 + $0x20] sm:$0xff]
    %v4795 = vld [vmem:[%s4789 + $0x28] sm:$0xff]
    %v4796 = vld [vmem:[%s4789 + $0x30] sm:$0xff]
    %v4797 = vld [vmem:[%s4789 + $0x38] sm:$0xff]
    %v4798 = vld [vmem:[%s4789 + $0x40] sm:$0xff]
    %v4799 = vld [vmem:[%s4789 + $0x48] sm:$0xff]
    %v4800 = vld [vmem:[%s4789 + $0x50] sm:$0xff]
    %v4801 = vld [vmem:[%s4789 + $0x58] sm:$0xff]
    %v4802 = vld [vmem:[%s4789 + $0x60] sm:$0xff]
    %v4803 = vld [vmem:[%s4789 + $0x68] sm:$0xff]
    %v4804 = vld [vmem:[%s4789 + $0x70] sm:$0xff]
    %v4805 = vld [vmem:[%s4789 + $0x78] sm:$0xff]
    %v4806 = vld [vmem:[%s4789 + $0x80] sm:$0xff]
    %v4807 = vld [vmem:[%s4789 + $0x88] sm:$0xff]
    %v4808 = vld [vmem:[%s4789 + $0x90] sm:$0xff]
    %v4809 = vld [vmem:[%s4789 + $0x98] sm:$0xff]
    %v4810 = vld [vmem:[%s4789 + $0xa0] sm:$0xff]
    %v4811 = vld [vmem:[%s4789 + $0xa8] sm:$0xff]
    %v4812 = vld [vmem:[%s4789 + $0xb0] sm:$0xff]
    %v4813 = vld [vmem:[%s4789 + $0xb8] sm:$0xff]
    %v4814 = vld [vmem:[%s4789 + $0xc0] sm:$0xf]
    %v4816 = vsel %vm61, %v4790, 0
    %v4819 = vsel %vm61, %v4791, 0
    %v4822 = vsel %vm61, %v4792, 0
    %v4825 = vsel %vm61, %v4793, 0
    %v4828 = vsel %vm61, %v4794, 0
    %v4831 = vsel %vm61, %v4795, 0
    %v4834 = vsel %vm61, %v4796, 0
    %v4837 = vsel %vm61, %v4797, 0
    %v4840 = vsel %vm61, %v4798, 0
    %v4843 = vsel %vm61, %v4799, 0
    %v4846 = vsel %vm61, %v4800, 0
    %v4849 = vsel %vm61, %v4801, 0
    %v4852 = vsel %vm61, %v4802, 0
    %v4855 = vsel %vm61, %v4803, 0
    %v4858 = vsel %vm61, %v4804, 0
    %v4861 = vsel %vm61, %v4805, 0
    %v4864 = vsel %vm61, %v4806, 0
    %v4867 = vsel %vm61, %v4807, 0
    %v4870 = vsel %vm61, %v4808, 0
    %v4873 = vsel %vm61, %v4809, 0
    %v4876 = vsel %vm61, %v4810, 0
    %v4879 = vsel %vm61, %v4811, 0
    %v4882 = vsel %vm61, %v4812, 0
    %v4885 = vsel %vm61, %v4813, 0
    %v4888 = vsel %vm61, %v4814, 0
    %4890 = vmatprep.subr.mxu0 0.0
    %4891 = vmatpush1.msra.mxu0 %v30
    %4892 = vmatprep.subr.mxu0 0.0
    %4893 = vmatpush1.msra.mxu0 %v31
    %4894 = vmatprep.subr.mxu0 0.0
    %4895 = vmatpush1.msra.mxu0 %v32
    %4896 = vmatprep.subr.mxu0 0.0
    %4897 = vmatpush1.msra.mxu0 %v139
    %4898 = vmatprep.subr.mxu0 0.0
    %4899 = vmatpush1.msra.mxu0 0.0
    %4900 = vmatprep.subr.mxu0 0.0
    %4901 = vmatpush1.msra.mxu0 0.0
    %4902 = vmatprep.subr.mxu0 0.0
    %4903 = vmatpush1.msra.mxu0 0.0
    %4904 = vmatprep.subr.mxu0 0.0
    %4905 = vmatpush1.msra.mxu0 0.0
    %4906 = vmatprep.subr.mxu0 0.0
    %4907 = vmatpush1.msra.mxu0 0.0
    %4908 = vmatprep.subr.mxu0 0.0
    %4909 = vmatpush1.msra.mxu0 0.0
    %4910 = vmatprep.subr.mxu0 0.0
    %4911 = vmatpush1.msra.mxu0 0.0
    %4912 = vmatprep.subr.mxu0 0.0
    %4913 = vmatpush1.msra.mxu0 0.0
    %4914 = vmatprep.subr.mxu0 0.0
    %4915 = vmatpush1.msra.mxu0 0.0
    %4916 = vmatprep.subr.mxu0 0.0
    %4917 = vmatpush1.msra.mxu0 0.0
    %4918 = vmatprep.subr.mxu0 0.0
    %4919 = vmatpush1.msra.mxu0 0.0
    %4920 = vmatprep.subr.mxu0 0.0
    %4921 = vmatpush1.msra.mxu0 0.0
    %4922 = vmatprep.subr.mxu0 0.0
    %4923 = vmatpush1.msra.mxu0 0.0
    %4924 = vmatprep.subr.mxu0 0.0
    %4925 = vmatpush1.msra.mxu0 0.0
    %4926 = vmatprep.subr.mxu0 0.0
    %4927 = vmatpush1.msra.mxu0 0.0
    %4928 = vmatprep.subr.mxu0 0.0
    %4929 = vmatpush1.msra.mxu0 0.0
    %4930 = vmatprep.subr.mxu0 0.0
    %4931 = vmatpush1.msra.mxu0 0.0
    %4932 = vmatprep.subr.mxu0 0.0
    %4933 = vmatpush1.msra.mxu0 0.0
    %4934 = vmatprep.subr.mxu0 0.0
    %4935 = vmatpush1.msra.mxu0 0.0
    %4936 = vmatprep.subr.mxu0 0.0
    %4937 = vmatpush1.msra.mxu0 0.0
    %4938 = vmatprep.subr.mxu0 0.0
    %4939 = vmatpush1.msra.mxu0 0.0
    %4940 = vmatprep.subr.mxu0 0.0
    %4941 = vmatpush1.msra.mxu0 0.0
    %4942 = vmatprep.subr.mxu0 0.0
    %4943 = vmatpush1.msra.mxu0 0.0
    %4944 = vmatprep.subr.mxu0 0.0
    %4945 = vmatpush1.msra.mxu0 0.0
    %4946 = vmatprep.subr.mxu0 0.0
    %4947 = vmatpush1.msra.mxu0 0.0
    %4948 = vmatprep.subr.mxu0 0.0
    %4949 = vmatpush1.msra.mxu0 0.0
    %4950 = vmatprep.subr.mxu0 0.0
    %4951 = vmatpush1.msra.mxu0 0.0
    %4952 = vmatprep.subr.mxu0 0.0
    %4953 = vmatpush1.msra.mxu0 0.0
    %4954 = vmatprep.mubr.f32.mxu0 0.0
    %4955 = vmatmul.mubr.f32.gmra.mrb[0].mxu0 %v4816
    %v4956 = vpop.f32.mrb[0].mxu0
    %v4957 = vadd.f32 0.0, %v4956
    %v4958 = vpop.f32.mrb[0].mxu0
    %4959 = vmatprep.mubr.f32.mxu0 0.0
    %4960 = vmatmul.mubr.f32.gmra.mrb[0].mxu0 %v4819
    %v4961 = vpop.f32.mrb[0].mxu0
    %v4962 = vadd.f32 0.0, %v4961
    %v4963 = vpop.f32.mrb[0].mxu0
    %4964 = vmatprep.mubr.f32.mxu0 0.0
    %4965 = vmatmul.mubr.f32.gmra.mrb[0].mxu0 %v4822
    %v4966 = vpop.f32.mrb[0].mxu0
    %v4967 = vadd.f32 0.0, %v4966
    %v4968 = vpop.f32.mrb[0].mxu0
    %4969 = vmatprep.mubr.f32.mxu0 0.0
    %4970 = vmatmul.mubr.f32.gmra.mrb[0].mxu0 %v4825
    %v4971 = vpop.f32.mrb[0].mxu0
    %v4972 = vadd.f32 0.0, %v4971
    %v4973 = vpop.f32.mrb[0].mxu0
    %4974 = vmatprep.mubr.f32.mxu0 0.0
    %4975 = vmatmul.mubr.f32.gmra.mrb[0].mxu0 %v4828
    %v4976 = vpop.f32.mrb[0].mxu0
    %v4977 = vadd.f32 0.0, %v4976
    %v4978 = vpop.f32.mrb[0].mxu0
    %4979 = vmatprep.mubr.f32.mxu0 0.0
    %4980 = vmatmul.mubr.f32.gmra.mrb[0].mxu0 %v4831
    %v4981 = vpop.f32.mrb[0].mxu0
    %v4982 = vadd.f32 0.0, %v4981
    %v4983 = vpop.f32.mrb[0].mxu0
    %4984 = vmatprep.mubr.f32.mxu0 0.0
    %4985 = vmatmul.mubr.f32.gmra.mrb[0].mxu0 %v4834
    %v4986 = vpop.f32.mrb[0].mxu0
    %v4987 = vadd.f32 0.0, %v4986
    %v4988 = vpop.f32.mrb[0].mxu0
    %4989 = vmatprep.mubr.f32.mxu0 0.0
    %4990 = vmatmul.mubr.f32.gmra.mrb[0].mxu0 %v4837
    %v4991 = vpop.f32.mrb[0].mxu0
    %v4992 = vadd.f32 0.0, %v4991
    %v4993 = vpop.f32.mrb[0].mxu0
    %4994 = vmatprep.mubr.f32.mxu0 0.0
    %4995 = vmatmul.mubr.f32.gmra.mrb[0].mxu0 %v4840
    %v4996 = vpop.f32.mrb[0].mxu0
    %v4997 = vadd.f32 0.0, %v4996
    %v4998 = vpop.f32.mrb[0].mxu0
    %4999 = vmatprep.mubr.f32.mxu0 0.0
    %5000 = vmatmul.mubr.f32.gmra.mrb[0].mxu0 %v4843
    %v5001 = vpop.f32.mrb[0].mxu0
    %v5002 = vadd.f32 0.0, %v5001
    %v5003 = vpop.f32.mrb[0].mxu0
    %5004 = vmatprep.mubr.f32.mxu0 0.0
    %5005 = vmatmul.mubr.f32.gmra.mrb[0].mxu0 %v4846
    %v5006 = vpop.f32.mrb[0].mxu0
    %v5007 = vadd.f32 0.0, %v5006
    %v5008 = vpop.f32.mrb[0].mxu0
    %5009 = vmatprep.mubr.f32.mxu0 0.0
    %5010 = vmatmul.mubr.f32.gmra.mrb[0].mxu0 %v4849
    %v5011 = vpop.f32.mrb[0].mxu0
    %v5012 = vadd.f32 0.0, %v5011
    %v5013 = vpop.f32.mrb[0].mxu0
    %5014 = vmatprep.mubr.f32.mxu0 0.0
    %5015 = vmatmul.mubr.f32.gmra.mrb[0].mxu0 %v4852
    %v5016 = vpop.f32.mrb[0].mxu0
    %v5017 = vadd.f32 0.0, %v5016
    %v5018 = vpop.f32.mrb[0].mxu0
    %5019 = vmatprep.mubr.f32.mxu0 0.0
    %5020 = vmatmul.mubr.f32.gmra.mrb[0].mxu0 %v4855
    %v5021 = vpop.f32.mrb[0].mxu0
    %v5022 = vadd.f32 0.0, %v5021
    %v5023 = vpop.f32.mrb[0].mxu0
    %5024 = vmatprep.mubr.f32.mxu0 0.0
    %5025 = vmatmul.mubr.f32.gmra.mrb[0].mxu0 %v4858
    %v5026 = vpop.f32.mrb[0].mxu0
    %v5027 = vadd.f32 0.0, %v5026
    %v5028 = vpop.f32.mrb[0].mxu0
    %5029 = vmatprep.mubr.f32.mxu0 0.0
    %5030 = vmatmul.mubr.f32.gmra.mrb[0].mxu0 %v4861
    %v5031 = vpop.f32.mrb[0].mxu0
    %v5032 = vadd.f32 0.0, %v5031
    %v5033 = vpop.f32.mrb[0].mxu0
    %5034 = vmatprep.mubr.f32.mxu0 0.0
    %5035 = vmatmul.mubr.f32.gmra.mrb[0].mxu0 %v4864
    %v5036 = vpop.f32.mrb[0].mxu0
    %v5037 = vadd.f32 0.0, %v5036
    %v5038 = vpop.f32.mrb[0].mxu0
    %5039 = vmatprep.mubr.f32.mxu0 0.0
    %5040 = vmatmul.mubr.f32.gmra.mrb[0].mxu0 %v4867
    %v5041 = vpop.f32.mrb[0].mxu0
    %v5042 = vadd.f32 0.0, %v5041
    %v5043 = vpop.f32.mrb[0].mxu0
    %5044 = vmatprep.mubr.f32.mxu0 0.0
    %5045 = vmatmul.mubr.f32.gmra.mrb[0].mxu0 %v4870
    %v5046 = vpop.f32.mrb[0].mxu0
    %v5047 = vadd.f32 0.0, %v5046
    %v5048 = vpop.f32.mrb[0].mxu0
    %5049 = vmatprep.mubr.f32.mxu0 0.0
    %5050 = vmatmul.mubr.f32.gmra.mrb[0].mxu0 %v4873
    %v5051 = vpop.f32.mrb[0].mxu0
    %v5052 = vadd.f32 0.0, %v5051
    %v5053 = vpop.f32.mrb[0].mxu0
    %5054 = vmatprep.mubr.f32.mxu0 0.0
    %5055 = vmatmul.mubr.f32.gmra.mrb[0].mxu0 %v4876
    %v5056 = vpop.f32.mrb[0].mxu0
    %v5057 = vadd.f32 0.0, %v5056
    %v5058 = vpop.f32.mrb[0].mxu0
    %5059 = vmatprep.mubr.f32.mxu0 0.0
    %5060 = vmatmul.mubr.f32.gmra.mrb[0].mxu0 %v4879
    %v5061 = vpop.f32.mrb[0].mxu0
    %v5062 = vadd.f32 0.0, %v5061
    %v5063 = vpop.f32.mrb[0].mxu0
    %5064 = vmatprep.mubr.f32.mxu0 0.0
    %5065 = vmatmul.mubr.f32.gmra.mrb[0].mxu0 %v4882
    %v5066 = vpop.f32.mrb[0].mxu0
    %v5067 = vadd.f32 0.0, %v5066
    %v5068 = vpop.f32.mrb[0].mxu0
    %5069 = vmatprep.mubr.f32.mxu0 0.0
    %5070 = vmatmul.mubr.f32.gmra.mrb[0].mxu0 %v4885
    %v5071 = vpop.f32.mrb[0].mxu0
    %v5072 = vadd.f32 0.0, %v5071
    %v5073 = vpop.f32.mrb[0].mxu0
    %5074 = vmatprep.mubr.f32.mxu0 0.0
    %5075 = vmatmul.mubr.f32.gmra.mrb[0].mxu0 %v4888
    %v5076 = vpop.f32.mrb[0].mxu0
    %v5077 = vadd.f32 0.0, %v5076
    %v5078 = vpop.f32.mrb[0].mxu0
    %5079 = vdwg.mxu0
    %s5080 = scalar_lea.vmem %s3, 200
    %v5081 = vld [vmem:[%s5080] sm:$0xff]
    %v5082 = vld [vmem:[%s5080 + $0x8] sm:$0xff]
    %v5083 = vld [vmem:[%s5080 + $0x10] sm:$0xff]
    %v5084 = vld [vmem:[%s5080 + $0x18] sm:$0xff]
    %v5085 = vld [vmem:[%s5080 + $0x20] sm:$0xff]
    %v5086 = vld [vmem:[%s5080 + $0x28] sm:$0xff]
    %v5087 = vld [vmem:[%s5080 + $0x30] sm:$0xff]
    %v5088 = vld [vmem:[%s5080 + $0x38] sm:$0xff]
    %v5089 = vld [vmem:[%s5080 + $0x40] sm:$0xff]
    %v5090 = vld [vmem:[%s5080 + $0x48] sm:$0xff]
    %v5091 = vld [vmem:[%s5080 + $0x50] sm:$0xff]
    %v5092 = vld [vmem:[%s5080 + $0x58] sm:$0xff]
    %v5093 = vld [vmem:[%s5080 + $0x60] sm:$0xff]
    %v5094 = vld [vmem:[%s5080 + $0x68] sm:$0xff]
    %v5095 = vld [vmem:[%s5080 + $0x70] sm:$0xff]
    %v5096 = vld [vmem:[%s5080 + $0x78] sm:$0xff]
    %v5097 = vld [vmem:[%s5080 + $0x80] sm:$0xff]
    %v5098 = vld [vmem:[%s5080 + $0x88] sm:$0xff]
    %v5099 = vld [vmem:[%s5080 + $0x90] sm:$0xff]
    %v5100 = vld [vmem:[%s5080 + $0x98] sm:$0xff]
    %v5101 = vld [vmem:[%s5080 + $0xa0] sm:$0xff]
    %v5102 = vld [vmem:[%s5080 + $0xa8] sm:$0xff]
    %v5103 = vld [vmem:[%s5080 + $0xb0] sm:$0xff]
    %v5104 = vld [vmem:[%s5080 + $0xb8] sm:$0xff]
    %v5105 = vld [vmem:[%s5080 + $0xc0] sm:$0xf]
    %v5107 = vsel %vm61, %v5081, 0
    %v5110 = vsel %vm61, %v5082, 0
    %v5113 = vsel %vm61, %v5083, 0
    %v5116 = vsel %vm61, %v5084, 0
    %v5119 = vsel %vm61, %v5085, 0
    %v5122 = vsel %vm61, %v5086, 0
    %v5125 = vsel %vm61, %v5087, 0
    %v5128 = vsel %vm61, %v5088, 0
    %v5131 = vsel %vm61, %v5089, 0
    %v5134 = vsel %vm61, %v5090, 0
    %v5137 = vsel %vm61, %v5091, 0
    %v5140 = vsel %vm61, %v5092, 0
    %v5143 = vsel %vm61, %v5093, 0
    %v5146 = vsel %vm61, %v5094, 0
    %v5149 = vsel %vm61, %v5095, 0
    %v5152 = vsel %vm61, %v5096, 0
    %v5155 = vsel %vm61, %v5097, 0
    %v5158 = vsel %vm61, %v5098, 0
    %v5161 = vsel %vm61, %v5099, 0
    %v5164 = vsel %vm61, %v5100, 0
    %v5167 = vsel %vm61, %v5101, 0
    %v5170 = vsel %vm61, %v5102, 0
    %v5173 = vsel %vm61, %v5103, 0
    %v5176 = vsel %vm61, %v5104, 0
    %v5179 = vsel %vm61, %v5105, 0
    %5181 = vmatprep.subr.mxu0 0.0
    %5182 = vmatpush1.msra.mxu0 %v30
    %5183 = vmatprep.subr.mxu0 0.0
    %5184 = vmatpush1.msra.mxu0 %v31
    %5185 = vmatprep.subr.mxu0 0.0
    %5186 = vmatpush1.msra.mxu0 %v32
    %5187 = vmatprep.subr.mxu0 0.0
    %5188 = vmatpush1.msra.mxu0 %v139
    %5189 = vmatprep.subr.mxu0 0.0
    %5190 = vmatpush1.msra.mxu0 0.0
    %5191 = vmatprep.subr.mxu0 0.0
    %5192 = vmatpush1.msra.mxu0 0.0
    %5193 = vmatprep.subr.mxu0 0.0
    %5194 = vmatpush1.msra.mxu0 0.0
    %5195 = vmatprep.subr.mxu0 0.0
    %5196 = vmatpush1.msra.mxu0 0.0
    %5197 = vmatprep.subr.mxu0 0.0
    %5198 = vmatpush1.msra.mxu0 0.0
    %5199 = vmatprep.subr.mxu0 0.0
    %5200 = vmatpush1.msra.mxu0 0.0
    %5201 = vmatprep.subr.mxu0 0.0
    %5202 = vmatpush1.msra.mxu0 0.0
    %5203 = vmatprep.subr.mxu0 0.0
    %5204 = vmatpush1.msra.mxu0 0.0
    %5205 = vmatprep.subr.mxu0 0.0
    %5206 = vmatpush1.msra.mxu0 0.0
    %5207 = vmatprep.subr.mxu0 0.0
    %5208 = vmatpush1.msra.mxu0 0.0
    %5209 = vmatprep.subr.mxu0 0.0
    %5210 = vmatpush1.msra.mxu0 0.0
    %5211 = vmatprep.subr.mxu0 0.0
    %5212 = vmatpush1.msra.mxu0 0.0
    %5213 = vmatprep.subr.mxu0 0.0
    %5214 = vmatpush1.msra.mxu0 0.0
    %5215 = vmatprep.subr.mxu0 0.0
    %5216 = vmatpush1.msra.mxu0 0.0
    %5217 = vmatprep.subr.mxu0 0.0
    %5218 = vmatpush1.msra.mxu0 0.0
    %5219 = vmatprep.subr.mxu0 0.0
    %5220 = vmatpush1.msra.mxu0 0.0
    %5221 = vmatprep.subr.mxu0 0.0
    %5222 = vmatpush1.msra.mxu0 0.0
    %5223 = vmatprep.subr.mxu0 0.0
    %5224 = vmatpush1.msra.mxu0 0.0
    %5225 = vmatprep.subr.mxu0 0.0
    %5226 = vmatpush1.msra.mxu0 0.0
    %5227 = vmatprep.subr.mxu0 0.0
    %5228 = vmatpush1.msra.mxu0 0.0
    %5229 = vmatprep.subr.mxu0 0.0
    %5230 = vmatpush1.msra.mxu0 0.0
    %5231 = vmatprep.subr.mxu0 0.0
    %5232 = vmatpush1.msra.mxu0 0.0
    %5233 = vmatprep.subr.mxu0 0.0
    %5234 = vmatpush1.msra.mxu0 0.0
    %5235 = vmatprep.subr.mxu0 0.0
    %5236 = vmatpush1.msra.mxu0 0.0
    %5237 = vmatprep.subr.mxu0 0.0
    %5238 = vmatpush1.msra.mxu0 0.0
    %5239 = vmatprep.subr.mxu0 0.0
    %5240 = vmatpush1.msra.mxu0 0.0
    %5241 = vmatprep.subr.mxu0 0.0
    %5242 = vmatpush1.msra.mxu0 0.0
    %5243 = vmatprep.subr.mxu0 0.0
    %5244 = vmatpush1.msra.mxu0 0.0
    %5245 = vmatprep.mubr.f32.mxu0 0.0
    %5246 = vmatmul.mubr.f32.gmra.mrb[0].mxu0 %v5107
    %v5247 = vpop.f32.mrb[0].mxu0
    %v5248 = vadd.f32 0.0, %v5247
    %v5249 = vpop.f32.mrb[0].mxu0
    %5250 = vmatprep.mubr.f32.mxu0 0.0
    %5251 = vmatmul.mubr.f32.gmra.mrb[0].mxu0 %v5110
    %v5252 = vpop.f32.mrb[0].mxu0
    %v5253 = vadd.f32 0.0, %v5252
    %v5254 = vpop.f32.mrb[0].mxu0
    %5255 = vmatprep.mubr.f32.mxu0 0.0
    %5256 = vmatmul.mubr.f32.gmra.mrb[0].mxu0 %v5113
    %v5257 = vpop.f32.mrb[0].mxu0
    %v5258 = vadd.f32 0.0, %v5257
    %v5259 = vpop.f32.mrb[0].mxu0
    %5260 = vmatprep.mubr.f32.mxu0 0.0
    %5261 = vmatmul.mubr.f32.gmra.mrb[0].mxu0 %v5116
    %v5262 = vpop.f32.mrb[0].mxu0
    %v5263 = vadd.f32 0.0, %v5262
    %v5264 = vpop.f32.mrb[0].mxu0
    %5265 = vmatprep.mubr.f32.mxu0 0.0
    %5266 = vmatmul.mubr.f32.gmra.mrb[0].mxu0 %v5119
    %v5267 = vpop.f32.mrb[0].mxu0
    %v5268 = vadd.f32 0.0, %v5267
    %v5269 = vpop.f32.mrb[0].mxu0
    %5270 = vmatprep.mubr.f32.mxu0 0.0
    %5271 = vmatmul.mubr.f32.gmra.mrb[0].mxu0 %v5122
    %v5272 = vpop.f32.mrb[0].mxu0
    %v5273 = vadd.f32 0.0, %v5272
    %v5274 = vpop.f32.mrb[0].mxu0
    %5275 = vmatprep.mubr.f32.mxu0 0.0
    %5276 = vmatmul.mubr.f32.gmra.mrb[0].mxu0 %v5125
    %v5277 = vpop.f32.mrb[0].mxu0
    %v5278 = vadd.f32 0.0, %v5277
    %v5279 = vpop.f32.mrb[0].mxu0
    %5280 = vmatprep.mubr.f32.mxu0 0.0
    %5281 = vmatmul.mubr.f32.gmra.mrb[0].mxu0 %v5128
    %v5282 = vpop.f32.mrb[0].mxu0
    %v5283 = vadd.f32 0.0, %v5282
    %v5284 = vpop.f32.mrb[0].mxu0
    %5285 = vmatprep.mubr.f32.mxu0 0.0
    %5286 = vmatmul.mubr.f32.gmra.mrb[0].mxu0 %v5131
    %v5287 = vpop.f32.mrb[0].mxu0
    %v5288 = vadd.f32 0.0, %v5287
    %v5289 = vpop.f32.mrb[0].mxu0
    %5290 = vmatprep.mubr.f32.mxu0 0.0
    %5291 = vmatmul.mubr.f32.gmra.mrb[0].mxu0 %v5134
    %v5292 = vpop.f32.mrb[0].mxu0
    %v5293 = vadd.f32 0.0, %v5292
    %v5294 = vpop.f32.mrb[0].mxu0
    %5295 = vmatprep.mubr.f32.mxu0 0.0
    %5296 = vmatmul.mubr.f32.gmra.mrb[0].mxu0 %v5137
    %v5297 = vpop.f32.mrb[0].mxu0
    %v5298 = vadd.f32 0.0, %v5297
    %v5299 = vpop.f32.mrb[0].mxu0
    %5300 = vmatprep.mubr.f32.mxu0 0.0
    %5301 = vmatmul.mubr.f32.gmra.mrb[0].mxu0 %v5140
    %v5302 = vpop.f32.mrb[0].mxu0
    %v5303 = vadd.f32 0.0, %v5302
    %v5304 = vpop.f32.mrb[0].mxu0
    %5305 = vmatprep.mubr.f32.mxu0 0.0
    %5306 = vmatmul.mubr.f32.gmra.mrb[0].mxu0 %v5143
    %v5307 = vpop.f32.mrb[0].mxu0
    %v5308 = vadd.f32 0.0, %v5307
    %v5309 = vpop.f32.mrb[0].mxu0
    %5310 = vmatprep.mubr.f32.mxu0 0.0
    %5311 = vmatmul.mubr.f32.gmra.mrb[0].mxu0 %v5146
    %v5312 = vpop.f32.mrb[0].mxu0
    %v5313 = vadd.f32 0.0, %v5312
    %v5314 = vpop.f32.mrb[0].mxu0
    %5315 = vmatprep.mubr.f32.mxu0 0.0
    %5316 = vmatmul.mubr.f32.gmra.mrb[0].mxu0 %v5149
    %v5317 = vpop.f32.mrb[0].mxu0
    %v5318 = vadd.f32 0.0, %v5317
    %v5319 = vpop.f32.mrb[0].mxu0
    %5320 = vmatprep.mubr.f32.mxu0 0.0
    %5321 = vmatmul.mubr.f32.gmra.mrb[0].mxu0 %v5152
    %v5322 = vpop.f32.mrb[0].mxu0
    %v5323 = vadd.f32 0.0, %v5322
    %v5324 = vpop.f32.mrb[0].mxu0
    %5325 = vmatprep.mubr.f32.mxu0 0.0
    %5326 = vmatmul.mubr.f32.gmra.mrb[0].mxu0 %v5155
    %v5327 = vpop.f32.mrb[0].mxu0
    %v5328 = vadd.f32 0.0, %v5327
    %v5329 = vpop.f32.mrb[0].mxu0
    %5330 = vmatprep.mubr.f32.mxu0 0.0
    %5331 = vmatmul.mubr.f32.gmra.mrb[0].mxu0 %v5158
    %v5332 = vpop.f32.mrb[0].mxu0
    %v5333 = vadd.f32 0.0, %v5332
    %v5334 = vpop.f32.mrb[0].mxu0
    %5335 = vmatprep.mubr.f32.mxu0 0.0
    %5336 = vmatmul.mubr.f32.gmra.mrb[0].mxu0 %v5161
    %v5337 = vpop.f32.mrb[0].mxu0
    %v5338 = vadd.f32 0.0, %v5337
    %v5339 = vpop.f32.mrb[0].mxu0
    %5340 = vmatprep.mubr.f32.mxu0 0.0
    %5341 = vmatmul.mubr.f32.gmra.mrb[0].mxu0 %v5164
    %v5342 = vpop.f32.mrb[0].mxu0
    %v5343 = vadd.f32 0.0, %v5342
    %v5344 = vpop.f32.mrb[0].mxu0
    %5345 = vmatprep.mubr.f32.mxu0 0.0
    %5346 = vmatmul.mubr.f32.gmra.mrb[0].mxu0 %v5167
    %v5347 = vpop.f32.mrb[0].mxu0
    %v5348 = vadd.f32 0.0, %v5347
    %v5349 = vpop.f32.mrb[0].mxu0
    %5350 = vmatprep.mubr.f32.mxu0 0.0
    %5351 = vmatmul.mubr.f32.gmra.mrb[0].mxu0 %v5170
    %v5352 = vpop.f32.mrb[0].mxu0
    %v5353 = vadd.f32 0.0, %v5352
    %v5354 = vpop.f32.mrb[0].mxu0
    %5355 = vmatprep.mubr.f32.mxu0 0.0
    %5356 = vmatmul.mubr.f32.gmra.mrb[0].mxu0 %v5173
    %v5357 = vpop.f32.mrb[0].mxu0
    %v5358 = vadd.f32 0.0, %v5357
    %v5359 = vpop.f32.mrb[0].mxu0
    %5360 = vmatprep.mubr.f32.mxu0 0.0
    %5361 = vmatmul.mubr.f32.gmra.mrb[0].mxu0 %v5176
    %v5362 = vpop.f32.mrb[0].mxu0
    %v5363 = vadd.f32 0.0, %v5362
    %v5364 = vpop.f32.mrb[0].mxu0
    %5365 = vmatprep.mubr.f32.mxu0 0.0
    %5366 = vmatmul.mubr.f32.gmra.mrb[0].mxu0 %v5179
    %v5367 = vpop.f32.mrb[0].mxu0
    %v5368 = vadd.f32 0.0, %v5367
    %v5369 = vpop.f32.mrb[0].mxu0
    %5370 = vdwg.mxu0
    %v5371 = vmax.f32 %v4375, %v4666
    %v5372 = vmax.f32 %v4380, %v4671
    %v5373 = vmax.f32 %v4385, %v4676
    %v5374 = vmax.f32 %v4390, %v4681
    %v5375 = vmax.f32 %v4395, %v4686
    %v5376 = vmax.f32 %v4400, %v4691
    %v5377 = vmax.f32 %v4405, %v4696
    %v5378 = vmax.f32 %v4410, %v4701
    %v5379 = vmax.f32 %v4415, %v4706
    %v5380 = vmax.f32 %v4420, %v4711
    %v5381 = vmax.f32 %v4425, %v4716
    %v5382 = vmax.f32 %v4430, %v4721
    %v5383 = vmax.f32 %v4435, %v4726
    %v5384 = vmax.f32 %v4440, %v4731
    %v5385 = vmax.f32 %v4445, %v4736
    %v5386 = vmax.f32 %v4450, %v4741
    %v5387 = vmax.f32 %v4455, %v4746
    %v5388 = vmax.f32 %v4460, %v4751
    %v5389 = vmax.f32 %v4465, %v4756
    %v5390 = vmax.f32 %v4470, %v4761
    %v5391 = vmax.f32 %v4475, %v4766
    %v5392 = vmax.f32 %v4480, %v4771
    %v5393 = vmax.f32 %v4485, %v4776
    %v5394 = vmax.f32 %v4490, %v4781
    %v5395 = vmax.f32 %v4495, %v4786
    %v5396 = vmax.f32 %v4957, %v5248
    %v5397 = vmax.f32 %v4962, %v5253
    %v5398 = vmax.f32 %v4967, %v5258
    %v5399 = vmax.f32 %v4972, %v5263
    %v5400 = vmax.f32 %v4977, %v5268
    %v5401 = vmax.f32 %v4982, %v5273
    %v5402 = vmax.f32 %v4987, %v5278
    %v5403 = vmax.f32 %v4992, %v5283
    %v5404 = vmax.f32 %v4997, %v5288
    %v5405 = vmax.f32 %v5002, %v5293
    %v5406 = vmax.f32 %v5007, %v5298
    %v5407 = vmax.f32 %v5012, %v5303
    %v5408 = vmax.f32 %v5017, %v5308
    %v5409 = vmax.f32 %v5022, %v5313
    %v5410 = vmax.f32 %v5027, %v5318
    %v5411 = vmax.f32 %v5032, %v5323
    %v5412 = vmax.f32 %v5037, %v5328
    %v5413 = vmax.f32 %v5042, %v5333
    %v5414 = vmax.f32 %v5047, %v5338
    %v5415 = vmax.f32 %v5052, %v5343
    %v5416 = vmax.f32 %v5057, %v5348
    %v5417 = vmax.f32 %v5062, %v5353
    %v5418 = vmax.f32 %v5067, %v5358
    %v5419 = vmax.f32 %v5072, %v5363
    %v5420 = vmax.f32 %v5077, %v5368
    %v5421 = vmax.f32 %v5371, %v5396
    %v5422 = vmax.f32 %v5372, %v5397
    %v5423 = vmax.f32 %v5373, %v5398
    %v5424 = vmax.f32 %v5374, %v5399
    %v5425 = vmax.f32 %v5375, %v5400
    %v5426 = vmax.f32 %v5376, %v5401
    %v5427 = vmax.f32 %v5377, %v5402
    %v5428 = vmax.f32 %v5378, %v5403
    %v5429 = vmax.f32 %v5379, %v5404
    %v5430 = vmax.f32 %v5380, %v5405
    %v5431 = vmax.f32 %v5381, %v5406
    %v5432 = vmax.f32 %v5382, %v5407
    %v5433 = vmax.f32 %v5383, %v5408
    %v5434 = vmax.f32 %v5384, %v5409
    %v5435 = vmax.f32 %v5385, %v5410
    %v5436 = vmax.f32 %v5386, %v5411
    %v5437 = vmax.f32 %v5387, %v5412
    %v5438 = vmax.f32 %v5388, %v5413
    %v5439 = vmax.f32 %v5389, %v5414
    %v5440 = vmax.f32 %v5390, %v5415
    %v5441 = vmax.f32 %v5391, %v5416
    %v5442 = vmax.f32 %v5392, %v5417
    %v5443 = vmax.f32 %v5393, %v5418
    %v5444 = vmax.f32 %v5394, %v5419
    %v5445 = vmax.f32 %v5395, %v5420
    %v5446 = vadd.f32 %v5421, %v1280
    %v5447 = vadd.f32 %v5422, %v1280
    %v5448 = vadd.f32 %v5423, %v1280
    %v5449 = vadd.f32 %v5424, %v1280
    %v5450 = vadd.f32 %v5425, %v1280
    %v5451 = vadd.f32 %v5426, %v1280
    %v5452 = vadd.f32 %v5427, %v1280
    %v5453 = vadd.f32 %v5428, %v1280
    %v5454 = vadd.f32 %v5429, %v1280
    %v5455 = vadd.f32 %v5430, %v1280
    %v5456 = vadd.f32 %v5431, %v1280
    %v5457 = vadd.f32 %v5432, %v1280
    %v5458 = vadd.f32 %v5433, %v1280
    %v5459 = vadd.f32 %v5434, %v1280
    %v5460 = vadd.f32 %v5435, %v1280
    %v5461 = vadd.f32 %v5436, %v1280
    %v5462 = vadd.f32 %v5437, %v1280
    %v5463 = vadd.f32 %v5438, %v1280
    %v5464 = vadd.f32 %v5439, %v1280
    %v5465 = vadd.f32 %v5440, %v1280
    %v5466 = vadd.f32 %v5441, %v1280
    %v5467 = vadd.f32 %v5442, %v1280
    %v5468 = vadd.f32 %v5443, %v1280
    %v5469 = vadd.f32 %v5444, %v1280
    %v5470 = vadd.f32 %v5445, %v1280
    %v5471 = vmax.f32 %v5446, 0.0
    %v5472 = vmax.f32 %v5447, 0.0
    %v5473 = vmax.f32 %v5448, 0.0
    %v5474 = vmax.f32 %v5449, 0.0
    %v5475 = vmax.f32 %v5450, 0.0
    %v5476 = vmax.f32 %v5451, 0.0
    %v5477 = vmax.f32 %v5452, 0.0
    %v5478 = vmax.f32 %v5453, 0.0
    %v5479 = vmax.f32 %v5454, 0.0
    %v5480 = vmax.f32 %v5455, 0.0
    %v5481 = vmax.f32 %v5456, 0.0
    %v5482 = vmax.f32 %v5457, 0.0
    %v5483 = vmax.f32 %v5458, 0.0
    %v5484 = vmax.f32 %v5459, 0.0
    %v5485 = vmax.f32 %v5460, 0.0
    %v5486 = vmax.f32 %v5461, 0.0
    %v5487 = vmax.f32 %v5462, 0.0
    %v5488 = vmax.f32 %v5463, 0.0
    %v5489 = vmax.f32 %v5464, 0.0
    %v5490 = vmax.f32 %v5465, 0.0
    %v5491 = vmax.f32 %v5466, 0.0
    %v5492 = vmax.f32 %v5467, 0.0
    %v5493 = vmax.f32 %v5468, 0.0
    %v5494 = vmax.f32 %v5469, 0.0
    %v5495 = vmax.f32 %v5470, 0.0
    %v5496 = vld [vmem:[%s6] sm:$0xff]
    %v5497 = vld [vmem:[%s6 + $0x8] sm:$0xff]
    %v5498 = vld [vmem:[%s6 + $0x10] sm:$0xff]
    %v5499 = vld [vmem:[%s6 + $0x18] sm:$0xff]
    %v5500 = vld [vmem:[%s6 + $0x20] sm:$0xff]
    %v5501 = vld [vmem:[%s6 + $0x28] sm:$0xff]
    %v5502 = vld [vmem:[%s6 + $0x30] sm:$0xff]
    %v5503 = vld [vmem:[%s6 + $0x38] sm:$0xff]
    %v5504 = vld [vmem:[%s6 + $0x40] sm:$0xff]
    %v5505 = vld [vmem:[%s6 + $0x48] sm:$0xff]
    %v5506 = vld [vmem:[%s6 + $0x50] sm:$0xff]
    %v5507 = vld [vmem:[%s6 + $0x58] sm:$0xff]
    %v5508 = vld [vmem:[%s6 + $0x60] sm:$0xff]
    %v5509 = vld [vmem:[%s6 + $0x68] sm:$0xff]
    %v5510 = vld [vmem:[%s6 + $0x70] sm:$0xff]
    %v5511 = vld [vmem:[%s6 + $0x78] sm:$0xff]
    %v5512 = vld [vmem:[%s6 + $0x80] sm:$0xff]
    %v5513 = vld [vmem:[%s6 + $0x88] sm:$0xff]
    %v5514 = vld [vmem:[%s6 + $0x90] sm:$0xff]
    %v5515 = vld [vmem:[%s6 + $0x98] sm:$0xff]
    %v5516 = vld [vmem:[%s6 + $0xa0] sm:$0xff]
    %v5517 = vld [vmem:[%s6 + $0xa8] sm:$0xff]
    %v5518 = vld [vmem:[%s6 + $0xb0] sm:$0xff]
    %v5519 = vld [vmem:[%s6 + $0xb8] sm:$0xff]
    %v5520 = vld [vmem:[%s6 + $0xc0] sm:$0xf]
    %5522 = vset.pattern.permute.xlu0 0
    %5523 = vperm.xlu0 %5522, %v5471
    %v5524 = vpop.permute.xlu0 %5523
    %5527 = vset.pattern.permute.xlu0 0
    %5528 = vperm.xlu0 %5527, %v5472
    %v5529 = vpop.permute.xlu0 %5528
    %5532 = vset.pattern.permute.xlu0 0
    %5533 = vperm.xlu0 %5532, %v5473
    %v5534 = vpop.permute.xlu0 %5533
    %5537 = vset.pattern.permute.xlu0 0
    %5538 = vperm.xlu0 %5537, %v5474
    %v5539 = vpop.permute.xlu0 %5538
    %5542 = vset.pattern.permute.xlu0 0
    %5543 = vperm.xlu0 %5542, %v5475
    %v5544 = vpop.permute.xlu0 %5543
    %5547 = vset.pattern.permute.xlu0 0
    %5548 = vperm.xlu0 %5547, %v5476
    %v5549 = vpop.permute.xlu0 %5548
    %5552 = vset.pattern.permute.xlu0 0
    %5553 = vperm.xlu0 %5552, %v5477
    %v5554 = vpop.permute.xlu0 %5553
    %5557 = vset.pattern.permute.xlu0 0
    %5558 = vperm.xlu0 %5557, %v5478
    %v5559 = vpop.permute.xlu0 %5558
    %5562 = vset.pattern.permute.xlu0 0
    %5563 = vperm.xlu0 %5562, %v5479
    %v5564 = vpop.permute.xlu0 %5563
    %5567 = vset.pattern.permute.xlu0 0
    %5568 = vperm.xlu0 %5567, %v5480
    %v5569 = vpop.permute.xlu0 %5568
    %5572 = vset.pattern.permute.xlu0 0
    %5573 = vperm.xlu0 %5572, %v5481
    %v5574 = vpop.permute.xlu0 %5573
    %5577 = vset.pattern.permute.xlu0 0
    %5578 = vperm.xlu0 %5577, %v5482
    %v5579 = vpop.permute.xlu0 %5578
    %5582 = vset.pattern.permute.xlu0 0
    %5583 = vperm.xlu0 %5582, %v5483
    %v5584 = vpop.permute.xlu0 %5583
    %5587 = vset.pattern.permute.xlu0 0
    %5588 = vperm.xlu0 %5587, %v5484
    %v5589 = vpop.permute.xlu0 %5588
    %5592 = vset.pattern.permute.xlu0 0
    %5593 = vperm.xlu0 %5592, %v5485
    %v5594 = vpop.permute.xlu0 %5593
    %5597 = vset.pattern.permute.xlu0 0
    %5598 = vperm.xlu0 %5597, %v5486
    %v5599 = vpop.permute.xlu0 %5598
    %5602 = vset.pattern.permute.xlu0 0
    %5603 = vperm.xlu0 %5602, %v5487
    %v5604 = vpop.permute.xlu0 %5603
    %5607 = vset.pattern.permute.xlu0 0
    %5608 = vperm.xlu0 %5607, %v5488
    %v5609 = vpop.permute.xlu0 %5608
    %5612 = vset.pattern.permute.xlu0 0
    %5613 = vperm.xlu0 %5612, %v5489
    %v5614 = vpop.permute.xlu0 %5613
    %5617 = vset.pattern.permute.xlu0 0
    %5618 = vperm.xlu0 %5617, %v5490
    %v5619 = vpop.permute.xlu0 %5618
    %5622 = vset.pattern.permute.xlu0 0
    %5623 = vperm.xlu0 %5622, %v5491
    %v5624 = vpop.permute.xlu0 %5623
    %5627 = vset.pattern.permute.xlu0 0
    %5628 = vperm.xlu0 %5627, %v5492
    %v5629 = vpop.permute.xlu0 %5628
    %5632 = vset.pattern.permute.xlu0 0
    %5633 = vperm.xlu0 %5632, %v5493
    %v5634 = vpop.permute.xlu0 %5633
    %5637 = vset.pattern.permute.xlu0 0
    %5638 = vperm.xlu0 %5637, %v5494
    %v5639 = vpop.permute.xlu0 %5638
    %5642 = vset.pattern.permute.xlu0 0
    %5643 = vperm.xlu0 %5642, %v5495
    %v5644 = vpop.permute.xlu0 %5643
    %v5646 = vmul.f32 %v5524, %v5496
    %v5647 = vmul.f32 %v5529, %v5497
    %v5648 = vmul.f32 %v5534, %v5498
    %v5649 = vmul.f32 %v5539, %v5499
    %v5650 = vmul.f32 %v5544, %v5500
    %v5651 = vmul.f32 %v5549, %v5501
    %v5652 = vmul.f32 %v5554, %v5502
    %v5653 = vmul.f32 %v5559, %v5503
    %v5654 = vmul.f32 %v5564, %v5504
    %v5655 = vmul.f32 %v5569, %v5505
    %v5656 = vmul.f32 %v5574, %v5506
    %v5657 = vmul.f32 %v5579, %v5507
    %v5658 = vmul.f32 %v5584, %v5508
    %v5659 = vmul.f32 %v5589, %v5509
    %v5660 = vmul.f32 %v5594, %v5510
    %v5661 = vmul.f32 %v5599, %v5511
    %v5662 = vmul.f32 %v5604, %v5512
    %v5663 = vmul.f32 %v5609, %v5513
    %v5664 = vmul.f32 %v5614, %v5514
    %v5665 = vmul.f32 %v5619, %v5515
    %v5666 = vmul.f32 %v5624, %v5516
    %v5667 = vmul.f32 %v5629, %v5517
    %v5668 = vmul.f32 %v5634, %v5518
    %v5669 = vmul.f32 %v5639, %v5519
    %v5670 = vmul.f32 %v5644, %v5520
    %v5671 = vld [vmem:[%s1507] sm:$0xff]
    %v5672 = vld [vmem:[%s1507 + $0x8] sm:$0xff]
    %v5673 = vld [vmem:[%s1507 + $0x10] sm:$0xff]
    %v5674 = vld [vmem:[%s1507 + $0x18] sm:$0xff]
    %v5675 = vld [vmem:[%s1507 + $0x20] sm:$0xff]
    %v5676 = vld [vmem:[%s1507 + $0x28] sm:$0xff]
    %v5677 = vld [vmem:[%s1507 + $0x30] sm:$0xff]
    %v5678 = vld [vmem:[%s1507 + $0x38] sm:$0xff]
    %v5679 = vld [vmem:[%s1507 + $0x40] sm:$0xff]
    %v5680 = vld [vmem:[%s1507 + $0x48] sm:$0xff]
    %v5681 = vld [vmem:[%s1507 + $0x50] sm:$0xff]
    %v5682 = vld [vmem:[%s1507 + $0x58] sm:$0xff]
    %v5683 = vld [vmem:[%s1507 + $0x60] sm:$0xff]
    %v5684 = vld [vmem:[%s1507 + $0x68] sm:$0xff]
    %v5685 = vld [vmem:[%s1507 + $0x70] sm:$0xff]
    %v5686 = vld [vmem:[%s1507 + $0x78] sm:$0xff]
    %v5687 = vld [vmem:[%s1507 + $0x80] sm:$0xff]
    %v5688 = vld [vmem:[%s1507 + $0x88] sm:$0xff]
    %v5689 = vld [vmem:[%s1507 + $0x90] sm:$0xff]
    %v5690 = vld [vmem:[%s1507 + $0x98] sm:$0xff]
    %v5691 = vld [vmem:[%s1507 + $0xa0] sm:$0xff]
    %v5692 = vld [vmem:[%s1507 + $0xa8] sm:$0xff]
    %v5693 = vld [vmem:[%s1507 + $0xb0] sm:$0xff]
    %v5694 = vld [vmem:[%s1507 + $0xb8] sm:$0xff]
    %v5695 = vld [vmem:[%s1507 + $0xc0] sm:$0xf]
    %5696 = vset.pattern.permute.xlu0 1
    %5697 = vperm.xlu0 %5696, %v5471
    %v5698 = vpop.permute.xlu0 %5697
    %5700 = vset.pattern.permute.xlu0 1
    %5701 = vperm.xlu0 %5700, %v5472
    %v5702 = vpop.permute.xlu0 %5701
    %5704 = vset.pattern.permute.xlu0 1
    %5705 = vperm.xlu0 %5704, %v5473
    %v5706 = vpop.permute.xlu0 %5705
    %5708 = vset.pattern.permute.xlu0 1
    %5709 = vperm.xlu0 %5708, %v5474
    %v5710 = vpop.permute.xlu0 %5709
    %5712 = vset.pattern.permute.xlu0 1
    %5713 = vperm.xlu0 %5712, %v5475
    %v5714 = vpop.permute.xlu0 %5713
    %5716 = vset.pattern.permute.xlu0 1
    %5717 = vperm.xlu0 %5716, %v5476
    %v5718 = vpop.permute.xlu0 %5717
    %5720 = vset.pattern.permute.xlu0 1
    %5721 = vperm.xlu0 %5720, %v5477
    %v5722 = vpop.permute.xlu0 %5721
    %5724 = vset.pattern.permute.xlu0 1
    %5725 = vperm.xlu0 %5724, %v5478
    %v5726 = vpop.permute.xlu0 %5725
    %5728 = vset.pattern.permute.xlu0 1
    %5729 = vperm.xlu0 %5728, %v5479
    %v5730 = vpop.permute.xlu0 %5729
    %5732 = vset.pattern.permute.xlu0 1
    %5733 = vperm.xlu0 %5732, %v5480
    %v5734 = vpop.permute.xlu0 %5733
    %5736 = vset.pattern.permute.xlu0 1
    %5737 = vperm.xlu0 %5736, %v5481
    %v5738 = vpop.permute.xlu0 %5737
    %5740 = vset.pattern.permute.xlu0 1
    %5741 = vperm.xlu0 %5740, %v5482
    %v5742 = vpop.permute.xlu0 %5741
    %5744 = vset.pattern.permute.xlu0 1
    %5745 = vperm.xlu0 %5744, %v5483
    %v5746 = vpop.permute.xlu0 %5745
    %5748 = vset.pattern.permute.xlu0 1
    %5749 = vperm.xlu0 %5748, %v5484
    %v5750 = vpop.permute.xlu0 %5749
    %5752 = vset.pattern.permute.xlu0 1
    %5753 = vperm.xlu0 %5752, %v5485
    %v5754 = vpop.permute.xlu0 %5753
    %5756 = vset.pattern.permute.xlu0 1
    %5757 = vperm.xlu0 %5756, %v5486
    %v5758 = vpop.permute.xlu0 %5757
    %5760 = vset.pattern.permute.xlu0 1
    %5761 = vperm.xlu0 %5760, %v5487
    %v5762 = vpop.permute.xlu0 %5761
    %5764 = vset.pattern.permute.xlu0 1
    %5765 = vperm.xlu0 %5764, %v5488
    %v5766 = vpop.permute.xlu0 %5765
    %5768 = vset.pattern.permute.xlu0 1
    %5769 = vperm.xlu0 %5768, %v5489
    %v5770 = vpop.permute.xlu0 %5769
    %5772 = vset.pattern.permute.xlu0 1
    %5773 = vperm.xlu0 %5772, %v5490
    %v5774 = vpop.permute.xlu0 %5773
    %5776 = vset.pattern.permute.xlu0 1
    %5777 = vperm.xlu0 %5776, %v5491
    %v5778 = vpop.permute.xlu0 %5777
    %5780 = vset.pattern.permute.xlu0 1
    %5781 = vperm.xlu0 %5780, %v5492
    %v5782 = vpop.permute.xlu0 %5781
    %5784 = vset.pattern.permute.xlu0 1
    %5785 = vperm.xlu0 %5784, %v5493
    %v5786 = vpop.permute.xlu0 %5785
    %5788 = vset.pattern.permute.xlu0 1
    %5789 = vperm.xlu0 %5788, %v5494
    %v5790 = vpop.permute.xlu0 %5789
    %5792 = vset.pattern.permute.xlu0 1
    %5793 = vperm.xlu0 %5792, %v5495
    %v5794 = vpop.permute.xlu0 %5793
    %v5796 = vmul.f32 %v5698, %v5671
    %v5797 = vmul.f32 %v5702, %v5672
    %v5798 = vmul.f32 %v5706, %v5673
    %v5799 = vmul.f32 %v5710, %v5674
    %v5800 = vmul.f32 %v5714, %v5675
    %v5801 = vmul.f32 %v5718, %v5676
    %v5802 = vmul.f32 %v5722, %v5677
    %v5803 = vmul.f32 %v5726, %v5678
    %v5804 = vmul.f32 %v5730, %v5679
    %v5805 = vmul.f32 %v5734, %v5680
    %v5806 = vmul.f32 %v5738, %v5681
    %v5807 = vmul.f32 %v5742, %v5682
    %v5808 = vmul.f32 %v5746, %v5683
    %v5809 = vmul.f32 %v5750, %v5684
    %v5810 = vmul.f32 %v5754, %v5685
    %v5811 = vmul.f32 %v5758, %v5686
    %v5812 = vmul.f32 %v5762, %v5687
    %v5813 = vmul.f32 %v5766, %v5688
    %v5814 = vmul.f32 %v5770, %v5689
    %v5815 = vmul.f32 %v5774, %v5690
    %v5816 = vmul.f32 %v5778, %v5691
    %v5817 = vmul.f32 %v5782, %v5692
    %v5818 = vmul.f32 %v5786, %v5693
    %v5819 = vmul.f32 %v5790, %v5694
    %v5820 = vmul.f32 %v5794, %v5695
    %v5821 = vadd.f32 %v5646, %v5796
    %v5822 = vadd.f32 %v5647, %v5797
    %v5823 = vadd.f32 %v5648, %v5798
    %v5824 = vadd.f32 %v5649, %v5799
    %v5825 = vadd.f32 %v5650, %v5800
    %v5826 = vadd.f32 %v5651, %v5801
    %v5827 = vadd.f32 %v5652, %v5802
    %v5828 = vadd.f32 %v5653, %v5803
    %v5829 = vadd.f32 %v5654, %v5804
    %v5830 = vadd.f32 %v5655, %v5805
    %v5831 = vadd.f32 %v5656, %v5806
    %v5832 = vadd.f32 %v5657, %v5807
    %v5833 = vadd.f32 %v5658, %v5808
    %v5834 = vadd.f32 %v5659, %v5809
    %v5835 = vadd.f32 %v5660, %v5810
    %v5836 = vadd.f32 %v5661, %v5811
    %v5837 = vadd.f32 %v5662, %v5812
    %v5838 = vadd.f32 %v5663, %v5813
    %v5839 = vadd.f32 %v5664, %v5814
    %v5840 = vadd.f32 %v5665, %v5815
    %v5841 = vadd.f32 %v5666, %v5816
    %v5842 = vadd.f32 %v5667, %v5817
    %v5843 = vadd.f32 %v5668, %v5818
    %v5844 = vadd.f32 %v5669, %v5819
    %v5845 = vadd.f32 %v5670, %v5820
    %v5846 = vld [vmem:[%s1683] sm:$0xff]
    %v5847 = vld [vmem:[%s1683 + $0x8] sm:$0xff]
    %v5848 = vld [vmem:[%s1683 + $0x10] sm:$0xff]
    %v5849 = vld [vmem:[%s1683 + $0x18] sm:$0xff]
    %v5850 = vld [vmem:[%s1683 + $0x20] sm:$0xff]
    %v5851 = vld [vmem:[%s1683 + $0x28] sm:$0xff]
    %v5852 = vld [vmem:[%s1683 + $0x30] sm:$0xff]
    %v5853 = vld [vmem:[%s1683 + $0x38] sm:$0xff]
    %v5854 = vld [vmem:[%s1683 + $0x40] sm:$0xff]
    %v5855 = vld [vmem:[%s1683 + $0x48] sm:$0xff]
    %v5856 = vld [vmem:[%s1683 + $0x50] sm:$0xff]
    %v5857 = vld [vmem:[%s1683 + $0x58] sm:$0xff]
    %v5858 = vld [vmem:[%s1683 + $0x60] sm:$0xff]
    %v5859 = vld [vmem:[%s1683 + $0x68] sm:$0xff]
    %v5860 = vld [vmem:[%s1683 + $0x70] sm:$0xff]
    %v5861 = vld [vmem:[%s1683 + $0x78] sm:$0xff]
    %v5862 = vld [vmem:[%s1683 + $0x80] sm:$0xff]
    %v5863 = vld [vmem:[%s1683 + $0x88] sm:$0xff]
    %v5864 = vld [vmem:[%s1683 + $0x90] sm:$0xff]
    %v5865 = vld [vmem:[%s1683 + $0x98] sm:$0xff]
    %v5866 = vld [vmem:[%s1683 + $0xa0] sm:$0xff]
    %v5867 = vld [vmem:[%s1683 + $0xa8] sm:$0xff]
    %v5868 = vld [vmem:[%s1683 + $0xb0] sm:$0xff]
    %v5869 = vld [vmem:[%s1683 + $0xb8] sm:$0xff]
    %v5870 = vld [vmem:[%s1683 + $0xc0] sm:$0xf]
    %5871 = vset.pattern.permute.xlu0 2
    %5872 = vperm.xlu0 %5871, %v5471
    %v5873 = vpop.permute.xlu0 %5872
    %5875 = vset.pattern.permute.xlu0 2
    %5876 = vperm.xlu0 %5875, %v5472
    %v5877 = vpop.permute.xlu0 %5876
    %5879 = vset.pattern.permute.xlu0 2
    %5880 = vperm.xlu0 %5879, %v5473
    %v5881 = vpop.permute.xlu0 %5880
    %5883 = vset.pattern.permute.xlu0 2
    %5884 = vperm.xlu0 %5883, %v5474
    %v5885 = vpop.permute.xlu0 %5884
    %5887 = vset.pattern.permute.xlu0 2
    %5888 = vperm.xlu0 %5887, %v5475
    %v5889 = vpop.permute.xlu0 %5888
    %5891 = vset.pattern.permute.xlu0 2
    %5892 = vperm.xlu0 %5891, %v5476
    %v5893 = vpop.permute.xlu0 %5892
    %5895 = vset.pattern.permute.xlu0 2
    %5896 = vperm.xlu0 %5895, %v5477
    %v5897 = vpop.permute.xlu0 %5896
    %5899 = vset.pattern.permute.xlu0 2
    %5900 = vperm.xlu0 %5899, %v5478
    %v5901 = vpop.permute.xlu0 %5900
    %5903 = vset.pattern.permute.xlu0 2
    %5904 = vperm.xlu0 %5903, %v5479
    %v5905 = vpop.permute.xlu0 %5904
    %5907 = vset.pattern.permute.xlu0 2
    %5908 = vperm.xlu0 %5907, %v5480
    %v5909 = vpop.permute.xlu0 %5908
    %5911 = vset.pattern.permute.xlu0 2
    %5912 = vperm.xlu0 %5911, %v5481
    %v5913 = vpop.permute.xlu0 %5912
    %5915 = vset.pattern.permute.xlu0 2
    %5916 = vperm.xlu0 %5915, %v5482
    %v5917 = vpop.permute.xlu0 %5916
    %5919 = vset.pattern.permute.xlu0 2
    %5920 = vperm.xlu0 %5919, %v5483
    %v5921 = vpop.permute.xlu0 %5920
    %5923 = vset.pattern.permute.xlu0 2
    %5924 = vperm.xlu0 %5923, %v5484
    %v5925 = vpop.permute.xlu0 %5924
    %5927 = vset.pattern.permute.xlu0 2
    %5928 = vperm.xlu0 %5927, %v5485
    %v5929 = vpop.permute.xlu0 %5928
    %5931 = vset.pattern.permute.xlu0 2
    %5932 = vperm.xlu0 %5931, %v5486
    %v5933 = vpop.permute.xlu0 %5932
    %5935 = vset.pattern.permute.xlu0 2
    %5936 = vperm.xlu0 %5935, %v5487
    %v5937 = vpop.permute.xlu0 %5936
    %5939 = vset.pattern.permute.xlu0 2
    %5940 = vperm.xlu0 %5939, %v5488
    %v5941 = vpop.permute.xlu0 %5940
    %5943 = vset.pattern.permute.xlu0 2
    %5944 = vperm.xlu0 %5943, %v5489
    %v5945 = vpop.permute.xlu0 %5944
    %5947 = vset.pattern.permute.xlu0 2
    %5948 = vperm.xlu0 %5947, %v5490
    %v5949 = vpop.permute.xlu0 %5948
    %5951 = vset.pattern.permute.xlu0 2
    %5952 = vperm.xlu0 %5951, %v5491
    %v5953 = vpop.permute.xlu0 %5952
    %5955 = vset.pattern.permute.xlu0 2
    %5956 = vperm.xlu0 %5955, %v5492
    %v5957 = vpop.permute.xlu0 %5956
    %5959 = vset.pattern.permute.xlu0 2
    %5960 = vperm.xlu0 %5959, %v5493
    %v5961 = vpop.permute.xlu0 %5960
    %5963 = vset.pattern.permute.xlu0 2
    %5964 = vperm.xlu0 %5963, %v5494
    %v5965 = vpop.permute.xlu0 %5964
    %5967 = vset.pattern.permute.xlu0 2
    %5968 = vperm.xlu0 %5967, %v5495
    %v5969 = vpop.permute.xlu0 %5968
    %v5971 = vmul.f32 %v5873, %v5846
    %v5972 = vmul.f32 %v5877, %v5847
    %v5973 = vmul.f32 %v5881, %v5848
    %v5974 = vmul.f32 %v5885, %v5849
    %v5975 = vmul.f32 %v5889, %v5850
    %v5976 = vmul.f32 %v5893, %v5851
    %v5977 = vmul.f32 %v5897, %v5852
    %v5978 = vmul.f32 %v5901, %v5853
    %v5979 = vmul.f32 %v5905, %v5854
    %v5980 = vmul.f32 %v5909, %v5855
    %v5981 = vmul.f32 %v5913, %v5856
    %v5982 = vmul.f32 %v5917, %v5857
    %v5983 = vmul.f32 %v5921, %v5858
    %v5984 = vmul.f32 %v5925, %v5859
    %v5985 = vmul.f32 %v5929, %v5860
    %v5986 = vmul.f32 %v5933, %v5861
    %v5987 = vmul.f32 %v5937, %v5862
    %v5988 = vmul.f32 %v5941, %v5863
    %v5989 = vmul.f32 %v5945, %v5864
    %v5990 = vmul.f32 %v5949, %v5865
    %v5991 = vmul.f32 %v5953, %v5866
    %v5992 = vmul.f32 %v5957, %v5867
    %v5993 = vmul.f32 %v5961, %v5868
    %v5994 = vmul.f32 %v5965, %v5869
    %v5995 = vmul.f32 %v5969, %v5870
    %v5996 = vadd.f32 %v5821, %v5971
    %v5997 = vadd.f32 %v5822, %v5972
    %v5998 = vadd.f32 %v5823, %v5973
    %v5999 = vadd.f32 %v5824, %v5974
    %v6000 = vadd.f32 %v5825, %v5975
    %v6001 = vadd.f32 %v5826, %v5976
    %v6002 = vadd.f32 %v5827, %v5977
    %v6003 = vadd.f32 %v5828, %v5978
    %v6004 = vadd.f32 %v5829, %v5979
    %v6005 = vadd.f32 %v5830, %v5980
    %v6006 = vadd.f32 %v5831, %v5981
    %v6007 = vadd.f32 %v5832, %v5982
    %v6008 = vadd.f32 %v5833, %v5983
    %v6009 = vadd.f32 %v5834, %v5984
    %v6010 = vadd.f32 %v5835, %v5985
    %v6011 = vadd.f32 %v5836, %v5986
    %v6012 = vadd.f32 %v5837, %v5987
    %v6013 = vadd.f32 %v5838, %v5988
    %v6014 = vadd.f32 %v5839, %v5989
    %v6015 = vadd.f32 %v5840, %v5990
    %v6016 = vadd.f32 %v5841, %v5991
    %v6017 = vadd.f32 %v5842, %v5992
    %v6018 = vadd.f32 %v5843, %v5993
    %v6019 = vadd.f32 %v5844, %v5994
    %v6020 = vadd.f32 %v5845, %v5995
    %v6021 = vld [vmem:[%s1859] sm:$0xff]
    %v6022 = vld [vmem:[%s1859 + $0x8] sm:$0xff]
    %v6023 = vld [vmem:[%s1859 + $0x10] sm:$0xff]
    %v6024 = vld [vmem:[%s1859 + $0x18] sm:$0xff]
    %v6025 = vld [vmem:[%s1859 + $0x20] sm:$0xff]
    %v6026 = vld [vmem:[%s1859 + $0x28] sm:$0xff]
    %v6027 = vld [vmem:[%s1859 + $0x30] sm:$0xff]
    %v6028 = vld [vmem:[%s1859 + $0x38] sm:$0xff]
    %v6029 = vld [vmem:[%s1859 + $0x40] sm:$0xff]
    %v6030 = vld [vmem:[%s1859 + $0x48] sm:$0xff]
    %v6031 = vld [vmem:[%s1859 + $0x50] sm:$0xff]
    %v6032 = vld [vmem:[%s1859 + $0x58] sm:$0xff]
    %v6033 = vld [vmem:[%s1859 + $0x60] sm:$0xff]
    %v6034 = vld [vmem:[%s1859 + $0x68] sm:$0xff]
    %v6035 = vld [vmem:[%s1859 + $0x70] sm:$0xff]
    %v6036 = vld [vmem:[%s1859 + $0x78] sm:$0xff]
    %v6037 = vld [vmem:[%s1859 + $0x80] sm:$0xff]
    %v6038 = vld [vmem:[%s1859 + $0x88] sm:$0xff]
    %v6039 = vld [vmem:[%s1859 + $0x90] sm:$0xff]
    %v6040 = vld [vmem:[%s1859 + $0x98] sm:$0xff]
    %v6041 = vld [vmem:[%s1859 + $0xa0] sm:$0xff]
    %v6042 = vld [vmem:[%s1859 + $0xa8] sm:$0xff]
    %v6043 = vld [vmem:[%s1859 + $0xb0] sm:$0xff]
    %v6044 = vld [vmem:[%s1859 + $0xb8] sm:$0xff]
    %v6045 = vld [vmem:[%s1859 + $0xc0] sm:$0xf]
    %6046 = vset.pattern.permute.xlu0 3
    %6047 = vperm.xlu0 %6046, %v5471
    %v6048 = vpop.permute.xlu0 %6047
    %6050 = vset.pattern.permute.xlu0 3
    %6051 = vperm.xlu0 %6050, %v5472
    %v6052 = vpop.permute.xlu0 %6051
    %6054 = vset.pattern.permute.xlu0 3
    %6055 = vperm.xlu0 %6054, %v5473
    %v6056 = vpop.permute.xlu0 %6055
    %6058 = vset.pattern.permute.xlu0 3
    %6059 = vperm.xlu0 %6058, %v5474
    %v6060 = vpop.permute.xlu0 %6059
    %6062 = vset.pattern.permute.xlu0 3
    %6063 = vperm.xlu0 %6062, %v5475
    %v6064 = vpop.permute.xlu0 %6063
    %6066 = vset.pattern.permute.xlu0 3
    %6067 = vperm.xlu0 %6066, %v5476
    %v6068 = vpop.permute.xlu0 %6067
    %6070 = vset.pattern.permute.xlu0 3
    %6071 = vperm.xlu0 %6070, %v5477
    %v6072 = vpop.permute.xlu0 %6071
    %6074 = vset.pattern.permute.xlu0 3
    %6075 = vperm.xlu0 %6074, %v5478
    %v6076 = vpop.permute.xlu0 %6075
    %6078 = vset.pattern.permute.xlu0 3
    %6079 = vperm.xlu0 %6078, %v5479
    %v6080 = vpop.permute.xlu0 %6079
    %6082 = vset.pattern.permute.xlu0 3
    %6083 = vperm.xlu0 %6082, %v5480
    %v6084 = vpop.permute.xlu0 %6083
    %6086 = vset.pattern.permute.xlu0 3
    %6087 = vperm.xlu0 %6086, %v5481
    %v6088 = vpop.permute.xlu0 %6087
    %6090 = vset.pattern.permute.xlu0 3
    %6091 = vperm.xlu0 %6090, %v5482
    %v6092 = vpop.permute.xlu0 %6091
    %6094 = vset.pattern.permute.xlu0 3
    %6095 = vperm.xlu0 %6094, %v5483
    %v6096 = vpop.permute.xlu0 %6095
    %6098 = vset.pattern.permute.xlu0 3
    %6099 = vperm.xlu0 %6098, %v5484
    %v6100 = vpop.permute.xlu0 %6099
    %6102 = vset.pattern.permute.xlu0 3
    %6103 = vperm.xlu0 %6102, %v5485
    %v6104 = vpop.permute.xlu0 %6103
    %6106 = vset.pattern.permute.xlu0 3
    %6107 = vperm.xlu0 %6106, %v5486
    %v6108 = vpop.permute.xlu0 %6107
    %6110 = vset.pattern.permute.xlu0 3
    %6111 = vperm.xlu0 %6110, %v5487
    %v6112 = vpop.permute.xlu0 %6111
    %6114 = vset.pattern.permute.xlu0 3
    %6115 = vperm.xlu0 %6114, %v5488
    %v6116 = vpop.permute.xlu0 %6115
    %6118 = vset.pattern.permute.xlu0 3
    %6119 = vperm.xlu0 %6118, %v5489
    %v6120 = vpop.permute.xlu0 %6119
    %6122 = vset.pattern.permute.xlu0 3
    %6123 = vperm.xlu0 %6122, %v5490
    %v6124 = vpop.permute.xlu0 %6123
    %6126 = vset.pattern.permute.xlu0 3
    %6127 = vperm.xlu0 %6126, %v5491
    %v6128 = vpop.permute.xlu0 %6127
    %6130 = vset.pattern.permute.xlu0 3
    %6131 = vperm.xlu0 %6130, %v5492
    %v6132 = vpop.permute.xlu0 %6131
    %6134 = vset.pattern.permute.xlu0 3
    %6135 = vperm.xlu0 %6134, %v5493
    %v6136 = vpop.permute.xlu0 %6135
    %6138 = vset.pattern.permute.xlu0 3
    %6139 = vperm.xlu0 %6138, %v5494
    %v6140 = vpop.permute.xlu0 %6139
    %6142 = vset.pattern.permute.xlu0 3
    %6143 = vperm.xlu0 %6142, %v5495
    %v6144 = vpop.permute.xlu0 %6143
    %v6146 = vmul.f32 %v6048, %v6021
    %v6147 = vmul.f32 %v6052, %v6022
    %v6148 = vmul.f32 %v6056, %v6023
    %v6149 = vmul.f32 %v6060, %v6024
    %v6150 = vmul.f32 %v6064, %v6025
    %v6151 = vmul.f32 %v6068, %v6026
    %v6152 = vmul.f32 %v6072, %v6027
    %v6153 = vmul.f32 %v6076, %v6028
    %v6154 = vmul.f32 %v6080, %v6029
    %v6155 = vmul.f32 %v6084, %v6030
    %v6156 = vmul.f32 %v6088, %v6031
    %v6157 = vmul.f32 %v6092, %v6032
    %v6158 = vmul.f32 %v6096, %v6033
    %v6159 = vmul.f32 %v6100, %v6034
    %v6160 = vmul.f32 %v6104, %v6035
    %v6161 = vmul.f32 %v6108, %v6036
    %v6162 = vmul.f32 %v6112, %v6037
    %v6163 = vmul.f32 %v6116, %v6038
    %v6164 = vmul.f32 %v6120, %v6039
    %v6165 = vmul.f32 %v6124, %v6040
    %v6166 = vmul.f32 %v6128, %v6041
    %v6167 = vmul.f32 %v6132, %v6042
    %v6168 = vmul.f32 %v6136, %v6043
    %v6169 = vmul.f32 %v6140, %v6044
    %v6170 = vmul.f32 %v6144, %v6045
    %v6171 = vadd.f32 %v5996, %v6146
    %v6172 = vadd.f32 %v5997, %v6147
    %v6173 = vadd.f32 %v5998, %v6148
    %v6174 = vadd.f32 %v5999, %v6149
    %v6175 = vadd.f32 %v6000, %v6150
    %v6176 = vadd.f32 %v6001, %v6151
    %v6177 = vadd.f32 %v6002, %v6152
    %v6178 = vadd.f32 %v6003, %v6153
    %v6179 = vadd.f32 %v6004, %v6154
    %v6180 = vadd.f32 %v6005, %v6155
    %v6181 = vadd.f32 %v6006, %v6156
    %v6182 = vadd.f32 %v6007, %v6157
    %v6183 = vadd.f32 %v6008, %v6158
    %v6184 = vadd.f32 %v6009, %v6159
    %v6185 = vadd.f32 %v6010, %v6160
    %v6186 = vadd.f32 %v6011, %v6161
    %v6187 = vadd.f32 %v6012, %v6162
    %v6188 = vadd.f32 %v6013, %v6163
    %v6189 = vadd.f32 %v6014, %v6164
    %v6190 = vadd.f32 %v6015, %v6165
    %v6191 = vadd.f32 %v6016, %v6166
    %v6192 = vadd.f32 %v6017, %v6167
    %v6193 = vadd.f32 %v6018, %v6168
    %v6194 = vadd.f32 %v6019, %v6169
    %v6195 = vadd.f32 %v6020, %v6170
    %v6196 = vld [vmem:[%s2035] sm:$0xff]
    %v6197 = vld [vmem:[%s2035 + $0x8] sm:$0xff]
    %v6198 = vld [vmem:[%s2035 + $0x10] sm:$0xff]
    %v6199 = vld [vmem:[%s2035 + $0x18] sm:$0xff]
    %v6200 = vld [vmem:[%s2035 + $0x20] sm:$0xff]
    %v6201 = vld [vmem:[%s2035 + $0x28] sm:$0xff]
    %v6202 = vld [vmem:[%s2035 + $0x30] sm:$0xff]
    %v6203 = vld [vmem:[%s2035 + $0x38] sm:$0xff]
    %v6204 = vld [vmem:[%s2035 + $0x40] sm:$0xff]
    %v6205 = vld [vmem:[%s2035 + $0x48] sm:$0xff]
    %v6206 = vld [vmem:[%s2035 + $0x50] sm:$0xff]
    %v6207 = vld [vmem:[%s2035 + $0x58] sm:$0xff]
    %v6208 = vld [vmem:[%s2035 + $0x60] sm:$0xff]
    %v6209 = vld [vmem:[%s2035 + $0x68] sm:$0xff]
    %v6210 = vld [vmem:[%s2035 + $0x70] sm:$0xff]
    %v6211 = vld [vmem:[%s2035 + $0x78] sm:$0xff]
    %v6212 = vld [vmem:[%s2035 + $0x80] sm:$0xff]
    %v6213 = vld [vmem:[%s2035 + $0x88] sm:$0xff]
    %v6214 = vld [vmem:[%s2035 + $0x90] sm:$0xff]
    %v6215 = vld [vmem:[%s2035 + $0x98] sm:$0xff]
    %v6216 = vld [vmem:[%s2035 + $0xa0] sm:$0xff]
    %v6217 = vld [vmem:[%s2035 + $0xa8] sm:$0xff]
    %v6218 = vld [vmem:[%s2035 + $0xb0] sm:$0xff]
    %v6219 = vld [vmem:[%s2035 + $0xb8] sm:$0xff]
    %v6220 = vld [vmem:[%s2035 + $0xc0] sm:$0xf]
    %6221 = vset.pattern.permute.xlu0 4
    %6222 = vperm.xlu0 %6221, %v5471
    %v6223 = vpop.permute.xlu0 %6222
    %6225 = vset.pattern.permute.xlu0 4
    %6226 = vperm.xlu0 %6225, %v5472
    %v6227 = vpop.permute.xlu0 %6226
    %6229 = vset.pattern.permute.xlu0 4
    %6230 = vperm.xlu0 %6229, %v5473
    %v6231 = vpop.permute.xlu0 %6230
    %6233 = vset.pattern.permute.xlu0 4
    %6234 = vperm.xlu0 %6233, %v5474
    %v6235 = vpop.permute.xlu0 %6234
    %6237 = vset.pattern.permute.xlu0 4
    %6238 = vperm.xlu0 %6237, %v5475
    %v6239 = vpop.permute.xlu0 %6238
    %6241 = vset.pattern.permute.xlu0 4
    %6242 = vperm.xlu0 %6241, %v5476
    %v6243 = vpop.permute.xlu0 %6242
    %6245 = vset.pattern.permute.xlu0 4
    %6246 = vperm.xlu0 %6245, %v5477
    %v6247 = vpop.permute.xlu0 %6246
    %6249 = vset.pattern.permute.xlu0 4
    %6250 = vperm.xlu0 %6249, %v5478
    %v6251 = vpop.permute.xlu0 %6250
    %6253 = vset.pattern.permute.xlu0 4
    %6254 = vperm.xlu0 %6253, %v5479
    %v6255 = vpop.permute.xlu0 %6254
    %6257 = vset.pattern.permute.xlu0 4
    %6258 = vperm.xlu0 %6257, %v5480
    %v6259 = vpop.permute.xlu0 %6258
    %6261 = vset.pattern.permute.xlu0 4
    %6262 = vperm.xlu0 %6261, %v5481
    %v6263 = vpop.permute.xlu0 %6262
    %6265 = vset.pattern.permute.xlu0 4
    %6266 = vperm.xlu0 %6265, %v5482
    %v6267 = vpop.permute.xlu0 %6266
    %6269 = vset.pattern.permute.xlu0 4
    %6270 = vperm.xlu0 %6269, %v5483
    %v6271 = vpop.permute.xlu0 %6270
    %6273 = vset.pattern.permute.xlu0 4
    %6274 = vperm.xlu0 %6273, %v5484
    %v6275 = vpop.permute.xlu0 %6274
    %6277 = vset.pattern.permute.xlu0 4
    %6278 = vperm.xlu0 %6277, %v5485
    %v6279 = vpop.permute.xlu0 %6278
    %6281 = vset.pattern.permute.xlu0 4
    %6282 = vperm.xlu0 %6281, %v5486
    %v6283 = vpop.permute.xlu0 %6282
    %6285 = vset.pattern.permute.xlu0 4
    %6286 = vperm.xlu0 %6285, %v5487
    %v6287 = vpop.permute.xlu0 %6286
    %6289 = vset.pattern.permute.xlu0 4
    %6290 = vperm.xlu0 %6289, %v5488
    %v6291 = vpop.permute.xlu0 %6290
    %6293 = vset.pattern.permute.xlu0 4
    %6294 = vperm.xlu0 %6293, %v5489
    %v6295 = vpop.permute.xlu0 %6294
    %6297 = vset.pattern.permute.xlu0 4
    %6298 = vperm.xlu0 %6297, %v5490
    %v6299 = vpop.permute.xlu0 %6298
    %6301 = vset.pattern.permute.xlu0 4
    %6302 = vperm.xlu0 %6301, %v5491
    %v6303 = vpop.permute.xlu0 %6302
    %6305 = vset.pattern.permute.xlu0 4
    %6306 = vperm.xlu0 %6305, %v5492
    %v6307 = vpop.permute.xlu0 %6306
    %6309 = vset.pattern.permute.xlu0 4
    %6310 = vperm.xlu0 %6309, %v5493
    %v6311 = vpop.permute.xlu0 %6310
    %6313 = vset.pattern.permute.xlu0 4
    %6314 = vperm.xlu0 %6313, %v5494
    %v6315 = vpop.permute.xlu0 %6314
    %6317 = vset.pattern.permute.xlu0 4
    %6318 = vperm.xlu0 %6317, %v5495
    %v6319 = vpop.permute.xlu0 %6318
    %v6321 = vmul.f32 %v6223, %v6196
    %v6322 = vmul.f32 %v6227, %v6197
    %v6323 = vmul.f32 %v6231, %v6198
    %v6324 = vmul.f32 %v6235, %v6199
    %v6325 = vmul.f32 %v6239, %v6200
    %v6326 = vmul.f32 %v6243, %v6201
    %v6327 = vmul.f32 %v6247, %v6202
    %v6328 = vmul.f32 %v6251, %v6203
    %v6329 = vmul.f32 %v6255, %v6204
    %v6330 = vmul.f32 %v6259, %v6205
    %v6331 = vmul.f32 %v6263, %v6206
    %v6332 = vmul.f32 %v6267, %v6207
    %v6333 = vmul.f32 %v6271, %v6208
    %v6334 = vmul.f32 %v6275, %v6209
    %v6335 = vmul.f32 %v6279, %v6210
    %v6336 = vmul.f32 %v6283, %v6211
    %v6337 = vmul.f32 %v6287, %v6212
    %v6338 = vmul.f32 %v6291, %v6213
    %v6339 = vmul.f32 %v6295, %v6214
    %v6340 = vmul.f32 %v6299, %v6215
    %v6341 = vmul.f32 %v6303, %v6216
    %v6342 = vmul.f32 %v6307, %v6217
    %v6343 = vmul.f32 %v6311, %v6218
    %v6344 = vmul.f32 %v6315, %v6219
    %v6345 = vmul.f32 %v6319, %v6220
    %v6346 = vadd.f32 %v6171, %v6321
    %v6347 = vadd.f32 %v6172, %v6322
    %v6348 = vadd.f32 %v6173, %v6323
    %v6349 = vadd.f32 %v6174, %v6324
    %v6350 = vadd.f32 %v6175, %v6325
    %v6351 = vadd.f32 %v6176, %v6326
    %v6352 = vadd.f32 %v6177, %v6327
    %v6353 = vadd.f32 %v6178, %v6328
    %v6354 = vadd.f32 %v6179, %v6329
    %v6355 = vadd.f32 %v6180, %v6330
    %v6356 = vadd.f32 %v6181, %v6331
    %v6357 = vadd.f32 %v6182, %v6332
    %v6358 = vadd.f32 %v6183, %v6333
    %v6359 = vadd.f32 %v6184, %v6334
    %v6360 = vadd.f32 %v6185, %v6335
    %v6361 = vadd.f32 %v6186, %v6336
    %v6362 = vadd.f32 %v6187, %v6337
    %v6363 = vadd.f32 %v6188, %v6338
    %v6364 = vadd.f32 %v6189, %v6339
    %v6365 = vadd.f32 %v6190, %v6340
    %v6366 = vadd.f32 %v6191, %v6341
    %v6367 = vadd.f32 %v6192, %v6342
    %v6368 = vadd.f32 %v6193, %v6343
    %v6369 = vadd.f32 %v6194, %v6344
    %v6370 = vadd.f32 %v6195, %v6345
    %v6371 = vld [vmem:[%s2211] sm:$0xff]
    %v6372 = vld [vmem:[%s2211 + $0x8] sm:$0xff]
    %v6373 = vld [vmem:[%s2211 + $0x10] sm:$0xff]
    %v6374 = vld [vmem:[%s2211 + $0x18] sm:$0xff]
    %v6375 = vld [vmem:[%s2211 + $0x20] sm:$0xff]
    %v6376 = vld [vmem:[%s2211 + $0x28] sm:$0xff]
    %v6377 = vld [vmem:[%s2211 + $0x30] sm:$0xff]
    %v6378 = vld [vmem:[%s2211 + $0x38] sm:$0xff]
    %v6379 = vld [vmem:[%s2211 + $0x40] sm:$0xff]
    %v6380 = vld [vmem:[%s2211 + $0x48] sm:$0xff]
    %v6381 = vld [vmem:[%s2211 + $0x50] sm:$0xff]
    %v6382 = vld [vmem:[%s2211 + $0x58] sm:$0xff]
    %v6383 = vld [vmem:[%s2211 + $0x60] sm:$0xff]
    %v6384 = vld [vmem:[%s2211 + $0x68] sm:$0xff]
    %v6385 = vld [vmem:[%s2211 + $0x70] sm:$0xff]
    %v6386 = vld [vmem:[%s2211 + $0x78] sm:$0xff]
    %v6387 = vld [vmem:[%s2211 + $0x80] sm:$0xff]
    %v6388 = vld [vmem:[%s2211 + $0x88] sm:$0xff]
    %v6389 = vld [vmem:[%s2211 + $0x90] sm:$0xff]
    %v6390 = vld [vmem:[%s2211 + $0x98] sm:$0xff]
    %v6391 = vld [vmem:[%s2211 + $0xa0] sm:$0xff]
    %v6392 = vld [vmem:[%s2211 + $0xa8] sm:$0xff]
    %v6393 = vld [vmem:[%s2211 + $0xb0] sm:$0xff]
    %v6394 = vld [vmem:[%s2211 + $0xb8] sm:$0xff]
    %v6395 = vld [vmem:[%s2211 + $0xc0] sm:$0xf]
    %6396 = vset.pattern.permute.xlu0 5
    %6397 = vperm.xlu0 %6396, %v5471
    %v6398 = vpop.permute.xlu0 %6397
    %6400 = vset.pattern.permute.xlu0 5
    %6401 = vperm.xlu0 %6400, %v5472
    %v6402 = vpop.permute.xlu0 %6401
    %6404 = vset.pattern.permute.xlu0 5
    %6405 = vperm.xlu0 %6404, %v5473
    %v6406 = vpop.permute.xlu0 %6405
    %6408 = vset.pattern.permute.xlu0 5
    %6409 = vperm.xlu0 %6408, %v5474
    %v6410 = vpop.permute.xlu0 %6409
    %6412 = vset.pattern.permute.xlu0 5
    %6413 = vperm.xlu0 %6412, %v5475
    %v6414 = vpop.permute.xlu0 %6413
    %6416 = vset.pattern.permute.xlu0 5
    %6417 = vperm.xlu0 %6416, %v5476
    %v6418 = vpop.permute.xlu0 %6417
    %6420 = vset.pattern.permute.xlu0 5
    %6421 = vperm.xlu0 %6420, %v5477
    %v6422 = vpop.permute.xlu0 %6421
    %6424 = vset.pattern.permute.xlu0 5
    %6425 = vperm.xlu0 %6424, %v5478
    %v6426 = vpop.permute.xlu0 %6425
    %6428 = vset.pattern.permute.xlu0 5
    %6429 = vperm.xlu0 %6428, %v5479
    %v6430 = vpop.permute.xlu0 %6429
    %6432 = vset.pattern.permute.xlu0 5
    %6433 = vperm.xlu0 %6432, %v5480
    %v6434 = vpop.permute.xlu0 %6433
    %6436 = vset.pattern.permute.xlu0 5
    %6437 = vperm.xlu0 %6436, %v5481
    %v6438 = vpop.permute.xlu0 %6437
    %6440 = vset.pattern.permute.xlu0 5
    %6441 = vperm.xlu0 %6440, %v5482
    %v6442 = vpop.permute.xlu0 %6441
    %6444 = vset.pattern.permute.xlu0 5
    %6445 = vperm.xlu0 %6444, %v5483
    %v6446 = vpop.permute.xlu0 %6445
    %6448 = vset.pattern.permute.xlu0 5
    %6449 = vperm.xlu0 %6448, %v5484
    %v6450 = vpop.permute.xlu0 %6449
    %6452 = vset.pattern.permute.xlu0 5
    %6453 = vperm.xlu0 %6452, %v5485
    %v6454 = vpop.permute.xlu0 %6453
    %6456 = vset.pattern.permute.xlu0 5
    %6457 = vperm.xlu0 %6456, %v5486
    %v6458 = vpop.permute.xlu0 %6457
    %6460 = vset.pattern.permute.xlu0 5
    %6461 = vperm.xlu0 %6460, %v5487
    %v6462 = vpop.permute.xlu0 %6461
    %6464 = vset.pattern.permute.xlu0 5
    %6465 = vperm.xlu0 %6464, %v5488
    %v6466 = vpop.permute.xlu0 %6465
    %6468 = vset.pattern.permute.xlu0 5
    %6469 = vperm.xlu0 %6468, %v5489
    %v6470 = vpop.permute.xlu0 %6469
    %6472 = vset.pattern.permute.xlu0 5
    %6473 = vperm.xlu0 %6472, %v5490
    %v6474 = vpop.permute.xlu0 %6473
    %6476 = vset.pattern.permute.xlu0 5
    %6477 = vperm.xlu0 %6476, %v5491
    %v6478 = vpop.permute.xlu0 %6477
    %6480 = vset.pattern.permute.xlu0 5
    %6481 = vperm.xlu0 %6480, %v5492
    %v6482 = vpop.permute.xlu0 %6481
    %6484 = vset.pattern.permute.xlu0 5
    %6485 = vperm.xlu0 %6484, %v5493
    %v6486 = vpop.permute.xlu0 %6485
    %6488 = vset.pattern.permute.xlu0 5
    %6489 = vperm.xlu0 %6488, %v5494
    %v6490 = vpop.permute.xlu0 %6489
    %6492 = vset.pattern.permute.xlu0 5
    %6493 = vperm.xlu0 %6492, %v5495
    %v6494 = vpop.permute.xlu0 %6493
    %v6496 = vmul.f32 %v6398, %v6371
    %v6497 = vmul.f32 %v6402, %v6372
    %v6498 = vmul.f32 %v6406, %v6373
    %v6499 = vmul.f32 %v6410, %v6374
    %v6500 = vmul.f32 %v6414, %v6375
    %v6501 = vmul.f32 %v6418, %v6376
    %v6502 = vmul.f32 %v6422, %v6377
    %v6503 = vmul.f32 %v6426, %v6378
    %v6504 = vmul.f32 %v6430, %v6379
    %v6505 = vmul.f32 %v6434, %v6380
    %v6506 = vmul.f32 %v6438, %v6381
    %v6507 = vmul.f32 %v6442, %v6382
    %v6508 = vmul.f32 %v6446, %v6383
    %v6509 = vmul.f32 %v6450, %v6384
    %v6510 = vmul.f32 %v6454, %v6385
    %v6511 = vmul.f32 %v6458, %v6386
    %v6512 = vmul.f32 %v6462, %v6387
    %v6513 = vmul.f32 %v6466, %v6388
    %v6514 = vmul.f32 %v6470, %v6389
    %v6515 = vmul.f32 %v6474, %v6390
    %v6516 = vmul.f32 %v6478, %v6391
    %v6517 = vmul.f32 %v6482, %v6392
    %v6518 = vmul.f32 %v6486, %v6393
    %v6519 = vmul.f32 %v6490, %v6394
    %v6520 = vmul.f32 %v6494, %v6395
    %v6521 = vadd.f32 %v6346, %v6496
    %v6522 = vadd.f32 %v6347, %v6497
    %v6523 = vadd.f32 %v6348, %v6498
    %v6524 = vadd.f32 %v6349, %v6499
    %v6525 = vadd.f32 %v6350, %v6500
    %v6526 = vadd.f32 %v6351, %v6501
    %v6527 = vadd.f32 %v6352, %v6502
    %v6528 = vadd.f32 %v6353, %v6503
    %v6529 = vadd.f32 %v6354, %v6504
    %v6530 = vadd.f32 %v6355, %v6505
    %v6531 = vadd.f32 %v6356, %v6506
    %v6532 = vadd.f32 %v6357, %v6507
    %v6533 = vadd.f32 %v6358, %v6508
    %v6534 = vadd.f32 %v6359, %v6509
    %v6535 = vadd.f32 %v6360, %v6510
    %v6536 = vadd.f32 %v6361, %v6511
    %v6537 = vadd.f32 %v6362, %v6512
    %v6538 = vadd.f32 %v6363, %v6513
    %v6539 = vadd.f32 %v6364, %v6514
    %v6540 = vadd.f32 %v6365, %v6515
    %v6541 = vadd.f32 %v6366, %v6516
    %v6542 = vadd.f32 %v6367, %v6517
    %v6543 = vadd.f32 %v6368, %v6518
    %v6544 = vadd.f32 %v6369, %v6519
    %v6545 = vadd.f32 %v6370, %v6520
    %v6546 = vld [vmem:[%s2387] sm:$0xff]
    %v6547 = vld [vmem:[%s2387 + $0x8] sm:$0xff]
    %v6548 = vld [vmem:[%s2387 + $0x10] sm:$0xff]
    %v6549 = vld [vmem:[%s2387 + $0x18] sm:$0xff]
    %v6550 = vld [vmem:[%s2387 + $0x20] sm:$0xff]
    %v6551 = vld [vmem:[%s2387 + $0x28] sm:$0xff]
    %v6552 = vld [vmem:[%s2387 + $0x30] sm:$0xff]
    %v6553 = vld [vmem:[%s2387 + $0x38] sm:$0xff]
    %v6554 = vld [vmem:[%s2387 + $0x40] sm:$0xff]
    %v6555 = vld [vmem:[%s2387 + $0x48] sm:$0xff]
    %v6556 = vld [vmem:[%s2387 + $0x50] sm:$0xff]
    %v6557 = vld [vmem:[%s2387 + $0x58] sm:$0xff]
    %v6558 = vld [vmem:[%s2387 + $0x60] sm:$0xff]
    %v6559 = vld [vmem:[%s2387 + $0x68] sm:$0xff]
    %v6560 = vld [vmem:[%s2387 + $0x70] sm:$0xff]
    %v6561 = vld [vmem:[%s2387 + $0x78] sm:$0xff]
    %v6562 = vld [vmem:[%s2387 + $0x80] sm:$0xff]
    %v6563 = vld [vmem:[%s2387 + $0x88] sm:$0xff]
    %v6564 = vld [vmem:[%s2387 + $0x90] sm:$0xff]
    %v6565 = vld [vmem:[%s2387 + $0x98] sm:$0xff]
    %v6566 = vld [vmem:[%s2387 + $0xa0] sm:$0xff]
    %v6567 = vld [vmem:[%s2387 + $0xa8] sm:$0xff]
    %v6568 = vld [vmem:[%s2387 + $0xb0] sm:$0xff]
    %v6569 = vld [vmem:[%s2387 + $0xb8] sm:$0xff]
    %v6570 = vld [vmem:[%s2387 + $0xc0] sm:$0xf]
    %6571 = vset.pattern.permute.xlu0 6
    %6572 = vperm.xlu0 %6571, %v5471
    %v6573 = vpop.permute.xlu0 %6572
    %6575 = vset.pattern.permute.xlu0 6
    %6576 = vperm.xlu0 %6575, %v5472
    %v6577 = vpop.permute.xlu0 %6576
    %6579 = vset.pattern.permute.xlu0 6
    %6580 = vperm.xlu0 %6579, %v5473
    %v6581 = vpop.permute.xlu0 %6580
    %6583 = vset.pattern.permute.xlu0 6
    %6584 = vperm.xlu0 %6583, %v5474
    %v6585 = vpop.permute.xlu0 %6584
    %6587 = vset.pattern.permute.xlu0 6
    %6588 = vperm.xlu0 %6587, %v5475
    %v6589 = vpop.permute.xlu0 %6588
    %6591 = vset.pattern.permute.xlu0 6
    %6592 = vperm.xlu0 %6591, %v5476
    %v6593 = vpop.permute.xlu0 %6592
    %6595 = vset.pattern.permute.xlu0 6
    %6596 = vperm.xlu0 %6595, %v5477
    %v6597 = vpop.permute.xlu0 %6596
    %6599 = vset.pattern.permute.xlu0 6
    %6600 = vperm.xlu0 %6599, %v5478
    %v6601 = vpop.permute.xlu0 %6600
    %6603 = vset.pattern.permute.xlu0 6
    %6604 = vperm.xlu0 %6603, %v5479
    %v6605 = vpop.permute.xlu0 %6604
    %6607 = vset.pattern.permute.xlu0 6
    %6608 = vperm.xlu0 %6607, %v5480
    %v6609 = vpop.permute.xlu0 %6608
    %6611 = vset.pattern.permute.xlu0 6
    %6612 = vperm.xlu0 %6611, %v5481
    %v6613 = vpop.permute.xlu0 %6612
    %6615 = vset.pattern.permute.xlu0 6
    %6616 = vperm.xlu0 %6615, %v5482
    %v6617 = vpop.permute.xlu0 %6616
    %6619 = vset.pattern.permute.xlu0 6
    %6620 = vperm.xlu0 %6619, %v5483
    %v6621 = vpop.permute.xlu0 %6620
    %6623 = vset.pattern.permute.xlu0 6
    %6624 = vperm.xlu0 %6623, %v5484
    %v6625 = vpop.permute.xlu0 %6624
    %6627 = vset.pattern.permute.xlu0 6
    %6628 = vperm.xlu0 %6627, %v5485
    %v6629 = vpop.permute.xlu0 %6628
    %6631 = vset.pattern.permute.xlu0 6
    %6632 = vperm.xlu0 %6631, %v5486
    %v6633 = vpop.permute.xlu0 %6632
    %6635 = vset.pattern.permute.xlu0 6
    %6636 = vperm.xlu0 %6635, %v5487
    %v6637 = vpop.permute.xlu0 %6636
    %6639 = vset.pattern.permute.xlu0 6
    %6640 = vperm.xlu0 %6639, %v5488
    %v6641 = vpop.permute.xlu0 %6640
    %6643 = vset.pattern.permute.xlu0 6
    %6644 = vperm.xlu0 %6643, %v5489
    %v6645 = vpop.permute.xlu0 %6644
    %6647 = vset.pattern.permute.xlu0 6
    %6648 = vperm.xlu0 %6647, %v5490
    %v6649 = vpop.permute.xlu0 %6648
    %6651 = vset.pattern.permute.xlu0 6
    %6652 = vperm.xlu0 %6651, %v5491
    %v6653 = vpop.permute.xlu0 %6652
    %6655 = vset.pattern.permute.xlu0 6
    %6656 = vperm.xlu0 %6655, %v5492
    %v6657 = vpop.permute.xlu0 %6656
    %6659 = vset.pattern.permute.xlu0 6
    %6660 = vperm.xlu0 %6659, %v5493
    %v6661 = vpop.permute.xlu0 %6660
    %6663 = vset.pattern.permute.xlu0 6
    %6664 = vperm.xlu0 %6663, %v5494
    %v6665 = vpop.permute.xlu0 %6664
    %6667 = vset.pattern.permute.xlu0 6
    %6668 = vperm.xlu0 %6667, %v5495
    %v6669 = vpop.permute.xlu0 %6668
    %v6671 = vmul.f32 %v6573, %v6546
    %v6672 = vmul.f32 %v6577, %v6547
    %v6673 = vmul.f32 %v6581, %v6548
    %v6674 = vmul.f32 %v6585, %v6549
    %v6675 = vmul.f32 %v6589, %v6550
    %v6676 = vmul.f32 %v6593, %v6551
    %v6677 = vmul.f32 %v6597, %v6552
    %v6678 = vmul.f32 %v6601, %v6553
    %v6679 = vmul.f32 %v6605, %v6554
    %v6680 = vmul.f32 %v6609, %v6555
    %v6681 = vmul.f32 %v6613, %v6556
    %v6682 = vmul.f32 %v6617, %v6557
    %v6683 = vmul.f32 %v6621, %v6558
    %v6684 = vmul.f32 %v6625, %v6559
    %v6685 = vmul.f32 %v6629, %v6560
    %v6686 = vmul.f32 %v6633, %v6561
    %v6687 = vmul.f32 %v6637, %v6562
    %v6688 = vmul.f32 %v6641, %v6563
    %v6689 = vmul.f32 %v6645, %v6564
    %v6690 = vmul.f32 %v6649, %v6565
    %v6691 = vmul.f32 %v6653, %v6566
    %v6692 = vmul.f32 %v6657, %v6567
    %v6693 = vmul.f32 %v6661, %v6568
    %v6694 = vmul.f32 %v6665, %v6569
    %v6695 = vmul.f32 %v6669, %v6570
    %v6696 = vadd.f32 %v6521, %v6671
    %v6697 = vadd.f32 %v6522, %v6672
    %v6698 = vadd.f32 %v6523, %v6673
    %v6699 = vadd.f32 %v6524, %v6674
    %v6700 = vadd.f32 %v6525, %v6675
    %v6701 = vadd.f32 %v6526, %v6676
    %v6702 = vadd.f32 %v6527, %v6677
    %v6703 = vadd.f32 %v6528, %v6678
    %v6704 = vadd.f32 %v6529, %v6679
    %v6705 = vadd.f32 %v6530, %v6680
    %v6706 = vadd.f32 %v6531, %v6681
    %v6707 = vadd.f32 %v6532, %v6682
    %v6708 = vadd.f32 %v6533, %v6683
    %v6709 = vadd.f32 %v6534, %v6684
    %v6710 = vadd.f32 %v6535, %v6685
    %v6711 = vadd.f32 %v6536, %v6686
    %v6712 = vadd.f32 %v6537, %v6687
    %v6713 = vadd.f32 %v6538, %v6688
    %v6714 = vadd.f32 %v6539, %v6689
    %v6715 = vadd.f32 %v6540, %v6690
    %v6716 = vadd.f32 %v6541, %v6691
    %v6717 = vadd.f32 %v6542, %v6692
    %v6718 = vadd.f32 %v6543, %v6693
    %v6719 = vadd.f32 %v6544, %v6694
    %v6720 = vadd.f32 %v6545, %v6695
    %v6721 = vld [vmem:[%s2563] sm:$0xff]
    %v6722 = vld [vmem:[%s2563 + $0x8] sm:$0xff]
    %v6723 = vld [vmem:[%s2563 + $0x10] sm:$0xff]
    %v6724 = vld [vmem:[%s2563 + $0x18] sm:$0xff]
    %v6725 = vld [vmem:[%s2563 + $0x20] sm:$0xff]
    %v6726 = vld [vmem:[%s2563 + $0x28] sm:$0xff]
    %v6727 = vld [vmem:[%s2563 + $0x30] sm:$0xff]
    %v6728 = vld [vmem:[%s2563 + $0x38] sm:$0xff]
    %v6729 = vld [vmem:[%s2563 + $0x40] sm:$0xff]
    %v6730 = vld [vmem:[%s2563 + $0x48] sm:$0xff]
    %v6731 = vld [vmem:[%s2563 + $0x50] sm:$0xff]
    %v6732 = vld [vmem:[%s2563 + $0x58] sm:$0xff]
    %v6733 = vld [vmem:[%s2563 + $0x60] sm:$0xff]
    %v6734 = vld [vmem:[%s2563 + $0x68] sm:$0xff]
    %v6735 = vld [vmem:[%s2563 + $0x70] sm:$0xff]
    %v6736 = vld [vmem:[%s2563 + $0x78] sm:$0xff]
    %v6737 = vld [vmem:[%s2563 + $0x80] sm:$0xff]
    %v6738 = vld [vmem:[%s2563 + $0x88] sm:$0xff]
    %v6739 = vld [vmem:[%s2563 + $0x90] sm:$0xff]
    %v6740 = vld [vmem:[%s2563 + $0x98] sm:$0xff]
    %v6741 = vld [vmem:[%s2563 + $0xa0] sm:$0xff]
    %v6742 = vld [vmem:[%s2563 + $0xa8] sm:$0xff]
    %v6743 = vld [vmem:[%s2563 + $0xb0] sm:$0xff]
    %v6744 = vld [vmem:[%s2563 + $0xb8] sm:$0xff]
    %v6745 = vld [vmem:[%s2563 + $0xc0] sm:$0xf]
    %6746 = vset.pattern.permute.xlu0 7
    %6747 = vperm.xlu0 %6746, %v5471
    %v6748 = vpop.permute.xlu0 %6747
    %6750 = vset.pattern.permute.xlu0 7
    %6751 = vperm.xlu0 %6750, %v5472
    %v6752 = vpop.permute.xlu0 %6751
    %6754 = vset.pattern.permute.xlu0 7
    %6755 = vperm.xlu0 %6754, %v5473
    %v6756 = vpop.permute.xlu0 %6755
    %6758 = vset.pattern.permute.xlu0 7
    %6759 = vperm.xlu0 %6758, %v5474
    %v6760 = vpop.permute.xlu0 %6759
    %6762 = vset.pattern.permute.xlu0 7
    %6763 = vperm.xlu0 %6762, %v5475
    %v6764 = vpop.permute.xlu0 %6763
    %6766 = vset.pattern.permute.xlu0 7
    %6767 = vperm.xlu0 %6766, %v5476
    %v6768 = vpop.permute.xlu0 %6767
    %6770 = vset.pattern.permute.xlu0 7
    %6771 = vperm.xlu0 %6770, %v5477
    %v6772 = vpop.permute.xlu0 %6771
    %6774 = vset.pattern.permute.xlu0 7
    %6775 = vperm.xlu0 %6774, %v5478
    %v6776 = vpop.permute.xlu0 %6775
    %6778 = vset.pattern.permute.xlu0 7
    %6779 = vperm.xlu0 %6778, %v5479
    %v6780 = vpop.permute.xlu0 %6779
    %6782 = vset.pattern.permute.xlu0 7
    %6783 = vperm.xlu0 %6782, %v5480
    %v6784 = vpop.permute.xlu0 %6783
    %6786 = vset.pattern.permute.xlu0 7
    %6787 = vperm.xlu0 %6786, %v5481
    %v6788 = vpop.permute.xlu0 %6787
    %6790 = vset.pattern.permute.xlu0 7
    %6791 = vperm.xlu0 %6790, %v5482
    %v6792 = vpop.permute.xlu0 %6791
    %6794 = vset.pattern.permute.xlu0 7
    %6795 = vperm.xlu0 %6794, %v5483
    %v6796 = vpop.permute.xlu0 %6795
    %6798 = vset.pattern.permute.xlu0 7
    %6799 = vperm.xlu0 %6798, %v5484
    %v6800 = vpop.permute.xlu0 %6799
    %6802 = vset.pattern.permute.xlu0 7
    %6803 = vperm.xlu0 %6802, %v5485
    %v6804 = vpop.permute.xlu0 %6803
    %6806 = vset.pattern.permute.xlu0 7
    %6807 = vperm.xlu0 %6806, %v5486
    %v6808 = vpop.permute.xlu0 %6807
    %6810 = vset.pattern.permute.xlu0 7
    %6811 = vperm.xlu0 %6810, %v5487
    %v6812 = vpop.permute.xlu0 %6811
    %6814 = vset.pattern.permute.xlu0 7
    %6815 = vperm.xlu0 %6814, %v5488
    %v6816 = vpop.permute.xlu0 %6815
    %6818 = vset.pattern.permute.xlu0 7
    %6819 = vperm.xlu0 %6818, %v5489
    %v6820 = vpop.permute.xlu0 %6819
    %6822 = vset.pattern.permute.xlu0 7
    %6823 = vperm.xlu0 %6822, %v5490
    %v6824 = vpop.permute.xlu0 %6823
    %6826 = vset.pattern.permute.xlu0 7
    %6827 = vperm.xlu0 %6826, %v5491
    %v6828 = vpop.permute.xlu0 %6827
    %6830 = vset.pattern.permute.xlu0 7
    %6831 = vperm.xlu0 %6830, %v5492
    %v6832 = vpop.permute.xlu0 %6831
    %6834 = vset.pattern.permute.xlu0 7
    %6835 = vperm.xlu0 %6834, %v5493
    %v6836 = vpop.permute.xlu0 %6835
    %6838 = vset.pattern.permute.xlu0 7
    %6839 = vperm.xlu0 %6838, %v5494
    %v6840 = vpop.permute.xlu0 %6839
    %6842 = vset.pattern.permute.xlu0 7
    %6843 = vperm.xlu0 %6842, %v5495
    %v6844 = vpop.permute.xlu0 %6843
    %v6846 = vmul.f32 %v6748, %v6721
    %v6847 = vmul.f32 %v6752, %v6722
    %v6848 = vmul.f32 %v6756, %v6723
    %v6849 = vmul.f32 %v6760, %v6724
    %v6850 = vmul.f32 %v6764, %v6725
    %v6851 = vmul.f32 %v6768, %v6726
    %v6852 = vmul.f32 %v6772, %v6727
    %v6853 = vmul.f32 %v6776, %v6728
    %v6854 = vmul.f32 %v6780, %v6729
    %v6855 = vmul.f32 %v6784, %v6730
    %v6856 = vmul.f32 %v6788, %v6731
    %v6857 = vmul.f32 %v6792, %v6732
    %v6858 = vmul.f32 %v6796, %v6733
    %v6859 = vmul.f32 %v6800, %v6734
    %v6860 = vmul.f32 %v6804, %v6735
    %v6861 = vmul.f32 %v6808, %v6736
    %v6862 = vmul.f32 %v6812, %v6737
    %v6863 = vmul.f32 %v6816, %v6738
    %v6864 = vmul.f32 %v6820, %v6739
    %v6865 = vmul.f32 %v6824, %v6740
    %v6866 = vmul.f32 %v6828, %v6741
    %v6867 = vmul.f32 %v6832, %v6742
    %v6868 = vmul.f32 %v6836, %v6743
    %v6869 = vmul.f32 %v6840, %v6744
    %v6870 = vmul.f32 %v6844, %v6745
    %v6871 = vadd.f32 %v6696, %v6846
    %v6872 = vadd.f32 %v6697, %v6847
    %v6873 = vadd.f32 %v6698, %v6848
    %v6874 = vadd.f32 %v6699, %v6849
    %v6875 = vadd.f32 %v6700, %v6850
    %v6876 = vadd.f32 %v6701, %v6851
    %v6877 = vadd.f32 %v6702, %v6852
    %v6878 = vadd.f32 %v6703, %v6853
    %v6879 = vadd.f32 %v6704, %v6854
    %v6880 = vadd.f32 %v6705, %v6855
    %v6881 = vadd.f32 %v6706, %v6856
    %v6882 = vadd.f32 %v6707, %v6857
    %v6883 = vadd.f32 %v6708, %v6858
    %v6884 = vadd.f32 %v6709, %v6859
    %v6885 = vadd.f32 %v6710, %v6860
    %v6886 = vadd.f32 %v6711, %v6861
    %v6887 = vadd.f32 %v6712, %v6862
    %v6888 = vadd.f32 %v6713, %v6863
    %v6889 = vadd.f32 %v6714, %v6864
    %v6890 = vadd.f32 %v6715, %v6865
    %v6891 = vadd.f32 %v6716, %v6866
    %v6892 = vadd.f32 %v6717, %v6867
    %v6893 = vadd.f32 %v6718, %v6868
    %v6894 = vadd.f32 %v6719, %v6869
    %v6895 = vadd.f32 %v6720, %v6870
    %v6896 = vld [vmem:[%s2739] sm:$0xff]
    %v6897 = vld [vmem:[%s2739 + $0x8] sm:$0xff]
    %v6898 = vld [vmem:[%s2739 + $0x10] sm:$0xff]
    %v6899 = vld [vmem:[%s2739 + $0x18] sm:$0xff]
    %v6900 = vld [vmem:[%s2739 + $0x20] sm:$0xff]
    %v6901 = vld [vmem:[%s2739 + $0x28] sm:$0xff]
    %v6902 = vld [vmem:[%s2739 + $0x30] sm:$0xff]
    %v6903 = vld [vmem:[%s2739 + $0x38] sm:$0xff]
    %v6904 = vld [vmem:[%s2739 + $0x40] sm:$0xff]
    %v6905 = vld [vmem:[%s2739 + $0x48] sm:$0xff]
    %v6906 = vld [vmem:[%s2739 + $0x50] sm:$0xff]
    %v6907 = vld [vmem:[%s2739 + $0x58] sm:$0xff]
    %v6908 = vld [vmem:[%s2739 + $0x60] sm:$0xff]
    %v6909 = vld [vmem:[%s2739 + $0x68] sm:$0xff]
    %v6910 = vld [vmem:[%s2739 + $0x70] sm:$0xff]
    %v6911 = vld [vmem:[%s2739 + $0x78] sm:$0xff]
    %v6912 = vld [vmem:[%s2739 + $0x80] sm:$0xff]
    %v6913 = vld [vmem:[%s2739 + $0x88] sm:$0xff]
    %v6914 = vld [vmem:[%s2739 + $0x90] sm:$0xff]
    %v6915 = vld [vmem:[%s2739 + $0x98] sm:$0xff]
    %v6916 = vld [vmem:[%s2739 + $0xa0] sm:$0xff]
    %v6917 = vld [vmem:[%s2739 + $0xa8] sm:$0xff]
    %v6918 = vld [vmem:[%s2739 + $0xb0] sm:$0xff]
    %v6919 = vld [vmem:[%s2739 + $0xb8] sm:$0xff]
    %v6920 = vld [vmem:[%s2739 + $0xc0] sm:$0xf]
    %6921 = vset.pattern.permute.xlu0 8
    %6922 = vperm.xlu0 %6921, %v5471
    %v6923 = vpop.permute.xlu0 %6922
    %6925 = vset.pattern.permute.xlu0 8
    %6926 = vperm.xlu0 %6925, %v5472
    %v6927 = vpop.permute.xlu0 %6926
    %6929 = vset.pattern.permute.xlu0 8
    %6930 = vperm.xlu0 %6929, %v5473
    %v6931 = vpop.permute.xlu0 %6930
    %6933 = vset.pattern.permute.xlu0 8
    %6934 = vperm.xlu0 %6933, %v5474
    %v6935 = vpop.permute.xlu0 %6934
    %6937 = vset.pattern.permute.xlu0 8
    %6938 = vperm.xlu0 %6937, %v5475
    %v6939 = vpop.permute.xlu0 %6938
    %6941 = vset.pattern.permute.xlu0 8
    %6942 = vperm.xlu0 %6941, %v5476
    %v6943 = vpop.permute.xlu0 %6942
    %6945 = vset.pattern.permute.xlu0 8
    %6946 = vperm.xlu0 %6945, %v5477
    %v6947 = vpop.permute.xlu0 %6946
    %6949 = vset.pattern.permute.xlu0 8
    %6950 = vperm.xlu0 %6949, %v5478
    %v6951 = vpop.permute.xlu0 %6950
    %6953 = vset.pattern.permute.xlu0 8
    %6954 = vperm.xlu0 %6953, %v5479
    %v6955 = vpop.permute.xlu0 %6954
    %6957 = vset.pattern.permute.xlu0 8
    %6958 = vperm.xlu0 %6957, %v5480
    %v6959 = vpop.permute.xlu0 %6958
    %6961 = vset.pattern.permute.xlu0 8
    %6962 = vperm.xlu0 %6961, %v5481
    %v6963 = vpop.permute.xlu0 %6962
    %6965 = vset.pattern.permute.xlu0 8
    %6966 = vperm.xlu0 %6965, %v5482
    %v6967 = vpop.permute.xlu0 %6966
    %6969 = vset.pattern.permute.xlu0 8
    %6970 = vperm.xlu0 %6969, %v5483
    %v6971 = vpop.permute.xlu0 %6970
    %6973 = vset.pattern.permute.xlu0 8
    %6974 = vperm.xlu0 %6973, %v5484
    %v6975 = vpop.permute.xlu0 %6974
    %6977 = vset.pattern.permute.xlu0 8
    %6978 = vperm.xlu0 %6977, %v5485
    %v6979 = vpop.permute.xlu0 %6978
    %6981 = vset.pattern.permute.xlu0 8
    %6982 = vperm.xlu0 %6981, %v5486
    %v6983 = vpop.permute.xlu0 %6982
    %6985 = vset.pattern.permute.xlu0 8
    %6986 = vperm.xlu0 %6985, %v5487
    %v6987 = vpop.permute.xlu0 %6986
    %6989 = vset.pattern.permute.xlu0 8
    %6990 = vperm.xlu0 %6989, %v5488
    %v6991 = vpop.permute.xlu0 %6990
    %6993 = vset.pattern.permute.xlu0 8
    %6994 = vperm.xlu0 %6993, %v5489
    %v6995 = vpop.permute.xlu0 %6994
    %6997 = vset.pattern.permute.xlu0 8
    %6998 = vperm.xlu0 %6997, %v5490
    %v6999 = vpop.permute.xlu0 %6998
    %7001 = vset.pattern.permute.xlu0 8
    %7002 = vperm.xlu0 %7001, %v5491
    %v7003 = vpop.permute.xlu0 %7002
    %7005 = vset.pattern.permute.xlu0 8
    %7006 = vperm.xlu0 %7005, %v5492
    %v7007 = vpop.permute.xlu0 %7006
    %7009 = vset.pattern.permute.xlu0 8
    %7010 = vperm.xlu0 %7009, %v5493
    %v7011 = vpop.permute.xlu0 %7010
    %7013 = vset.pattern.permute.xlu0 8
    %7014 = vperm.xlu0 %7013, %v5494
    %v7015 = vpop.permute.xlu0 %7014
    %7017 = vset.pattern.permute.xlu0 8
    %7018 = vperm.xlu0 %7017, %v5495
    %v7019 = vpop.permute.xlu0 %7018
    %v7021 = vmul.f32 %v6923, %v6896
    %v7022 = vmul.f32 %v6927, %v6897
    %v7023 = vmul.f32 %v6931, %v6898
    %v7024 = vmul.f32 %v6935, %v6899
    %v7025 = vmul.f32 %v6939, %v6900
    %v7026 = vmul.f32 %v6943, %v6901
    %v7027 = vmul.f32 %v6947, %v6902
    %v7028 = vmul.f32 %v6951, %v6903
    %v7029 = vmul.f32 %v6955, %v6904
    %v7030 = vmul.f32 %v6959, %v6905
    %v7031 = vmul.f32 %v6963, %v6906
    %v7032 = vmul.f32 %v6967, %v6907
    %v7033 = vmul.f32 %v6971, %v6908
    %v7034 = vmul.f32 %v6975, %v6909
    %v7035 = vmul.f32 %v6979, %v6910
    %v7036 = vmul.f32 %v6983, %v6911
    %v7037 = vmul.f32 %v6987, %v6912
    %v7038 = vmul.f32 %v6991, %v6913
    %v7039 = vmul.f32 %v6995, %v6914
    %v7040 = vmul.f32 %v6999, %v6915
    %v7041 = vmul.f32 %v7003, %v6916
    %v7042 = vmul.f32 %v7007, %v6917
    %v7043 = vmul.f32 %v7011, %v6918
    %v7044 = vmul.f32 %v7015, %v6919
    %v7045 = vmul.f32 %v7019, %v6920
    %v7046 = vadd.f32 %v6871, %v7021
    %v7047 = vadd.f32 %v6872, %v7022
    %v7048 = vadd.f32 %v6873, %v7023
    %v7049 = vadd.f32 %v6874, %v7024
    %v7050 = vadd.f32 %v6875, %v7025
    %v7051 = vadd.f32 %v6876, %v7026
    %v7052 = vadd.f32 %v6877, %v7027
    %v7053 = vadd.f32 %v6878, %v7028
    %v7054 = vadd.f32 %v6879, %v7029
    %v7055 = vadd.f32 %v6880, %v7030
    %v7056 = vadd.f32 %v6881, %v7031
    %v7057 = vadd.f32 %v6882, %v7032
    %v7058 = vadd.f32 %v6883, %v7033
    %v7059 = vadd.f32 %v6884, %v7034
    %v7060 = vadd.f32 %v6885, %v7035
    %v7061 = vadd.f32 %v6886, %v7036
    %v7062 = vadd.f32 %v6887, %v7037
    %v7063 = vadd.f32 %v6888, %v7038
    %v7064 = vadd.f32 %v6889, %v7039
    %v7065 = vadd.f32 %v6890, %v7040
    %v7066 = vadd.f32 %v6891, %v7041
    %v7067 = vadd.f32 %v6892, %v7042
    %v7068 = vadd.f32 %v6893, %v7043
    %v7069 = vadd.f32 %v6894, %v7044
    %v7070 = vadd.f32 %v6895, %v7045
    %v7071 = vld [vmem:[%s2915] sm:$0xff]
    %v7072 = vld [vmem:[%s2915 + $0x8] sm:$0xff]
    %v7073 = vld [vmem:[%s2915 + $0x10] sm:$0xff]
    %v7074 = vld [vmem:[%s2915 + $0x18] sm:$0xff]
    %v7075 = vld [vmem:[%s2915 + $0x20] sm:$0xff]
    %v7076 = vld [vmem:[%s2915 + $0x28] sm:$0xff]
    %v7077 = vld [vmem:[%s2915 + $0x30] sm:$0xff]
    %v7078 = vld [vmem:[%s2915 + $0x38] sm:$0xff]
    %v7079 = vld [vmem:[%s2915 + $0x40] sm:$0xff]
    %v7080 = vld [vmem:[%s2915 + $0x48] sm:$0xff]
    %v7081 = vld [vmem:[%s2915 + $0x50] sm:$0xff]
    %v7082 = vld [vmem:[%s2915 + $0x58] sm:$0xff]
    %v7083 = vld [vmem:[%s2915 + $0x60] sm:$0xff]
    %v7084 = vld [vmem:[%s2915 + $0x68] sm:$0xff]
    %v7085 = vld [vmem:[%s2915 + $0x70] sm:$0xff]
    %v7086 = vld [vmem:[%s2915 + $0x78] sm:$0xff]
    %v7087 = vld [vmem:[%s2915 + $0x80] sm:$0xff]
    %v7088 = vld [vmem:[%s2915 + $0x88] sm:$0xff]
    %v7089 = vld [vmem:[%s2915 + $0x90] sm:$0xff]
    %v7090 = vld [vmem:[%s2915 + $0x98] sm:$0xff]
    %v7091 = vld [vmem:[%s2915 + $0xa0] sm:$0xff]
    %v7092 = vld [vmem:[%s2915 + $0xa8] sm:$0xff]
    %v7093 = vld [vmem:[%s2915 + $0xb0] sm:$0xff]
    %v7094 = vld [vmem:[%s2915 + $0xb8] sm:$0xff]
    %v7095 = vld [vmem:[%s2915 + $0xc0] sm:$0xf]
    %7096 = vset.pattern.permute.xlu0 9
    %7097 = vperm.xlu0 %7096, %v5471
    %v7098 = vpop.permute.xlu0 %7097
    %7100 = vset.pattern.permute.xlu0 9
    %7101 = vperm.xlu0 %7100, %v5472
    %v7102 = vpop.permute.xlu0 %7101
    %7104 = vset.pattern.permute.xlu0 9
    %7105 = vperm.xlu0 %7104, %v5473
    %v7106 = vpop.permute.xlu0 %7105
    %7108 = vset.pattern.permute.xlu0 9
    %7109 = vperm.xlu0 %7108, %v5474
    %v7110 = vpop.permute.xlu0 %7109
    %7112 = vset.pattern.permute.xlu0 9
    %7113 = vperm.xlu0 %7112, %v5475
    %v7114 = vpop.permute.xlu0 %7113
    %7116 = vset.pattern.permute.xlu0 9
    %7117 = vperm.xlu0 %7116, %v5476
    %v7118 = vpop.permute.xlu0 %7117
    %7120 = vset.pattern.permute.xlu0 9
    %7121 = vperm.xlu0 %7120, %v5477
    %v7122 = vpop.permute.xlu0 %7121
    %7124 = vset.pattern.permute.xlu0 9
    %7125 = vperm.xlu0 %7124, %v5478
    %v7126 = vpop.permute.xlu0 %7125
    %7128 = vset.pattern.permute.xlu0 9
    %7129 = vperm.xlu0 %7128, %v5479
    %v7130 = vpop.permute.xlu0 %7129
    %7132 = vset.pattern.permute.xlu0 9
    %7133 = vperm.xlu0 %7132, %v5480
    %v7134 = vpop.permute.xlu0 %7133
    %7136 = vset.pattern.permute.xlu0 9
    %7137 = vperm.xlu0 %7136, %v5481
    %v7138 = vpop.permute.xlu0 %7137
    %7140 = vset.pattern.permute.xlu0 9
    %7141 = vperm.xlu0 %7140, %v5482
    %v7142 = vpop.permute.xlu0 %7141
    %7144 = vset.pattern.permute.xlu0 9
    %7145 = vperm.xlu0 %7144, %v5483
    %v7146 = vpop.permute.xlu0 %7145
    %7148 = vset.pattern.permute.xlu0 9
    %7149 = vperm.xlu0 %7148, %v5484
    %v7150 = vpop.permute.xlu0 %7149
    %7152 = vset.pattern.permute.xlu0 9
    %7153 = vperm.xlu0 %7152, %v5485
    %v7154 = vpop.permute.xlu0 %7153
    %7156 = vset.pattern.permute.xlu0 9
    %7157 = vperm.xlu0 %7156, %v5486
    %v7158 = vpop.permute.xlu0 %7157
    %7160 = vset.pattern.permute.xlu0 9
    %7161 = vperm.xlu0 %7160, %v5487
    %v7162 = vpop.permute.xlu0 %7161
    %7164 = vset.pattern.permute.xlu0 9
    %7165 = vperm.xlu0 %7164, %v5488
    %v7166 = vpop.permute.xlu0 %7165
    %7168 = vset.pattern.permute.xlu0 9
    %7169 = vperm.xlu0 %7168, %v5489
    %v7170 = vpop.permute.xlu0 %7169
    %7172 = vset.pattern.permute.xlu0 9
    %7173 = vperm.xlu0 %7172, %v5490
    %v7174 = vpop.permute.xlu0 %7173
    %7176 = vset.pattern.permute.xlu0 9
    %7177 = vperm.xlu0 %7176, %v5491
    %v7178 = vpop.permute.xlu0 %7177
    %7180 = vset.pattern.permute.xlu0 9
    %7181 = vperm.xlu0 %7180, %v5492
    %v7182 = vpop.permute.xlu0 %7181
    %7184 = vset.pattern.permute.xlu0 9
    %7185 = vperm.xlu0 %7184, %v5493
    %v7186 = vpop.permute.xlu0 %7185
    %7188 = vset.pattern.permute.xlu0 9
    %7189 = vperm.xlu0 %7188, %v5494
    %v7190 = vpop.permute.xlu0 %7189
    %7192 = vset.pattern.permute.xlu0 9
    %7193 = vperm.xlu0 %7192, %v5495
    %v7194 = vpop.permute.xlu0 %7193
    %v7196 = vmul.f32 %v7098, %v7071
    %v7197 = vmul.f32 %v7102, %v7072
    %v7198 = vmul.f32 %v7106, %v7073
    %v7199 = vmul.f32 %v7110, %v7074
    %v7200 = vmul.f32 %v7114, %v7075
    %v7201 = vmul.f32 %v7118, %v7076
    %v7202 = vmul.f32 %v7122, %v7077
    %v7203 = vmul.f32 %v7126, %v7078
    %v7204 = vmul.f32 %v7130, %v7079
    %v7205 = vmul.f32 %v7134, %v7080
    %v7206 = vmul.f32 %v7138, %v7081
    %v7207 = vmul.f32 %v7142, %v7082
    %v7208 = vmul.f32 %v7146, %v7083
    %v7209 = vmul.f32 %v7150, %v7084
    %v7210 = vmul.f32 %v7154, %v7085
    %v7211 = vmul.f32 %v7158, %v7086
    %v7212 = vmul.f32 %v7162, %v7087
    %v7213 = vmul.f32 %v7166, %v7088
    %v7214 = vmul.f32 %v7170, %v7089
    %v7215 = vmul.f32 %v7174, %v7090
    %v7216 = vmul.f32 %v7178, %v7091
    %v7217 = vmul.f32 %v7182, %v7092
    %v7218 = vmul.f32 %v7186, %v7093
    %v7219 = vmul.f32 %v7190, %v7094
    %v7220 = vmul.f32 %v7194, %v7095
    %v7221 = vadd.f32 %v7046, %v7196
    %v7222 = vadd.f32 %v7047, %v7197
    %v7223 = vadd.f32 %v7048, %v7198
    %v7224 = vadd.f32 %v7049, %v7199
    %v7225 = vadd.f32 %v7050, %v7200
    %v7226 = vadd.f32 %v7051, %v7201
    %v7227 = vadd.f32 %v7052, %v7202
    %v7228 = vadd.f32 %v7053, %v7203
    %v7229 = vadd.f32 %v7054, %v7204
    %v7230 = vadd.f32 %v7055, %v7205
    %v7231 = vadd.f32 %v7056, %v7206
    %v7232 = vadd.f32 %v7057, %v7207
    %v7233 = vadd.f32 %v7058, %v7208
    %v7234 = vadd.f32 %v7059, %v7209
    %v7235 = vadd.f32 %v7060, %v7210
    %v7236 = vadd.f32 %v7061, %v7211
    %v7237 = vadd.f32 %v7062, %v7212
    %v7238 = vadd.f32 %v7063, %v7213
    %v7239 = vadd.f32 %v7064, %v7214
    %v7240 = vadd.f32 %v7065, %v7215
    %v7241 = vadd.f32 %v7066, %v7216
    %v7242 = vadd.f32 %v7067, %v7217
    %v7243 = vadd.f32 %v7068, %v7218
    %v7244 = vadd.f32 %v7069, %v7219
    %v7245 = vadd.f32 %v7070, %v7220
    %v7246 = vld [vmem:[%s3091] sm:$0xff]
    %v7247 = vld [vmem:[%s3091 + $0x8] sm:$0xff]
    %v7248 = vld [vmem:[%s3091 + $0x10] sm:$0xff]
    %v7249 = vld [vmem:[%s3091 + $0x18] sm:$0xff]
    %v7250 = vld [vmem:[%s3091 + $0x20] sm:$0xff]
    %v7251 = vld [vmem:[%s3091 + $0x28] sm:$0xff]
    %v7252 = vld [vmem:[%s3091 + $0x30] sm:$0xff]
    %v7253 = vld [vmem:[%s3091 + $0x38] sm:$0xff]
    %v7254 = vld [vmem:[%s3091 + $0x40] sm:$0xff]
    %v7255 = vld [vmem:[%s3091 + $0x48] sm:$0xff]
    %v7256 = vld [vmem:[%s3091 + $0x50] sm:$0xff]
    %v7257 = vld [vmem:[%s3091 + $0x58] sm:$0xff]
    %v7258 = vld [vmem:[%s3091 + $0x60] sm:$0xff]
    %v7259 = vld [vmem:[%s3091 + $0x68] sm:$0xff]
    %v7260 = vld [vmem:[%s3091 + $0x70] sm:$0xff]
    %v7261 = vld [vmem:[%s3091 + $0x78] sm:$0xff]
    %v7262 = vld [vmem:[%s3091 + $0x80] sm:$0xff]
    %v7263 = vld [vmem:[%s3091 + $0x88] sm:$0xff]
    %v7264 = vld [vmem:[%s3091 + $0x90] sm:$0xff]
    %v7265 = vld [vmem:[%s3091 + $0x98] sm:$0xff]
    %v7266 = vld [vmem:[%s3091 + $0xa0] sm:$0xff]
    %v7267 = vld [vmem:[%s3091 + $0xa8] sm:$0xff]
    %v7268 = vld [vmem:[%s3091 + $0xb0] sm:$0xff]
    %v7269 = vld [vmem:[%s3091 + $0xb8] sm:$0xff]
    %v7270 = vld [vmem:[%s3091 + $0xc0] sm:$0xf]
    %7271 = vset.pattern.permute.xlu0 10
    %7272 = vperm.xlu0 %7271, %v5471
    %v7273 = vpop.permute.xlu0 %7272
    %7275 = vset.pattern.permute.xlu0 10
    %7276 = vperm.xlu0 %7275, %v5472
    %v7277 = vpop.permute.xlu0 %7276
    %7279 = vset.pattern.permute.xlu0 10
    %7280 = vperm.xlu0 %7279, %v5473
    %v7281 = vpop.permute.xlu0 %7280
    %7283 = vset.pattern.permute.xlu0 10
    %7284 = vperm.xlu0 %7283, %v5474
    %v7285 = vpop.permute.xlu0 %7284
    %7287 = vset.pattern.permute.xlu0 10
    %7288 = vperm.xlu0 %7287, %v5475
    %v7289 = vpop.permute.xlu0 %7288
    %7291 = vset.pattern.permute.xlu0 10
    %7292 = vperm.xlu0 %7291, %v5476
    %v7293 = vpop.permute.xlu0 %7292
    %7295 = vset.pattern.permute.xlu0 10
    %7296 = vperm.xlu0 %7295, %v5477
    %v7297 = vpop.permute.xlu0 %7296
    %7299 = vset.pattern.permute.xlu0 10
    %7300 = vperm.xlu0 %7299, %v5478
    %v7301 = vpop.permute.xlu0 %7300
    %7303 = vset.pattern.permute.xlu0 10
    %7304 = vperm.xlu0 %7303, %v5479
    %v7305 = vpop.permute.xlu0 %7304
    %7307 = vset.pattern.permute.xlu0 10
    %7308 = vperm.xlu0 %7307, %v5480
    %v7309 = vpop.permute.xlu0 %7308
    %7311 = vset.pattern.permute.xlu0 10
    %7312 = vperm.xlu0 %7311, %v5481
    %v7313 = vpop.permute.xlu0 %7312
    %7315 = vset.pattern.permute.xlu0 10
    %7316 = vperm.xlu0 %7315, %v5482
    %v7317 = vpop.permute.xlu0 %7316
    %7319 = vset.pattern.permute.xlu0 10
    %7320 = vperm.xlu0 %7319, %v5483
    %v7321 = vpop.permute.xlu0 %7320
    %7323 = vset.pattern.permute.xlu0 10
    %7324 = vperm.xlu0 %7323, %v5484
    %v7325 = vpop.permute.xlu0 %7324
    %7327 = vset.pattern.permute.xlu0 10
    %7328 = vperm.xlu0 %7327, %v5485
    %v7329 = vpop.permute.xlu0 %7328
    %7331 = vset.pattern.permute.xlu0 10
    %7332 = vperm.xlu0 %7331, %v5486
    %v7333 = vpop.permute.xlu0 %7332
    %7335 = vset.pattern.permute.xlu0 10
    %7336 = vperm.xlu0 %7335, %v5487
    %v7337 = vpop.permute.xlu0 %7336
    %7339 = vset.pattern.permute.xlu0 10
    %7340 = vperm.xlu0 %7339, %v5488
    %v7341 = vpop.permute.xlu0 %7340
    %7343 = vset.pattern.permute.xlu0 10
    %7344 = vperm.xlu0 %7343, %v5489
    %v7345 = vpop.permute.xlu0 %7344
    %7347 = vset.pattern.permute.xlu0 10
    %7348 = vperm.xlu0 %7347, %v5490
    %v7349 = vpop.permute.xlu0 %7348
    %7351 = vset.pattern.permute.xlu0 10
    %7352 = vperm.xlu0 %7351, %v5491
    %v7353 = vpop.permute.xlu0 %7352
    %7355 = vset.pattern.permute.xlu0 10
    %7356 = vperm.xlu0 %7355, %v5492
    %v7357 = vpop.permute.xlu0 %7356
    %7359 = vset.pattern.permute.xlu0 10
    %7360 = vperm.xlu0 %7359, %v5493
    %v7361 = vpop.permute.xlu0 %7360
    %7363 = vset.pattern.permute.xlu0 10
    %7364 = vperm.xlu0 %7363, %v5494
    %v7365 = vpop.permute.xlu0 %7364
    %7367 = vset.pattern.permute.xlu0 10
    %7368 = vperm.xlu0 %7367, %v5495
    %v7369 = vpop.permute.xlu0 %7368
    %v7371 = vmul.f32 %v7273, %v7246
    %v7372 = vmul.f32 %v7277, %v7247
    %v7373 = vmul.f32 %v7281, %v7248
    %v7374 = vmul.f32 %v7285, %v7249
    %v7375 = vmul.f32 %v7289, %v7250
    %v7376 = vmul.f32 %v7293, %v7251
    %v7377 = vmul.f32 %v7297, %v7252
    %v7378 = vmul.f32 %v7301, %v7253
    %v7379 = vmul.f32 %v7305, %v7254
    %v7380 = vmul.f32 %v7309, %v7255
    %v7381 = vmul.f32 %v7313, %v7256
    %v7382 = vmul.f32 %v7317, %v7257
    %v7383 = vmul.f32 %v7321, %v7258
    %v7384 = vmul.f32 %v7325, %v7259
    %v7385 = vmul.f32 %v7329, %v7260
    %v7386 = vmul.f32 %v7333, %v7261
    %v7387 = vmul.f32 %v7337, %v7262
    %v7388 = vmul.f32 %v7341, %v7263
    %v7389 = vmul.f32 %v7345, %v7264
    %v7390 = vmul.f32 %v7349, %v7265
    %v7391 = vmul.f32 %v7353, %v7266
    %v7392 = vmul.f32 %v7357, %v7267
    %v7393 = vmul.f32 %v7361, %v7268
    %v7394 = vmul.f32 %v7365, %v7269
    %v7395 = vmul.f32 %v7369, %v7270
    %v7396 = vadd.f32 %v7221, %v7371
    %v7397 = vadd.f32 %v7222, %v7372
    %v7398 = vadd.f32 %v7223, %v7373
    %v7399 = vadd.f32 %v7224, %v7374
    %v7400 = vadd.f32 %v7225, %v7375
    %v7401 = vadd.f32 %v7226, %v7376
    %v7402 = vadd.f32 %v7227, %v7377
    %v7403 = vadd.f32 %v7228, %v7378
    %v7404 = vadd.f32 %v7229, %v7379
    %v7405 = vadd.f32 %v7230, %v7380
    %v7406 = vadd.f32 %v7231, %v7381
    %v7407 = vadd.f32 %v7232, %v7382
    %v7408 = vadd.f32 %v7233, %v7383
    %v7409 = vadd.f32 %v7234, %v7384
    %v7410 = vadd.f32 %v7235, %v7385
    %v7411 = vadd.f32 %v7236, %v7386
    %v7412 = vadd.f32 %v7237, %v7387
    %v7413 = vadd.f32 %v7238, %v7388
    %v7414 = vadd.f32 %v7239, %v7389
    %v7415 = vadd.f32 %v7240, %v7390
    %v7416 = vadd.f32 %v7241, %v7391
    %v7417 = vadd.f32 %v7242, %v7392
    %v7418 = vadd.f32 %v7243, %v7393
    %v7419 = vadd.f32 %v7244, %v7394
    %v7420 = vadd.f32 %v7245, %v7395
    %v7421 = vld [vmem:[%s3267] sm:$0xff]
    %v7422 = vld [vmem:[%s3267 + $0x8] sm:$0xff]
    %v7423 = vld [vmem:[%s3267 + $0x10] sm:$0xff]
    %v7424 = vld [vmem:[%s3267 + $0x18] sm:$0xff]
    %v7425 = vld [vmem:[%s3267 + $0x20] sm:$0xff]
    %v7426 = vld [vmem:[%s3267 + $0x28] sm:$0xff]
    %v7427 = vld [vmem:[%s3267 + $0x30] sm:$0xff]
    %v7428 = vld [vmem:[%s3267 + $0x38] sm:$0xff]
    %v7429 = vld [vmem:[%s3267 + $0x40] sm:$0xff]
    %v7430 = vld [vmem:[%s3267 + $0x48] sm:$0xff]
    %v7431 = vld [vmem:[%s3267 + $0x50] sm:$0xff]
    %v7432 = vld [vmem:[%s3267 + $0x58] sm:$0xff]
    %v7433 = vld [vmem:[%s3267 + $0x60] sm:$0xff]
    %v7434 = vld [vmem:[%s3267 + $0x68] sm:$0xff]
    %v7435 = vld [vmem:[%s3267 + $0x70] sm:$0xff]
    %v7436 = vld [vmem:[%s3267 + $0x78] sm:$0xff]
    %v7437 = vld [vmem:[%s3267 + $0x80] sm:$0xff]
    %v7438 = vld [vmem:[%s3267 + $0x88] sm:$0xff]
    %v7439 = vld [vmem:[%s3267 + $0x90] sm:$0xff]
    %v7440 = vld [vmem:[%s3267 + $0x98] sm:$0xff]
    %v7441 = vld [vmem:[%s3267 + $0xa0] sm:$0xff]
    %v7442 = vld [vmem:[%s3267 + $0xa8] sm:$0xff]
    %v7443 = vld [vmem:[%s3267 + $0xb0] sm:$0xff]
    %v7444 = vld [vmem:[%s3267 + $0xb8] sm:$0xff]
    %v7445 = vld [vmem:[%s3267 + $0xc0] sm:$0xf]
    %7446 = vset.pattern.permute.xlu0 11
    %7447 = vperm.xlu0 %7446, %v5471
    %v7448 = vpop.permute.xlu0 %7447
    %7450 = vset.pattern.permute.xlu0 11
    %7451 = vperm.xlu0 %7450, %v5472
    %v7452 = vpop.permute.xlu0 %7451
    %7454 = vset.pattern.permute.xlu0 11
    %7455 = vperm.xlu0 %7454, %v5473
    %v7456 = vpop.permute.xlu0 %7455
    %7458 = vset.pattern.permute.xlu0 11
    %7459 = vperm.xlu0 %7458, %v5474
    %v7460 = vpop.permute.xlu0 %7459
    %7462 = vset.pattern.permute.xlu0 11
    %7463 = vperm.xlu0 %7462, %v5475
    %v7464 = vpop.permute.xlu0 %7463
    %7466 = vset.pattern.permute.xlu0 11
    %7467 = vperm.xlu0 %7466, %v5476
    %v7468 = vpop.permute.xlu0 %7467
    %7470 = vset.pattern.permute.xlu0 11
    %7471 = vperm.xlu0 %7470, %v5477
    %v7472 = vpop.permute.xlu0 %7471
    %7474 = vset.pattern.permute.xlu0 11
    %7475 = vperm.xlu0 %7474, %v5478
    %v7476 = vpop.permute.xlu0 %7475
    %7478 = vset.pattern.permute.xlu0 11
    %7479 = vperm.xlu0 %7478, %v5479
    %v7480 = vpop.permute.xlu0 %7479
    %7482 = vset.pattern.permute.xlu0 11
    %7483 = vperm.xlu0 %7482, %v5480
    %v7484 = vpop.permute.xlu0 %7483
    %7486 = vset.pattern.permute.xlu0 11
    %7487 = vperm.xlu0 %7486, %v5481
    %v7488 = vpop.permute.xlu0 %7487
    %7490 = vset.pattern.permute.xlu0 11
    %7491 = vperm.xlu0 %7490, %v5482
    %v7492 = vpop.permute.xlu0 %7491
    %7494 = vset.pattern.permute.xlu0 11
    %7495 = vperm.xlu0 %7494, %v5483
    %v7496 = vpop.permute.xlu0 %7495
    %7498 = vset.pattern.permute.xlu0 11
    %7499 = vperm.xlu0 %7498, %v5484
    %v7500 = vpop.permute.xlu0 %7499
    %7502 = vset.pattern.permute.xlu0 11
    %7503 = vperm.xlu0 %7502, %v5485
    %v7504 = vpop.permute.xlu0 %7503
    %7506 = vset.pattern.permute.xlu0 11
    %7507 = vperm.xlu0 %7506, %v5486
    %v7508 = vpop.permute.xlu0 %7507
    %7510 = vset.pattern.permute.xlu0 11
    %7511 = vperm.xlu0 %7510, %v5487
    %v7512 = vpop.permute.xlu0 %7511
    %7514 = vset.pattern.permute.xlu0 11
    %7515 = vperm.xlu0 %7514, %v5488
    %v7516 = vpop.permute.xlu0 %7515
    %7518 = vset.pattern.permute.xlu0 11
    %7519 = vperm.xlu0 %7518, %v5489
    %v7520 = vpop.permute.xlu0 %7519
    %7522 = vset.pattern.permute.xlu0 11
    %7523 = vperm.xlu0 %7522, %v5490
    %v7524 = vpop.permute.xlu0 %7523
    %7526 = vset.pattern.permute.xlu0 11
    %7527 = vperm.xlu0 %7526, %v5491
    %v7528 = vpop.permute.xlu0 %7527
    %7530 = vset.pattern.permute.xlu0 11
    %7531 = vperm.xlu0 %7530, %v5492
    %v7532 = vpop.permute.xlu0 %7531
    %7534 = vset.pattern.permute.xlu0 11
    %7535 = vperm.xlu0 %7534, %v5493
    %v7536 = vpop.permute.xlu0 %7535
    %7538 = vset.pattern.permute.xlu0 11
    %7539 = vperm.xlu0 %7538, %v5494
    %v7540 = vpop.permute.xlu0 %7539
    %7542 = vset.pattern.permute.xlu0 11
    %7543 = vperm.xlu0 %7542, %v5495
    %v7544 = vpop.permute.xlu0 %7543
    %v7546 = vmul.f32 %v7448, %v7421
    %v7547 = vmul.f32 %v7452, %v7422
    %v7548 = vmul.f32 %v7456, %v7423
    %v7549 = vmul.f32 %v7460, %v7424
    %v7550 = vmul.f32 %v7464, %v7425
    %v7551 = vmul.f32 %v7468, %v7426
    %v7552 = vmul.f32 %v7472, %v7427
    %v7553 = vmul.f32 %v7476, %v7428
    %v7554 = vmul.f32 %v7480, %v7429
    %v7555 = vmul.f32 %v7484, %v7430
    %v7556 = vmul.f32 %v7488, %v7431
    %v7557 = vmul.f32 %v7492, %v7432
    %v7558 = vmul.f32 %v7496, %v7433
    %v7559 = vmul.f32 %v7500, %v7434
    %v7560 = vmul.f32 %v7504, %v7435
    %v7561 = vmul.f32 %v7508, %v7436
    %v7562 = vmul.f32 %v7512, %v7437
    %v7563 = vmul.f32 %v7516, %v7438
    %v7564 = vmul.f32 %v7520, %v7439
    %v7565 = vmul.f32 %v7524, %v7440
    %v7566 = vmul.f32 %v7528, %v7441
    %v7567 = vmul.f32 %v7532, %v7442
    %v7568 = vmul.f32 %v7536, %v7443
    %v7569 = vmul.f32 %v7540, %v7444
    %v7570 = vmul.f32 %v7544, %v7445
    %v7571 = vadd.f32 %v7396, %v7546
    %v7572 = vadd.f32 %v7397, %v7547
    %v7573 = vadd.f32 %v7398, %v7548
    %v7574 = vadd.f32 %v7399, %v7549
    %v7575 = vadd.f32 %v7400, %v7550
    %v7576 = vadd.f32 %v7401, %v7551
    %v7577 = vadd.f32 %v7402, %v7552
    %v7578 = vadd.f32 %v7403, %v7553
    %v7579 = vadd.f32 %v7404, %v7554
    %v7580 = vadd.f32 %v7405, %v7555
    %v7581 = vadd.f32 %v7406, %v7556
    %v7582 = vadd.f32 %v7407, %v7557
    %v7583 = vadd.f32 %v7408, %v7558
    %v7584 = vadd.f32 %v7409, %v7559
    %v7585 = vadd.f32 %v7410, %v7560
    %v7586 = vadd.f32 %v7411, %v7561
    %v7587 = vadd.f32 %v7412, %v7562
    %v7588 = vadd.f32 %v7413, %v7563
    %v7589 = vadd.f32 %v7414, %v7564
    %v7590 = vadd.f32 %v7415, %v7565
    %v7591 = vadd.f32 %v7416, %v7566
    %v7592 = vadd.f32 %v7417, %v7567
    %v7593 = vadd.f32 %v7418, %v7568
    %v7594 = vadd.f32 %v7419, %v7569
    %v7595 = vadd.f32 %v7420, %v7570
    %v7596 = vld [vmem:[%s3443] sm:$0xff]
    %v7597 = vld [vmem:[%s3443 + $0x8] sm:$0xff]
    %v7598 = vld [vmem:[%s3443 + $0x10] sm:$0xff]
    %v7599 = vld [vmem:[%s3443 + $0x18] sm:$0xff]
    %v7600 = vld [vmem:[%s3443 + $0x20] sm:$0xff]
    %v7601 = vld [vmem:[%s3443 + $0x28] sm:$0xff]
    %v7602 = vld [vmem:[%s3443 + $0x30] sm:$0xff]
    %v7603 = vld [vmem:[%s3443 + $0x38] sm:$0xff]
    %v7604 = vld [vmem:[%s3443 + $0x40] sm:$0xff]
    %v7605 = vld [vmem:[%s3443 + $0x48] sm:$0xff]
    %v7606 = vld [vmem:[%s3443 + $0x50] sm:$0xff]
    %v7607 = vld [vmem:[%s3443 + $0x58] sm:$0xff]
    %v7608 = vld [vmem:[%s3443 + $0x60] sm:$0xff]
    %v7609 = vld [vmem:[%s3443 + $0x68] sm:$0xff]
    %v7610 = vld [vmem:[%s3443 + $0x70] sm:$0xff]
    %v7611 = vld [vmem:[%s3443 + $0x78] sm:$0xff]
    %v7612 = vld [vmem:[%s3443 + $0x80] sm:$0xff]
    %v7613 = vld [vmem:[%s3443 + $0x88] sm:$0xff]
    %v7614 = vld [vmem:[%s3443 + $0x90] sm:$0xff]
    %v7615 = vld [vmem:[%s3443 + $0x98] sm:$0xff]
    %v7616 = vld [vmem:[%s3443 + $0xa0] sm:$0xff]
    %v7617 = vld [vmem:[%s3443 + $0xa8] sm:$0xff]
    %v7618 = vld [vmem:[%s3443 + $0xb0] sm:$0xff]
    %v7619 = vld [vmem:[%s3443 + $0xb8] sm:$0xff]
    %v7620 = vld [vmem:[%s3443 + $0xc0] sm:$0xf]
    %7621 = vset.pattern.permute.xlu0 12
    %7622 = vperm.xlu0 %7621, %v5471
    %v7623 = vpop.permute.xlu0 %7622
    %7625 = vset.pattern.permute.xlu0 12
    %7626 = vperm.xlu0 %7625, %v5472
    %v7627 = vpop.permute.xlu0 %7626
    %7629 = vset.pattern.permute.xlu0 12
    %7630 = vperm.xlu0 %7629, %v5473
    %v7631 = vpop.permute.xlu0 %7630
    %7633 = vset.pattern.permute.xlu0 12
    %7634 = vperm.xlu0 %7633, %v5474
    %v7635 = vpop.permute.xlu0 %7634
    %7637 = vset.pattern.permute.xlu0 12
    %7638 = vperm.xlu0 %7637, %v5475
    %v7639 = vpop.permute.xlu0 %7638
    %7641 = vset.pattern.permute.xlu0 12
    %7642 = vperm.xlu0 %7641, %v5476
    %v7643 = vpop.permute.xlu0 %7642
    %7645 = vset.pattern.permute.xlu0 12
    %7646 = vperm.xlu0 %7645, %v5477
    %v7647 = vpop.permute.xlu0 %7646
    %7649 = vset.pattern.permute.xlu0 12
    %7650 = vperm.xlu0 %7649, %v5478
    %v7651 = vpop.permute.xlu0 %7650
    %7653 = vset.pattern.permute.xlu0 12
    %7654 = vperm.xlu0 %7653, %v5479
    %v7655 = vpop.permute.xlu0 %7654
    %7657 = vset.pattern.permute.xlu0 12
    %7658 = vperm.xlu0 %7657, %v5480
    %v7659 = vpop.permute.xlu0 %7658
    %7661 = vset.pattern.permute.xlu0 12
    %7662 = vperm.xlu0 %7661, %v5481
    %v7663 = vpop.permute.xlu0 %7662
    %7665 = vset.pattern.permute.xlu0 12
    %7666 = vperm.xlu0 %7665, %v5482
    %v7667 = vpop.permute.xlu0 %7666
    %7669 = vset.pattern.permute.xlu0 12
    %7670 = vperm.xlu0 %7669, %v5483
    %v7671 = vpop.permute.xlu0 %7670
    %7673 = vset.pattern.permute.xlu0 12
    %7674 = vperm.xlu0 %7673, %v5484
    %v7675 = vpop.permute.xlu0 %7674
    %7677 = vset.pattern.permute.xlu0 12
    %7678 = vperm.xlu0 %7677, %v5485
    %v7679 = vpop.permute.xlu0 %7678
    %7681 = vset.pattern.permute.xlu0 12
    %7682 = vperm.xlu0 %7681, %v5486
    %v7683 = vpop.permute.xlu0 %7682
    %7685 = vset.pattern.permute.xlu0 12
    %7686 = vperm.xlu0 %7685, %v5487
    %v7687 = vpop.permute.xlu0 %7686
    %7689 = vset.pattern.permute.xlu0 12
    %7690 = vperm.xlu0 %7689, %v5488
    %v7691 = vpop.permute.xlu0 %7690
    %7693 = vset.pattern.permute.xlu0 12
    %7694 = vperm.xlu0 %7693, %v5489
    %v7695 = vpop.permute.xlu0 %7694
    %7697 = vset.pattern.permute.xlu0 12
    %7698 = vperm.xlu0 %7697, %v5490
    %v7699 = vpop.permute.xlu0 %7698
    %7701 = vset.pattern.permute.xlu0 12
    %7702 = vperm.xlu0 %7701, %v5491
    %v7703 = vpop.permute.xlu0 %7702
    %7705 = vset.pattern.permute.xlu0 12
    %7706 = vperm.xlu0 %7705, %v5492
    %v7707 = vpop.permute.xlu0 %7706
    %7709 = vset.pattern.permute.xlu0 12
    %7710 = vperm.xlu0 %7709, %v5493
    %v7711 = vpop.permute.xlu0 %7710
    %7713 = vset.pattern.permute.xlu0 12
    %7714 = vperm.xlu0 %7713, %v5494
    %v7715 = vpop.permute.xlu0 %7714
    %7717 = vset.pattern.permute.xlu0 12
    %7718 = vperm.xlu0 %7717, %v5495
    %v7719 = vpop.permute.xlu0 %7718
    %v7721 = vmul.f32 %v7623, %v7596
    %v7722 = vmul.f32 %v7627, %v7597
    %v7723 = vmul.f32 %v7631, %v7598
    %v7724 = vmul.f32 %v7635, %v7599
    %v7725 = vmul.f32 %v7639, %v7600
    %v7726 = vmul.f32 %v7643, %v7601
    %v7727 = vmul.f32 %v7647, %v7602
    %v7728 = vmul.f32 %v7651, %v7603
    %v7729 = vmul.f32 %v7655, %v7604
    %v7730 = vmul.f32 %v7659, %v7605
    %v7731 = vmul.f32 %v7663, %v7606
    %v7732 = vmul.f32 %v7667, %v7607
    %v7733 = vmul.f32 %v7671, %v7608
    %v7734 = vmul.f32 %v7675, %v7609
    %v7735 = vmul.f32 %v7679, %v7610
    %v7736 = vmul.f32 %v7683, %v7611
    %v7737 = vmul.f32 %v7687, %v7612
    %v7738 = vmul.f32 %v7691, %v7613
    %v7739 = vmul.f32 %v7695, %v7614
    %v7740 = vmul.f32 %v7699, %v7615
    %v7741 = vmul.f32 %v7703, %v7616
    %v7742 = vmul.f32 %v7707, %v7617
    %v7743 = vmul.f32 %v7711, %v7618
    %v7744 = vmul.f32 %v7715, %v7619
    %v7745 = vmul.f32 %v7719, %v7620
    %v7746 = vadd.f32 %v7571, %v7721
    %v7747 = vadd.f32 %v7572, %v7722
    %v7748 = vadd.f32 %v7573, %v7723
    %v7749 = vadd.f32 %v7574, %v7724
    %v7750 = vadd.f32 %v7575, %v7725
    %v7751 = vadd.f32 %v7576, %v7726
    %v7752 = vadd.f32 %v7577, %v7727
    %v7753 = vadd.f32 %v7578, %v7728
    %v7754 = vadd.f32 %v7579, %v7729
    %v7755 = vadd.f32 %v7580, %v7730
    %v7756 = vadd.f32 %v7581, %v7731
    %v7757 = vadd.f32 %v7582, %v7732
    %v7758 = vadd.f32 %v7583, %v7733
    %v7759 = vadd.f32 %v7584, %v7734
    %v7760 = vadd.f32 %v7585, %v7735
    %v7761 = vadd.f32 %v7586, %v7736
    %v7762 = vadd.f32 %v7587, %v7737
    %v7763 = vadd.f32 %v7588, %v7738
    %v7764 = vadd.f32 %v7589, %v7739
    %v7765 = vadd.f32 %v7590, %v7740
    %v7766 = vadd.f32 %v7591, %v7741
    %v7767 = vadd.f32 %v7592, %v7742
    %v7768 = vadd.f32 %v7593, %v7743
    %v7769 = vadd.f32 %v7594, %v7744
    %v7770 = vadd.f32 %v7595, %v7745
    %v7771 = vld [vmem:[%s3619] sm:$0xff]
    %v7772 = vld [vmem:[%s3619 + $0x8] sm:$0xff]
    %v7773 = vld [vmem:[%s3619 + $0x10] sm:$0xff]
    %v7774 = vld [vmem:[%s3619 + $0x18] sm:$0xff]
    %v7775 = vld [vmem:[%s3619 + $0x20] sm:$0xff]
    %v7776 = vld [vmem:[%s3619 + $0x28] sm:$0xff]
    %v7777 = vld [vmem:[%s3619 + $0x30] sm:$0xff]
    %v7778 = vld [vmem:[%s3619 + $0x38] sm:$0xff]
    %v7779 = vld [vmem:[%s3619 + $0x40] sm:$0xff]
    %v7780 = vld [vmem:[%s3619 + $0x48] sm:$0xff]
    %v7781 = vld [vmem:[%s3619 + $0x50] sm:$0xff]
    %v7782 = vld [vmem:[%s3619 + $0x58] sm:$0xff]
    %v7783 = vld [vmem:[%s3619 + $0x60] sm:$0xff]
    %v7784 = vld [vmem:[%s3619 + $0x68] sm:$0xff]
    %v7785 = vld [vmem:[%s3619 + $0x70] sm:$0xff]
    %v7786 = vld [vmem:[%s3619 + $0x78] sm:$0xff]
    %v7787 = vld [vmem:[%s3619 + $0x80] sm:$0xff]
    %v7788 = vld [vmem:[%s3619 + $0x88] sm:$0xff]
    %v7789 = vld [vmem:[%s3619 + $0x90] sm:$0xff]
    %v7790 = vld [vmem:[%s3619 + $0x98] sm:$0xff]
    %v7791 = vld [vmem:[%s3619 + $0xa0] sm:$0xff]
    %v7792 = vld [vmem:[%s3619 + $0xa8] sm:$0xff]
    %v7793 = vld [vmem:[%s3619 + $0xb0] sm:$0xff]
    %v7794 = vld [vmem:[%s3619 + $0xb8] sm:$0xff]
    %v7795 = vld [vmem:[%s3619 + $0xc0] sm:$0xf]
    %7796 = vset.pattern.permute.xlu0 13
    %7797 = vperm.xlu0 %7796, %v5471
    %v7798 = vpop.permute.xlu0 %7797
    %7800 = vset.pattern.permute.xlu0 13
    %7801 = vperm.xlu0 %7800, %v5472
    %v7802 = vpop.permute.xlu0 %7801
    %7804 = vset.pattern.permute.xlu0 13
    %7805 = vperm.xlu0 %7804, %v5473
    %v7806 = vpop.permute.xlu0 %7805
    %7808 = vset.pattern.permute.xlu0 13
    %7809 = vperm.xlu0 %7808, %v5474
    %v7810 = vpop.permute.xlu0 %7809
    %7812 = vset.pattern.permute.xlu0 13
    %7813 = vperm.xlu0 %7812, %v5475
    %v7814 = vpop.permute.xlu0 %7813
    %7816 = vset.pattern.permute.xlu0 13
    %7817 = vperm.xlu0 %7816, %v5476
    %v7818 = vpop.permute.xlu0 %7817
    %7820 = vset.pattern.permute.xlu0 13
    %7821 = vperm.xlu0 %7820, %v5477
    %v7822 = vpop.permute.xlu0 %7821
    %7824 = vset.pattern.permute.xlu0 13
    %7825 = vperm.xlu0 %7824, %v5478
    %v7826 = vpop.permute.xlu0 %7825
    %7828 = vset.pattern.permute.xlu0 13
    %7829 = vperm.xlu0 %7828, %v5479
    %v7830 = vpop.permute.xlu0 %7829
    %7832 = vset.pattern.permute.xlu0 13
    %7833 = vperm.xlu0 %7832, %v5480
    %v7834 = vpop.permute.xlu0 %7833
    %7836 = vset.pattern.permute.xlu0 13
    %7837 = vperm.xlu0 %7836, %v5481
    %v7838 = vpop.permute.xlu0 %7837
    %7840 = vset.pattern.permute.xlu0 13
    %7841 = vperm.xlu0 %7840, %v5482
    %v7842 = vpop.permute.xlu0 %7841
    %7844 = vset.pattern.permute.xlu0 13
    %7845 = vperm.xlu0 %7844, %v5483
    %v7846 = vpop.permute.xlu0 %7845
    %7848 = vset.pattern.permute.xlu0 13
    %7849 = vperm.xlu0 %7848, %v5484
    %v7850 = vpop.permute.xlu0 %7849
    %7852 = vset.pattern.permute.xlu0 13
    %7853 = vperm.xlu0 %7852, %v5485
    %v7854 = vpop.permute.xlu0 %7853
    %7856 = vset.pattern.permute.xlu0 13
    %7857 = vperm.xlu0 %7856, %v5486
    %v7858 = vpop.permute.xlu0 %7857
    %7860 = vset.pattern.permute.xlu0 13
    %7861 = vperm.xlu0 %7860, %v5487
    %v7862 = vpop.permute.xlu0 %7861
    %7864 = vset.pattern.permute.xlu0 13
    %7865 = vperm.xlu0 %7864, %v5488
    %v7866 = vpop.permute.xlu0 %7865
    %7868 = vset.pattern.permute.xlu0 13
    %7869 = vperm.xlu0 %7868, %v5489
    %v7870 = vpop.permute.xlu0 %7869
    %7872 = vset.pattern.permute.xlu0 13
    %7873 = vperm.xlu0 %7872, %v5490
    %v7874 = vpop.permute.xlu0 %7873
    %7876 = vset.pattern.permute.xlu0 13
    %7877 = vperm.xlu0 %7876, %v5491
    %v7878 = vpop.permute.xlu0 %7877
    %7880 = vset.pattern.permute.xlu0 13
    %7881 = vperm.xlu0 %7880, %v5492
    %v7882 = vpop.permute.xlu0 %7881
    %7884 = vset.pattern.permute.xlu0 13
    %7885 = vperm.xlu0 %7884, %v5493
    %v7886 = vpop.permute.xlu0 %7885
    %7888 = vset.pattern.permute.xlu0 13
    %7889 = vperm.xlu0 %7888, %v5494
    %v7890 = vpop.permute.xlu0 %7889
    %7892 = vset.pattern.permute.xlu0 13
    %7893 = vperm.xlu0 %7892, %v5495
    %v7894 = vpop.permute.xlu0 %7893
    %v7896 = vmul.f32 %v7798, %v7771
    %v7897 = vmul.f32 %v7802, %v7772
    %v7898 = vmul.f32 %v7806, %v7773
    %v7899 = vmul.f32 %v7810, %v7774
    %v7900 = vmul.f32 %v7814, %v7775
    %v7901 = vmul.f32 %v7818, %v7776
    %v7902 = vmul.f32 %v7822, %v7777
    %v7903 = vmul.f32 %v7826, %v7778
    %v7904 = vmul.f32 %v7830, %v7779
    %v7905 = vmul.f32 %v7834, %v7780
    %v7906 = vmul.f32 %v7838, %v7781
    %v7907 = vmul.f32 %v7842, %v7782
    %v7908 = vmul.f32 %v7846, %v7783
    %v7909 = vmul.f32 %v7850, %v7784
    %v7910 = vmul.f32 %v7854, %v7785
    %v7911 = vmul.f32 %v7858, %v7786
    %v7912 = vmul.f32 %v7862, %v7787
    %v7913 = vmul.f32 %v7866, %v7788
    %v7914 = vmul.f32 %v7870, %v7789
    %v7915 = vmul.f32 %v7874, %v7790
    %v7916 = vmul.f32 %v7878, %v7791
    %v7917 = vmul.f32 %v7882, %v7792
    %v7918 = vmul.f32 %v7886, %v7793
    %v7919 = vmul.f32 %v7890, %v7794
    %v7920 = vmul.f32 %v7894, %v7795
    %v7921 = vadd.f32 %v7746, %v7896
    %v7922 = vadd.f32 %v7747, %v7897
    %v7923 = vadd.f32 %v7748, %v7898
    %v7924 = vadd.f32 %v7749, %v7899
    %v7925 = vadd.f32 %v7750, %v7900
    %v7926 = vadd.f32 %v7751, %v7901
    %v7927 = vadd.f32 %v7752, %v7902
    %v7928 = vadd.f32 %v7753, %v7903
    %v7929 = vadd.f32 %v7754, %v7904
    %v7930 = vadd.f32 %v7755, %v7905
    %v7931 = vadd.f32 %v7756, %v7906
    %v7932 = vadd.f32 %v7757, %v7907
    %v7933 = vadd.f32 %v7758, %v7908
    %v7934 = vadd.f32 %v7759, %v7909
    %v7935 = vadd.f32 %v7760, %v7910
    %v7936 = vadd.f32 %v7761, %v7911
    %v7937 = vadd.f32 %v7762, %v7912
    %v7938 = vadd.f32 %v7763, %v7913
    %v7939 = vadd.f32 %v7764, %v7914
    %v7940 = vadd.f32 %v7765, %v7915
    %v7941 = vadd.f32 %v7766, %v7916
    %v7942 = vadd.f32 %v7767, %v7917
    %v7943 = vadd.f32 %v7768, %v7918
    %v7944 = vadd.f32 %v7769, %v7919
    %v7945 = vadd.f32 %v7770, %v7920
    %v7946 = vld [vmem:[%s3795] sm:$0xff]
    %v7947 = vld [vmem:[%s3795 + $0x8] sm:$0xff]
    %v7948 = vld [vmem:[%s3795 + $0x10] sm:$0xff]
    %v7949 = vld [vmem:[%s3795 + $0x18] sm:$0xff]
    %v7950 = vld [vmem:[%s3795 + $0x20] sm:$0xff]
    %v7951 = vld [vmem:[%s3795 + $0x28] sm:$0xff]
    %v7952 = vld [vmem:[%s3795 + $0x30] sm:$0xff]
    %v7953 = vld [vmem:[%s3795 + $0x38] sm:$0xff]
    %v7954 = vld [vmem:[%s3795 + $0x40] sm:$0xff]
    %v7955 = vld [vmem:[%s3795 + $0x48] sm:$0xff]
    %v7956 = vld [vmem:[%s3795 + $0x50] sm:$0xff]
    %v7957 = vld [vmem:[%s3795 + $0x58] sm:$0xff]
    %v7958 = vld [vmem:[%s3795 + $0x60] sm:$0xff]
    %v7959 = vld [vmem:[%s3795 + $0x68] sm:$0xff]
    %v7960 = vld [vmem:[%s3795 + $0x70] sm:$0xff]
    %v7961 = vld [vmem:[%s3795 + $0x78] sm:$0xff]
    %v7962 = vld [vmem:[%s3795 + $0x80] sm:$0xff]
    %v7963 = vld [vmem:[%s3795 + $0x88] sm:$0xff]
    %v7964 = vld [vmem:[%s3795 + $0x90] sm:$0xff]
    %v7965 = vld [vmem:[%s3795 + $0x98] sm:$0xff]
    %v7966 = vld [vmem:[%s3795 + $0xa0] sm:$0xff]
    %v7967 = vld [vmem:[%s3795 + $0xa8] sm:$0xff]
    %v7968 = vld [vmem:[%s3795 + $0xb0] sm:$0xff]
    %v7969 = vld [vmem:[%s3795 + $0xb8] sm:$0xff]
    %v7970 = vld [vmem:[%s3795 + $0xc0] sm:$0xf]
    %7971 = vset.pattern.permute.xlu0 14
    %7972 = vperm.xlu0 %7971, %v5471
    %v7973 = vpop.permute.xlu0 %7972
    %7975 = vset.pattern.permute.xlu0 14
    %7976 = vperm.xlu0 %7975, %v5472
    %v7977 = vpop.permute.xlu0 %7976
    %7979 = vset.pattern.permute.xlu0 14
    %7980 = vperm.xlu0 %7979, %v5473
    %v7981 = vpop.permute.xlu0 %7980
    %7983 = vset.pattern.permute.xlu0 14
    %7984 = vperm.xlu0 %7983, %v5474
    %v7985 = vpop.permute.xlu0 %7984
    %7987 = vset.pattern.permute.xlu0 14
    %7988 = vperm.xlu0 %7987, %v5475
    %v7989 = vpop.permute.xlu0 %7988
    %7991 = vset.pattern.permute.xlu0 14
    %7992 = vperm.xlu0 %7991, %v5476
    %v7993 = vpop.permute.xlu0 %7992
    %7995 = vset.pattern.permute.xlu0 14
    %7996 = vperm.xlu0 %7995, %v5477
    %v7997 = vpop.permute.xlu0 %7996
    %7999 = vset.pattern.permute.xlu0 14
    %8000 = vperm.xlu0 %7999, %v5478
    %v8001 = vpop.permute.xlu0 %8000
    %8003 = vset.pattern.permute.xlu0 14
    %8004 = vperm.xlu0 %8003, %v5479
    %v8005 = vpop.permute.xlu0 %8004
    %8007 = vset.pattern.permute.xlu0 14
    %8008 = vperm.xlu0 %8007, %v5480
    %v8009 = vpop.permute.xlu0 %8008
    %8011 = vset.pattern.permute.xlu0 14
    %8012 = vperm.xlu0 %8011, %v5481
    %v8013 = vpop.permute.xlu0 %8012
    %8015 = vset.pattern.permute.xlu0 14
    %8016 = vperm.xlu0 %8015, %v5482
    %v8017 = vpop.permute.xlu0 %8016
    %8019 = vset.pattern.permute.xlu0 14
    %8020 = vperm.xlu0 %8019, %v5483
    %v8021 = vpop.permute.xlu0 %8020
    %8023 = vset.pattern.permute.xlu0 14
    %8024 = vperm.xlu0 %8023, %v5484
    %v8025 = vpop.permute.xlu0 %8024
    %8027 = vset.pattern.permute.xlu0 14
    %8028 = vperm.xlu0 %8027, %v5485
    %v8029 = vpop.permute.xlu0 %8028
    %8031 = vset.pattern.permute.xlu0 14
    %8032 = vperm.xlu0 %8031, %v5486
    %v8033 = vpop.permute.xlu0 %8032
    %8035 = vset.pattern.permute.xlu0 14
    %8036 = vperm.xlu0 %8035, %v5487
    %v8037 = vpop.permute.xlu0 %8036
    %8039 = vset.pattern.permute.xlu0 14
    %8040 = vperm.xlu0 %8039, %v5488
    %v8041 = vpop.permute.xlu0 %8040
    %8043 = vset.pattern.permute.xlu0 14
    %8044 = vperm.xlu0 %8043, %v5489
    %v8045 = vpop.permute.xlu0 %8044
    %8047 = vset.pattern.permute.xlu0 14
    %8048 = vperm.xlu0 %8047, %v5490
    %v8049 = vpop.permute.xlu0 %8048
    %8051 = vset.pattern.permute.xlu0 14
    %8052 = vperm.xlu0 %8051, %v5491
    %v8053 = vpop.permute.xlu0 %8052
    %8055 = vset.pattern.permute.xlu0 14
    %8056 = vperm.xlu0 %8055, %v5492
    %v8057 = vpop.permute.xlu0 %8056
    %8059 = vset.pattern.permute.xlu0 14
    %8060 = vperm.xlu0 %8059, %v5493
    %v8061 = vpop.permute.xlu0 %8060
    %8063 = vset.pattern.permute.xlu0 14
    %8064 = vperm.xlu0 %8063, %v5494
    %v8065 = vpop.permute.xlu0 %8064
    %8067 = vset.pattern.permute.xlu0 14
    %8068 = vperm.xlu0 %8067, %v5495
    %v8069 = vpop.permute.xlu0 %8068
    %v8071 = vmul.f32 %v7973, %v7946
    %v8072 = vmul.f32 %v7977, %v7947
    %v8073 = vmul.f32 %v7981, %v7948
    %v8074 = vmul.f32 %v7985, %v7949
    %v8075 = vmul.f32 %v7989, %v7950
    %v8076 = vmul.f32 %v7993, %v7951
    %v8077 = vmul.f32 %v7997, %v7952
    %v8078 = vmul.f32 %v8001, %v7953
    %v8079 = vmul.f32 %v8005, %v7954
    %v8080 = vmul.f32 %v8009, %v7955
    %v8081 = vmul.f32 %v8013, %v7956
    %v8082 = vmul.f32 %v8017, %v7957
    %v8083 = vmul.f32 %v8021, %v7958
    %v8084 = vmul.f32 %v8025, %v7959
    %v8085 = vmul.f32 %v8029, %v7960
    %v8086 = vmul.f32 %v8033, %v7961
    %v8087 = vmul.f32 %v8037, %v7962
    %v8088 = vmul.f32 %v8041, %v7963
    %v8089 = vmul.f32 %v8045, %v7964
    %v8090 = vmul.f32 %v8049, %v7965
    %v8091 = vmul.f32 %v8053, %v7966
    %v8092 = vmul.f32 %v8057, %v7967
    %v8093 = vmul.f32 %v8061, %v7968
    %v8094 = vmul.f32 %v8065, %v7969
    %v8095 = vmul.f32 %v8069, %v7970
    %v8096 = vadd.f32 %v7921, %v8071
    %v8097 = vadd.f32 %v7922, %v8072
    %v8098 = vadd.f32 %v7923, %v8073
    %v8099 = vadd.f32 %v7924, %v8074
    %v8100 = vadd.f32 %v7925, %v8075
    %v8101 = vadd.f32 %v7926, %v8076
    %v8102 = vadd.f32 %v7927, %v8077
    %v8103 = vadd.f32 %v7928, %v8078
    %v8104 = vadd.f32 %v7929, %v8079
    %v8105 = vadd.f32 %v7930, %v8080
    %v8106 = vadd.f32 %v7931, %v8081
    %v8107 = vadd.f32 %v7932, %v8082
    %v8108 = vadd.f32 %v7933, %v8083
    %v8109 = vadd.f32 %v7934, %v8084
    %v8110 = vadd.f32 %v7935, %v8085
    %v8111 = vadd.f32 %v7936, %v8086
    %v8112 = vadd.f32 %v7937, %v8087
    %v8113 = vadd.f32 %v7938, %v8088
    %v8114 = vadd.f32 %v7939, %v8089
    %v8115 = vadd.f32 %v7940, %v8090
    %v8116 = vadd.f32 %v7941, %v8091
    %v8117 = vadd.f32 %v7942, %v8092
    %v8118 = vadd.f32 %v7943, %v8093
    %v8119 = vadd.f32 %v7944, %v8094
    %v8120 = vadd.f32 %v7945, %v8095
    %v8121 = vld [vmem:[%s3971] sm:$0xff]
    %v8122 = vld [vmem:[%s3971 + $0x8] sm:$0xff]
    %v8123 = vld [vmem:[%s3971 + $0x10] sm:$0xff]
    %v8124 = vld [vmem:[%s3971 + $0x18] sm:$0xff]
    %v8125 = vld [vmem:[%s3971 + $0x20] sm:$0xff]
    %v8126 = vld [vmem:[%s3971 + $0x28] sm:$0xff]
    %v8127 = vld [vmem:[%s3971 + $0x30] sm:$0xff]
    %v8128 = vld [vmem:[%s3971 + $0x38] sm:$0xff]
    %v8129 = vld [vmem:[%s3971 + $0x40] sm:$0xff]
    %v8130 = vld [vmem:[%s3971 + $0x48] sm:$0xff]
    %v8131 = vld [vmem:[%s3971 + $0x50] sm:$0xff]
    %v8132 = vld [vmem:[%s3971 + $0x58] sm:$0xff]
    %v8133 = vld [vmem:[%s3971 + $0x60] sm:$0xff]
    %v8134 = vld [vmem:[%s3971 + $0x68] sm:$0xff]
    %v8135 = vld [vmem:[%s3971 + $0x70] sm:$0xff]
    %v8136 = vld [vmem:[%s3971 + $0x78] sm:$0xff]
    %v8137 = vld [vmem:[%s3971 + $0x80] sm:$0xff]
    %v8138 = vld [vmem:[%s3971 + $0x88] sm:$0xff]
    %v8139 = vld [vmem:[%s3971 + $0x90] sm:$0xff]
    %v8140 = vld [vmem:[%s3971 + $0x98] sm:$0xff]
    %v8141 = vld [vmem:[%s3971 + $0xa0] sm:$0xff]
    %v8142 = vld [vmem:[%s3971 + $0xa8] sm:$0xff]
    %v8143 = vld [vmem:[%s3971 + $0xb0] sm:$0xff]
    %v8144 = vld [vmem:[%s3971 + $0xb8] sm:$0xff]
    %v8145 = vld [vmem:[%s3971 + $0xc0] sm:$0xf]
    %8146 = vset.pattern.permute.xlu0 15
    %8147 = vperm.xlu0 %8146, %v5471
    %v8148 = vpop.permute.xlu0 %8147
    %8150 = vset.pattern.permute.xlu0 15
    %8151 = vperm.xlu0 %8150, %v5472
    %v8152 = vpop.permute.xlu0 %8151
    %8154 = vset.pattern.permute.xlu0 15
    %8155 = vperm.xlu0 %8154, %v5473
    %v8156 = vpop.permute.xlu0 %8155
    %8158 = vset.pattern.permute.xlu0 15
    %8159 = vperm.xlu0 %8158, %v5474
    %v8160 = vpop.permute.xlu0 %8159
    %8162 = vset.pattern.permute.xlu0 15
    %8163 = vperm.xlu0 %8162, %v5475
    %v8164 = vpop.permute.xlu0 %8163
    %8166 = vset.pattern.permute.xlu0 15
    %8167 = vperm.xlu0 %8166, %v5476
    %v8168 = vpop.permute.xlu0 %8167
    %8170 = vset.pattern.permute.xlu0 15
    %8171 = vperm.xlu0 %8170, %v5477
    %v8172 = vpop.permute.xlu0 %8171
    %8174 = vset.pattern.permute.xlu0 15
    %8175 = vperm.xlu0 %8174, %v5478
    %v8176 = vpop.permute.xlu0 %8175
    %8178 = vset.pattern.permute.xlu0 15
    %8179 = vperm.xlu0 %8178, %v5479
    %v8180 = vpop.permute.xlu0 %8179
    %8182 = vset.pattern.permute.xlu0 15
    %8183 = vperm.xlu0 %8182, %v5480
    %v8184 = vpop.permute.xlu0 %8183
    %8186 = vset.pattern.permute.xlu0 15
    %8187 = vperm.xlu0 %8186, %v5481
    %v8188 = vpop.permute.xlu0 %8187
    %8190 = vset.pattern.permute.xlu0 15
    %8191 = vperm.xlu0 %8190, %v5482
    %v8192 = vpop.permute.xlu0 %8191
    %8194 = vset.pattern.permute.xlu0 15
    %8195 = vperm.xlu0 %8194, %v5483
    %v8196 = vpop.permute.xlu0 %8195
    %8198 = vset.pattern.permute.xlu0 15
    %8199 = vperm.xlu0 %8198, %v5484
    %v8200 = vpop.permute.xlu0 %8199
    %8202 = vset.pattern.permute.xlu0 15
    %8203 = vperm.xlu0 %8202, %v5485
    %v8204 = vpop.permute.xlu0 %8203
    %8206 = vset.pattern.permute.xlu0 15
    %8207 = vperm.xlu0 %8206, %v5486
    %v8208 = vpop.permute.xlu0 %8207
    %8210 = vset.pattern.permute.xlu0 15
    %8211 = vperm.xlu0 %8210, %v5487
    %v8212 = vpop.permute.xlu0 %8211
    %8214 = vset.pattern.permute.xlu0 15
    %8215 = vperm.xlu0 %8214, %v5488
    %v8216 = vpop.permute.xlu0 %8215
    %8218 = vset.pattern.permute.xlu0 15
    %8219 = vperm.xlu0 %8218, %v5489
    %v8220 = vpop.permute.xlu0 %8219
    %8222 = vset.pattern.permute.xlu0 15
    %8223 = vperm.xlu0 %8222, %v5490
    %v8224 = vpop.permute.xlu0 %8223
    %8226 = vset.pattern.permute.xlu0 15
    %8227 = vperm.xlu0 %8226, %v5491
    %v8228 = vpop.permute.xlu0 %8227
    %8230 = vset.pattern.permute.xlu0 15
    %8231 = vperm.xlu0 %8230, %v5492
    %v8232 = vpop.permute.xlu0 %8231
    %8234 = vset.pattern.permute.xlu0 15
    %8235 = vperm.xlu0 %8234, %v5493
    %v8236 = vpop.permute.xlu0 %8235
    %8238 = vset.pattern.permute.xlu0 15
    %8239 = vperm.xlu0 %8238, %v5494
    %v8240 = vpop.permute.xlu0 %8239
    %8242 = vset.pattern.permute.xlu0 15
    %8243 = vperm.xlu0 %8242, %v5495
    %v8244 = vpop.permute.xlu0 %8243
    %v8246 = vmul.f32 %v8148, %v8121
    %v8247 = vmul.f32 %v8152, %v8122
    %v8248 = vmul.f32 %v8156, %v8123
    %v8249 = vmul.f32 %v8160, %v8124
    %v8250 = vmul.f32 %v8164, %v8125
    %v8251 = vmul.f32 %v8168, %v8126
    %v8252 = vmul.f32 %v8172, %v8127
    %v8253 = vmul.f32 %v8176, %v8128
    %v8254 = vmul.f32 %v8180, %v8129
    %v8255 = vmul.f32 %v8184, %v8130
    %v8256 = vmul.f32 %v8188, %v8131
    %v8257 = vmul.f32 %v8192, %v8132
    %v8258 = vmul.f32 %v8196, %v8133
    %v8259 = vmul.f32 %v8200, %v8134
    %v8260 = vmul.f32 %v8204, %v8135
    %v8261 = vmul.f32 %v8208, %v8136
    %v8262 = vmul.f32 %v8212, %v8137
    %v8263 = vmul.f32 %v8216, %v8138
    %v8264 = vmul.f32 %v8220, %v8139
    %v8265 = vmul.f32 %v8224, %v8140
    %v8266 = vmul.f32 %v8228, %v8141
    %v8267 = vmul.f32 %v8232, %v8142
    %v8268 = vmul.f32 %v8236, %v8143
    %v8269 = vmul.f32 %v8240, %v8144
    %v8270 = vmul.f32 %v8244, %v8145
    %v8271 = vadd.f32 %v8096, %v8246
    %v8272 = vadd.f32 %v8097, %v8247
    %v8273 = vadd.f32 %v8098, %v8248
    %v8274 = vadd.f32 %v8099, %v8249
    %v8275 = vadd.f32 %v8100, %v8250
    %v8276 = vadd.f32 %v8101, %v8251
    %v8277 = vadd.f32 %v8102, %v8252
    %v8278 = vadd.f32 %v8103, %v8253
    %v8279 = vadd.f32 %v8104, %v8254
    %v8280 = vadd.f32 %v8105, %v8255
    %v8281 = vadd.f32 %v8106, %v8256
    %v8282 = vadd.f32 %v8107, %v8257
    %v8283 = vadd.f32 %v8108, %v8258
    %v8284 = vadd.f32 %v8109, %v8259
    %v8285 = vadd.f32 %v8110, %v8260
    %v8286 = vadd.f32 %v8111, %v8261
    %v8287 = vadd.f32 %v8112, %v8262
    %v8288 = vadd.f32 %v8113, %v8263
    %v8289 = vadd.f32 %v8114, %v8264
    %v8290 = vadd.f32 %v8115, %v8265
    %v8291 = vadd.f32 %v8116, %v8266
    %v8292 = vadd.f32 %v8117, %v8267
    %v8293 = vadd.f32 %v8118, %v8268
    %v8294 = vadd.f32 %v8119, %v8269
    %v8295 = vadd.f32 %v8120, %v8270
    %v8296 = vsel %vm4147, %v8271, 0.0
    %v8297 = vsel %vm4147, %v8272, 0.0
    %v8298 = vadd.f32 %v8296, %v8297
    %v8299 = vsel %vm4147, %v8273, 0.0
    %v8300 = vadd.f32 %v8298, %v8299
    %v8301 = vsel %vm4147, %v8274, 0.0
    %v8302 = vadd.f32 %v8300, %v8301
    %v8303 = vsel %vm4147, %v8275, 0.0
    %v8304 = vadd.f32 %v8302, %v8303
    %v8305 = vsel %vm4147, %v8276, 0.0
    %v8306 = vadd.f32 %v8304, %v8305
    %v8307 = vsel %vm4147, %v8277, 0.0
    %v8308 = vadd.f32 %v8306, %v8307
    %v8309 = vsel %vm4147, %v8278, 0.0
    %v8310 = vadd.f32 %v8308, %v8309
    %v8311 = vsel %vm4147, %v8279, 0.0
    %v8312 = vadd.f32 %v8310, %v8311
    %v8313 = vsel %vm4147, %v8280, 0.0
    %v8314 = vadd.f32 %v8312, %v8313
    %v8315 = vsel %vm4147, %v8281, 0.0
    %v8316 = vadd.f32 %v8314, %v8315
    %v8317 = vsel %vm4147, %v8282, 0.0
    %v8318 = vadd.f32 %v8316, %v8317
    %v8319 = vsel %vm4147, %v8283, 0.0
    %v8320 = vadd.f32 %v8318, %v8319
    %v8321 = vsel %vm4147, %v8284, 0.0
    %v8322 = vadd.f32 %v8320, %v8321
    %v8323 = vsel %vm4147, %v8285, 0.0
    %v8324 = vadd.f32 %v8322, %v8323
    %v8325 = vsel %vm4147, %v8286, 0.0
    %v8326 = vadd.f32 %v8324, %v8325
    %v8327 = vsel %vm4147, %v8287, 0.0
    %v8328 = vadd.f32 %v8326, %v8327
    %v8329 = vsel %vm4147, %v8288, 0.0
    %v8330 = vadd.f32 %v8328, %v8329
    %v8331 = vsel %vm4147, %v8289, 0.0
    %v8332 = vadd.f32 %v8330, %v8331
    %v8333 = vsel %vm4147, %v8290, 0.0
    %v8334 = vadd.f32 %v8332, %v8333
    %v8335 = vsel %vm4147, %v8291, 0.0
    %v8336 = vadd.f32 %v8334, %v8335
    %v8337 = vsel %vm4147, %v8292, 0.0
    %v8338 = vadd.f32 %v8336, %v8337
    %v8339 = vsel %vm4147, %v8293, 0.0
    %v8340 = vadd.f32 %v8338, %v8339
    %v8341 = vsel %vm4147, %v8294, 0.0
    %v8342 = vadd.f32 %v8340, %v8341
    %v8343 = vsel %vm4195, %v8295, 0.0
    %v8344 = vadd.f32 %v8342, %v8343
    %v8345 = vrot.slane %v8344, 4
    %v8346 = vadd.f32 %v8344, %v8345
    %v8347 = vrot.slane %v8346, 2
    %v8348 = vadd.f32 %v8346, %v8347
    %v8349 = vrot.slane %v8348, 1
    %v8350 = vadd.f32 %v8348, %v8349
    %v8351 = vadd.f32 %v8350, %v35
    %8352 = vst.msk [vmem:[#allocation2 + $0x1] sm:$0x1] %vm4205, %v8351
    // Predicated region
    $region34: #{simple_cnn_forward.1} parent=1 // pred_check
      _
    $region35: #{simple_cnn_forward.1} parent=1 // pred_check_branch
      %8354 = sbr.rel (0) target = $region37
    $region36: #{simple_cnn_forward.1} parent=1 // pred_region
      %s8356 = ssub.s32 32, 32
      %8357 = vsyncadd [#allocation3], %s8356
      %s8359 = sshll.u32 [#allocation2], 4
      %s8360 = int_to_ptr.vmem [resolvable:$true] %s8359
      %8362 = dma.vmem_to_hbm [thread:$0]  %s8360, 32, %s8, [#allocation3]
    $region37: #{simple_cnn_forward.1} parent=1 // pred_fallthru
      _
    // Predicated region
    $region38: #{simple_cnn_forward.1} parent=1 // pred_check
      _
    $region39: #{simple_cnn_forward.1} parent=1 // pred_check_branch
      %8364 = sbr.rel (0) target = $region41
    $region40: #{simple_cnn_forward.1} parent=1 // pred_region
      %8365 = dma.done [#allocation3], 32
    $region41: #{simple_cnn_forward.1} parent=1 // pred_fallthru
      _
    %8366 = vsyncpa [#allocation3], 1

</llo_original>
